<compile_context>
chip_gen: v5e
topology: v5e:2x2
jax: 0.10.0
libtpu: 0.0.40
codegen_flags: <defaults>
</compile_context>

<pallas_src>
import jax
import jax.numpy as jnp
from jax.experimental import pallas as pl
from jax.experimental.pallas import tpu as pltpu

# ----- synthetic config (small, TPU-friendly) -----
HIDDEN = 128            # config.hidden_size
MOE_INTER = 128         # config.moe_intermediate_size
N_ROUTED = 8            # config.n_routed_experts
N_GROUP = 4             # config.n_group
TOPK_GROUP = 2          # config.topk_group
TOP_K = 2               # config.num_experts_per_tok
N_SHARED = 1            # config.n_shared_experts
SHARED_INTER = MOE_INTER * N_SHARED
ROUTED_SCALING = 2.5    # config.routed_scaling_factor
RENORMALIZE = True      # config.norm_topk_prob
NUM_TOKENS = 256
TILE_T = 128            # 2 token tiles at T=256 (v7x megacore) / 2 steps on v5e/v6e


# ----------------------------------------------------------------------------
# Grouped top-k routing (vLLM FusedMoE grouped_topk, noaux_tc + sigmoid) — glue
# ----------------------------------------------------------------------------
def grouped_topk_dense(logits, correction_bias):
    T, E = logits.shape
    scores = jax.nn.sigmoid(logits)                      # scoring_func="sigmoid"
    original_scores = scores
    scores_b = scores + correction_bias[None, :]         # e_score_correction_bias
    # group scores = sum of top-2 biased scores within each expert group
    grp = scores_b.reshape(T, N_GROUP, E // N_GROUP)
    group_scores = jnp.sum(jax.lax.top_k(grp, 2)[0], axis=-1)
    group_idx = jax.lax.top_k(group_scores, TOPK_GROUP)[1]          # [T, topk_group]
    group_mask = jnp.sum(jax.nn.one_hot(group_idx, N_GROUP, dtype=scores.dtype), axis=1)
    score_mask = jnp.repeat(group_mask, E // N_GROUP, axis=1)       # [T, E]
    tmp_scores = jnp.where(score_mask > 0, scores_b, 0.0)
    topk_ids = jax.lax.top_k(tmp_scores, TOP_K)[1]                  # [T, top_k]
    topk_w = jnp.take_along_axis(original_scores, topk_ids, axis=1)
    if RENORMALIZE:
        topk_w = topk_w / jnp.sum(topk_w, axis=-1, keepdims=True)
    # scatter to a dense [T, E] weight matrix (non-selected experts get exactly 0)
    dense = jnp.sum(
        jax.nn.one_hot(topk_ids, E, dtype=topk_w.dtype) * topk_w[..., None], axis=1
    )
    return dense


# ----------------------------------------------------------------------------
# Fused all-expert MoE (+ shared expert) kernel.  grid = (token_tiles,)
# ----------------------------------------------------------------------------
def make_moe_kernel(inter_sizes):
    """inter_sizes: static tuple of per-expert intermediate sizes, shared last."""
    gu_offs, h_offs = [], []
    go = ho = 0
    for isz in inter_sizes:
        gu_offs.append(go)
        h_offs.append(ho)
        go += 2 * isz
        ho += isz

    def moe_kernel(x_ref,        # VMEM bf16 [TILE_T, H]
                   wgu_ref,      # VMEM bf16 [H, sum(2I)]  (all experts + shared)
                   wdn_ref,      # VMEM bf16 [sum(I), H]
                   wts_ref,      # VMEM f32  [TILE_T, E+1] routing weights
                   o_ref,        # VMEM      [TILE_T, H]
                   gu_ref,       # VMEM f32  [TILE_T, sum(2I)] scratch
                   h_ref):       # VMEM bf16 [TILE_T, sum(I)]  scratch
        # 1) one fused gate_up matmul across all experts (incl. shared)
        gu_ref[...] = jnp.dot(x_ref[...], wgu_ref[...],
                              preferred_element_type=jnp.float32)
        # 2) per-expert SiLU(gate)*up with the routing weight folded in, written
        #    into the stacked bf16 h buffer.  Chunked (static unrolled loop) so
        #    the big f32 intermediate never lives as one vreg expression.
        for e, isz in enumerate(inter_sizes):
            g0 = gu_offs[e]
            gate = gu_ref[:, g0:g0 + isz]
            up = gu_ref[:, g0 + isz:g0 + 2 * isz]
            w_e = wts_ref[:, e:e + 1]                     # [TILE_T, 1] static lane slice
            h_ref[:, h_offs[e]:h_offs[e] + isz] = (
                gate * jax.nn.sigmoid(gate) * (up * w_e)).astype(jnp.bfloat16)
        # 3) one stacked-K down matmul: the MXU performs the weighted expert
        #    accumulation (non-selected experts contribute exactly 0 via w=0).
        o_ref[...] = jnp.dot(h_ref[...], wdn_ref[...],
                             preferred_element_type=jnp.float32).astype(o_ref.dtype)

    return moe_kernel


def megrez_moe_forward(hidden_states, pre_gate_hidden_states,
                       wg, correction_bias, w1, w2, sw1, sw2):
    T, H = hidden_states.shape
    E = w1.shape[0]

    # ---- router logits (tiny matmul; plain XLA, no dedicated pallas_call) ----
    gate_in = hidden_states if pre_gate_hidden_states is None else pre_gate_hidden_states
    logits = jnp.dot(gate_in.astype(jnp.float32), wg.astype(jnp.float32))
    dense_w = grouped_topk_dense(logits, correction_bias)            # [T, E] f32

    # ---- fold routed_scaling (f32); shared expert appended with weight 1.0 ----
    full_w = jnp.concatenate(
        [dense_w * jnp.float32(ROUTED_SCALING), jnp.ones((T, 1), jnp.float32)],
        axis=1)                                                      # [T, E+1]

    # ---- stack expert weights on the host: gate_up along N, down along K ----
    inter_sizes = tuple([w1.shape[-1] // 2] * E + [sw1.shape[-1] // 2])
    # lane-aligned per-expert chunks; TODO(synk): relax to non-128-multiple inters
    assert all(isz % 128 == 0 for isz in inter_sizes)
    wgu_all = jnp.concatenate([w1[e] for e in range(E)] + [sw1],
                              axis=1).astype(jnp.bfloat16)           # [H, sum(2I)]
    wdn_all = jnp.concatenate([w2[e] for e in range(E)] + [sw2],
                              axis=0).astype(jnp.bfloat16)           # [sum(I), H]
    n_gu = wgu_all.shape[-1]
    k_dn = wdn_all.shape[0]
    e_total = len(inter_sizes)

    # ---- pad tokens to a multiple of TILE_T (padded rows get zero weights) ----
    t_tiles = pl.cdiv(T, TILE_T)
    t_pad = t_tiles * TILE_T
    x = hidden_states
    if t_pad != T:
        x = jnp.pad(x, ((0, t_pad - T), (0, 0)))
        full_w = jnp.pad(full_w, ((0, t_pad - T), (0, 0)))
    x_bf = x.astype(jnp.bfloat16)        # bf16 MXU operand; halves the x DMA

    kernel = make_moe_kernel(inter_sizes)
    grid_spec = pltpu.PrefetchScalarGridSpec(
        num_scalar_prefetch=0,
        grid=(t_tiles,),
        in_specs=[
            pl.BlockSpec((TILE_T, H), lambda t: (t, 0)),       # x tile
            pl.BlockSpec((H, n_gu), lambda t: (0, 0)),         # stacked gate_up (resident)
            pl.BlockSpec((k_dn, H), lambda t: (0, 0)),         # stacked down (resident)
            pl.BlockSpec((TILE_T, e_total), lambda t: (t, 0)), # routing weights
        ],
        out_specs=pl.BlockSpec((TILE_T, H), lambda t: (t, 0)), # lane-dense (H=128)
        scratch_shapes=[
            pltpu.VMEM((TILE_T, n_gu), jnp.float32),           # gate_up result
            pltpu.VMEM((TILE_T, k_dn), jnp.bfloat16),          # weighted SiLU*up
        ],
    )
    # TODO(synk): at production sizes (H~4K, I~1.4K, E~64) the fully resident
    # stacked weights exceed v7x's 64 MiB VMEM; stream per expert-pair with
    # pl.Buffered(3) weight specs (or a grouped-GEMM layout) instead.

    out = pl.pallas_call(
        kernel,
        out_shape=jax.ShapeDtypeStruct((t_pad, H), hidden_states.dtype),
        grid_spec=grid_spec,
        compiler_params=pltpu.CompilerParams(
            dimension_semantics=("parallel",)),
    )(x_bf, wgu_all, wdn_all, full_w)

    # TODO(synk): tp_size>1 all-reduce path is a distributed collective; single-chip here.
    return out[:T]


# ----------------------------------------------------------------------------
# pure-JAX f32 reference for verification (upcasts the bf16 weights)
# ----------------------------------------------------------------------------
def reference(hidden_states, pre_gate_hidden_states, wg, correction_bias, w1, w2, sw1, sw2):
    gate_in = hidden_states if pre_gate_hidden_states is None else pre_gate_hidden_states
    logits = jnp.dot(gate_in.astype(jnp.float32), wg.astype(jnp.float32))
    dense_w = grouped_topk_dense(logits, correction_bias)

    def mlp(x, wgu, wd):
        wgu = wgu.astype(jnp.float32)
        wd = wd.astype(jnp.float32)
        gu = x @ wgu
        i = wgu.shape[-1] // 2
        return (jax.nn.silu(gu[:, :i]) * gu[:, i:]) @ wd

    shared = mlp(hidden_states, sw1, sw2)
    routed = jnp.zeros_like(hidden_states)
    for e in range(w1.shape[0]):
        routed = routed + dense_w[:, e:e + 1] * mlp(hidden_states, w1[e], w2[e])
    return routed * ROUTED_SCALING + shared


if __name__ == "__main__":
    key = jax.random.PRNGKey(0)
    ks = jax.random.split(key, 7)
    x = jax.random.normal(ks[0], (NUM_TOKENS, HIDDEN), jnp.float32)
    wg = jax.random.normal(ks[1], (HIDDEN, N_ROUTED), jnp.float32) * 0.05
    e_score_correction_bias = jax.random.normal(ks[2], (N_ROUTED,), jnp.float32) * 0.05
    # expert weights stored in bf16 (MXU fast path); accumulation stays f32
    w1 = (jax.random.normal(ks[3], (N_ROUTED, HIDDEN, 2 * MOE_INTER), jnp.float32)
          * 0.05).astype(jnp.bfloat16)
    w2 = (jax.random.normal(ks[4], (N_ROUTED, MOE_INTER, HIDDEN), jnp.float32)
          * 0.05).astype(jnp.bfloat16)
    sw1 = (jax.random.normal(ks[5], (HIDDEN, 2 * SHARED_INTER), jnp.float32)
           * 0.05).astype(jnp.bfloat16)
    sw2 = (jax.random.normal(ks[6], (SHARED_INTER, HIDDEN), jnp.float32)
           * 0.05).astype(jnp.bfloat16)

    out = megrez_moe_forward(x, None, wg, e_score_correction_bias, w1, w2, sw1, sw2)
    out = jax.block_until_ready(out)

    ref = reference(x, None, wg, e_score_correction_bias, w1, w2, sw1, sw2)
    assert out.shape == (NUM_TOKENS, HIDDEN)
    max_err = jnp.max(jnp.abs(out - ref))
    assert jnp.allclose(out, ref, rtol=2e-2, atol=3e-2), (
        f"mismatch: max abs err {max_err}")
    print("KERNEL_OK")
</pallas_src>

<mosaic_0001>
module attributes {stable_mosaic.version = 11 : i64} {
  func.func @moe_kernel(%arg0: i32, %arg1: memref<128x128xbf16, #tpu.memory_space<vmem>>, %arg2: memref<128x2304xbf16, #tpu.memory_space<vmem>>, %arg3: memref<1152x128xbf16, #tpu.memory_space<vmem>>, %arg4: memref<128x9xf32, #tpu.memory_space<vmem>>, %arg5: memref<128x128xf32, #tpu.memory_space<vmem>>, %arg6: memref<128x2304xf32, #tpu.memory_space<vmem>>, %arg7: memref<128x1152xbf16, #tpu.memory_space<vmem>>) attributes {dimension_semantics = [#tpu.dimension_semantics<parallel>], iteration_bounds = array<i64: 2>, scalar_prefetch = 0 : i64, scratch_operands = 2 : i64, tpu.core_type = #tpu.core_type<tc>, window_params = [{transform_indices = @transform_0, window_bounds = array<i64: 128, 128>}, {pipeline_mode = #tpu.pipeline_mode<synchronous>, transform_indices = @transform_1, window_bounds = array<i64: 128, 2304>}, {pipeline_mode = #tpu.pipeline_mode<synchronous>, transform_indices = @transform_2, window_bounds = array<i64: 1152, 128>}, {transform_indices = @transform_3, window_bounds = array<i64: 128, 9>}, {transform_indices = @transform_4, window_bounds = array<i64: 128, 128>}]} {
    %c0 = arith.constant 0 : index
    %c0_0 = arith.constant 0 : index
    %0 = vector.load %arg1[%c0, %c0_0] : memref<128x128xbf16, #tpu.memory_space<vmem>>, vector<128x128xbf16>
    %c0_1 = arith.constant 0 : index
    %c0_2 = arith.constant 0 : index
    %1 = vector.load %arg2[%c0_1, %c0_2] : memref<128x2304xbf16, #tpu.memory_space<vmem>>, vector<128x2304xbf16>
    %cst = arith.constant dense<0.000000e+00> : vector<128x2304xf32>
    %2 = tpu.matmul %0, %1, %cst {dimension_numbers = #tpu.dot_dimension_numbers<[1], [0], [0], [1], [0, 0, 1, 1], [], []>} : vector<128x128xbf16>, vector<128x2304xbf16>, vector<128x2304xf32> -> vector<128x2304xf32>
    %c0_3 = arith.constant 0 : index
    %c0_4 = arith.constant 0 : index
    %3 = vector.load %arg6[%c0_3, %c0_4] : memref<128x2304xf32, #tpu.memory_space<vmem>>, vector<128x2304xf32>
    tpu.vector_store %arg6[%c0_3, %c0_4], %2 {strides = array<i32>} : memref<128x2304xf32, #tpu.memory_space<vmem>>, vector<128x2304xf32>,
    %c0_5 = arith.constant 0 : index
    %c0_6 = arith.constant 0 : index
    %4 = vector.load %arg6[%c0_5, %c0_6] : memref<128x2304xf32, #tpu.memory_space<vmem>>, vector<128x128xf32>
    %c0_7 = arith.constant 0 : index
    %c128 = arith.constant 128 : index
    %5 = vector.load %arg6[%c0_7, %c128] : memref<128x2304xf32, #tpu.memory_space<vmem>>, vector<128x128xf32>
    %c0_8 = arith.constant 0 : index
    %c0_9 = arith.constant 0 : index
    %6 = vector.load %arg4[%c0_8, %c0_9] : memref<128x9xf32, #tpu.memory_space<vmem>>, vector<128x1xf32>
    %7 = arith.negf %4 : vector<128x128xf32>
    %8 = math.exp %7 : vector<128x128xf32>
    %cst_10 = arith.constant 1.000000e+00 : f32
    %9 = vector.broadcast %cst_10 : f32 to vector<128x128xf32>
    %10 = arith.addf %9, %8 : vector<128x128xf32>
    %11 = arith.divf %9, %10 : vector<128x128xf32>
    %12 = arith.mulf %4, %11 : vector<128x128xf32>
    %13 = vector.broadcast %6 : vector<128x1xf32> to vector<128x128xf32>
    %14 = arith.mulf %5, %13 : vector<128x128xf32>
    %15 = arith.mulf %12, %14 : vector<128x128xf32>
    %16 = arith.truncf %15 : vector<128x128xf32> to vector<128x128xbf16>
    %c0_11 = arith.constant 0 : index
    %c0_12 = arith.constant 0 : index
    %17 = vector.load %arg7[%c0_11, %c0_12] : memref<128x1152xbf16, #tpu.memory_space<vmem>>, vector<128x128xbf16>
    tpu.vector_store %arg7[%c0_11, %c0_12], %16 {strides = array<i32>} : memref<128x1152xbf16, #tpu.memory_space<vmem>>, vector<128x128xbf16>,
    %c0_13 = arith.constant 0 : index
    %c256 = arith.constant 256 : index
    %18 = vector.load %arg6[%c0_13, %c256] : memref<128x2304xf32, #tpu.memory_space<vmem>>, vector<128x128xf32>
    %c0_14 = arith.constant 0 : index
    %c384 = arith.constant 384 : index
    %19 = vector.load %arg6[%c0_14, %c384] : memref<128x2304xf32, #tpu.memory_space<vmem>>, vector<128x128xf32>
    %c0_15 = arith.constant 0 : index
    %c1 = arith.constant 1 : index
    %20 = vector.load %arg4[%c0_15, %c1] : memref<128x9xf32, #tpu.memory_space<vmem>>, vector<128x1xf32>
    %21 = arith.negf %18 : vector<128x128xf32>
    %22 = math.exp %21 : vector<128x128xf32>
    %cst_16 = arith.constant 1.000000e+00 : f32
    %23 = vector.broadcast %cst_16 : f32 to vector<128x128xf32>
    %24 = arith.addf %23, %22 : vector<128x128xf32>
    %25 = arith.divf %23, %24 : vector<128x128xf32>
    %26 = arith.mulf %18, %25 : vector<128x128xf32>
    %27 = vector.broadcast %20 : vector<128x1xf32> to vector<128x128xf32>
    %28 = arith.mulf %19, %27 : vector<128x128xf32>
    %29 = arith.mulf %26, %28 : vector<128x128xf32>
    %30 = arith.truncf %29 : vector<128x128xf32> to vector<128x128xbf16>
    %c0_17 = arith.constant 0 : index
    %c128_18 = arith.constant 128 : index
    %31 = vector.load %arg7[%c0_17, %c128_18] : memref<128x1152xbf16, #tpu.memory_space<vmem>>, vector<128x128xbf16>
    tpu.vector_store %arg7[%c0_17, %c128_18], %30 {strides = array<i32>} : memref<128x1152xbf16, #tpu.memory_space<vmem>>, vector<128x128xbf16>,
    %c0_19 = arith.constant 0 : index
    %c512 = arith.constant 512 : index
    %32 = vector.load %arg6[%c0_19, %c512] : memref<128x2304xf32, #tpu.memory_space<vmem>>, vector<128x128xf32>
    %c0_20 = arith.constant 0 : index
    %c640 = arith.constant 640 : index
    %33 = vector.load %arg6[%c0_20, %c640] : memref<128x2304xf32, #tpu.memory_space<vmem>>, vector<128x128xf32>
    %c0_21 = arith.constant 0 : index
    %c2 = arith.constant 2 : index
    %34 = vector.load %arg4[%c0_21, %c2] : memref<128x9xf32, #tpu.memory_space<vmem>>, vector<128x1xf32>
    %35 = arith.negf %32 : vector<128x128xf32>
    %36 = math.exp %35 : vector<128x128xf32>
    %cst_22 = arith.constant 1.000000e+00 : f32
    %37 = vector.broadcast %cst_22 : f32 to vector<128x128xf32>
    %38 = arith.addf %37, %36 : vector<128x128xf32>
    %39 = arith.divf %37, %38 : vector<128x128xf32>
    %40 = arith.mulf %32, %39 : vector<128x128xf32>
    %41 = vector.broadcast %34 : vector<128x1xf32> to vector<128x128xf32>
    %42 = arith.mulf %33, %41 : vector<128x128xf32>
    %43 = arith.mulf %40, %42 : vector<128x128xf32>
    %44 = arith.truncf %43 : vector<128x128xf32> to vector<128x128xbf16>
    %c0_23 = arith.constant 0 : index
    %c256_24 = arith.constant 256 : index
    %45 = vector.load %arg7[%c0_23, %c256_24] : memref<128x1152xbf16, #tpu.memory_space<vmem>>, vector<128x128xbf16>
    tpu.vector_store %arg7[%c0_23, %c256_24], %44 {strides = array<i32>} : memref<128x1152xbf16, #tpu.memory_space<vmem>>, vector<128x128xbf16>,
    %c0_25 = arith.constant 0 : index
    %c768 = arith.constant 768 : index
    %46 = vector.load %arg6[%c0_25, %c768] : memref<128x2304xf32, #tpu.memory_space<vmem>>, vector<128x128xf32>
    %c0_26 = arith.constant 0 : index
    %c896 = arith.constant 896 : index
    %47 = vector.load %arg6[%c0_26, %c896] : memref<128x2304xf32, #tpu.memory_space<vmem>>, vector<128x128xf32>
    %c0_27 = arith.constant 0 : index
    %c3 = arith.constant 3 : index
    %48 = vector.load %arg4[%c0_27, %c3] : memref<128x9xf32, #tpu.memory_space<vmem>>, vector<128x1xf32>
    %49 = arith.negf %46 : vector<128x128xf32>
    %50 = math.exp %49 : vector<128x128xf32>
    %cst_28 = arith.constant 1.000000e+00 : f32
    %51 = vector.broadcast %cst_28 : f32 to vector<128x128xf32>
    %52 = arith.addf %51, %50 : vector<128x128xf32>
    %53 = arith.divf %51, %52 : vector<128x128xf32>
    %54 = arith.mulf %46, %53 : vector<128x128xf32>
    %55 = vector.broadcast %48 : vector<128x1xf32> to vector<128x128xf32>
    %56 = arith.mulf %47, %55 : vector<128x128xf32>
    %57 = arith.mulf %54, %56 : vector<128x128xf32>
    %58 = arith.truncf %57 : vector<128x128xf32> to vector<128x128xbf16>
    %c0_29 = arith.constant 0 : index
    %c384_30 = arith.constant 384 : index
    %59 = vector.load %arg7[%c0_29, %c384_30] : memref<128x1152xbf16, #tpu.memory_space<vmem>>, vector<128x128xbf16>
    tpu.vector_store %arg7[%c0_29, %c384_30], %58 {strides = array<i32>} : memref<128x1152xbf16, #tpu.memory_space<vmem>>, vector<128x128xbf16>,
    %c0_31 = arith.constant 0 : index
    %c1024 = arith.constant 1024 : index
    %60 = vector.load %arg6[%c0_31, %c1024] : memref<128x2304xf32, #tpu.memory_space<vmem>>, vector<128x128xf32>
    %c0_32 = arith.constant 0 : index
    %c1152 = arith.constant 1152 : index
    %61 = vector.load %arg6[%c0_32, %c1152] : memref<128x2304xf32, #tpu.memory_space<vmem>>, vector<128x128xf32>
    %c0_33 = arith.constant 0 : index
    %c4 = arith.constant 4 : index
    %62 = vector.load %arg4[%c0_33, %c4] : memref<128x9xf32, #tpu.memory_space<vmem>>, vector<128x1xf32>
    %63 = arith.negf %60 : vector<128x128xf32>
    %64 = math.exp %63 : vector<128x128xf32>
    %cst_34 = arith.constant 1.000000e+00 : f32
    %65 = vector.broadcast %cst_34 : f32 to vector<128x128xf32>
    %66 = arith.addf %65, %64 : vector<128x128xf32>
    %67 = arith.divf %65, %66 : vector<128x128xf32>
    %68 = arith.mulf %60, %67 : vector<128x128xf32>
    %69 = vector.broadcast %62 : vector<128x1xf32> to vector<128x128xf32>
    %70 = arith.mulf %61, %69 : vector<128x128xf32>
    %71 = arith.mulf %68, %70 : vector<128x128xf32>
    %72 = arith.truncf %71 : vector<128x128xf32> to vector<128x128xbf16>
    %c0_35 = arith.constant 0 : index
    %c512_36 = arith.constant 512 : index
    %73 = vector.load %arg7[%c0_35, %c512_36] : memref<128x1152xbf16, #tpu.memory_space<vmem>>, vector<128x128xbf16>
    tpu.vector_store %arg7[%c0_35, %c512_36], %72 {strides = array<i32>} : memref<128x1152xbf16, #tpu.memory_space<vmem>>, vector<128x128xbf16>,
    %c0_37 = arith.constant 0 : index
    %c1280 = arith.constant 1280 : index
    %74 = vector.load %arg6[%c0_37, %c1280] : memref<128x2304xf32, #tpu.memory_space<vmem>>, vector<128x128xf32>
    %c0_38 = arith.constant 0 : index
    %c1408 = arith.constant 1408 : index
    %75 = vector.load %arg6[%c0_38, %c1408] : memref<128x2304xf32, #tpu.memory_space<vmem>>, vector<128x128xf32>
    %c0_39 = arith.constant 0 : index
    %c5 = arith.constant 5 : index
    %76 = vector.load %arg4[%c0_39, %c5] : memref<128x9xf32, #tpu.memory_space<vmem>>, vector<128x1xf32>
    %77 = arith.negf %74 : vector<128x128xf32>
    %78 = math.exp %77 : vector<128x128xf32>
    %cst_40 = arith.constant 1.000000e+00 : f32
    %79 = vector.broadcast %cst_40 : f32 to vector<128x128xf32>
    %80 = arith.addf %79, %78 : vector<128x128xf32>
    %81 = arith.divf %79, %80 : vector<128x128xf32>
    %82 = arith.mulf %74, %81 : vector<128x128xf32>
    %83 = vector.broadcast %76 : vector<128x1xf32> to vector<128x128xf32>
    %84 = arith.mulf %75, %83 : vector<128x128xf32>
    %85 = arith.mulf %82, %84 : vector<128x128xf32>
    %86 = arith.truncf %85 : vector<128x128xf32> to vector<128x128xbf16>
    %c0_41 = arith.constant 0 : index
    %c640_42 = arith.constant 640 : index
    %87 = vector.load %arg7[%c0_41, %c640_42] : memref<128x1152xbf16, #tpu.memory_space<vmem>>, vector<128x128xbf16>
    tpu.vector_store %arg7[%c0_41, %c640_42], %86 {strides = array<i32>} : memref<128x1152xbf16, #tpu.memory_space<vmem>>, vector<128x128xbf16>,
    %c0_43 = arith.constant 0 : index
    %c1536 = arith.constant 1536 : index
    %88 = vector.load %arg6[%c0_43, %c1536] : memref<128x2304xf32, #tpu.memory_space<vmem>>, vector<128x128xf32>
    %c0_44 = arith.constant 0 : index
    %c1664 = arith.constant 1664 : index
    %89 = vector.load %arg6[%c0_44, %c1664] : memref<128x2304xf32, #tpu.memory_space<vmem>>, vector<128x128xf32>
    %c0_45 = arith.constant 0 : index
    %c6 = arith.constant 6 : index
    %90 = vector.load %arg4[%c0_45, %c6] : memref<128x9xf32, #tpu.memory_space<vmem>>, vector<128x1xf32>
    %91 = arith.negf %88 : vector<128x128xf32>
    %92 = math.exp %91 : vector<128x128xf32>
    %cst_46 = arith.constant 1.000000e+00 : f32
    %93 = vector.broadcast %cst_46 : f32 to vector<128x128xf32>
    %94 = arith.addf %93, %92 : vector<128x128xf32>
    %95 = arith.divf %93, %94 : vector<128x128xf32>
    %96 = arith.mulf %88, %95 : vector<128x128xf32>
    %97 = vector.broadcast %90 : vector<128x1xf32> to vector<128x128xf32>
    %98 = arith.mulf %89, %97 : vector<128x128xf32>
    %99 = arith.mulf %96, %98 : vector<128x128xf32>
    %100 = arith.truncf %99 : vector<128x128xf32> to vector<128x128xbf16>
    %c0_47 = arith.constant 0 : index
    %c768_48 = arith.constant 768 : index
    %101 = vector.load %arg7[%c0_47, %c768_48] : memref<128x1152xbf16, #tpu.memory_space<vmem>>, vector<128x128xbf16>
    tpu.vector_store %arg7[%c0_47, %c768_48], %100 {strides = array<i32>} : memref<128x1152xbf16, #tpu.memory_space<vmem>>, vector<128x128xbf16>,
    %c0_49 = arith.constant 0 : index
    %c1792 = arith.constant 1792 : index
    %102 = vector.load %arg6[%c0_49, %c1792] : memref<128x2304xf32, #tpu.memory_space<vmem>>, vector<128x128xf32>
    %c0_50 = arith.constant 0 : index
    %c1920 = arith.constant 1920 : index
    %103 = vector.load %arg6[%c0_50, %c1920] : memref<128x2304xf32, #tpu.memory_space<vmem>>, vector<128x128xf32>
    %c0_51 = arith.constant 0 : index
    %c7 = arith.constant 7 : index
    %104 = vector.load %arg4[%c0_51, %c7] : memref<128x9xf32, #tpu.memory_space<vmem>>, vector<128x1xf32>
    %105 = arith.negf %102 : vector<128x128xf32>
    %106 = math.exp %105 : vector<128x128xf32>
    %cst_52 = arith.constant 1.000000e+00 : f32
    %107 = vector.broadcast %cst_52 : f32 to vector<128x128xf32>
    %108 = arith.addf %107, %106 : vector<128x128xf32>
    %109 = arith.divf %107, %108 : vector<128x128xf32>
    %110 = arith.mulf %102, %109 : vector<128x128xf32>
    %111 = vector.broadcast %104 : vector<128x1xf32> to vector<128x128xf32>
    %112 = arith.mulf %103, %111 : vector<128x128xf32>
    %113 = arith.mulf %110, %112 : vector<128x128xf32>
    %114 = arith.truncf %113 : vector<128x128xf32> to vector<128x128xbf16>
    %c0_53 = arith.constant 0 : index
    %c896_54 = arith.constant 896 : index
    %115 = vector.load %arg7[%c0_53, %c896_54] : memref<128x1152xbf16, #tpu.memory_space<vmem>>, vector<128x128xbf16>
    tpu.vector_store %arg7[%c0_53, %c896_54], %114 {strides = array<i32>} : memref<128x1152xbf16, #tpu.memory_space<vmem>>, vector<128x128xbf16>,
    %c0_55 = arith.constant 0 : index
    %c2048 = arith.constant 2048 : index
    %116 = vector.load %arg6[%c0_55, %c2048] : memref<128x2304xf32, #tpu.memory_space<vmem>>, vector<128x128xf32>
    %c0_56 = arith.constant 0 : index
    %c2176 = arith.constant 2176 : index
    %117 = vector.load %arg6[%c0_56, %c2176] : memref<128x2304xf32, #tpu.memory_space<vmem>>, vector<128x128xf32>
    %c0_57 = arith.constant 0 : index
    %c8 = arith.constant 8 : index
    %118 = vector.load %arg4[%c0_57, %c8] : memref<128x9xf32, #tpu.memory_space<vmem>>, vector<128x1xf32>
    %119 = arith.negf %116 : vector<128x128xf32>
    %120 = math.exp %119 : vector<128x128xf32>
    %cst_58 = arith.constant 1.000000e+00 : f32
    %121 = vector.broadcast %cst_58 : f32 to vector<128x128xf32>
    %122 = arith.addf %121, %120 : vector<128x128xf32>
    %123 = arith.divf %121, %122 : vector<128x128xf32>
    %124 = arith.mulf %116, %123 : vector<128x128xf32>
    %125 = vector.broadcast %118 : vector<128x1xf32> to vector<128x128xf32>
    %126 = arith.mulf %117, %125 : vector<128x128xf32>
    %127 = arith.mulf %124, %126 : vector<128x128xf32>
    %128 = arith.truncf %127 : vector<128x128xf32> to vector<128x128xbf16>
    %c0_59 = arith.constant 0 : index
    %c1024_60 = arith.constant 1024 : index
    %129 = vector.load %arg7[%c0_59, %c1024_60] : memref<128x1152xbf16, #tpu.memory_space<vmem>>, vector<128x128xbf16>
    tpu.vector_store %arg7[%c0_59, %c1024_60], %128 {strides = array<i32>} : memref<128x1152xbf16, #tpu.memory_space<vmem>>, vector<128x128xbf16>,
    %c0_61 = arith.constant 0 : index
    %c0_62 = arith.constant 0 : index
    %130 = vector.load %arg7[%c0_61, %c0_62] : memref<128x1152xbf16, #tpu.memory_space<vmem>>, vector<128x1152xbf16>
    %c0_63 = arith.constant 0 : index
    %c0_64 = arith.constant 0 : index
    %131 = vector.load %arg3[%c0_63, %c0_64] : memref<1152x128xbf16, #tpu.memory_space<vmem>>, vector<1152x128xbf16>
    %cst_65 = arith.constant dense<0.000000e+00> : vector<128x128xf32>
    %132 = tpu.matmul %130, %131, %cst_65 {dimension_numbers = #tpu.dot_dimension_numbers<[1], [0], [0], [1], [0, 0, 1, 1], [], []>} : vector<128x1152xbf16>, vector<1152x128xbf16>, vector<128x128xf32> -> vector<128x128xf32>
    %c0_66 = arith.constant 0 : index
    %c0_67 = arith.constant 0 : index
    %133 = vector.load %arg5[%c0_66, %c0_67] : memref<128x128xf32, #tpu.memory_space<vmem>>, vector<128x128xf32>
    tpu.vector_store %arg5[%c0_66, %c0_67], %132 {strides = array<i32>} : memref<128x128xf32, #tpu.memory_space<vmem>>, vector<128x128xf32>,
    return
  }
  func.func @transform_0(%arg0: i32) -> (i32, i32) {
    %c0_i32 = arith.constant 0 : i32
    %c0_i32_0 = arith.constant 0 : i32
    return %arg0, %c0_i32 : i32, i32
  }
  func.func @transform_1(%arg0: i32) -> (i32, i32) {
    %c0_i32 = arith.constant 0 : i32
    %c0_i32_0 = arith.constant 0 : i32
    %c0_i32_1 = arith.constant 0 : i32
    return %c0_i32, %c0_i32_0 : i32, i32
  }
  func.func @transform_2(%arg0: i32) -> (i32, i32) {
    %c0_i32 = arith.constant 0 : i32
    %c0_i32_0 = arith.constant 0 : i32
    %c0_i32_1 = arith.constant 0 : i32
    return %c0_i32, %c0_i32_0 : i32, i32
  }
  func.func @transform_3(%arg0: i32) -> (i32, i32) {
    %c0_i32 = arith.constant 0 : i32
    %c0_i32_0 = arith.constant 0 : i32
    return %arg0, %c0_i32 : i32, i32
  }
  func.func @transform_4(%arg0: i32) -> (i32, i32) {
    %c0_i32 = arith.constant 0 : i32
    %c0_i32_0 = arith.constant 0 : i32
    return %arg0, %c0_i32 : i32, i32
  }
}

</mosaic_0001>

<llo_original>
// kernel: tpu_custom_call.1
$region0: #{tpu_custom_call.1}
  #allocation0 [shape = 'u32[]', space=smem, size = 0x4, offset = 0x4, fixed_abs, tag = 'smem constant byte address 0x4 - core index']
  #allocation1 [shape = 'u32[72,128]{1,0:T(1,128)}', space=vmem, size = 0x9000, scoped, tag = 'internal scratch']
  #allocation2 [shape = 'f32[128,2304]{1,0:T(8,128)}', space=vmem, size = 0x120000, scoped, tag = 'scratch operand']
  #allocation3 [shape = 'bf16[128,1152]{1,0:T(8,128)(2,1)}', space=vmem, size = 0x48000, scoped, tag = 'scratch operand']
  %s0 = inlined_call_operand.vmem [shape: bf16[256,128], index: 0, kind: input, shape index: {}]
  %s1 = inlined_call_operand.hbm [shape: bf16[128,2304], index: 1, kind: input, shape index: {}]
  %s2 = inlined_call_operand.hbm [shape: bf16[1152,128], index: 2, kind: input, shape index: {}]
  %s3 = inlined_call_operand.vmem [shape: f32[256,9], index: 3, kind: input, shape index: {}]
  %s4 = inlined_call_operand.hbm [shape: f32[256,128], index: 4, kind: output, shape index: {}]
  %s5 = sld [smem:[#allocation0]]
  $region57: #{tpu_custom_call.1} parent=0
    _
  %s7 = ssub.s32 1, %s5
  %s8 = scalar_select 0, %s7, %s5
  $region1: #{tpu_custom_call.1} parent=0
    #allocation4 [shape = 'u8[589824]{0}', space=vmem, size = 0x90000, scoped, tag = 'input window, operand 1, single buffered']
    #allocation5 [shape = 's32[2]{0}', space=sflag, size = 0x8, scoped, tag = 'scoped memory for tpu_custom_call.1']
    #allocation6 [shape = 's32[2]{0}', space=sflag, size = 0x8, scoped, tag = 'scoped memory for tpu_custom_call.1']
    #allocation7 [shape = 'u8[294912]{0}', space=vmem, size = 0x48000, scoped, tag = 'input window, operand 2, single buffered']
    #allocation8 [shape = 's32[1]{0}', space=sflag, size = 0x4, scoped, tag = 'scoped memory for tpu_custom_call.1']
    #allocation9 [shape = 'u8[131072]{0}', space=vmem, size = 0x20000, scoped, tag = 'output window, operand 0']
    %9 = vsyncpa [#allocation5], 0
    %10 = vsyncpa [#allocation8], 0
    %11 = vsyncpa [#allocation6], 0
    %s12 = scalar_lea.sflag [#allocation6], 1
    %13 = vsyncpa %s12, 0
    loop: start=0, step=1, limit=4
    $region2: #{tpu_custom_call.1} parent=1 // loop_pre_header
      _
    $region3: #{tpu_custom_call.1} parent=1 // loop_header
      %s15 = sphi 0, %s19
      %p16 = scmp.ge.s32.totalorder %s15, 4
      %s25 = sphi 0, %s27
      %s28 = sphi 0, %s25
      %s29 = sphi 0, %s28
      %s45 = sphi 0, %s29
      %s49 = sphi 0, %s49
      %s51 = sphi 0, %s49
      %s52 = sphi 0, %s51
      %s66 = sphi 0, %s52
      %s70 = sphi 0, %s70
      %s72 = sphi 0, %s70
      %s73 = sphi 0, %s72
      %s87 = sphi 0, %s73
      %s93 = sphi 0, %s95
      %s96 = sphi 0, %s93
      %s97 = sphi 0, %s96
      %s113 = sphi 0, %s97
      %s119 = sphi 0, %s121
      %s122 = sphi 0, %s119
      %s123 = sphi 0, %s122
      %s139 = sphi 0, %s123
    $region4: #{tpu_custom_call.1} parent=1 // loop_header_branch
      %18 = sbr.rel (%p16) target = $region8
    $region5: #{tpu_custom_call.1} parent=1 // loop_body
      %s20 = ssub.s32 %s15, 1
      %s21 = ssub.s32 %s15, 2
      %s22 = sadd.s32 %s15, 1
      %s23 = ssub.s32 %s15, %s22
      %p24 = scmp.eq.s32.totalorder %s23, 0
      %s26 = sadd.s32 %s25, 1
      %s27 = scalar_select %p24, %s25, %s26
      %p30 = pneg %p24
      %p31 = scmp.eq.s32.totalorder %s15, 1
      %p32 = por %p30, %p31
      %p33 = scmp.ne.s32.totalorder %s25, %s28
      %p34 = scmp.eq.s32.totalorder %s15, 0
      %p35 = por %p33, %p34
      %p36 = scmp.ne.s32.totalorder %s25, %s28
      %p37 = scmp.eq.s32.totalorder %s20, 1
      %p38 = por %p36, %p37
      %p39 = scmp.ne.s32.totalorder %s28, %s29
      %p40 = scmp.eq.s32.totalorder %s20, 0
      %p41 = por %p39, %p40
      %p42 = scmp.ne.s32.totalorder %s28, %s29
      %p43 = scmp.eq.s32.totalorder %s21, 1
      %p44 = por %p42, %p43
      %p46 = scmp.ne.s32.totalorder %s29, %s45
      %p47 = scmp.eq.s32.totalorder %s21, 0
      %p48 = por %p46, %p47
      %s50 = sadd.s32 %s49, 1
      %p53 = scmp.eq.s32.totalorder %s15, 1
      %p54 = scmp.ne.s32.totalorder %s49, %s51
      %p55 = scmp.eq.s32.totalorder %s15, 0
      %p56 = por %p54, %p55
      %p57 = scmp.ne.s32.totalorder %s49, %s51
      %p58 = scmp.eq.s32.totalorder %s20, 1
      %p59 = por %p57, %p58
      %p60 = scmp.ne.s32.totalorder %s51, %s52
      %p61 = scmp.eq.s32.totalorder %s20, 0
      %p62 = por %p60, %p61
      %p63 = scmp.ne.s32.totalorder %s51, %s52
      %p64 = scmp.eq.s32.totalorder %s21, 1
      %p65 = por %p63, %p64
      %p67 = scmp.ne.s32.totalorder %s52, %s66
      %p68 = scmp.eq.s32.totalorder %s21, 0
      %p69 = por %p67, %p68
      %s71 = sadd.s32 %s70, 1
      %p74 = scmp.eq.s32.totalorder %s15, 1
      %p75 = scmp.ne.s32.totalorder %s70, %s72
      %p76 = scmp.eq.s32.totalorder %s15, 0
      %p77 = por %p75, %p76
      %p78 = scmp.ne.s32.totalorder %s70, %s72
      %p79 = scmp.eq.s32.totalorder %s20, 1
      %p80 = por %p78, %p79
      %p81 = scmp.ne.s32.totalorder %s72, %s73
      %p82 = scmp.eq.s32.totalorder %s20, 0
      %p83 = por %p81, %p82
      %p84 = scmp.ne.s32.totalorder %s72, %s73
      %p85 = scmp.eq.s32.totalorder %s21, 1
      %p86 = por %p84, %p85
      %p88 = scmp.ne.s32.totalorder %s73, %s87
      %p89 = scmp.eq.s32.totalorder %s21, 0
      %p90 = por %p88, %p89
      %s91 = ssub.s32 %s15, %s22
      %p92 = scmp.eq.s32.totalorder %s91, 0
      %s94 = sadd.s32 %s93, 1
      %s95 = scalar_select %p92, %s93, %s94
      %p98 = pneg %p92
      %p99 = scmp.eq.s32.totalorder %s15, 1
      %p100 = por %p98, %p99
      %p101 = scmp.ne.s32.totalorder %s93, %s96
      %p102 = scmp.eq.s32.totalorder %s15, 0
      %p103 = por %p101, %p102
      %p104 = scmp.ne.s32.totalorder %s93, %s96
      %p105 = scmp.eq.s32.totalorder %s20, 1
      %p106 = por %p104, %p105
      %p107 = scmp.ne.s32.totalorder %s96, %s97
      %p108 = scmp.eq.s32.totalorder %s20, 0
      %p109 = por %p107, %p108
      %p110 = scmp.ne.s32.totalorder %s96, %s97
      %p111 = scmp.eq.s32.totalorder %s21, 1
      %p112 = por %p110, %p111
      %p114 = scmp.ne.s32.totalorder %s97, %s113
      %p115 = scmp.eq.s32.totalorder %s21, 0
      %p116 = por %p114, %p115
      %s117 = ssub.s32 %s15, %s22
      %p118 = scmp.eq.s32.totalorder %s117, 0
      %s120 = sadd.s32 %s119, 1
      %s121 = scalar_select %p118, %s119, %s120
      %p124 = pneg %p118
      %p125 = scmp.eq.s32.totalorder %s15, 1
      %p126 = por %p124, %p125
      %p127 = scmp.ne.s32.totalorder %s119, %s122
      %p128 = scmp.eq.s32.totalorder %s15, 0
      %p129 = por %p127, %p128
      %p130 = scmp.ne.s32.totalorder %s119, %s122
      %p131 = scmp.eq.s32.totalorder %s20, 1
      %p132 = por %p130, %p131
      %p133 = scmp.ne.s32.totalorder %s122, %s123
      %p134 = scmp.eq.s32.totalorder %s20, 0
      %p135 = por %p133, %p134
      %p136 = scmp.ne.s32.totalorder %s122, %s123
      %p137 = scmp.eq.s32.totalorder %s21, 1
      %p138 = por %p136, %p137
      %p140 = scmp.ne.s32.totalorder %s123, %s139
      %p141 = scmp.eq.s32.totalorder %s21, 0
      %p142 = por %p140, %p141
      %p143 = scmp.le.s32.totalorder 1, %s15
      %p144 = scmp.lt.s32.totalorder %s15, 3
      %p145 = pnand %p143, %p144
      %p146 = pneg %p145
      // Predicated region
      $region9: #{tpu_custom_call.1} parent=5 // pred_check
        _
      $region10: #{tpu_custom_call.1} parent=5 // pred_check_branch
        %148 = sbr.rel (%p145) target = $region12
      $region11: #{tpu_custom_call.1} parent=5 // pred_region
        %s149 = ssub.s32 %s15, 1
        // Predicated region
        $region13: #{tpu_custom_call.1} parent=11 // pred_check
          %p150 = pneg %p62
        $region14: #{tpu_custom_call.1} parent=11 // pred_check_branch
          %152 = sbr.rel (%p150) target = $region16
        $region15: #{tpu_custom_call.1} parent=11 // pred_region
          %154 = vsyncadd [#allocation5], 0
          %s155 = sshll.u32 %s1, 4
          %s156 = int_to_ptr.hbm [resolvable:$true] %s155
          %s157 = sshll.u32 [#allocation4], 4
          %s158 = int_to_ptr.vmem [resolvable:$true] %s157
          %163 = dma.hbm_to_vmem [thread:$0]  %s156, 18432, %s158, [#allocation5], 1152, 1152, 72
        $region16: #{tpu_custom_call.1} parent=11 // pred_fallthru
          _
        // Predicated region
        $region17: #{tpu_custom_call.1} parent=11 // pred_check
          %p164 = pneg %p83
        $region18: #{tpu_custom_call.1} parent=11 // pred_check_branch
          %166 = sbr.rel (%p164) target = $region20
        $region19: #{tpu_custom_call.1} parent=11 // pred_region
          %168 = vsyncadd [#allocation8], 0
          %s169 = sshll.u32 %s2, 4
          %s170 = int_to_ptr.hbm [resolvable:$true] %s169
          %s171 = sshll.u32 [#allocation7], 4
          %s172 = int_to_ptr.vmem [resolvable:$true] %s171
          %177 = dma.hbm_to_vmem [thread:$0]  %s170, 9216, %s172, [#allocation8], 64, 64, 4
        $region20: #{tpu_custom_call.1} parent=11 // pred_fallthru
          _
      $region12: #{tpu_custom_call.1} parent=5 // pred_fallthru
        _
      %p178 = scmp.lt.s32.totalorder %s15, 2
      // Predicated region
      $region21: #{tpu_custom_call.1} parent=5 // pred_check
        %p179 = pneg %p178
      $region22: #{tpu_custom_call.1} parent=5 // pred_check_branch
        %181 = sbr.rel (%p179) target = $region24
      $region23: #{tpu_custom_call.1} parent=5 // pred_region
        // Predicated region
        $region25: #{tpu_custom_call.1} parent=23 // pred_check
          %p182 = pneg %p35
        $region26: #{tpu_custom_call.1} parent=23 // pred_check_branch
          %184 = sbr.rel (%p182) target = $region28
        $region27: #{tpu_custom_call.1} parent=23 // pred_region
          %s185 = smul.u32 16, %s15
          %p186 = scmp.lt.s32.totalorder %s185, 31
          %s187 = scalar_select %p186, %s185, 31
          %s188 = smul.addr %s187, 4
          %s189 = scalar_lea.vmem %s0, %s188
          %s190 = smul.u32 16, %s15
        $region28: #{tpu_custom_call.1} parent=23 // pred_fallthru
          _
        // Predicated region
        $region29: #{tpu_custom_call.1} parent=23 // pred_check
          %p191 = pneg %p103
        $region30: #{tpu_custom_call.1} parent=23 // pred_check_branch
          %193 = sbr.rel (%p191) target = $region32
        $region31: #{tpu_custom_call.1} parent=23 // pred_region
          %s194 = smul.u32 16, %s15
          %p195 = scmp.lt.s32.totalorder %s194, 31
          %s196 = scalar_select %p195, %s194, 31
          %s197 = smul.addr %s196, 8
          %s198 = scalar_lea.vmem %s3, %s197
          %s199 = smul.u32 16, %s15
        $region32: #{tpu_custom_call.1} parent=23 // pred_fallthru
          _
      $region24: #{tpu_custom_call.1} parent=5 // pred_fallthru
        _
      %p200 = scmp.le.s32.totalorder 1, %s15
      %p201 = scmp.lt.s32.totalorder %s15, 3
      %p202 = pnand %p200, %p201
      %p203 = pneg %p202
      // Predicated region
      $region33: #{tpu_custom_call.1} parent=5 // pred_check
        _
      $region34: #{tpu_custom_call.1} parent=5 // pred_check_branch
        %205 = sbr.rel (%p202) target = $region36
      $region35: #{tpu_custom_call.1} parent=5 // pred_region
        %s206 = ssub.s32 %s15, 1
        // Predicated region
        $region37: #{tpu_custom_call.1} parent=35 // pred_check
          %p207 = pneg %p62
        $region38: #{tpu_custom_call.1} parent=35 // pred_check_branch
          %209 = sbr.rel (%p207) target = $region40
        $region39: #{tpu_custom_call.1} parent=35 // pred_region
          %211 = dma.done [#allocation5], 18432
        $region40: #{tpu_custom_call.1} parent=35 // pred_fallthru
          _
        // Predicated region
        $region41: #{tpu_custom_call.1} parent=35 // pred_check
          %p212 = pneg %p83
        $region42: #{tpu_custom_call.1} parent=35 // pred_check_branch
          %214 = sbr.rel (%p212) target = $region44
        $region43: #{tpu_custom_call.1} parent=35 // pred_region
          %216 = dma.done [#allocation8], 9216
        $region44: #{tpu_custom_call.1} parent=35 // pred_fallthru
          _
        %s217 = smul.u32 16, %s20
        %p218 = scmp.lt.s32.totalorder %s217, 31
        %s219 = scalar_select %p218, %s217, 31
        %s220 = smul.addr %s219, 4
        %s221 = scalar_lea.vmem %s0, %s220
        %p222 = pneg %p41
        %p223 = pneg %p38
        %p224 = pneg %p62
        %p225 = pneg %p59
        %p226 = pneg %p83
        %p227 = pneg %p80
        %s228 = smul.u32 16, %s20
        %p229 = scmp.lt.s32.totalorder %s228, 31
        %s230 = scalar_select %p229, %s228, 31
        %s231 = smul.addr %s230, 8
        %s232 = scalar_lea.vmem %s3, %s231
        %p233 = pneg %p109
        %p234 = pneg %p106
        %p235 = pneg %p135
        %p236 = pneg %p132
        %s237 = sand.u32 %s122, 1
        %s238 = scalar_lea.sflag [#allocation6], %s237
        %s239 = sand.u32 %s122, 1
        %s240 = smul.addr %s239, 128
        %s241 = scalar_lea.vmem [#allocation9], %s240
        %s242 = smul.u32 16, %s20
        %p243 = scmp.lt.s32.totalorder %s242, 31
        %s244 = scalar_select %p243, %s242, 31
        %s245 = smul.addr %s244, 4
        %s246 = scalar_lea.vmem %s0, %s245
        %s247 = smul.u32 16, %s20
        %s248 = smul.u32 16, %s20
        %p249 = scmp.lt.s32.totalorder %s248, 31
        %s250 = scalar_select %p249, %s248, 31
        %s251 = smul.addr %s250, 8
        %s252 = scalar_lea.vmem %s3, %s251
        %s253 = smul.u32 16, %s20
        %s254 = smul.u32 16, %s20
        %v255 = vld [vmem:[%s246] sm:$0xf]
        %v256 = vld [vmem:[%s246 + $0x4] sm:$0xf]
        %v257 = vld [vmem:[%s246 + $0x8] sm:$0xf]
        %v258 = vld [vmem:[%s246 + $0xc] sm:$0xf]
        %v259 = vld [vmem:[%s246 + $0x10] sm:$0xf]
        %v260 = vld [vmem:[%s246 + $0x14] sm:$0xf]
        %v261 = vld [vmem:[%s246 + $0x18] sm:$0xf]
        %v262 = vld [vmem:[%s246 + $0x1c] sm:$0xf]
        %v263 = vld [vmem:[%s246 + $0x20] sm:$0xf]
        %v264 = vld [vmem:[%s246 + $0x24] sm:$0xf]
        %v265 = vld [vmem:[%s246 + $0x28] sm:$0xf]
        %v266 = vld [vmem:[%s246 + $0x2c] sm:$0xf]
        %v267 = vld [vmem:[%s246 + $0x30] sm:$0xf]
        %v268 = vld [vmem:[%s246 + $0x34] sm:$0xf]
        %v269 = vld [vmem:[%s246 + $0x38] sm:$0xf]
        %v270 = vld [vmem:[%s246 + $0x3c] sm:$0xf]
        %v271 = vld [vmem:[#allocation4] sm:$0xff]
        %v272 = vld [vmem:[#allocation4 + $0x8] sm:$0xff]
        %v273 = vld [vmem:[#allocation4 + $0x10] sm:$0xff]
        %v274 = vld [vmem:[#allocation4 + $0x18] sm:$0xff]
        %v275 = vld [vmem:[#allocation4 + $0x20] sm:$0xff]
        %v276 = vld [vmem:[#allocation4 + $0x28] sm:$0xff]
        %v277 = vld [vmem:[#allocation4 + $0x30] sm:$0xff]
        %v278 = vld [vmem:[#allocation4 + $0x38] sm:$0xff]
        %v279 = vld [vmem:[#allocation4 + $0x40] sm:$0xff]
        %v280 = vld [vmem:[#allocation4 + $0x48] sm:$0xff]
        %v281 = vld [vmem:[#allocation4 + $0x50] sm:$0xff]
        %v282 = vld [vmem:[#allocation4 + $0x58] sm:$0xff]
        %v283 = vld [vmem:[#allocation4 + $0x60] sm:$0xff]
        %v284 = vld [vmem:[#allocation4 + $0x68] sm:$0xff]
        %v285 = vld [vmem:[#allocation4 + $0x70] sm:$0xff]
        %v286 = vld [vmem:[#allocation4 + $0x78] sm:$0xff]
        %v287 = vld [vmem:[#allocation4 + $0x80] sm:$0xff]
        %v288 = vld [vmem:[#allocation4 + $0x88] sm:$0xff]
        %v289 = vld [vmem:[#allocation4 + $0x90] sm:$0xff]
        %v290 = vld [vmem:[#allocation4 + $0x98] sm:$0xff]
        %v291 = vld [vmem:[#allocation4 + $0xa0] sm:$0xff]
        %v292 = vld [vmem:[#allocation4 + $0xa8] sm:$0xff]
        %v293 = vld [vmem:[#allocation4 + $0xb0] sm:$0xff]
        %v294 = vld [vmem:[#allocation4 + $0xb8] sm:$0xff]
        %v295 = vld [vmem:[#allocation4 + $0xc0] sm:$0xff]
        %v296 = vld [vmem:[#allocation4 + $0xc8] sm:$0xff]
        %v297 = vld [vmem:[#allocation4 + $0xd0] sm:$0xff]
        %v298 = vld [vmem:[#allocation4 + $0xd8] sm:$0xff]
        %v299 = vld [vmem:[#allocation4 + $0xe0] sm:$0xff]
        %v300 = vld [vmem:[#allocation4 + $0xe8] sm:$0xff]
        %v301 = vld [vmem:[#allocation4 + $0xf0] sm:$0xff]
        %v302 = vld [vmem:[#allocation4 + $0xf8] sm:$0xff]
        %v303 = vld [vmem:[#allocation4 + $0x100] sm:$0xff]
        %v304 = vld [vmem:[#allocation4 + $0x108] sm:$0xff]
        %v305 = vld [vmem:[#allocation4 + $0x110] sm:$0xff]
        %v306 = vld [vmem:[#allocation4 + $0x118] sm:$0xff]
        %v307 = vld [vmem:[#allocation4 + $0x120] sm:$0xff]
        %v308 = vld [vmem:[#allocation4 + $0x128] sm:$0xff]
        %v309 = vld [vmem:[#allocation4 + $0x130] sm:$0xff]
        %v310 = vld [vmem:[#allocation4 + $0x138] sm:$0xff]
        %v311 = vld [vmem:[#allocation4 + $0x140] sm:$0xff]
        %v312 = vld [vmem:[#allocation4 + $0x148] sm:$0xff]
        %v313 = vld [vmem:[#allocation4 + $0x150] sm:$0xff]
        %v314 = vld [vmem:[#allocation4 + $0x158] sm:$0xff]
        %v315 = vld [vmem:[#allocation4 + $0x160] sm:$0xff]
        %v316 = vld [vmem:[#allocation4 + $0x168] sm:$0xff]
        %v317 = vld [vmem:[#allocation4 + $0x170] sm:$0xff]
        %v318 = vld [vmem:[#allocation4 + $0x178] sm:$0xff]
        %v319 = vld [vmem:[#allocation4 + $0x180] sm:$0xff]
        %v320 = vld [vmem:[#allocation4 + $0x188] sm:$0xff]
        %v321 = vld [vmem:[#allocation4 + $0x190] sm:$0xff]
        %v322 = vld [vmem:[#allocation4 + $0x198] sm:$0xff]
        %v323 = vld [vmem:[#allocation4 + $0x1a0] sm:$0xff]
        %v324 = vld [vmem:[#allocation4 + $0x1a8] sm:$0xff]
        %v325 = vld [vmem:[#allocation4 + $0x1b0] sm:$0xff]
        %v326 = vld [vmem:[#allocation4 + $0x1b8] sm:$0xff]
        %v327 = vld [vmem:[#allocation4 + $0x1c0] sm:$0xff]
        %v328 = vld [vmem:[#allocation4 + $0x1c8] sm:$0xff]
        %v329 = vld [vmem:[#allocation4 + $0x1d0] sm:$0xff]
        %v330 = vld [vmem:[#allocation4 + $0x1d8] sm:$0xff]
        %v331 = vld [vmem:[#allocation4 + $0x1e0] sm:$0xff]
        %v332 = vld [vmem:[#allocation4 + $0x1e8] sm:$0xff]
        %v333 = vld [vmem:[#allocation4 + $0x1f0] sm:$0xff]
        %v334 = vld [vmem:[#allocation4 + $0x1f8] sm:$0xff]
        %v335 = vld [vmem:[#allocation4 + $0x200] sm:$0xff]
        %v336 = vld [vmem:[#allocation4 + $0x208] sm:$0xff]
        %v337 = vld [vmem:[#allocation4 + $0x210] sm:$0xff]
        %v338 = vld [vmem:[#allocation4 + $0x218] sm:$0xff]
        %v339 = vld [vmem:[#allocation4 + $0x220] sm:$0xff]
        %v340 = vld [vmem:[#allocation4 + $0x228] sm:$0xff]
        %v341 = vld [vmem:[#allocation4 + $0x230] sm:$0xff]
        %v342 = vld [vmem:[#allocation4 + $0x238] sm:$0xff]
        %v343 = vld [vmem:[#allocation4 + $0x240] sm:$0xff]
        %v344 = vld [vmem:[#allocation4 + $0x248] sm:$0xff]
        %v345 = vld [vmem:[#allocation4 + $0x250] sm:$0xff]
        %v346 = vld [vmem:[#allocation4 + $0x258] sm:$0xff]
        %v347 = vld [vmem:[#allocation4 + $0x260] sm:$0xff]
        %v348 = vld [vmem:[#allocation4 + $0x268] sm:$0xff]
        %v349 = vld [vmem:[#allocation4 + $0x270] sm:$0xff]
        %v350 = vld [vmem:[#allocation4 + $0x278] sm:$0xff]
        %v351 = vld [vmem:[#allocation4 + $0x280] sm:$0xff]
        %v352 = vld [vmem:[#allocation4 + $0x288] sm:$0xff]
        %v353 = vld [vmem:[#allocation4 + $0x290] sm:$0xff]
        %v354 = vld [vmem:[#allocation4 + $0x298] sm:$0xff]
        %v355 = vld [vmem:[#allocation4 + $0x2a0] sm:$0xff]
        %v356 = vld [vmem:[#allocation4 + $0x2a8] sm:$0xff]
        %v357 = vld [vmem:[#allocation4 + $0x2b0] sm:$0xff]
        %v358 = vld [vmem:[#allocation4 + $0x2b8] sm:$0xff]
        %v359 = vld [vmem:[#allocation4 + $0x2c0] sm:$0xff]
        %v360 = vld [vmem:[#allocation4 + $0x2c8] sm:$0xff]
        %v361 = vld [vmem:[#allocation4 + $0x2d0] sm:$0xff]
        %v362 = vld [vmem:[#allocation4 + $0x2d8] sm:$0xff]
        %v363 = vld [vmem:[#allocation4 + $0x2e0] sm:$0xff]
        %v364 = vld [vmem:[#allocation4 + $0x2e8] sm:$0xff]
        %v365 = vld [vmem:[#allocation4 + $0x2f0] sm:$0xff]
        %v366 = vld [vmem:[#allocation4 + $0x2f8] sm:$0xff]
        %v367 = vld [vmem:[#allocation4 + $0x300] sm:$0xff]
        %v368 = vld [vmem:[#allocation4 + $0x308] sm:$0xff]
        %v369 = vld [vmem:[#allocation4 + $0x310] sm:$0xff]
        %v370 = vld [vmem:[#allocation4 + $0x318] sm:$0xff]
        %v371 = vld [vmem:[#allocation4 + $0x320] sm:$0xff]
        %v372 = vld [vmem:[#allocation4 + $0x328] sm:$0xff]
        %v373 = vld [vmem:[#allocation4 + $0x330] sm:$0xff]
        %v374 = vld [vmem:[#allocation4 + $0x338] sm:$0xff]
        %v375 = vld [vmem:[#allocation4 + $0x340] sm:$0xff]
        %v376 = vld [vmem:[#allocation4 + $0x348] sm:$0xff]
        %v377 = vld [vmem:[#allocation4 + $0x350] sm:$0xff]
        %v378 = vld [vmem:[#allocation4 + $0x358] sm:$0xff]
        %v379 = vld [vmem:[#allocation4 + $0x360] sm:$0xff]
        %v380 = vld [vmem:[#allocation4 + $0x368] sm:$0xff]
        %v381 = vld [vmem:[#allocation4 + $0x370] sm:$0xff]
        %v382 = vld [vmem:[#allocation4 + $0x378] sm:$0xff]
        %v383 = vld [vmem:[#allocation4 + $0x380] sm:$0xff]
        %v384 = vld [vmem:[#allocation4 + $0x388] sm:$0xff]
        %v385 = vld [vmem:[#allocation4 + $0x390] sm:$0xff]
        %v386 = vld [vmem:[#allocation4 + $0x398] sm:$0xff]
        %v387 = vld [vmem:[#allocation4 + $0x3a0] sm:$0xff]
        %v388 = vld [vmem:[#allocation4 + $0x3a8] sm:$0xff]
        %v389 = vld [vmem:[#allocation4 + $0x3b0] sm:$0xff]
        %v390 = vld [vmem:[#allocation4 + $0x3b8] sm:$0xff]
        %v391 = vld [vmem:[#allocation4 + $0x3c0] sm:$0xff]
        %v392 = vld [vmem:[#allocation4 + $0x3c8] sm:$0xff]
        %v393 = vld [vmem:[#allocation4 + $0x3d0] sm:$0xff]
        %v394 = vld [vmem:[#allocation4 + $0x3d8] sm:$0xff]
        %v395 = vld [vmem:[#allocation4 + $0x3e0] sm:$0xff]
        %v396 = vld [vmem:[#allocation4 + $0x3e8] sm:$0xff]
        %v397 = vld [vmem:[#allocation4 + $0x3f0] sm:$0xff]
        %v398 = vld [vmem:[#allocation4 + $0x3f8] sm:$0xff]
        %v399 = vld [vmem:[#allocation4 + $0x400] sm:$0xff]
        %v400 = vld [vmem:[#allocation4 + $0x408] sm:$0xff]
        %v401 = vld [vmem:[#allocation4 + $0x410] sm:$0xff]
        %v402 = vld [vmem:[#allocation4 + $0x418] sm:$0xff]
        %v403 = vld [vmem:[#allocation4 + $0x420] sm:$0xff]
        %v404 = vld [vmem:[#allocation4 + $0x428] sm:$0xff]
        %v405 = vld [vmem:[#allocation4 + $0x430] sm:$0xff]
        %v406 = vld [vmem:[#allocation4 + $0x438] sm:$0xff]
        %v407 = vld [vmem:[#allocation4 + $0x440] sm:$0xff]
        %v408 = vld [vmem:[#allocation4 + $0x448] sm:$0xff]
        %v409 = vld [vmem:[#allocation4 + $0x450] sm:$0xff]
        %v410 = vld [vmem:[#allocation4 + $0x458] sm:$0xff]
        %v411 = vld [vmem:[#allocation4 + $0x460] sm:$0xff]
        %v412 = vld [vmem:[#allocation4 + $0x468] sm:$0xff]
        %v413 = vld [vmem:[#allocation4 + $0x470] sm:$0xff]
        %v414 = vld [vmem:[#allocation4 + $0x478] sm:$0xff]
        %v431 = vunpack.c.l.b16 %v255
        %v432 = vunpack.c.l.b16 %v256
        %v433 = vunpack.c.l.b16 %v257
        %v434 = vunpack.c.l.b16 %v258
        %v435 = vunpack.c.l.b16 %v259
        %v436 = vunpack.c.l.b16 %v260
        %v437 = vunpack.c.l.b16 %v261
        %v438 = vunpack.c.l.b16 %v262
        %v439 = vunpack.c.l.b16 %v263
        %v440 = vunpack.c.l.b16 %v264
        %v441 = vunpack.c.l.b16 %v265
        %v442 = vunpack.c.l.b16 %v266
        %v443 = vunpack.c.l.b16 %v267
        %v444 = vunpack.c.l.b16 %v268
        %v445 = vunpack.c.l.b16 %v269
        %v446 = vunpack.c.l.b16 %v270
        %v447 = vpack.c.b16 %v432, %v431
        %v448 = vpack.c.b16 %v434, %v433
        %v449 = vpack.c.b16 %v436, %v435
        %v450 = vpack.c.b16 %v438, %v437
        %v451 = vpack.c.b16 %v440, %v439
        %v452 = vpack.c.b16 %v442, %v441
        %v453 = vpack.c.b16 %v444, %v443
        %v454 = vpack.c.b16 %v446, %v445
        %v607 = vunpack.c.l.b16 %v271
        %v608 = vunpack.c.h.b16 %v271
        %v609 = vunpack.c.l.b16 %v272
        %v610 = vunpack.c.h.b16 %v272
        %v611 = vunpack.c.l.b16 %v273
        %v612 = vunpack.c.h.b16 %v273
        %v613 = vunpack.c.l.b16 %v274
        %v614 = vunpack.c.h.b16 %v274
        %v615 = vunpack.c.l.b16 %v275
        %v616 = vunpack.c.h.b16 %v275
        %v617 = vunpack.c.l.b16 %v276
        %v618 = vunpack.c.h.b16 %v276
        %v619 = vunpack.c.l.b16 %v277
        %v620 = vunpack.c.h.b16 %v277
        %v621 = vunpack.c.l.b16 %v278
        %v622 = vunpack.c.h.b16 %v278
        %v623 = vunpack.c.l.b16 %v279
        %v624 = vunpack.c.h.b16 %v279
        %v625 = vunpack.c.l.b16 %v280
        %v626 = vunpack.c.h.b16 %v280
        %v627 = vunpack.c.l.b16 %v281
        %v628 = vunpack.c.h.b16 %v281
        %v629 = vunpack.c.l.b16 %v282
        %v630 = vunpack.c.h.b16 %v282
        %v631 = vunpack.c.l.b16 %v283
        %v632 = vunpack.c.h.b16 %v283
        %v633 = vunpack.c.l.b16 %v284
        %v634 = vunpack.c.h.b16 %v284
        %v635 = vunpack.c.l.b16 %v285
        %v636 = vunpack.c.h.b16 %v285
        %v637 = vunpack.c.l.b16 %v286
        %v638 = vunpack.c.h.b16 %v286
        %v639 = vunpack.c.l.b16 %v287
        %v640 = vunpack.c.h.b16 %v287
        %v641 = vunpack.c.l.b16 %v288
        %v642 = vunpack.c.h.b16 %v288
        %v643 = vunpack.c.l.b16 %v289
        %v644 = vunpack.c.h.b16 %v289
        %v645 = vunpack.c.l.b16 %v290
        %v646 = vunpack.c.h.b16 %v290
        %v647 = vunpack.c.l.b16 %v291
        %v648 = vunpack.c.h.b16 %v291
        %v649 = vunpack.c.l.b16 %v292
        %v650 = vunpack.c.h.b16 %v292
        %v651 = vunpack.c.l.b16 %v293
        %v652 = vunpack.c.h.b16 %v293
        %v653 = vunpack.c.l.b16 %v294
        %v654 = vunpack.c.h.b16 %v294
        %v655 = vunpack.c.l.b16 %v295
        %v656 = vunpack.c.h.b16 %v295
        %v657 = vunpack.c.l.b16 %v296
        %v658 = vunpack.c.h.b16 %v296
        %v659 = vunpack.c.l.b16 %v297
        %v660 = vunpack.c.h.b16 %v297
        %v661 = vunpack.c.l.b16 %v298
        %v662 = vunpack.c.h.b16 %v298
        %v663 = vunpack.c.l.b16 %v299
        %v664 = vunpack.c.h.b16 %v299
        %v665 = vunpack.c.l.b16 %v300
        %v666 = vunpack.c.h.b16 %v300
        %v667 = vunpack.c.l.b16 %v301
        %v668 = vunpack.c.h.b16 %v301
        %v669 = vunpack.c.l.b16 %v302
        %v670 = vunpack.c.h.b16 %v302
        %v671 = vunpack.c.l.b16 %v303
        %v672 = vunpack.c.h.b16 %v303
        %v673 = vunpack.c.l.b16 %v304
        %v674 = vunpack.c.h.b16 %v304
        %v675 = vunpack.c.l.b16 %v305
        %v676 = vunpack.c.h.b16 %v305
        %v677 = vunpack.c.l.b16 %v306
        %v678 = vunpack.c.h.b16 %v306
        %v679 = vunpack.c.l.b16 %v307
        %v680 = vunpack.c.h.b16 %v307
        %v681 = vunpack.c.l.b16 %v308
        %v682 = vunpack.c.h.b16 %v308
        %v683 = vunpack.c.l.b16 %v309
        %v684 = vunpack.c.h.b16 %v309
        %v685 = vunpack.c.l.b16 %v310
        %v686 = vunpack.c.h.b16 %v310
        %v687 = vunpack.c.l.b16 %v311
        %v688 = vunpack.c.h.b16 %v311
        %v689 = vunpack.c.l.b16 %v312
        %v690 = vunpack.c.h.b16 %v312
        %v691 = vunpack.c.l.b16 %v313
        %v692 = vunpack.c.h.b16 %v313
        %v693 = vunpack.c.l.b16 %v314
        %v694 = vunpack.c.h.b16 %v314
        %v695 = vunpack.c.l.b16 %v315
        %v696 = vunpack.c.h.b16 %v315
        %v697 = vunpack.c.l.b16 %v316
        %v698 = vunpack.c.h.b16 %v316
        %v699 = vunpack.c.l.b16 %v317
        %v700 = vunpack.c.h.b16 %v317
        %v701 = vunpack.c.l.b16 %v318
        %v702 = vunpack.c.h.b16 %v318
        %v703 = vunpack.c.l.b16 %v319
        %v704 = vunpack.c.h.b16 %v319
        %v705 = vunpack.c.l.b16 %v320
        %v706 = vunpack.c.h.b16 %v320
        %v707 = vunpack.c.l.b16 %v321
        %v708 = vunpack.c.h.b16 %v321
        %v709 = vunpack.c.l.b16 %v322
        %v710 = vunpack.c.h.b16 %v322
        %v711 = vunpack.c.l.b16 %v323
        %v712 = vunpack.c.h.b16 %v323
        %v713 = vunpack.c.l.b16 %v324
        %v714 = vunpack.c.h.b16 %v324
        %v715 = vunpack.c.l.b16 %v325
        %v716 = vunpack.c.h.b16 %v325
        %v717 = vunpack.c.l.b16 %v326
        %v718 = vunpack.c.h.b16 %v326
        %v719 = vunpack.c.l.b16 %v327
        %v720 = vunpack.c.h.b16 %v327
        %v721 = vunpack.c.l.b16 %v328
        %v722 = vunpack.c.h.b16 %v328
        %v723 = vunpack.c.l.b16 %v329
        %v724 = vunpack.c.h.b16 %v329
        %v725 = vunpack.c.l.b16 %v330
        %v726 = vunpack.c.h.b16 %v330
        %v727 = vunpack.c.l.b16 %v331
        %v728 = vunpack.c.h.b16 %v331
        %v729 = vunpack.c.l.b16 %v332
        %v730 = vunpack.c.h.b16 %v332
        %v731 = vunpack.c.l.b16 %v333
        %v732 = vunpack.c.h.b16 %v333
        %v733 = vunpack.c.l.b16 %v334
        %v734 = vunpack.c.h.b16 %v334
        %v735 = vunpack.c.l.b16 %v335
        %v736 = vunpack.c.h.b16 %v335
        %v737 = vunpack.c.l.b16 %v336
        %v738 = vunpack.c.h.b16 %v336
        %v739 = vunpack.c.l.b16 %v337
        %v740 = vunpack.c.h.b16 %v337
        %v741 = vunpack.c.l.b16 %v338
        %v742 = vunpack.c.h.b16 %v338
        %v743 = vunpack.c.l.b16 %v339
        %v744 = vunpack.c.h.b16 %v339
        %v745 = vunpack.c.l.b16 %v340
        %v746 = vunpack.c.h.b16 %v340
        %v747 = vunpack.c.l.b16 %v341
        %v748 = vunpack.c.h.b16 %v341
        %v749 = vunpack.c.l.b16 %v342
        %v750 = vunpack.c.h.b16 %v342
        %v751 = vunpack.c.l.b16 %v343
        %v752 = vunpack.c.h.b16 %v343
        %v753 = vunpack.c.l.b16 %v344
        %v754 = vunpack.c.h.b16 %v344
        %v755 = vunpack.c.l.b16 %v345
        %v756 = vunpack.c.h.b16 %v345
        %v757 = vunpack.c.l.b16 %v346
        %v758 = vunpack.c.h.b16 %v346
        %v759 = vunpack.c.l.b16 %v347
        %v760 = vunpack.c.h.b16 %v347
        %v761 = vunpack.c.l.b16 %v348
        %v762 = vunpack.c.h.b16 %v348
        %v763 = vunpack.c.l.b16 %v349
        %v764 = vunpack.c.h.b16 %v349
        %v765 = vunpack.c.l.b16 %v350
        %v766 = vunpack.c.h.b16 %v350
        %v767 = vunpack.c.l.b16 %v351
        %v768 = vunpack.c.h.b16 %v351
        %v769 = vunpack.c.l.b16 %v352
        %v770 = vunpack.c.h.b16 %v352
        %v771 = vunpack.c.l.b16 %v353
        %v772 = vunpack.c.h.b16 %v353
        %v773 = vunpack.c.l.b16 %v354
        %v774 = vunpack.c.h.b16 %v354
        %v775 = vunpack.c.l.b16 %v355
        %v776 = vunpack.c.h.b16 %v355
        %v777 = vunpack.c.l.b16 %v356
        %v778 = vunpack.c.h.b16 %v356
        %v779 = vunpack.c.l.b16 %v357
        %v780 = vunpack.c.h.b16 %v357
        %v781 = vunpack.c.l.b16 %v358
        %v782 = vunpack.c.h.b16 %v358
        %v783 = vunpack.c.l.b16 %v359
        %v784 = vunpack.c.h.b16 %v359
        %v785 = vunpack.c.l.b16 %v360
        %v786 = vunpack.c.h.b16 %v360
        %v787 = vunpack.c.l.b16 %v361
        %v788 = vunpack.c.h.b16 %v361
        %v789 = vunpack.c.l.b16 %v362
        %v790 = vunpack.c.h.b16 %v362
        %v791 = vunpack.c.l.b16 %v363
        %v792 = vunpack.c.h.b16 %v363
        %v793 = vunpack.c.l.b16 %v364
        %v794 = vunpack.c.h.b16 %v364
        %v795 = vunpack.c.l.b16 %v365
        %v796 = vunpack.c.h.b16 %v365
        %v797 = vunpack.c.l.b16 %v366
        %v798 = vunpack.c.h.b16 %v366
        %v799 = vunpack.c.l.b16 %v367
        %v800 = vunpack.c.h.b16 %v367
        %v801 = vunpack.c.l.b16 %v368
        %v802 = vunpack.c.h.b16 %v368
        %v803 = vunpack.c.l.b16 %v369
        %v804 = vunpack.c.h.b16 %v369
        %v805 = vunpack.c.l.b16 %v370
        %v806 = vunpack.c.h.b16 %v370
        %v807 = vunpack.c.l.b16 %v371
        %v808 = vunpack.c.h.b16 %v371
        %v809 = vunpack.c.l.b16 %v372
        %v810 = vunpack.c.h.b16 %v372
        %v811 = vunpack.c.l.b16 %v373
        %v812 = vunpack.c.h.b16 %v373
        %v813 = vunpack.c.l.b16 %v374
        %v814 = vunpack.c.h.b16 %v374
        %v815 = vunpack.c.l.b16 %v375
        %v816 = vunpack.c.h.b16 %v375
        %v817 = vunpack.c.l.b16 %v376
        %v818 = vunpack.c.h.b16 %v376
        %v819 = vunpack.c.l.b16 %v377
        %v820 = vunpack.c.h.b16 %v377
        %v821 = vunpack.c.l.b16 %v378
        %v822 = vunpack.c.h.b16 %v378
        %v823 = vunpack.c.l.b16 %v379
        %v824 = vunpack.c.h.b16 %v379
        %v825 = vunpack.c.l.b16 %v380
        %v826 = vunpack.c.h.b16 %v380
        %v827 = vunpack.c.l.b16 %v381
        %v828 = vunpack.c.h.b16 %v381
        %v829 = vunpack.c.l.b16 %v382
        %v830 = vunpack.c.h.b16 %v382
        %v831 = vunpack.c.l.b16 %v383
        %v832 = vunpack.c.h.b16 %v383
        %v833 = vunpack.c.l.b16 %v384
        %v834 = vunpack.c.h.b16 %v384
        %v835 = vunpack.c.l.b16 %v385
        %v836 = vunpack.c.h.b16 %v385
        %v837 = vunpack.c.l.b16 %v386
        %v838 = vunpack.c.h.b16 %v386
        %v839 = vunpack.c.l.b16 %v387
        %v840 = vunpack.c.h.b16 %v387
        %v841 = vunpack.c.l.b16 %v388
        %v842 = vunpack.c.h.b16 %v388
        %v843 = vunpack.c.l.b16 %v389
        %v844 = vunpack.c.h.b16 %v389
        %v845 = vunpack.c.l.b16 %v390
        %v846 = vunpack.c.h.b16 %v390
        %v847 = vunpack.c.l.b16 %v391
        %v848 = vunpack.c.h.b16 %v391
        %v849 = vunpack.c.l.b16 %v392
        %v850 = vunpack.c.h.b16 %v392
        %v851 = vunpack.c.l.b16 %v393
        %v852 = vunpack.c.h.b16 %v393
        %v853 = vunpack.c.l.b16 %v394
        %v854 = vunpack.c.h.b16 %v394
        %v855 = vunpack.c.l.b16 %v395
        %v856 = vunpack.c.h.b16 %v395
        %v857 = vunpack.c.l.b16 %v396
        %v858 = vunpack.c.h.b16 %v396
        %v859 = vunpack.c.l.b16 %v397
        %v860 = vunpack.c.h.b16 %v397
        %v861 = vunpack.c.l.b16 %v398
        %v862 = vunpack.c.h.b16 %v398
        %v863 = vunpack.c.l.b16 %v399
        %v864 = vunpack.c.h.b16 %v399
        %v865 = vunpack.c.l.b16 %v400
        %v866 = vunpack.c.h.b16 %v400
        %v867 = vunpack.c.l.b16 %v401
        %v868 = vunpack.c.h.b16 %v401
        %v869 = vunpack.c.l.b16 %v402
        %v870 = vunpack.c.h.b16 %v402
        %v871 = vunpack.c.l.b16 %v403
        %v872 = vunpack.c.h.b16 %v403
        %v873 = vunpack.c.l.b16 %v404
        %v874 = vunpack.c.h.b16 %v404
        %v875 = vunpack.c.l.b16 %v405
        %v876 = vunpack.c.h.b16 %v405
        %v877 = vunpack.c.l.b16 %v406
        %v878 = vunpack.c.h.b16 %v406
        %v879 = vunpack.c.l.b16 %v407
        %v880 = vunpack.c.h.b16 %v407
        %v881 = vunpack.c.l.b16 %v408
        %v882 = vunpack.c.h.b16 %v408
        %v883 = vunpack.c.l.b16 %v409
        %v884 = vunpack.c.h.b16 %v409
        %v885 = vunpack.c.l.b16 %v410
        %v886 = vunpack.c.h.b16 %v410
        %v887 = vunpack.c.l.b16 %v411
        %v888 = vunpack.c.h.b16 %v411
        %v889 = vunpack.c.l.b16 %v412
        %v890 = vunpack.c.h.b16 %v412
        %v891 = vunpack.c.l.b16 %v413
        %v892 = vunpack.c.h.b16 %v413
        %v893 = vunpack.c.l.b16 %v414
        %v894 = vunpack.c.h.b16 %v414
        %v895 = vpack.c.b16 %v625, %v607
        %v896 = vpack.c.b16 %v626, %v608
        %v897 = vpack.c.b16 %v627, %v609
        %v898 = vpack.c.b16 %v628, %v610
        %v899 = vpack.c.b16 %v629, %v611
        %v900 = vpack.c.b16 %v630, %v612
        %v901 = vpack.c.b16 %v631, %v613
        %v902 = vpack.c.b16 %v632, %v614
        %v903 = vpack.c.b16 %v633, %v615
        %v904 = vpack.c.b16 %v634, %v616
        %v905 = vpack.c.b16 %v635, %v617
        %v906 = vpack.c.b16 %v636, %v618
        %v907 = vpack.c.b16 %v637, %v619
        %v908 = vpack.c.b16 %v638, %v620
        %v909 = vpack.c.b16 %v639, %v621
        %v910 = vpack.c.b16 %v640, %v622
        %v911 = vpack.c.b16 %v641, %v623
        %v912 = vpack.c.b16 %v642, %v624
        %v913 = vpack.c.b16 %v661, %v643
        %v914 = vpack.c.b16 %v662, %v644
        %v915 = vpack.c.b16 %v663, %v645
        %v916 = vpack.c.b16 %v664, %v646
        %v917 = vpack.c.b16 %v665, %v647
        %v918 = vpack.c.b16 %v666, %v648
        %v919 = vpack.c.b16 %v667, %v649
        %v920 = vpack.c.b16 %v668, %v650
        %v921 = vpack.c.b16 %v669, %v651
        %v922 = vpack.c.b16 %v670, %v652
        %v923 = vpack.c.b16 %v671, %v653
        %v924 = vpack.c.b16 %v672, %v654
        %v925 = vpack.c.b16 %v673, %v655
        %v926 = vpack.c.b16 %v674, %v656
        %v927 = vpack.c.b16 %v675, %v657
        %v928 = vpack.c.b16 %v676, %v658
        %v929 = vpack.c.b16 %v677, %v659
        %v930 = vpack.c.b16 %v678, %v660
        %v931 = vpack.c.b16 %v697, %v679
        %v932 = vpack.c.b16 %v698, %v680
        %v933 = vpack.c.b16 %v699, %v681
        %v934 = vpack.c.b16 %v700, %v682
        %v935 = vpack.c.b16 %v701, %v683
        %v936 = vpack.c.b16 %v702, %v684
        %v937 = vpack.c.b16 %v703, %v685
        %v938 = vpack.c.b16 %v704, %v686
        %v939 = vpack.c.b16 %v705, %v687
        %v940 = vpack.c.b16 %v706, %v688
        %v941 = vpack.c.b16 %v707, %v689
        %v942 = vpack.c.b16 %v708, %v690
        %v943 = vpack.c.b16 %v709, %v691
        %v944 = vpack.c.b16 %v710, %v692
        %v945 = vpack.c.b16 %v711, %v693
        %v946 = vpack.c.b16 %v712, %v694
        %v947 = vpack.c.b16 %v713, %v695
        %v948 = vpack.c.b16 %v714, %v696
        %v949 = vpack.c.b16 %v733, %v715
        %v950 = vpack.c.b16 %v734, %v716
        %v951 = vpack.c.b16 %v735, %v717
        %v952 = vpack.c.b16 %v736, %v718
        %v953 = vpack.c.b16 %v737, %v719
        %v954 = vpack.c.b16 %v738, %v720
        %v955 = vpack.c.b16 %v739, %v721
        %v956 = vpack.c.b16 %v740, %v722
        %v957 = vpack.c.b16 %v741, %v723
        %v958 = vpack.c.b16 %v742, %v724
        %v959 = vpack.c.b16 %v743, %v725
        %v960 = vpack.c.b16 %v744, %v726
        %v961 = vpack.c.b16 %v745, %v727
        %v962 = vpack.c.b16 %v746, %v728
        %v963 = vpack.c.b16 %v747, %v729
        %v964 = vpack.c.b16 %v748, %v730
        %v965 = vpack.c.b16 %v749, %v731
        %v966 = vpack.c.b16 %v750, %v732
        %v967 = vpack.c.b16 %v769, %v751
        %v968 = vpack.c.b16 %v770, %v752
        %v969 = vpack.c.b16 %v771, %v753
        %v970 = vpack.c.b16 %v772, %v754
        %v971 = vpack.c.b16 %v773, %v755
        %v972 = vpack.c.b16 %v774, %v756
        %v973 = vpack.c.b16 %v775, %v757
        %v974 = vpack.c.b16 %v776, %v758
        %v975 = vpack.c.b16 %v777, %v759
        %v976 = vpack.c.b16 %v778, %v760
        %v977 = vpack.c.b16 %v779, %v761
        %v978 = vpack.c.b16 %v780, %v762
        %v979 = vpack.c.b16 %v781, %v763
        %v980 = vpack.c.b16 %v782, %v764
        %v981 = vpack.c.b16 %v783, %v765
        %v982 = vpack.c.b16 %v784, %v766
        %v983 = vpack.c.b16 %v785, %v767
        %v984 = vpack.c.b16 %v786, %v768
        %v985 = vpack.c.b16 %v805, %v787
        %v986 = vpack.c.b16 %v806, %v788
        %v987 = vpack.c.b16 %v807, %v789
        %v988 = vpack.c.b16 %v808, %v790
        %v989 = vpack.c.b16 %v809, %v791
        %v990 = vpack.c.b16 %v810, %v792
        %v991 = vpack.c.b16 %v811, %v793
        %v992 = vpack.c.b16 %v812, %v794
        %v993 = vpack.c.b16 %v813, %v795
        %v994 = vpack.c.b16 %v814, %v796
        %v995 = vpack.c.b16 %v815, %v797
        %v996 = vpack.c.b16 %v816, %v798
        %v997 = vpack.c.b16 %v817, %v799
        %v998 = vpack.c.b16 %v818, %v800
        %v999 = vpack.c.b16 %v819, %v801
        %v1000 = vpack.c.b16 %v820, %v802
        %v1001 = vpack.c.b16 %v821, %v803
        %v1002 = vpack.c.b16 %v822, %v804
        %v1003 = vpack.c.b16 %v841, %v823
        %v1004 = vpack.c.b16 %v842, %v824
        %v1005 = vpack.c.b16 %v843, %v825
        %v1006 = vpack.c.b16 %v844, %v826
        %v1007 = vpack.c.b16 %v845, %v827
        %v1008 = vpack.c.b16 %v846, %v828
        %v1009 = vpack.c.b16 %v847, %v829
        %v1010 = vpack.c.b16 %v848, %v830
        %v1011 = vpack.c.b16 %v849, %v831
        %v1012 = vpack.c.b16 %v850, %v832
        %v1013 = vpack.c.b16 %v851, %v833
        %v1014 = vpack.c.b16 %v852, %v834
        %v1015 = vpack.c.b16 %v853, %v835
        %v1016 = vpack.c.b16 %v854, %v836
        %v1017 = vpack.c.b16 %v855, %v837
        %v1018 = vpack.c.b16 %v856, %v838
        %v1019 = vpack.c.b16 %v857, %v839
        %v1020 = vpack.c.b16 %v858, %v840
        %v1021 = vpack.c.b16 %v877, %v859
        %v1022 = vpack.c.b16 %v878, %v860
        %v1023 = vpack.c.b16 %v879, %v861
        %v1024 = vpack.c.b16 %v880, %v862
        %v1025 = vpack.c.b16 %v881, %v863
        %v1026 = vpack.c.b16 %v882, %v864
        %v1027 = vpack.c.b16 %v883, %v865
        %v1028 = vpack.c.b16 %v884, %v866
        %v1029 = vpack.c.b16 %v885, %v867
        %v1030 = vpack.c.b16 %v886, %v868
        %v1031 = vpack.c.b16 %v887, %v869
        %v1032 = vpack.c.b16 %v888, %v870
        %v1033 = vpack.c.b16 %v889, %v871
        %v1034 = vpack.c.b16 %v890, %v872
        %v1035 = vpack.c.b16 %v891, %v873
        %v1036 = vpack.c.b16 %v892, %v874
        %v1037 = vpack.c.b16 %v893, %v875
        %v1038 = vpack.c.b16 %v894, %v876
        %1183 = vmatpush.bf16.msra.mxu0 %v1021
        %1184 = vmatpush.bf16.msra.mxu0 %v1003
        %1185 = vmatpush.bf16.msra.mxu0 %v985
        %1186 = vmatpush.bf16.msra.mxu0 %v967
        %1187 = vmatpush.bf16.msra.mxu0 %v949
        %1188 = vmatpush.bf16.msra.mxu0 %v931
        %1189 = vmatpush.bf16.msra.mxu0 %v913
        %1190 = vmatpush.bf16.msra.mxu0 %v895
        %1191 = vmatmul.bf16.gmra.mxu0 %v447
        %v1192 = vpop.f32.mrf.mxu0
        %v1193 = vadd.f32 0.0, %v1192
        %v1194 = vpop.f32.mrf.mxu0
        %v1195 = vadd.f32 0.0, %v1194
        %1196 = vmatmul.bf16.gmra.mxu0 %v448
        %v1197 = vpop.f32.mrf.mxu0
        %v1198 = vadd.f32 0.0, %v1197
        %v1199 = vpop.f32.mrf.mxu0
        %v1200 = vadd.f32 0.0, %v1199
        %1201 = vmatmul.bf16.gmra.mxu0 %v449
        %v1202 = vpop.f32.mrf.mxu0
        %v1203 = vadd.f32 0.0, %v1202
        %v1204 = vpop.f32.mrf.mxu0
        %v1205 = vadd.f32 0.0, %v1204
        %1206 = vmatmul.bf16.gmra.mxu0 %v450
        %v1207 = vpop.f32.mrf.mxu0
        %v1208 = vadd.f32 0.0, %v1207
        %v1209 = vpop.f32.mrf.mxu0
        %v1210 = vadd.f32 0.0, %v1209
        %1211 = vmatmul.bf16.gmra.mxu0 %v451
        %v1212 = vpop.f32.mrf.mxu0
        %v1213 = vadd.f32 0.0, %v1212
        %v1214 = vpop.f32.mrf.mxu0
        %v1215 = vadd.f32 0.0, %v1214
        %1216 = vmatmul.bf16.gmra.mxu0 %v452
        %v1217 = vpop.f32.mrf.mxu0
        %v1218 = vadd.f32 0.0, %v1217
        %v1219 = vpop.f32.mrf.mxu0
        %v1220 = vadd.f32 0.0, %v1219
        %1221 = vmatmul.bf16.gmra.mxu0 %v453
        %v1222 = vpop.f32.mrf.mxu0
        %v1223 = vadd.f32 0.0, %v1222
        %v1224 = vpop.f32.mrf.mxu0
        %v1225 = vadd.f32 0.0, %v1224
        %1226 = vmatmul.bf16.gmra.mxu0 %v454
        %v1227 = vpop.f32.mrf.mxu0
        %v1228 = vadd.f32 0.0, %v1227
        %v1229 = vpop.f32.mrf.mxu0
        %v1230 = vadd.f32 0.0, %v1229
        %1231 = vdwg.mxu0
        %1232 = vmatpush.bf16.msra.mxu0 %v1022
        %1233 = vmatpush.bf16.msra.mxu0 %v1004
        %1234 = vmatpush.bf16.msra.mxu0 %v986
        %1235 = vmatpush.bf16.msra.mxu0 %v968
        %1236 = vmatpush.bf16.msra.mxu0 %v950
        %1237 = vmatpush.bf16.msra.mxu0 %v932
        %1238 = vmatpush.bf16.msra.mxu0 %v914
        %1239 = vmatpush.bf16.msra.mxu0 %v896
        %1240 = vmatmul.bf16.gmra.mxu0 %v447
        %v1241 = vpop.f32.mrf.mxu0
        %v1242 = vadd.f32 0.0, %v1241
        %v1243 = vpop.f32.mrf.mxu0
        %v1244 = vadd.f32 0.0, %v1243
        %1245 = vmatmul.bf16.gmra.mxu0 %v448
        %v1246 = vpop.f32.mrf.mxu0
        %v1247 = vadd.f32 0.0, %v1246
        %v1248 = vpop.f32.mrf.mxu0
        %v1249 = vadd.f32 0.0, %v1248
        %1250 = vmatmul.bf16.gmra.mxu0 %v449
        %v1251 = vpop.f32.mrf.mxu0
        %v1252 = vadd.f32 0.0, %v1251
        %v1253 = vpop.f32.mrf.mxu0
        %v1254 = vadd.f32 0.0, %v1253
        %1255 = vmatmul.bf16.gmra.mxu0 %v450
        %v1256 = vpop.f32.mrf.mxu0
        %v1257 = vadd.f32 0.0, %v1256
        %v1258 = vpop.f32.mrf.mxu0
        %v1259 = vadd.f32 0.0, %v1258
        %1260 = vmatmul.bf16.gmra.mxu0 %v451
        %v1261 = vpop.f32.mrf.mxu0
        %v1262 = vadd.f32 0.0, %v1261
        %v1263 = vpop.f32.mrf.mxu0
        %v1264 = vadd.f32 0.0, %v1263
        %1265 = vmatmul.bf16.gmra.mxu0 %v452
        %v1266 = vpop.f32.mrf.mxu0
        %v1267 = vadd.f32 0.0, %v1266
        %v1268 = vpop.f32.mrf.mxu0
        %v1269 = vadd.f32 0.0, %v1268
        %1270 = vmatmul.bf16.gmra.mxu0 %v453
        %v1271 = vpop.f32.mrf.mxu0
        %v1272 = vadd.f32 0.0, %v1271
        %v1273 = vpop.f32.mrf.mxu0
        %v1274 = vadd.f32 0.0, %v1273
        %1275 = vmatmul.bf16.gmra.mxu0 %v454
        %v1276 = vpop.f32.mrf.mxu0
        %v1277 = vadd.f32 0.0, %v1276
        %v1278 = vpop.f32.mrf.mxu0
        %v1279 = vadd.f32 0.0, %v1278
        %1280 = vdwg.mxu0
        %1281 = vmatpush.bf16.msra.mxu0 %v1023
        %1282 = vmatpush.bf16.msra.mxu0 %v1005
        %1283 = vmatpush.bf16.msra.mxu0 %v987
        %1284 = vmatpush.bf16.msra.mxu0 %v969
        %1285 = vmatpush.bf16.msra.mxu0 %v951
        %1286 = vmatpush.bf16.msra.mxu0 %v933
        %1287 = vmatpush.bf16.msra.mxu0 %v915
        %1288 = vmatpush.bf16.msra.mxu0 %v897
        %1289 = vmatmul.bf16.gmra.mxu0 %v447
        %v1290 = vpop.f32.mrf.mxu0
        %v1291 = vadd.f32 0.0, %v1290
        %v1292 = vpop.f32.mrf.mxu0
        %v1293 = vadd.f32 0.0, %v1292
        %1294 = vmatmul.bf16.gmra.mxu0 %v448
        %v1295 = vpop.f32.mrf.mxu0
        %v1296 = vadd.f32 0.0, %v1295
        %v1297 = vpop.f32.mrf.mxu0
        %v1298 = vadd.f32 0.0, %v1297
        %1299 = vmatmul.bf16.gmra.mxu0 %v449
        %v1300 = vpop.f32.mrf.mxu0
        %v1301 = vadd.f32 0.0, %v1300
        %v1302 = vpop.f32.mrf.mxu0
        %v1303 = vadd.f32 0.0, %v1302
        %1304 = vmatmul.bf16.gmra.mxu0 %v450
        %v1305 = vpop.f32.mrf.mxu0
        %v1306 = vadd.f32 0.0, %v1305
        %v1307 = vpop.f32.mrf.mxu0
        %v1308 = vadd.f32 0.0, %v1307
        %1309 = vmatmul.bf16.gmra.mxu0 %v451
        %v1310 = vpop.f32.mrf.mxu0
        %v1311 = vadd.f32 0.0, %v1310
        %v1312 = vpop.f32.mrf.mxu0
        %v1313 = vadd.f32 0.0, %v1312
        %1314 = vmatmul.bf16.gmra.mxu0 %v452
        %v1315 = vpop.f32.mrf.mxu0
        %v1316 = vadd.f32 0.0, %v1315
        %v1317 = vpop.f32.mrf.mxu0
        %v1318 = vadd.f32 0.0, %v1317
        %1319 = vmatmul.bf16.gmra.mxu0 %v453
        %v1320 = vpop.f32.mrf.mxu0
        %v1321 = vadd.f32 0.0, %v1320
        %v1322 = vpop.f32.mrf.mxu0
        %v1323 = vadd.f32 0.0, %v1322
        %1324 = vmatmul.bf16.gmra.mxu0 %v454
        %v1325 = vpop.f32.mrf.mxu0
        %v1326 = vadd.f32 0.0, %v1325
        %v1327 = vpop.f32.mrf.mxu0
        %v1328 = vadd.f32 0.0, %v1327
        %1329 = vdwg.mxu0
        %1330 = vmatpush.bf16.msra.mxu0 %v1024
        %1331 = vmatpush.bf16.msra.mxu0 %v1006
        %1332 = vmatpush.bf16.msra.mxu0 %v988
        %1333 = vmatpush.bf16.msra.mxu0 %v970
        %1334 = vmatpush.bf16.msra.mxu0 %v952
        %1335 = vmatpush.bf16.msra.mxu0 %v934
        %1336 = vmatpush.bf16.msra.mxu0 %v916
        %1337 = vmatpush.bf16.msra.mxu0 %v898
        %1338 = vmatmul.bf16.gmra.mxu0 %v447
        %v1339 = vpop.f32.mrf.mxu0
        %v1340 = vadd.f32 0.0, %v1339
        %v1341 = vpop.f32.mrf.mxu0
        %v1342 = vadd.f32 0.0, %v1341
        %1343 = vmatmul.bf16.gmra.mxu0 %v448
        %v1344 = vpop.f32.mrf.mxu0
        %v1345 = vadd.f32 0.0, %v1344
        %v1346 = vpop.f32.mrf.mxu0
        %v1347 = vadd.f32 0.0, %v1346
        %1348 = vmatmul.bf16.gmra.mxu0 %v449
        %v1349 = vpop.f32.mrf.mxu0
        %v1350 = vadd.f32 0.0, %v1349
        %v1351 = vpop.f32.mrf.mxu0
        %v1352 = vadd.f32 0.0, %v1351
        %1353 = vmatmul.bf16.gmra.mxu0 %v450
        %v1354 = vpop.f32.mrf.mxu0
        %v1355 = vadd.f32 0.0, %v1354
        %v1356 = vpop.f32.mrf.mxu0
        %v1357 = vadd.f32 0.0, %v1356
        %1358 = vmatmul.bf16.gmra.mxu0 %v451
        %v1359 = vpop.f32.mrf.mxu0
        %v1360 = vadd.f32 0.0, %v1359
        %v1361 = vpop.f32.mrf.mxu0
        %v1362 = vadd.f32 0.0, %v1361
        %1363 = vmatmul.bf16.gmra.mxu0 %v452
        %v1364 = vpop.f32.mrf.mxu0
        %v1365 = vadd.f32 0.0, %v1364
        %v1366 = vpop.f32.mrf.mxu0
        %v1367 = vadd.f32 0.0, %v1366
        %1368 = vmatmul.bf16.gmra.mxu0 %v453
        %v1369 = vpop.f32.mrf.mxu0
        %v1370 = vadd.f32 0.0, %v1369
        %v1371 = vpop.f32.mrf.mxu0
        %v1372 = vadd.f32 0.0, %v1371
        %1373 = vmatmul.bf16.gmra.mxu0 %v454
        %v1374 = vpop.f32.mrf.mxu0
        %v1375 = vadd.f32 0.0, %v1374
        %v1376 = vpop.f32.mrf.mxu0
        %v1377 = vadd.f32 0.0, %v1376
        %1378 = vdwg.mxu0
        %1379 = vmatpush.bf16.msra.mxu0 %v1025
        %1380 = vmatpush.bf16.msra.mxu0 %v1007
        %1381 = vmatpush.bf16.msra.mxu0 %v989
        %1382 = vmatpush.bf16.msra.mxu0 %v971
        %1383 = vmatpush.bf16.msra.mxu0 %v953
        %1384 = vmatpush.bf16.msra.mxu0 %v935
        %1385 = vmatpush.bf16.msra.mxu0 %v917
        %1386 = vmatpush.bf16.msra.mxu0 %v899
        %1387 = vmatmul.bf16.gmra.mxu0 %v447
        %v1388 = vpop.f32.mrf.mxu0
        %v1389 = vadd.f32 0.0, %v1388
        %v1390 = vpop.f32.mrf.mxu0
        %v1391 = vadd.f32 0.0, %v1390
        %1392 = vmatmul.bf16.gmra.mxu0 %v448
        %v1393 = vpop.f32.mrf.mxu0
        %v1394 = vadd.f32 0.0, %v1393
        %v1395 = vpop.f32.mrf.mxu0
        %v1396 = vadd.f32 0.0, %v1395
        %1397 = vmatmul.bf16.gmra.mxu0 %v449
        %v1398 = vpop.f32.mrf.mxu0
        %v1399 = vadd.f32 0.0, %v1398
        %v1400 = vpop.f32.mrf.mxu0
        %v1401 = vadd.f32 0.0, %v1400
        %1402 = vmatmul.bf16.gmra.mxu0 %v450
        %v1403 = vpop.f32.mrf.mxu0
        %v1404 = vadd.f32 0.0, %v1403
        %v1405 = vpop.f32.mrf.mxu0
        %v1406 = vadd.f32 0.0, %v1405
        %1407 = vmatmul.bf16.gmra.mxu0 %v451
        %v1408 = vpop.f32.mrf.mxu0
        %v1409 = vadd.f32 0.0, %v1408
        %v1410 = vpop.f32.mrf.mxu0
        %v1411 = vadd.f32 0.0, %v1410
        %1412 = vmatmul.bf16.gmra.mxu0 %v452
        %v1413 = vpop.f32.mrf.mxu0
        %v1414 = vadd.f32 0.0, %v1413
        %v1415 = vpop.f32.mrf.mxu0
        %v1416 = vadd.f32 0.0, %v1415
        %1417 = vmatmul.bf16.gmra.mxu0 %v453
        %v1418 = vpop.f32.mrf.mxu0
        %v1419 = vadd.f32 0.0, %v1418
        %v1420 = vpop.f32.mrf.mxu0
        %v1421 = vadd.f32 0.0, %v1420
        %1422 = vmatmul.bf16.gmra.mxu0 %v454
        %v1423 = vpop.f32.mrf.mxu0
        %v1424 = vadd.f32 0.0, %v1423
        %v1425 = vpop.f32.mrf.mxu0
        %v1426 = vadd.f32 0.0, %v1425
        %1427 = vdwg.mxu0
        %1428 = vmatpush.bf16.msra.mxu0 %v1026
        %1429 = vmatpush.bf16.msra.mxu0 %v1008
        %1430 = vmatpush.bf16.msra.mxu0 %v990
        %1431 = vmatpush.bf16.msra.mxu0 %v972
        %1432 = vmatpush.bf16.msra.mxu0 %v954
        %1433 = vmatpush.bf16.msra.mxu0 %v936
        %1434 = vmatpush.bf16.msra.mxu0 %v918
        %1435 = vmatpush.bf16.msra.mxu0 %v900
        %1436 = vmatmul.bf16.gmra.mxu0 %v447
        %v1437 = vpop.f32.mrf.mxu0
        %v1438 = vadd.f32 0.0, %v1437
        %v1439 = vpop.f32.mrf.mxu0
        %v1440 = vadd.f32 0.0, %v1439
        %1441 = vmatmul.bf16.gmra.mxu0 %v448
        %v1442 = vpop.f32.mrf.mxu0
        %v1443 = vadd.f32 0.0, %v1442
        %v1444 = vpop.f32.mrf.mxu0
        %v1445 = vadd.f32 0.0, %v1444
        %1446 = vmatmul.bf16.gmra.mxu0 %v449
        %v1447 = vpop.f32.mrf.mxu0
        %v1448 = vadd.f32 0.0, %v1447
        %v1449 = vpop.f32.mrf.mxu0
        %v1450 = vadd.f32 0.0, %v1449
        %1451 = vmatmul.bf16.gmra.mxu0 %v450
        %v1452 = vpop.f32.mrf.mxu0
        %v1453 = vadd.f32 0.0, %v1452
        %v1454 = vpop.f32.mrf.mxu0
        %v1455 = vadd.f32 0.0, %v1454
        %1456 = vmatmul.bf16.gmra.mxu0 %v451
        %v1457 = vpop.f32.mrf.mxu0
        %v1458 = vadd.f32 0.0, %v1457
        %v1459 = vpop.f32.mrf.mxu0
        %v1460 = vadd.f32 0.0, %v1459
        %1461 = vmatmul.bf16.gmra.mxu0 %v452
        %v1462 = vpop.f32.mrf.mxu0
        %v1463 = vadd.f32 0.0, %v1462
        %v1464 = vpop.f32.mrf.mxu0
        %v1465 = vadd.f32 0.0, %v1464
        %1466 = vmatmul.bf16.gmra.mxu0 %v453
        %v1467 = vpop.f32.mrf.mxu0
        %v1468 = vadd.f32 0.0, %v1467
        %v1469 = vpop.f32.mrf.mxu0
        %v1470 = vadd.f32 0.0, %v1469
        %1471 = vmatmul.bf16.gmra.mxu0 %v454
        %v1472 = vpop.f32.mrf.mxu0
        %v1473 = vadd.f32 0.0, %v1472
        %v1474 = vpop.f32.mrf.mxu0
        %v1475 = vadd.f32 0.0, %v1474
        %1476 = vdwg.mxu0
        %1477 = vmatpush.bf16.msra.mxu0 %v1027
        %1478 = vmatpush.bf16.msra.mxu0 %v1009
        %1479 = vmatpush.bf16.msra.mxu0 %v991
        %1480 = vmatpush.bf16.msra.mxu0 %v973
        %1481 = vmatpush.bf16.msra.mxu0 %v955
        %1482 = vmatpush.bf16.msra.mxu0 %v937
        %1483 = vmatpush.bf16.msra.mxu0 %v919
        %1484 = vmatpush.bf16.msra.mxu0 %v901
        %1485 = vmatmul.bf16.gmra.mxu0 %v447
        %v1486 = vpop.f32.mrf.mxu0
        %v1487 = vadd.f32 0.0, %v1486
        %v1488 = vpop.f32.mrf.mxu0
        %v1489 = vadd.f32 0.0, %v1488
        %1490 = vmatmul.bf16.gmra.mxu0 %v448
        %v1491 = vpop.f32.mrf.mxu0
        %v1492 = vadd.f32 0.0, %v1491
        %v1493 = vpop.f32.mrf.mxu0
        %v1494 = vadd.f32 0.0, %v1493
        %1495 = vmatmul.bf16.gmra.mxu0 %v449
        %v1496 = vpop.f32.mrf.mxu0
        %v1497 = vadd.f32 0.0, %v1496
        %v1498 = vpop.f32.mrf.mxu0
        %v1499 = vadd.f32 0.0, %v1498
        %1500 = vmatmul.bf16.gmra.mxu0 %v450
        %v1501 = vpop.f32.mrf.mxu0
        %v1502 = vadd.f32 0.0, %v1501
        %v1503 = vpop.f32.mrf.mxu0
        %v1504 = vadd.f32 0.0, %v1503
        %1505 = vmatmul.bf16.gmra.mxu0 %v451
        %v1506 = vpop.f32.mrf.mxu0
        %v1507 = vadd.f32 0.0, %v1506
        %v1508 = vpop.f32.mrf.mxu0
        %v1509 = vadd.f32 0.0, %v1508
        %1510 = vmatmul.bf16.gmra.mxu0 %v452
        %v1511 = vpop.f32.mrf.mxu0
        %v1512 = vadd.f32 0.0, %v1511
        %v1513 = vpop.f32.mrf.mxu0
        %v1514 = vadd.f32 0.0, %v1513
        %1515 = vmatmul.bf16.gmra.mxu0 %v453
        %v1516 = vpop.f32.mrf.mxu0
        %v1517 = vadd.f32 0.0, %v1516
        %v1518 = vpop.f32.mrf.mxu0
        %v1519 = vadd.f32 0.0, %v1518
        %1520 = vmatmul.bf16.gmra.mxu0 %v454
        %v1521 = vpop.f32.mrf.mxu0
        %v1522 = vadd.f32 0.0, %v1521
        %v1523 = vpop.f32.mrf.mxu0
        %v1524 = vadd.f32 0.0, %v1523
        %1525 = vdwg.mxu0
        %1526 = vmatpush.bf16.msra.mxu0 %v1028
        %1527 = vmatpush.bf16.msra.mxu0 %v1010
        %1528 = vmatpush.bf16.msra.mxu0 %v992
        %1529 = vmatpush.bf16.msra.mxu0 %v974
        %1530 = vmatpush.bf16.msra.mxu0 %v956
        %1531 = vmatpush.bf16.msra.mxu0 %v938
        %1532 = vmatpush.bf16.msra.mxu0 %v920
        %1533 = vmatpush.bf16.msra.mxu0 %v902
        %1534 = vmatmul.bf16.gmra.mxu0 %v447
        %v1535 = vpop.f32.mrf.mxu0
        %v1536 = vadd.f32 0.0, %v1535
        %v1537 = vpop.f32.mrf.mxu0
        %v1538 = vadd.f32 0.0, %v1537
        %1539 = vmatmul.bf16.gmra.mxu0 %v448
        %v1540 = vpop.f32.mrf.mxu0
        %v1541 = vadd.f32 0.0, %v1540
        %v1542 = vpop.f32.mrf.mxu0
        %v1543 = vadd.f32 0.0, %v1542
        %1544 = vmatmul.bf16.gmra.mxu0 %v449
        %v1545 = vpop.f32.mrf.mxu0
        %v1546 = vadd.f32 0.0, %v1545
        %v1547 = vpop.f32.mrf.mxu0
        %v1548 = vadd.f32 0.0, %v1547
        %1549 = vmatmul.bf16.gmra.mxu0 %v450
        %v1550 = vpop.f32.mrf.mxu0
        %v1551 = vadd.f32 0.0, %v1550
        %v1552 = vpop.f32.mrf.mxu0
        %v1553 = vadd.f32 0.0, %v1552
        %1554 = vmatmul.bf16.gmra.mxu0 %v451
        %v1555 = vpop.f32.mrf.mxu0
        %v1556 = vadd.f32 0.0, %v1555
        %v1557 = vpop.f32.mrf.mxu0
        %v1558 = vadd.f32 0.0, %v1557
        %1559 = vmatmul.bf16.gmra.mxu0 %v452
        %v1560 = vpop.f32.mrf.mxu0
        %v1561 = vadd.f32 0.0, %v1560
        %v1562 = vpop.f32.mrf.mxu0
        %v1563 = vadd.f32 0.0, %v1562
        %1564 = vmatmul.bf16.gmra.mxu0 %v453
        %v1565 = vpop.f32.mrf.mxu0
        %v1566 = vadd.f32 0.0, %v1565
        %v1567 = vpop.f32.mrf.mxu0
        %v1568 = vadd.f32 0.0, %v1567
        %1569 = vmatmul.bf16.gmra.mxu0 %v454
        %v1570 = vpop.f32.mrf.mxu0
        %v1571 = vadd.f32 0.0, %v1570
        %v1572 = vpop.f32.mrf.mxu0
        %v1573 = vadd.f32 0.0, %v1572
        %1574 = vdwg.mxu0
        %1575 = vmatpush.bf16.msra.mxu0 %v1029
        %1576 = vmatpush.bf16.msra.mxu0 %v1011
        %1577 = vmatpush.bf16.msra.mxu0 %v993
        %1578 = vmatpush.bf16.msra.mxu0 %v975
        %1579 = vmatpush.bf16.msra.mxu0 %v957
        %1580 = vmatpush.bf16.msra.mxu0 %v939
        %1581 = vmatpush.bf16.msra.mxu0 %v921
        %1582 = vmatpush.bf16.msra.mxu0 %v903
        %1583 = vmatmul.bf16.gmra.mxu0 %v447
        %v1584 = vpop.f32.mrf.mxu0
        %v1585 = vadd.f32 0.0, %v1584
        %v1586 = vpop.f32.mrf.mxu0
        %v1587 = vadd.f32 0.0, %v1586
        %1588 = vmatmul.bf16.gmra.mxu0 %v448
        %v1589 = vpop.f32.mrf.mxu0
        %v1590 = vadd.f32 0.0, %v1589
        %v1591 = vpop.f32.mrf.mxu0
        %v1592 = vadd.f32 0.0, %v1591
        %1593 = vmatmul.bf16.gmra.mxu0 %v449
        %v1594 = vpop.f32.mrf.mxu0
        %v1595 = vadd.f32 0.0, %v1594
        %v1596 = vpop.f32.mrf.mxu0
        %v1597 = vadd.f32 0.0, %v1596
        %1598 = vmatmul.bf16.gmra.mxu0 %v450
        %v1599 = vpop.f32.mrf.mxu0
        %v1600 = vadd.f32 0.0, %v1599
        %v1601 = vpop.f32.mrf.mxu0
        %v1602 = vadd.f32 0.0, %v1601
        %1603 = vmatmul.bf16.gmra.mxu0 %v451
        %v1604 = vpop.f32.mrf.mxu0
        %v1605 = vadd.f32 0.0, %v1604
        %v1606 = vpop.f32.mrf.mxu0
        %v1607 = vadd.f32 0.0, %v1606
        %1608 = vmatmul.bf16.gmra.mxu0 %v452
        %v1609 = vpop.f32.mrf.mxu0
        %v1610 = vadd.f32 0.0, %v1609
        %v1611 = vpop.f32.mrf.mxu0
        %v1612 = vadd.f32 0.0, %v1611
        %1613 = vmatmul.bf16.gmra.mxu0 %v453
        %v1614 = vpop.f32.mrf.mxu0
        %v1615 = vadd.f32 0.0, %v1614
        %v1616 = vpop.f32.mrf.mxu0
        %v1617 = vadd.f32 0.0, %v1616
        %1618 = vmatmul.bf16.gmra.mxu0 %v454
        %v1619 = vpop.f32.mrf.mxu0
        %v1620 = vadd.f32 0.0, %v1619
        %v1621 = vpop.f32.mrf.mxu0
        %v1622 = vadd.f32 0.0, %v1621
        %1623 = vdwg.mxu0
        %1624 = vmatpush.bf16.msra.mxu0 %v1030
        %1625 = vmatpush.bf16.msra.mxu0 %v1012
        %1626 = vmatpush.bf16.msra.mxu0 %v994
        %1627 = vmatpush.bf16.msra.mxu0 %v976
        %1628 = vmatpush.bf16.msra.mxu0 %v958
        %1629 = vmatpush.bf16.msra.mxu0 %v940
        %1630 = vmatpush.bf16.msra.mxu0 %v922
        %1631 = vmatpush.bf16.msra.mxu0 %v904
        %1632 = vmatmul.bf16.gmra.mxu0 %v447
        %v1633 = vpop.f32.mrf.mxu0
        %v1634 = vadd.f32 0.0, %v1633
        %v1635 = vpop.f32.mrf.mxu0
        %v1636 = vadd.f32 0.0, %v1635
        %1637 = vmatmul.bf16.gmra.mxu0 %v448
        %v1638 = vpop.f32.mrf.mxu0
        %v1639 = vadd.f32 0.0, %v1638
        %v1640 = vpop.f32.mrf.mxu0
        %v1641 = vadd.f32 0.0, %v1640
        %1642 = vmatmul.bf16.gmra.mxu0 %v449
        %v1643 = vpop.f32.mrf.mxu0
        %v1644 = vadd.f32 0.0, %v1643
        %v1645 = vpop.f32.mrf.mxu0
        %v1646 = vadd.f32 0.0, %v1645
        %1647 = vmatmul.bf16.gmra.mxu0 %v450
        %v1648 = vpop.f32.mrf.mxu0
        %v1649 = vadd.f32 0.0, %v1648
        %v1650 = vpop.f32.mrf.mxu0
        %v1651 = vadd.f32 0.0, %v1650
        %1652 = vmatmul.bf16.gmra.mxu0 %v451
        %v1653 = vpop.f32.mrf.mxu0
        %v1654 = vadd.f32 0.0, %v1653
        %v1655 = vpop.f32.mrf.mxu0
        %v1656 = vadd.f32 0.0, %v1655
        %1657 = vmatmul.bf16.gmra.mxu0 %v452
        %v1658 = vpop.f32.mrf.mxu0
        %v1659 = vadd.f32 0.0, %v1658
        %v1660 = vpop.f32.mrf.mxu0
        %v1661 = vadd.f32 0.0, %v1660
        %1662 = vmatmul.bf16.gmra.mxu0 %v453
        %v1663 = vpop.f32.mrf.mxu0
        %v1664 = vadd.f32 0.0, %v1663
        %v1665 = vpop.f32.mrf.mxu0
        %v1666 = vadd.f32 0.0, %v1665
        %1667 = vmatmul.bf16.gmra.mxu0 %v454
        %v1668 = vpop.f32.mrf.mxu0
        %v1669 = vadd.f32 0.0, %v1668
        %v1670 = vpop.f32.mrf.mxu0
        %v1671 = vadd.f32 0.0, %v1670
        %1672 = vdwg.mxu0
        %1673 = vmatpush.bf16.msra.mxu0 %v1031
        %1674 = vmatpush.bf16.msra.mxu0 %v1013
        %1675 = vmatpush.bf16.msra.mxu0 %v995
        %1676 = vmatpush.bf16.msra.mxu0 %v977
        %1677 = vmatpush.bf16.msra.mxu0 %v959
        %1678 = vmatpush.bf16.msra.mxu0 %v941
        %1679 = vmatpush.bf16.msra.mxu0 %v923
        %1680 = vmatpush.bf16.msra.mxu0 %v905
        %1681 = vmatmul.bf16.gmra.mxu0 %v447
        %v1682 = vpop.f32.mrf.mxu0
        %v1683 = vadd.f32 0.0, %v1682
        %v1684 = vpop.f32.mrf.mxu0
        %v1685 = vadd.f32 0.0, %v1684
        %1686 = vmatmul.bf16.gmra.mxu0 %v448
        %v1687 = vpop.f32.mrf.mxu0
        %v1688 = vadd.f32 0.0, %v1687
        %v1689 = vpop.f32.mrf.mxu0
        %v1690 = vadd.f32 0.0, %v1689
        %1691 = vmatmul.bf16.gmra.mxu0 %v449
        %v1692 = vpop.f32.mrf.mxu0
        %v1693 = vadd.f32 0.0, %v1692
        %v1694 = vpop.f32.mrf.mxu0
        %v1695 = vadd.f32 0.0, %v1694
        %1696 = vmatmul.bf16.gmra.mxu0 %v450
        %v1697 = vpop.f32.mrf.mxu0
        %v1698 = vadd.f32 0.0, %v1697
        %v1699 = vpop.f32.mrf.mxu0
        %v1700 = vadd.f32 0.0, %v1699
        %1701 = vmatmul.bf16.gmra.mxu0 %v451
        %v1702 = vpop.f32.mrf.mxu0
        %v1703 = vadd.f32 0.0, %v1702
        %v1704 = vpop.f32.mrf.mxu0
        %v1705 = vadd.f32 0.0, %v1704
        %1706 = vmatmul.bf16.gmra.mxu0 %v452
        %v1707 = vpop.f32.mrf.mxu0
        %v1708 = vadd.f32 0.0, %v1707
        %v1709 = vpop.f32.mrf.mxu0
        %v1710 = vadd.f32 0.0, %v1709
        %1711 = vmatmul.bf16.gmra.mxu0 %v453
        %v1712 = vpop.f32.mrf.mxu0
        %v1713 = vadd.f32 0.0, %v1712
        %v1714 = vpop.f32.mrf.mxu0
        %v1715 = vadd.f32 0.0, %v1714
        %1716 = vmatmul.bf16.gmra.mxu0 %v454
        %v1717 = vpop.f32.mrf.mxu0
        %v1718 = vadd.f32 0.0, %v1717
        %v1719 = vpop.f32.mrf.mxu0
        %v1720 = vadd.f32 0.0, %v1719
        %1721 = vdwg.mxu0
        %1722 = vmatpush.bf16.msra.mxu0 %v1032
        %1723 = vmatpush.bf16.msra.mxu0 %v1014
        %1724 = vmatpush.bf16.msra.mxu0 %v996
        %1725 = vmatpush.bf16.msra.mxu0 %v978
        %1726 = vmatpush.bf16.msra.mxu0 %v960
        %1727 = vmatpush.bf16.msra.mxu0 %v942
        %1728 = vmatpush.bf16.msra.mxu0 %v924
        %1729 = vmatpush.bf16.msra.mxu0 %v906
        %1730 = vmatmul.bf16.gmra.mxu0 %v447
        %v1731 = vpop.f32.mrf.mxu0
        %v1732 = vadd.f32 0.0, %v1731
        %v1733 = vpop.f32.mrf.mxu0
        %v1734 = vadd.f32 0.0, %v1733
        %1735 = vmatmul.bf16.gmra.mxu0 %v448
        %v1736 = vpop.f32.mrf.mxu0
        %v1737 = vadd.f32 0.0, %v1736
        %v1738 = vpop.f32.mrf.mxu0
        %v1739 = vadd.f32 0.0, %v1738
        %1740 = vmatmul.bf16.gmra.mxu0 %v449
        %v1741 = vpop.f32.mrf.mxu0
        %v1742 = vadd.f32 0.0, %v1741
        %v1743 = vpop.f32.mrf.mxu0
        %v1744 = vadd.f32 0.0, %v1743
        %1745 = vmatmul.bf16.gmra.mxu0 %v450
        %v1746 = vpop.f32.mrf.mxu0
        %v1747 = vadd.f32 0.0, %v1746
        %v1748 = vpop.f32.mrf.mxu0
        %v1749 = vadd.f32 0.0, %v1748
        %1750 = vmatmul.bf16.gmra.mxu0 %v451
        %v1751 = vpop.f32.mrf.mxu0
        %v1752 = vadd.f32 0.0, %v1751
        %v1753 = vpop.f32.mrf.mxu0
        %v1754 = vadd.f32 0.0, %v1753
        %1755 = vmatmul.bf16.gmra.mxu0 %v452
        %v1756 = vpop.f32.mrf.mxu0
        %v1757 = vadd.f32 0.0, %v1756
        %v1758 = vpop.f32.mrf.mxu0
        %v1759 = vadd.f32 0.0, %v1758
        %1760 = vmatmul.bf16.gmra.mxu0 %v453
        %v1761 = vpop.f32.mrf.mxu0
        %v1762 = vadd.f32 0.0, %v1761
        %v1763 = vpop.f32.mrf.mxu0
        %v1764 = vadd.f32 0.0, %v1763
        %1765 = vmatmul.bf16.gmra.mxu0 %v454
        %v1766 = vpop.f32.mrf.mxu0
        %v1767 = vadd.f32 0.0, %v1766
        %v1768 = vpop.f32.mrf.mxu0
        %v1769 = vadd.f32 0.0, %v1768
        %1770 = vdwg.mxu0
        %1771 = vmatpush.bf16.msra.mxu0 %v1033
        %1772 = vmatpush.bf16.msra.mxu0 %v1015
        %1773 = vmatpush.bf16.msra.mxu0 %v997
        %1774 = vmatpush.bf16.msra.mxu0 %v979
        %1775 = vmatpush.bf16.msra.mxu0 %v961
        %1776 = vmatpush.bf16.msra.mxu0 %v943
        %1777 = vmatpush.bf16.msra.mxu0 %v925
        %1778 = vmatpush.bf16.msra.mxu0 %v907
        %1779 = vmatmul.bf16.gmra.mxu0 %v447
        %v1780 = vpop.f32.mrf.mxu0
        %v1781 = vadd.f32 0.0, %v1780
        %v1782 = vpop.f32.mrf.mxu0
        %v1783 = vadd.f32 0.0, %v1782
        %1784 = vmatmul.bf16.gmra.mxu0 %v448
        %v1785 = vpop.f32.mrf.mxu0
        %v1786 = vadd.f32 0.0, %v1785
        %v1787 = vpop.f32.mrf.mxu0
        %v1788 = vadd.f32 0.0, %v1787
        %1789 = vmatmul.bf16.gmra.mxu0 %v449
        %v1790 = vpop.f32.mrf.mxu0
        %v1791 = vadd.f32 0.0, %v1790
        %v1792 = vpop.f32.mrf.mxu0
        %v1793 = vadd.f32 0.0, %v1792
        %1794 = vmatmul.bf16.gmra.mxu0 %v450
        %v1795 = vpop.f32.mrf.mxu0
        %v1796 = vadd.f32 0.0, %v1795
        %v1797 = vpop.f32.mrf.mxu0
        %v1798 = vadd.f32 0.0, %v1797
        %1799 = vmatmul.bf16.gmra.mxu0 %v451
        %v1800 = vpop.f32.mrf.mxu0
        %v1801 = vadd.f32 0.0, %v1800
        %v1802 = vpop.f32.mrf.mxu0
        %v1803 = vadd.f32 0.0, %v1802
        %1804 = vmatmul.bf16.gmra.mxu0 %v452
        %v1805 = vpop.f32.mrf.mxu0
        %v1806 = vadd.f32 0.0, %v1805
        %v1807 = vpop.f32.mrf.mxu0
        %v1808 = vadd.f32 0.0, %v1807
        %1809 = vmatmul.bf16.gmra.mxu0 %v453
        %v1810 = vpop.f32.mrf.mxu0
        %v1811 = vadd.f32 0.0, %v1810
        %v1812 = vpop.f32.mrf.mxu0
        %v1813 = vadd.f32 0.0, %v1812
        %1814 = vmatmul.bf16.gmra.mxu0 %v454
        %v1815 = vpop.f32.mrf.mxu0
        %v1816 = vadd.f32 0.0, %v1815
        %v1817 = vpop.f32.mrf.mxu0
        %v1818 = vadd.f32 0.0, %v1817
        %1819 = vdwg.mxu0
        %1820 = vmatpush.bf16.msra.mxu0 %v1034
        %1821 = vmatpush.bf16.msra.mxu0 %v1016
        %1822 = vmatpush.bf16.msra.mxu0 %v998
        %1823 = vmatpush.bf16.msra.mxu0 %v980
        %1824 = vmatpush.bf16.msra.mxu0 %v962
        %1825 = vmatpush.bf16.msra.mxu0 %v944
        %1826 = vmatpush.bf16.msra.mxu0 %v926
        %1827 = vmatpush.bf16.msra.mxu0 %v908
        %1828 = vmatmul.bf16.gmra.mxu0 %v447
        %v1829 = vpop.f32.mrf.mxu0
        %v1830 = vadd.f32 0.0, %v1829
        %v1831 = vpop.f32.mrf.mxu0
        %v1832 = vadd.f32 0.0, %v1831
        %1833 = vmatmul.bf16.gmra.mxu0 %v448
        %v1834 = vpop.f32.mrf.mxu0
        %v1835 = vadd.f32 0.0, %v1834
        %v1836 = vpop.f32.mrf.mxu0
        %v1837 = vadd.f32 0.0, %v1836
        %1838 = vmatmul.bf16.gmra.mxu0 %v449
        %v1839 = vpop.f32.mrf.mxu0
        %v1840 = vadd.f32 0.0, %v1839
        %v1841 = vpop.f32.mrf.mxu0
        %v1842 = vadd.f32 0.0, %v1841
        %1843 = vmatmul.bf16.gmra.mxu0 %v450
        %v1844 = vpop.f32.mrf.mxu0
        %v1845 = vadd.f32 0.0, %v1844
        %v1846 = vpop.f32.mrf.mxu0
        %v1847 = vadd.f32 0.0, %v1846
        %1848 = vmatmul.bf16.gmra.mxu0 %v451
        %v1849 = vpop.f32.mrf.mxu0
        %v1850 = vadd.f32 0.0, %v1849
        %v1851 = vpop.f32.mrf.mxu0
        %v1852 = vadd.f32 0.0, %v1851
        %1853 = vmatmul.bf16.gmra.mxu0 %v452
        %v1854 = vpop.f32.mrf.mxu0
        %v1855 = vadd.f32 0.0, %v1854
        %v1856 = vpop.f32.mrf.mxu0
        %v1857 = vadd.f32 0.0, %v1856
        %1858 = vmatmul.bf16.gmra.mxu0 %v453
        %v1859 = vpop.f32.mrf.mxu0
        %v1860 = vadd.f32 0.0, %v1859
        %v1861 = vpop.f32.mrf.mxu0
        %v1862 = vadd.f32 0.0, %v1861
        %1863 = vmatmul.bf16.gmra.mxu0 %v454
        %v1864 = vpop.f32.mrf.mxu0
        %v1865 = vadd.f32 0.0, %v1864
        %v1866 = vpop.f32.mrf.mxu0
        %v1867 = vadd.f32 0.0, %v1866
        %1868 = vdwg.mxu0
        %1869 = vmatpush.bf16.msra.mxu0 %v1035
        %1870 = vmatpush.bf16.msra.mxu0 %v1017
        %1871 = vmatpush.bf16.msra.mxu0 %v999
        %1872 = vmatpush.bf16.msra.mxu0 %v981
        %1873 = vmatpush.bf16.msra.mxu0 %v963
        %1874 = vmatpush.bf16.msra.mxu0 %v945
        %1875 = vmatpush.bf16.msra.mxu0 %v927
        %1876 = vmatpush.bf16.msra.mxu0 %v909
        %1877 = vmatmul.bf16.gmra.mxu0 %v447
        %v1878 = vpop.f32.mrf.mxu0
        %v1879 = vadd.f32 0.0, %v1878
        %v1880 = vpop.f32.mrf.mxu0
        %v1881 = vadd.f32 0.0, %v1880
        %1882 = vmatmul.bf16.gmra.mxu0 %v448
        %v1883 = vpop.f32.mrf.mxu0
        %v1884 = vadd.f32 0.0, %v1883
        %v1885 = vpop.f32.mrf.mxu0
        %v1886 = vadd.f32 0.0, %v1885
        %1887 = vmatmul.bf16.gmra.mxu0 %v449
        %v1888 = vpop.f32.mrf.mxu0
        %v1889 = vadd.f32 0.0, %v1888
        %v1890 = vpop.f32.mrf.mxu0
        %v1891 = vadd.f32 0.0, %v1890
        %1892 = vmatmul.bf16.gmra.mxu0 %v450
        %v1893 = vpop.f32.mrf.mxu0
        %v1894 = vadd.f32 0.0, %v1893
        %v1895 = vpop.f32.mrf.mxu0
        %v1896 = vadd.f32 0.0, %v1895
        %1897 = vmatmul.bf16.gmra.mxu0 %v451
        %v1898 = vpop.f32.mrf.mxu0
        %v1899 = vadd.f32 0.0, %v1898
        %v1900 = vpop.f32.mrf.mxu0
        %v1901 = vadd.f32 0.0, %v1900
        %1902 = vmatmul.bf16.gmra.mxu0 %v452
        %v1903 = vpop.f32.mrf.mxu0
        %v1904 = vadd.f32 0.0, %v1903
        %v1905 = vpop.f32.mrf.mxu0
        %v1906 = vadd.f32 0.0, %v1905
        %1907 = vmatmul.bf16.gmra.mxu0 %v453
        %v1908 = vpop.f32.mrf.mxu0
        %v1909 = vadd.f32 0.0, %v1908
        %v1910 = vpop.f32.mrf.mxu0
        %v1911 = vadd.f32 0.0, %v1910
        %1912 = vmatmul.bf16.gmra.mxu0 %v454
        %v1913 = vpop.f32.mrf.mxu0
        %v1914 = vadd.f32 0.0, %v1913
        %v1915 = vpop.f32.mrf.mxu0
        %v1916 = vadd.f32 0.0, %v1915
        %1917 = vdwg.mxu0
        %1918 = vmatpush.bf16.msra.mxu0 %v1036
        %1919 = vmatpush.bf16.msra.mxu0 %v1018
        %1920 = vmatpush.bf16.msra.mxu0 %v1000
        %1921 = vmatpush.bf16.msra.mxu0 %v982
        %1922 = vmatpush.bf16.msra.mxu0 %v964
        %1923 = vmatpush.bf16.msra.mxu0 %v946
        %1924 = vmatpush.bf16.msra.mxu0 %v928
        %1925 = vmatpush.bf16.msra.mxu0 %v910
        %1926 = vmatmul.bf16.gmra.mxu0 %v447
        %v1927 = vpop.f32.mrf.mxu0
        %v1928 = vadd.f32 0.0, %v1927
        %v1929 = vpop.f32.mrf.mxu0
        %v1930 = vadd.f32 0.0, %v1929
        %1931 = vmatmul.bf16.gmra.mxu0 %v448
        %v1932 = vpop.f32.mrf.mxu0
        %v1933 = vadd.f32 0.0, %v1932
        %v1934 = vpop.f32.mrf.mxu0
        %v1935 = vadd.f32 0.0, %v1934
        %1936 = vmatmul.bf16.gmra.mxu0 %v449
        %v1937 = vpop.f32.mrf.mxu0
        %v1938 = vadd.f32 0.0, %v1937
        %v1939 = vpop.f32.mrf.mxu0
        %v1940 = vadd.f32 0.0, %v1939
        %1941 = vmatmul.bf16.gmra.mxu0 %v450
        %v1942 = vpop.f32.mrf.mxu0
        %v1943 = vadd.f32 0.0, %v1942
        %v1944 = vpop.f32.mrf.mxu0
        %v1945 = vadd.f32 0.0, %v1944
        %1946 = vmatmul.bf16.gmra.mxu0 %v451
        %v1947 = vpop.f32.mrf.mxu0
        %v1948 = vadd.f32 0.0, %v1947
        %v1949 = vpop.f32.mrf.mxu0
        %v1950 = vadd.f32 0.0, %v1949
        %1951 = vmatmul.bf16.gmra.mxu0 %v452
        %v1952 = vpop.f32.mrf.mxu0
        %v1953 = vadd.f32 0.0, %v1952
        %v1954 = vpop.f32.mrf.mxu0
        %v1955 = vadd.f32 0.0, %v1954
        %1956 = vmatmul.bf16.gmra.mxu0 %v453
        %v1957 = vpop.f32.mrf.mxu0
        %v1958 = vadd.f32 0.0, %v1957
        %v1959 = vpop.f32.mrf.mxu0
        %v1960 = vadd.f32 0.0, %v1959
        %1961 = vmatmul.bf16.gmra.mxu0 %v454
        %v1962 = vpop.f32.mrf.mxu0
        %v1963 = vadd.f32 0.0, %v1962
        %v1964 = vpop.f32.mrf.mxu0
        %v1965 = vadd.f32 0.0, %v1964
        %1966 = vdwg.mxu0
        %1967 = vmatpush.bf16.msra.mxu0 %v1037
        %1968 = vmatpush.bf16.msra.mxu0 %v1019
        %1969 = vmatpush.bf16.msra.mxu0 %v1001
        %1970 = vmatpush.bf16.msra.mxu0 %v983
        %1971 = vmatpush.bf16.msra.mxu0 %v965
        %1972 = vmatpush.bf16.msra.mxu0 %v947
        %1973 = vmatpush.bf16.msra.mxu0 %v929
        %1974 = vmatpush.bf16.msra.mxu0 %v911
        %1975 = vmatmul.bf16.gmra.mxu0 %v447
        %v1976 = vpop.f32.mrf.mxu0
        %v1977 = vadd.f32 0.0, %v1976
        %v1978 = vpop.f32.mrf.mxu0
        %v1979 = vadd.f32 0.0, %v1978
        %1980 = vmatmul.bf16.gmra.mxu0 %v448
        %v1981 = vpop.f32.mrf.mxu0
        %v1982 = vadd.f32 0.0, %v1981
        %v1983 = vpop.f32.mrf.mxu0
        %v1984 = vadd.f32 0.0, %v1983
        %1985 = vmatmul.bf16.gmra.mxu0 %v449
        %v1986 = vpop.f32.mrf.mxu0
        %v1987 = vadd.f32 0.0, %v1986
        %v1988 = vpop.f32.mrf.mxu0
        %v1989 = vadd.f32 0.0, %v1988
        %1990 = vmatmul.bf16.gmra.mxu0 %v450
        %v1991 = vpop.f32.mrf.mxu0
        %v1992 = vadd.f32 0.0, %v1991
        %v1993 = vpop.f32.mrf.mxu0
        %v1994 = vadd.f32 0.0, %v1993
        %1995 = vmatmul.bf16.gmra.mxu0 %v451
        %v1996 = vpop.f32.mrf.mxu0
        %v1997 = vadd.f32 0.0, %v1996
        %v1998 = vpop.f32.mrf.mxu0
        %v1999 = vadd.f32 0.0, %v1998
        %2000 = vmatmul.bf16.gmra.mxu0 %v452
        %v2001 = vpop.f32.mrf.mxu0
        %v2002 = vadd.f32 0.0, %v2001
        %v2003 = vpop.f32.mrf.mxu0
        %v2004 = vadd.f32 0.0, %v2003
        %2005 = vmatmul.bf16.gmra.mxu0 %v453
        %v2006 = vpop.f32.mrf.mxu0
        %v2007 = vadd.f32 0.0, %v2006
        %v2008 = vpop.f32.mrf.mxu0
        %v2009 = vadd.f32 0.0, %v2008
        %2010 = vmatmul.bf16.gmra.mxu0 %v454
        %v2011 = vpop.f32.mrf.mxu0
        %v2012 = vadd.f32 0.0, %v2011
        %v2013 = vpop.f32.mrf.mxu0
        %v2014 = vadd.f32 0.0, %v2013
        %2015 = vdwg.mxu0
        %2016 = vmatpush.bf16.msra.mxu0 %v1038
        %2017 = vmatpush.bf16.msra.mxu0 %v1020
        %2018 = vmatpush.bf16.msra.mxu0 %v1002
        %2019 = vmatpush.bf16.msra.mxu0 %v984
        %2020 = vmatpush.bf16.msra.mxu0 %v966
        %2021 = vmatpush.bf16.msra.mxu0 %v948
        %2022 = vmatpush.bf16.msra.mxu0 %v930
        %2023 = vmatpush.bf16.msra.mxu0 %v912
        %2024 = vmatmul.bf16.gmra.mxu0 %v447
        %v2025 = vpop.f32.mrf.mxu0
        %v2026 = vadd.f32 0.0, %v2025
        %v2027 = vpop.f32.mrf.mxu0
        %v2028 = vadd.f32 0.0, %v2027
        %2029 = vmatmul.bf16.gmra.mxu0 %v448
        %v2030 = vpop.f32.mrf.mxu0
        %v2031 = vadd.f32 0.0, %v2030
        %v2032 = vpop.f32.mrf.mxu0
        %v2033 = vadd.f32 0.0, %v2032
        %2034 = vmatmul.bf16.gmra.mxu0 %v449
        %v2035 = vpop.f32.mrf.mxu0
        %v2036 = vadd.f32 0.0, %v2035
        %v2037 = vpop.f32.mrf.mxu0
        %v2038 = vadd.f32 0.0, %v2037
        %2039 = vmatmul.bf16.gmra.mxu0 %v450
        %v2040 = vpop.f32.mrf.mxu0
        %v2041 = vadd.f32 0.0, %v2040
        %v2042 = vpop.f32.mrf.mxu0
        %v2043 = vadd.f32 0.0, %v2042
        %2044 = vmatmul.bf16.gmra.mxu0 %v451
        %v2045 = vpop.f32.mrf.mxu0
        %v2046 = vadd.f32 0.0, %v2045
        %v2047 = vpop.f32.mrf.mxu0
        %v2048 = vadd.f32 0.0, %v2047
        %2049 = vmatmul.bf16.gmra.mxu0 %v452
        %v2050 = vpop.f32.mrf.mxu0
        %v2051 = vadd.f32 0.0, %v2050
        %v2052 = vpop.f32.mrf.mxu0
        %v2053 = vadd.f32 0.0, %v2052
        %2054 = vmatmul.bf16.gmra.mxu0 %v453
        %v2055 = vpop.f32.mrf.mxu0
        %v2056 = vadd.f32 0.0, %v2055
        %v2057 = vpop.f32.mrf.mxu0
        %v2058 = vadd.f32 0.0, %v2057
        %2059 = vmatmul.bf16.gmra.mxu0 %v454
        %v2060 = vpop.f32.mrf.mxu0
        %v2061 = vadd.f32 0.0, %v2060
        %v2062 = vpop.f32.mrf.mxu0
        %v2063 = vadd.f32 0.0, %v2062
        %2064 = vdwg.mxu0
        %2065 = vst [vmem:[#allocation2] sm:$0xff] %v1193
        %2066 = vst [vmem:[#allocation2 + $0x8] sm:$0xff] %v1242
        %2067 = vst [vmem:[#allocation2 + $0x10] sm:$0xff] %v1291
        %2068 = vst [vmem:[#allocation2 + $0x18] sm:$0xff] %v1340
        %2069 = vst [vmem:[#allocation2 + $0x20] sm:$0xff] %v1389
        %2070 = vst [vmem:[#allocation2 + $0x28] sm:$0xff] %v1438
        %2071 = vst [vmem:[#allocation2 + $0x30] sm:$0xff] %v1487
        %2072 = vst [vmem:[#allocation2 + $0x38] sm:$0xff] %v1536
        %2073 = vst [vmem:[#allocation2 + $0x40] sm:$0xff] %v1585
        %2074 = vst [vmem:[#allocation2 + $0x48] sm:$0xff] %v1634
        %2075 = vst [vmem:[#allocation2 + $0x50] sm:$0xff] %v1683
        %2076 = vst [vmem:[#allocation2 + $0x58] sm:$0xff] %v1732
        %2077 = vst [vmem:[#allocation2 + $0x60] sm:$0xff] %v1781
        %2078 = vst [vmem:[#allocation2 + $0x68] sm:$0xff] %v1830
        %2079 = vst [vmem:[#allocation2 + $0x70] sm:$0xff] %v1879
        %2080 = vst [vmem:[#allocation2 + $0x78] sm:$0xff] %v1928
        %2081 = vst [vmem:[#allocation2 + $0x80] sm:$0xff] %v1977
        %2082 = vst [vmem:[#allocation2 + $0x88] sm:$0xff] %v2026
        %2083 = vst [vmem:[#allocation2 + $0x90] sm:$0xff] %v1195
        %2084 = vst [vmem:[#allocation2 + $0x98] sm:$0xff] %v1244
        %2085 = vst [vmem:[#allocation2 + $0xa0] sm:$0xff] %v1293
        %2086 = vst [vmem:[#allocation2 + $0xa8] sm:$0xff] %v1342
        %2087 = vst [vmem:[#allocation2 + $0xb0] sm:$0xff] %v1391
        %2088 = vst [vmem:[#allocation2 + $0xb8] sm:$0xff] %v1440
        %2089 = vst [vmem:[#allocation2 + $0xc0] sm:$0xff] %v1489
        %2090 = vst [vmem:[#allocation2 + $0xc8] sm:$0xff] %v1538
        %2091 = vst [vmem:[#allocation2 + $0xd0] sm:$0xff] %v1587
        %2092 = vst [vmem:[#allocation2 + $0xd8] sm:$0xff] %v1636
        %2093 = vst [vmem:[#allocation2 + $0xe0] sm:$0xff] %v1685
        %2094 = vst [vmem:[#allocation2 + $0xe8] sm:$0xff] %v1734
        %2095 = vst [vmem:[#allocation2 + $0xf0] sm:$0xff] %v1783
        %2096 = vst [vmem:[#allocation2 + $0xf8] sm:$0xff] %v1832
        %2097 = vst [vmem:[#allocation2 + $0x100] sm:$0xff] %v1881
        %2098 = vst [vmem:[#allocation2 + $0x108] sm:$0xff] %v1930
        %2099 = vst [vmem:[#allocation2 + $0x110] sm:$0xff] %v1979
        %2100 = vst [vmem:[#allocation2 + $0x118] sm:$0xff] %v2028
        %2101 = vst [vmem:[#allocation2 + $0x120] sm:$0xff] %v1198
        %2102 = vst [vmem:[#allocation2 + $0x128] sm:$0xff] %v1247
        %2103 = vst [vmem:[#allocation2 + $0x130] sm:$0xff] %v1296
        %2104 = vst [vmem:[#allocation2 + $0x138] sm:$0xff] %v1345
        %2105 = vst [vmem:[#allocation2 + $0x140] sm:$0xff] %v1394
        %2106 = vst [vmem:[#allocation2 + $0x148] sm:$0xff] %v1443
        %2107 = vst [vmem:[#allocation2 + $0x150] sm:$0xff] %v1492
        %2108 = vst [vmem:[#allocation2 + $0x158] sm:$0xff] %v1541
        %2109 = vst [vmem:[#allocation2 + $0x160] sm:$0xff] %v1590
        %2110 = vst [vmem:[#allocation2 + $0x168] sm:$0xff] %v1639
        %2111 = vst [vmem:[#allocation2 + $0x170] sm:$0xff] %v1688
        %2112 = vst [vmem:[#allocation2 + $0x178] sm:$0xff] %v1737
        %2113 = vst [vmem:[#allocation2 + $0x180] sm:$0xff] %v1786
        %2114 = vst [vmem:[#allocation2 + $0x188] sm:$0xff] %v1835
        %2115 = vst [vmem:[#allocation2 + $0x190] sm:$0xff] %v1884
        %2116 = vst [vmem:[#allocation2 + $0x198] sm:$0xff] %v1933
        %2117 = vst [vmem:[#allocation2 + $0x1a0] sm:$0xff] %v1982
        %2118 = vst [vmem:[#allocation2 + $0x1a8] sm:$0xff] %v2031
        %2119 = vst [vmem:[#allocation2 + $0x1b0] sm:$0xff] %v1200
        %2120 = vst [vmem:[#allocation2 + $0x1b8] sm:$0xff] %v1249
        %2121 = vst [vmem:[#allocation2 + $0x1c0] sm:$0xff] %v1298
        %2122 = vst [vmem:[#allocation2 + $0x1c8] sm:$0xff] %v1347
        %2123 = vst [vmem:[#allocation2 + $0x1d0] sm:$0xff] %v1396
        %2124 = vst [vmem:[#allocation2 + $0x1d8] sm:$0xff] %v1445
        %2125 = vst [vmem:[#allocation2 + $0x1e0] sm:$0xff] %v1494
        %2126 = vst [vmem:[#allocation2 + $0x1e8] sm:$0xff] %v1543
        %2127 = vst [vmem:[#allocation2 + $0x1f0] sm:$0xff] %v1592
        %2128 = vst [vmem:[#allocation2 + $0x1f8] sm:$0xff] %v1641
        %2129 = vst [vmem:[#allocation2 + $0x200] sm:$0xff] %v1690
        %2130 = vst [vmem:[#allocation2 + $0x208] sm:$0xff] %v1739
        %2131 = vst [vmem:[#allocation2 + $0x210] sm:$0xff] %v1788
        %2132 = vst [vmem:[#allocation2 + $0x218] sm:$0xff] %v1837
        %2133 = vst [vmem:[#allocation2 + $0x220] sm:$0xff] %v1886
        %2134 = vst [vmem:[#allocation2 + $0x228] sm:$0xff] %v1935
        %2135 = vst [vmem:[#allocation2 + $0x230] sm:$0xff] %v1984
        %2136 = vst [vmem:[#allocation2 + $0x238] sm:$0xff] %v2033
        %2137 = vst [vmem:[#allocation2 + $0x240] sm:$0xff] %v1203
        %2138 = vst [vmem:[#allocation2 + $0x248] sm:$0xff] %v1252
        %2139 = vst [vmem:[#allocation2 + $0x250] sm:$0xff] %v1301
        %2140 = vst [vmem:[#allocation2 + $0x258] sm:$0xff] %v1350
        %2141 = vst [vmem:[#allocation2 + $0x260] sm:$0xff] %v1399
        %2142 = vst [vmem:[#allocation2 + $0x268] sm:$0xff] %v1448
        %2143 = vst [vmem:[#allocation2 + $0x270] sm:$0xff] %v1497
        %2144 = vst [vmem:[#allocation2 + $0x278] sm:$0xff] %v1546
        %2145 = vst [vmem:[#allocation2 + $0x280] sm:$0xff] %v1595
        %2146 = vst [vmem:[#allocation2 + $0x288] sm:$0xff] %v1644
        %2147 = vst [vmem:[#allocation2 + $0x290] sm:$0xff] %v1693
        %2148 = vst [vmem:[#allocation2 + $0x298] sm:$0xff] %v1742
        %2149 = vst [vmem:[#allocation2 + $0x2a0] sm:$0xff] %v1791
        %2150 = vst [vmem:[#allocation2 + $0x2a8] sm:$0xff] %v1840
        %2151 = vst [vmem:[#allocation2 + $0x2b0] sm:$0xff] %v1889
        %2152 = vst [vmem:[#allocation2 + $0x2b8] sm:$0xff] %v1938
        %2153 = vst [vmem:[#allocation2 + $0x2c0] sm:$0xff] %v1987
        %2154 = vst [vmem:[#allocation2 + $0x2c8] sm:$0xff] %v2036
        %2155 = vst [vmem:[#allocation2 + $0x2d0] sm:$0xff] %v1205
        %2156 = vst [vmem:[#allocation2 + $0x2d8] sm:$0xff] %v1254
        %2157 = vst [vmem:[#allocation2 + $0x2e0] sm:$0xff] %v1303
        %2158 = vst [vmem:[#allocation2 + $0x2e8] sm:$0xff] %v1352
        %2159 = vst [vmem:[#allocation2 + $0x2f0] sm:$0xff] %v1401
        %2160 = vst [vmem:[#allocation2 + $0x2f8] sm:$0xff] %v1450
        %2161 = vst [vmem:[#allocation2 + $0x300] sm:$0xff] %v1499
        %2162 = vst [vmem:[#allocation2 + $0x308] sm:$0xff] %v1548
        %2163 = vst [vmem:[#allocation2 + $0x310] sm:$0xff] %v1597
        %2164 = vst [vmem:[#allocation2 + $0x318] sm:$0xff] %v1646
        %2165 = vst [vmem:[#allocation2 + $0x320] sm:$0xff] %v1695
        %2166 = vst [vmem:[#allocation2 + $0x328] sm:$0xff] %v1744
        %2167 = vst [vmem:[#allocation2 + $0x330] sm:$0xff] %v1793
        %2168 = vst [vmem:[#allocation2 + $0x338] sm:$0xff] %v1842
        %2169 = vst [vmem:[#allocation2 + $0x340] sm:$0xff] %v1891
        %2170 = vst [vmem:[#allocation2 + $0x348] sm:$0xff] %v1940
        %2171 = vst [vmem:[#allocation2 + $0x350] sm:$0xff] %v1989
        %2172 = vst [vmem:[#allocation2 + $0x358] sm:$0xff] %v2038
        %2173 = vst [vmem:[#allocation2 + $0x360] sm:$0xff] %v1208
        %2174 = vst [vmem:[#allocation2 + $0x368] sm:$0xff] %v1257
        %2175 = vst [vmem:[#allocation2 + $0x370] sm:$0xff] %v1306
        %2176 = vst [vmem:[#allocation2 + $0x378] sm:$0xff] %v1355
        %2177 = vst [vmem:[#allocation2 + $0x380] sm:$0xff] %v1404
        %2178 = vst [vmem:[#allocation2 + $0x388] sm:$0xff] %v1453
        %2179 = vst [vmem:[#allocation2 + $0x390] sm:$0xff] %v1502
        %2180 = vst [vmem:[#allocation2 + $0x398] sm:$0xff] %v1551
        %2181 = vst [vmem:[#allocation2 + $0x3a0] sm:$0xff] %v1600
        %2182 = vst [vmem:[#allocation2 + $0x3a8] sm:$0xff] %v1649
        %2183 = vst [vmem:[#allocation2 + $0x3b0] sm:$0xff] %v1698
        %2184 = vst [vmem:[#allocation2 + $0x3b8] sm:$0xff] %v1747
        %2185 = vst [vmem:[#allocation2 + $0x3c0] sm:$0xff] %v1796
        %2186 = vst [vmem:[#allocation2 + $0x3c8] sm:$0xff] %v1845
        %2187 = vst [vmem:[#allocation2 + $0x3d0] sm:$0xff] %v1894
        %2188 = vst [vmem:[#allocation2 + $0x3d8] sm:$0xff] %v1943
        %2189 = vst [vmem:[#allocation2 + $0x3e0] sm:$0xff] %v1992
        %2190 = vst [vmem:[#allocation2 + $0x3e8] sm:$0xff] %v2041
        %2191 = vst [vmem:[#allocation2 + $0x3f0] sm:$0xff] %v1210
        %2192 = vst [vmem:[#allocation2 + $0x3f8] sm:$0xff] %v1259
        %2193 = vst [vmem:[#allocation2 + $0x400] sm:$0xff] %v1308
        %2194 = vst [vmem:[#allocation2 + $0x408] sm:$0xff] %v1357
        %2195 = vst [vmem:[#allocation2 + $0x410] sm:$0xff] %v1406
        %2196 = vst [vmem:[#allocation2 + $0x418] sm:$0xff] %v1455
        %2197 = vst [vmem:[#allocation2 + $0x420] sm:$0xff] %v1504
        %2198 = vst [vmem:[#allocation2 + $0x428] sm:$0xff] %v1553
        %2199 = vst [vmem:[#allocation2 + $0x430] sm:$0xff] %v1602
        %2200 = vst [vmem:[#allocation2 + $0x438] sm:$0xff] %v1651
        %2201 = vst [vmem:[#allocation2 + $0x440] sm:$0xff] %v1700
        %2202 = vst [vmem:[#allocation2 + $0x448] sm:$0xff] %v1749
        %2203 = vst [vmem:[#allocation2 + $0x450] sm:$0xff] %v1798
        %2204 = vst [vmem:[#allocation2 + $0x458] sm:$0xff] %v1847
        %2205 = vst [vmem:[#allocation2 + $0x460] sm:$0xff] %v1896
        %2206 = vst [vmem:[#allocation2 + $0x468] sm:$0xff] %v1945
        %2207 = vst [vmem:[#allocation2 + $0x470] sm:$0xff] %v1994
        %2208 = vst [vmem:[#allocation2 + $0x478] sm:$0xff] %v2043
        %2209 = vst [vmem:[#allocation2 + $0x480] sm:$0xff] %v1213
        %2210 = vst [vmem:[#allocation2 + $0x488] sm:$0xff] %v1262
        %2211 = vst [vmem:[#allocation2 + $0x490] sm:$0xff] %v1311
        %2212 = vst [vmem:[#allocation2 + $0x498] sm:$0xff] %v1360
        %2213 = vst [vmem:[#allocation2 + $0x4a0] sm:$0xff] %v1409
        %2214 = vst [vmem:[#allocation2 + $0x4a8] sm:$0xff] %v1458
        %2215 = vst [vmem:[#allocation2 + $0x4b0] sm:$0xff] %v1507
        %2216 = vst [vmem:[#allocation2 + $0x4b8] sm:$0xff] %v1556
        %2217 = vst [vmem:[#allocation2 + $0x4c0] sm:$0xff] %v1605
        %2218 = vst [vmem:[#allocation2 + $0x4c8] sm:$0xff] %v1654
        %2219 = vst [vmem:[#allocation2 + $0x4d0] sm:$0xff] %v1703
        %2220 = vst [vmem:[#allocation2 + $0x4d8] sm:$0xff] %v1752
        %2221 = vst [vmem:[#allocation2 + $0x4e0] sm:$0xff] %v1801
        %2222 = vst [vmem:[#allocation2 + $0x4e8] sm:$0xff] %v1850
        %2223 = vst [vmem:[#allocation2 + $0x4f0] sm:$0xff] %v1899
        %2224 = vst [vmem:[#allocation2 + $0x4f8] sm:$0xff] %v1948
        %2225 = vst [vmem:[#allocation2 + $0x500] sm:$0xff] %v1997
        %2226 = vst [vmem:[#allocation2 + $0x508] sm:$0xff] %v2046
        %2227 = vst [vmem:[#allocation2 + $0x510] sm:$0xff] %v1215
        %2228 = vst [vmem:[#allocation2 + $0x518] sm:$0xff] %v1264
        %2229 = vst [vmem:[#allocation2 + $0x520] sm:$0xff] %v1313
        %2230 = vst [vmem:[#allocation2 + $0x528] sm:$0xff] %v1362
        %2231 = vst [vmem:[#allocation2 + $0x530] sm:$0xff] %v1411
        %2232 = vst [vmem:[#allocation2 + $0x538] sm:$0xff] %v1460
        %2233 = vst [vmem:[#allocation2 + $0x540] sm:$0xff] %v1509
        %2234 = vst [vmem:[#allocation2 + $0x548] sm:$0xff] %v1558
        %2235 = vst [vmem:[#allocation2 + $0x550] sm:$0xff] %v1607
        %2236 = vst [vmem:[#allocation2 + $0x558] sm:$0xff] %v1656
        %2237 = vst [vmem:[#allocation2 + $0x560] sm:$0xff] %v1705
        %2238 = vst [vmem:[#allocation2 + $0x568] sm:$0xff] %v1754
        %2239 = vst [vmem:[#allocation2 + $0x570] sm:$0xff] %v1803
        %2240 = vst [vmem:[#allocation2 + $0x578] sm:$0xff] %v1852
        %2241 = vst [vmem:[#allocation2 + $0x580] sm:$0xff] %v1901
        %2242 = vst [vmem:[#allocation2 + $0x588] sm:$0xff] %v1950
        %2243 = vst [vmem:[#allocation2 + $0x590] sm:$0xff] %v1999
        %2244 = vst [vmem:[#allocation2 + $0x598] sm:$0xff] %v2048
        %2245 = vst [vmem:[#allocation2 + $0x5a0] sm:$0xff] %v1218
        %2246 = vst [vmem:[#allocation2 + $0x5a8] sm:$0xff] %v1267
        %2247 = vst [vmem:[#allocation2 + $0x5b0] sm:$0xff] %v1316
        %2248 = vst [vmem:[#allocation2 + $0x5b8] sm:$0xff] %v1365
        %2249 = vst [vmem:[#allocation2 + $0x5c0] sm:$0xff] %v1414
        %2250 = vst [vmem:[#allocation2 + $0x5c8] sm:$0xff] %v1463
        %2251 = vst [vmem:[#allocation2 + $0x5d0] sm:$0xff] %v1512
        %2252 = vst [vmem:[#allocation2 + $0x5d8] sm:$0xff] %v1561
        %2253 = vst [vmem:[#allocation2 + $0x5e0] sm:$0xff] %v1610
        %2254 = vst [vmem:[#allocation2 + $0x5e8] sm:$0xff] %v1659
        %2255 = vst [vmem:[#allocation2 + $0x5f0] sm:$0xff] %v1708
        %2256 = vst [vmem:[#allocation2 + $0x5f8] sm:$0xff] %v1757
        %2257 = vst [vmem:[#allocation2 + $0x600] sm:$0xff] %v1806
        %2258 = vst [vmem:[#allocation2 + $0x608] sm:$0xff] %v1855
        %2259 = vst [vmem:[#allocation2 + $0x610] sm:$0xff] %v1904
        %2260 = vst [vmem:[#allocation2 + $0x618] sm:$0xff] %v1953
        %2261 = vst [vmem:[#allocation2 + $0x620] sm:$0xff] %v2002
        %2262 = vst [vmem:[#allocation2 + $0x628] sm:$0xff] %v2051
        %2263 = vst [vmem:[#allocation2 + $0x630] sm:$0xff] %v1220
        %2264 = vst [vmem:[#allocation2 + $0x638] sm:$0xff] %v1269
        %2265 = vst [vmem:[#allocation2 + $0x640] sm:$0xff] %v1318
        %2266 = vst [vmem:[#allocation2 + $0x648] sm:$0xff] %v1367
        %2267 = vst [vmem:[#allocation2 + $0x650] sm:$0xff] %v1416
        %2268 = vst [vmem:[#allocation2 + $0x658] sm:$0xff] %v1465
        %2269 = vst [vmem:[#allocation2 + $0x660] sm:$0xff] %v1514
        %2270 = vst [vmem:[#allocation2 + $0x668] sm:$0xff] %v1563
        %2271 = vst [vmem:[#allocation2 + $0x670] sm:$0xff] %v1612
        %2272 = vst [vmem:[#allocation2 + $0x678] sm:$0xff] %v1661
        %2273 = vst [vmem:[#allocation2 + $0x680] sm:$0xff] %v1710
        %2274 = vst [vmem:[#allocation2 + $0x688] sm:$0xff] %v1759
        %2275 = vst [vmem:[#allocation2 + $0x690] sm:$0xff] %v1808
        %2276 = vst [vmem:[#allocation2 + $0x698] sm:$0xff] %v1857
        %2277 = vst [vmem:[#allocation2 + $0x6a0] sm:$0xff] %v1906
        %2278 = vst [vmem:[#allocation2 + $0x6a8] sm:$0xff] %v1955
        %2279 = vst [vmem:[#allocation2 + $0x6b0] sm:$0xff] %v2004
        %2280 = vst [vmem:[#allocation2 + $0x6b8] sm:$0xff] %v2053
        %2281 = vst [vmem:[#allocation2 + $0x6c0] sm:$0xff] %v1223
        %2282 = vst [vmem:[#allocation2 + $0x6c8] sm:$0xff] %v1272
        %2283 = vst [vmem:[#allocation2 + $0x6d0] sm:$0xff] %v1321
        %2284 = vst [vmem:[#allocation2 + $0x6d8] sm:$0xff] %v1370
        %2285 = vst [vmem:[#allocation2 + $0x6e0] sm:$0xff] %v1419
        %2286 = vst [vmem:[#allocation2 + $0x6e8] sm:$0xff] %v1468
        %2287 = vst [vmem:[#allocation2 + $0x6f0] sm:$0xff] %v1517
        %2288 = vst [vmem:[#allocation2 + $0x6f8] sm:$0xff] %v1566
        %2289 = vst [vmem:[#allocation2 + $0x700] sm:$0xff] %v1615
        %2290 = vst [vmem:[#allocation2 + $0x708] sm:$0xff] %v1664
        %2291 = vst [vmem:[#allocation2 + $0x710] sm:$0xff] %v1713
        %2292 = vst [vmem:[#allocation2 + $0x718] sm:$0xff] %v1762
        %2293 = vst [vmem:[#allocation2 + $0x720] sm:$0xff] %v1811
        %2294 = vst [vmem:[#allocation2 + $0x728] sm:$0xff] %v1860
        %2295 = vst [vmem:[#allocation2 + $0x730] sm:$0xff] %v1909
        %2296 = vst [vmem:[#allocation2 + $0x738] sm:$0xff] %v1958
        %2297 = vst [vmem:[#allocation2 + $0x740] sm:$0xff] %v2007
        %2298 = vst [vmem:[#allocation2 + $0x748] sm:$0xff] %v2056
        %2299 = vst [vmem:[#allocation2 + $0x750] sm:$0xff] %v1225
        %2300 = vst [vmem:[#allocation2 + $0x758] sm:$0xff] %v1274
        %2301 = vst [vmem:[#allocation2 + $0x760] sm:$0xff] %v1323
        %2302 = vst [vmem:[#allocation2 + $0x768] sm:$0xff] %v1372
        %2303 = vst [vmem:[#allocation2 + $0x770] sm:$0xff] %v1421
        %2304 = vst [vmem:[#allocation2 + $0x778] sm:$0xff] %v1470
        %2305 = vst [vmem:[#allocation2 + $0x780] sm:$0xff] %v1519
        %2306 = vst [vmem:[#allocation2 + $0x788] sm:$0xff] %v1568
        %2307 = vst [vmem:[#allocation2 + $0x790] sm:$0xff] %v1617
        %2308 = vst [vmem:[#allocation2 + $0x798] sm:$0xff] %v1666
        %2309 = vst [vmem:[#allocation2 + $0x7a0] sm:$0xff] %v1715
        %2310 = vst [vmem:[#allocation2 + $0x7a8] sm:$0xff] %v1764
        %2311 = vst [vmem:[#allocation2 + $0x7b0] sm:$0xff] %v1813
        %2312 = vst [vmem:[#allocation2 + $0x7b8] sm:$0xff] %v1862
        %2313 = vst [vmem:[#allocation2 + $0x7c0] sm:$0xff] %v1911
        %2314 = vst [vmem:[#allocation2 + $0x7c8] sm:$0xff] %v1960
        %2315 = vst [vmem:[#allocation2 + $0x7d0] sm:$0xff] %v2009
        %2316 = vst [vmem:[#allocation2 + $0x7d8] sm:$0xff] %v2058
        %2317 = vst [vmem:[#allocation2 + $0x7e0] sm:$0xff] %v1228
        %2318 = vst [vmem:[#allocation2 + $0x7e8] sm:$0xff] %v1277
        %2319 = vst [vmem:[#allocation2 + $0x7f0] sm:$0xff] %v1326
        %2320 = vst [vmem:[#allocation2 + $0x7f8] sm:$0xff] %v1375
        %2321 = vst [vmem:[#allocation2 + $0x800] sm:$0xff] %v1424
        %2322 = vst [vmem:[#allocation2 + $0x808] sm:$0xff] %v1473
        %2323 = vst [vmem:[#allocation2 + $0x810] sm:$0xff] %v1522
        %2324 = vst [vmem:[#allocation2 + $0x818] sm:$0xff] %v1571
        %2325 = vst [vmem:[#allocation2 + $0x820] sm:$0xff] %v1620
        %2326 = vst [vmem:[#allocation2 + $0x828] sm:$0xff] %v1669
        %2327 = vst [vmem:[#allocation2 + $0x830] sm:$0xff] %v1718
        %2328 = vst [vmem:[#allocation2 + $0x838] sm:$0xff] %v1767
        %2329 = vst [vmem:[#allocation2 + $0x840] sm:$0xff] %v1816
        %2330 = vst [vmem:[#allocation2 + $0x848] sm:$0xff] %v1865
        %2331 = vst [vmem:[#allocation2 + $0x850] sm:$0xff] %v1914
        %2332 = vst [vmem:[#allocation2 + $0x858] sm:$0xff] %v1963
        %2333 = vst [vmem:[#allocation2 + $0x860] sm:$0xff] %v2012
        %2334 = vst [vmem:[#allocation2 + $0x868] sm:$0xff] %v2061
        %2335 = vst [vmem:[#allocation2 + $0x870] sm:$0xff] %v1230
        %2336 = vst [vmem:[#allocation2 + $0x878] sm:$0xff] %v1279
        %2337 = vst [vmem:[#allocation2 + $0x880] sm:$0xff] %v1328
        %2338 = vst [vmem:[#allocation2 + $0x888] sm:$0xff] %v1377
        %2339 = vst [vmem:[#allocation2 + $0x890] sm:$0xff] %v1426
        %2340 = vst [vmem:[#allocation2 + $0x898] sm:$0xff] %v1475
        %2341 = vst [vmem:[#allocation2 + $0x8a0] sm:$0xff] %v1524
        %2342 = vst [vmem:[#allocation2 + $0x8a8] sm:$0xff] %v1573
        %2343 = vst [vmem:[#allocation2 + $0x8b0] sm:$0xff] %v1622
        %2344 = vst [vmem:[#allocation2 + $0x8b8] sm:$0xff] %v1671
        %2345 = vst [vmem:[#allocation2 + $0x8c0] sm:$0xff] %v1720
        %2346 = vst [vmem:[#allocation2 + $0x8c8] sm:$0xff] %v1769
        %2347 = vst [vmem:[#allocation2 + $0x8d0] sm:$0xff] %v1818
        %2348 = vst [vmem:[#allocation2 + $0x8d8] sm:$0xff] %v1867
        %2349 = vst [vmem:[#allocation2 + $0x8e0] sm:$0xff] %v1916
        %2350 = vst [vmem:[#allocation2 + $0x8e8] sm:$0xff] %v1965
        %2351 = vst [vmem:[#allocation2 + $0x8f0] sm:$0xff] %v2014
        %2352 = vst [vmem:[#allocation2 + $0x8f8] sm:$0xff] %v2063
        %v2353 = vld [vmem:[#allocation2] sm:$0xff]
        %v2354 = vld [vmem:[#allocation2 + $0x90] sm:$0xff]
        %v2355 = vld [vmem:[#allocation2 + $0x120] sm:$0xff]
        %v2356 = vld [vmem:[#allocation2 + $0x1b0] sm:$0xff]
        %v2357 = vld [vmem:[#allocation2 + $0x240] sm:$0xff]
        %v2358 = vld [vmem:[#allocation2 + $0x2d0] sm:$0xff]
        %v2359 = vld [vmem:[#allocation2 + $0x360] sm:$0xff]
        %v2360 = vld [vmem:[#allocation2 + $0x3f0] sm:$0xff]
        %v2361 = vld [vmem:[#allocation2 + $0x480] sm:$0xff]
        %v2362 = vld [vmem:[#allocation2 + $0x510] sm:$0xff]
        %v2363 = vld [vmem:[#allocation2 + $0x5a0] sm:$0xff]
        %v2364 = vld [vmem:[#allocation2 + $0x630] sm:$0xff]
        %v2365 = vld [vmem:[#allocation2 + $0x6c0] sm:$0xff]
        %v2366 = vld [vmem:[#allocation2 + $0x750] sm:$0xff]
        %v2367 = vld [vmem:[#allocation2 + $0x7e0] sm:$0xff]
        %v2368 = vld [vmem:[#allocation2 + $0x870] sm:$0xff]
        %v2369 = vld [vmem:[#allocation2 + $0x8] sm:$0xff]
        %v2370 = vld [vmem:[#allocation2 + $0x98] sm:$0xff]
        %v2371 = vld [vmem:[#allocation2 + $0x128] sm:$0xff]
        %v2372 = vld [vmem:[#allocation2 + $0x1b8] sm:$0xff]
        %v2373 = vld [vmem:[#allocation2 + $0x248] sm:$0xff]
        %v2374 = vld [vmem:[#allocation2 + $0x2d8] sm:$0xff]
        %v2375 = vld [vmem:[#allocation2 + $0x368] sm:$0xff]
        %v2376 = vld [vmem:[#allocation2 + $0x3f8] sm:$0xff]
        %v2377 = vld [vmem:[#allocation2 + $0x488] sm:$0xff]
        %v2378 = vld [vmem:[#allocation2 + $0x518] sm:$0xff]
        %v2379 = vld [vmem:[#allocation2 + $0x5a8] sm:$0xff]
        %v2380 = vld [vmem:[#allocation2 + $0x638] sm:$0xff]
        %v2381 = vld [vmem:[#allocation2 + $0x6c8] sm:$0xff]
        %v2382 = vld [vmem:[#allocation2 + $0x758] sm:$0xff]
        %v2383 = vld [vmem:[#allocation2 + $0x7e8] sm:$0xff]
        %v2384 = vld [vmem:[#allocation2 + $0x878] sm:$0xff]
        %v2385 = vld [vmem:[%s252] sm:$0xff]
        %v2386 = vld [vmem:[%s252 + $0x8] sm:$0xff]
        %v2387 = vld [vmem:[%s252 + $0x10] sm:$0xff]
        %v2388 = vld [vmem:[%s252 + $0x18] sm:$0xff]
        %v2389 = vld [vmem:[%s252 + $0x20] sm:$0xff]
        %v2390 = vld [vmem:[%s252 + $0x28] sm:$0xff]
        %v2391 = vld [vmem:[%s252 + $0x30] sm:$0xff]
        %v2392 = vld [vmem:[%s252 + $0x38] sm:$0xff]
        %v2393 = vld [vmem:[%s252 + $0x40] sm:$0xff]
        %v2394 = vld [vmem:[%s252 + $0x48] sm:$0xff]
        %v2395 = vld [vmem:[%s252 + $0x50] sm:$0xff]
        %v2396 = vld [vmem:[%s252 + $0x58] sm:$0xff]
        %v2397 = vld [vmem:[%s252 + $0x60] sm:$0xff]
        %v2398 = vld [vmem:[%s252 + $0x68] sm:$0xff]
        %v2399 = vld [vmem:[%s252 + $0x70] sm:$0xff]
        %v2400 = vld [vmem:[%s252 + $0x78] sm:$0xff]
        %v2401 = vxor.u32 %v2353, 2147483648
        %v2402 = vxor.u32 %v2354, 2147483648
        %v2403 = vxor.u32 %v2355, 2147483648
        %v2404 = vxor.u32 %v2356, 2147483648
        %v2405 = vxor.u32 %v2357, 2147483648
        %v2406 = vxor.u32 %v2358, 2147483648
        %v2407 = vxor.u32 %v2359, 2147483648
        %v2408 = vxor.u32 %v2360, 2147483648
        %v2409 = vxor.u32 %v2361, 2147483648
        %v2410 = vxor.u32 %v2362, 2147483648
        %v2411 = vxor.u32 %v2363, 2147483648
        %v2412 = vxor.u32 %v2364, 2147483648
        %v2413 = vxor.u32 %v2365, 2147483648
        %v2414 = vxor.u32 %v2366, 2147483648
        %v2415 = vxor.u32 %v2367, 2147483648
        %v2416 = vxor.u32 %v2368, 2147483648
        %v2417 = vmul.f32 %v2401, 1.442695
        %v2418 = vpow.pop %v2417
        %v2419 = vmul.f32 %v2402, 1.442695
        %v2420 = vpow.pop %v2419
        %v2421 = vmul.f32 %v2403, 1.442695
        %v2422 = vpow.pop %v2421
        %v2423 = vmul.f32 %v2404, 1.442695
        %v2424 = vpow.pop %v2423
        %v2425 = vmul.f32 %v2405, 1.442695
        %v2426 = vpow.pop %v2425
        %v2427 = vmul.f32 %v2406, 1.442695
        %v2428 = vpow.pop %v2427
        %v2429 = vmul.f32 %v2407, 1.442695
        %v2430 = vpow.pop %v2429
        %v2431 = vmul.f32 %v2408, 1.442695
        %v2432 = vpow.pop %v2431
        %v2433 = vmul.f32 %v2409, 1.442695
        %v2434 = vpow.pop %v2433
        %v2435 = vmul.f32 %v2410, 1.442695
        %v2436 = vpow.pop %v2435
        %v2437 = vmul.f32 %v2411, 1.442695
        %v2438 = vpow.pop %v2437
        %v2439 = vmul.f32 %v2412, 1.442695
        %v2440 = vpow.pop %v2439
        %v2441 = vmul.f32 %v2413, 1.442695
        %v2442 = vpow.pop %v2441
        %v2443 = vmul.f32 %v2414, 1.442695
        %v2444 = vpow.pop %v2443
        %v2445 = vmul.f32 %v2415, 1.442695
        %v2446 = vpow.pop %v2445
        %v2447 = vmul.f32 %v2416, 1.442695
        %v2448 = vpow.pop %v2447
        %v2449 = vadd.f32 %v2418, 1.0
        %v2450 = vadd.f32 %v2420, 1.0
        %v2451 = vadd.f32 %v2422, 1.0
        %v2452 = vadd.f32 %v2424, 1.0
        %v2453 = vadd.f32 %v2426, 1.0
        %v2454 = vadd.f32 %v2428, 1.0
        %v2455 = vadd.f32 %v2430, 1.0
        %v2456 = vadd.f32 %v2432, 1.0
        %v2457 = vadd.f32 %v2434, 1.0
        %v2458 = vadd.f32 %v2436, 1.0
        %v2459 = vadd.f32 %v2438, 1.0
        %v2460 = vadd.f32 %v2440, 1.0
        %v2461 = vadd.f32 %v2442, 1.0
        %v2462 = vadd.f32 %v2444, 1.0
        %v2463 = vadd.f32 %v2446, 1.0
        %v2464 = vadd.f32 %v2448, 1.0
        %v2465 = vrcp.pop %v2449
        %v2466 = vmul.f32 %v2449, %v2465
        %v2467 = vsub.f32 1.0, %v2466
        %v2468 = vmul.f32 %v2465, %v2467
        %v2469 = vadd.f32 %v2465, %v2468
        %vm2470 = vweird.f32 %v2449
        %vm2471 = vweird.f32 %v2465
        %vm2472 = vmor %vm2470, %vm2471
        %v2473 = vsel %vm2472, %v2465, %v2469
        %v2474 = vand.u32 2147483647, %v2449
        %vm2475 = vcmp.eq.f32.partialorder %v2474, 8.507059e+37
        %v2476 = vand.u32 %v2449, 2147483648
        %v2477 = vor.u32 1.1754944e-38, %v2476
        %v2478 = vsel %vm2475, %v2477, %v2473
        %v2479 = vmul.f32 1.0, %v2478
        %v2480 = vrcp.pop %v2450
        %v2481 = vmul.f32 %v2450, %v2480
        %v2482 = vsub.f32 1.0, %v2481
        %v2483 = vmul.f32 %v2480, %v2482
        %v2484 = vadd.f32 %v2480, %v2483
        %vm2485 = vweird.f32 %v2450
        %vm2486 = vweird.f32 %v2480
        %vm2487 = vmor %vm2485, %vm2486
        %v2488 = vsel %vm2487, %v2480, %v2484
        %v2489 = vand.u32 2147483647, %v2450
        %vm2490 = vcmp.eq.f32.partialorder %v2489, 8.507059e+37
        %v2491 = vand.u32 %v2450, 2147483648
        %v2492 = vor.u32 1.1754944e-38, %v2491
        %v2493 = vsel %vm2490, %v2492, %v2488
        %v2494 = vmul.f32 1.0, %v2493
        %v2495 = vrcp.pop %v2451
        %v2496 = vmul.f32 %v2451, %v2495
        %v2497 = vsub.f32 1.0, %v2496
        %v2498 = vmul.f32 %v2495, %v2497
        %v2499 = vadd.f32 %v2495, %v2498
        %vm2500 = vweird.f32 %v2451
        %vm2501 = vweird.f32 %v2495
        %vm2502 = vmor %vm2500, %vm2501
        %v2503 = vsel %vm2502, %v2495, %v2499
        %v2504 = vand.u32 2147483647, %v2451
        %vm2505 = vcmp.eq.f32.partialorder %v2504, 8.507059e+37
        %v2506 = vand.u32 %v2451, 2147483648
        %v2507 = vor.u32 1.1754944e-38, %v2506
        %v2508 = vsel %vm2505, %v2507, %v2503
        %v2509 = vmul.f32 1.0, %v2508
        %v2510 = vrcp.pop %v2452
        %v2511 = vmul.f32 %v2452, %v2510
        %v2512 = vsub.f32 1.0, %v2511
        %v2513 = vmul.f32 %v2510, %v2512
        %v2514 = vadd.f32 %v2510, %v2513
        %vm2515 = vweird.f32 %v2452
        %vm2516 = vweird.f32 %v2510
        %vm2517 = vmor %vm2515, %vm2516
        %v2518 = vsel %vm2517, %v2510, %v2514
        %v2519 = vand.u32 2147483647, %v2452
        %vm2520 = vcmp.eq.f32.partialorder %v2519, 8.507059e+37
        %v2521 = vand.u32 %v2452, 2147483648
        %v2522 = vor.u32 1.1754944e-38, %v2521
        %v2523 = vsel %vm2520, %v2522, %v2518
        %v2524 = vmul.f32 1.0, %v2523
        %v2525 = vrcp.pop %v2453
        %v2526 = vmul.f32 %v2453, %v2525
        %v2527 = vsub.f32 1.0, %v2526
        %v2528 = vmul.f32 %v2525, %v2527
        %v2529 = vadd.f32 %v2525, %v2528
        %vm2530 = vweird.f32 %v2453
        %vm2531 = vweird.f32 %v2525
        %vm2532 = vmor %vm2530, %vm2531
        %v2533 = vsel %vm2532, %v2525, %v2529
        %v2534 = vand.u32 2147483647, %v2453
        %vm2535 = vcmp.eq.f32.partialorder %v2534, 8.507059e+37
        %v2536 = vand.u32 %v2453, 2147483648
        %v2537 = vor.u32 1.1754944e-38, %v2536
        %v2538 = vsel %vm2535, %v2537, %v2533
        %v2539 = vmul.f32 1.0, %v2538
        %v2540 = vrcp.pop %v2454
        %v2541 = vmul.f32 %v2454, %v2540
        %v2542 = vsub.f32 1.0, %v2541
        %v2543 = vmul.f32 %v2540, %v2542
        %v2544 = vadd.f32 %v2540, %v2543
        %vm2545 = vweird.f32 %v2454
        %vm2546 = vweird.f32 %v2540
        %vm2547 = vmor %vm2545, %vm2546
        %v2548 = vsel %vm2547, %v2540, %v2544
        %v2549 = vand.u32 2147483647, %v2454
        %vm2550 = vcmp.eq.f32.partialorder %v2549, 8.507059e+37
        %v2551 = vand.u32 %v2454, 2147483648
        %v2552 = vor.u32 1.1754944e-38, %v2551
        %v2553 = vsel %vm2550, %v2552, %v2548
        %v2554 = vmul.f32 1.0, %v2553
        %v2555 = vrcp.pop %v2455
        %v2556 = vmul.f32 %v2455, %v2555
        %v2557 = vsub.f32 1.0, %v2556
        %v2558 = vmul.f32 %v2555, %v2557
        %v2559 = vadd.f32 %v2555, %v2558
        %vm2560 = vweird.f32 %v2455
        %vm2561 = vweird.f32 %v2555
        %vm2562 = vmor %vm2560, %vm2561
        %v2563 = vsel %vm2562, %v2555, %v2559
        %v2564 = vand.u32 2147483647, %v2455
        %vm2565 = vcmp.eq.f32.partialorder %v2564, 8.507059e+37
        %v2566 = vand.u32 %v2455, 2147483648
        %v2567 = vor.u32 1.1754944e-38, %v2566
        %v2568 = vsel %vm2565, %v2567, %v2563
        %v2569 = vmul.f32 1.0, %v2568
        %v2570 = vrcp.pop %v2456
        %v2571 = vmul.f32 %v2456, %v2570
        %v2572 = vsub.f32 1.0, %v2571
        %v2573 = vmul.f32 %v2570, %v2572
        %v2574 = vadd.f32 %v2570, %v2573
        %vm2575 = vweird.f32 %v2456
        %vm2576 = vweird.f32 %v2570
        %vm2577 = vmor %vm2575, %vm2576
        %v2578 = vsel %vm2577, %v2570, %v2574
        %v2579 = vand.u32 2147483647, %v2456
        %vm2580 = vcmp.eq.f32.partialorder %v2579, 8.507059e+37
        %v2581 = vand.u32 %v2456, 2147483648
        %v2582 = vor.u32 1.1754944e-38, %v2581
        %v2583 = vsel %vm2580, %v2582, %v2578
        %v2584 = vmul.f32 1.0, %v2583
        %v2585 = vrcp.pop %v2457
        %v2586 = vmul.f32 %v2457, %v2585
        %v2587 = vsub.f32 1.0, %v2586
        %v2588 = vmul.f32 %v2585, %v2587
        %v2589 = vadd.f32 %v2585, %v2588
        %vm2590 = vweird.f32 %v2457
        %vm2591 = vweird.f32 %v2585
        %vm2592 = vmor %vm2590, %vm2591
        %v2593 = vsel %vm2592, %v2585, %v2589
        %v2594 = vand.u32 2147483647, %v2457
        %vm2595 = vcmp.eq.f32.partialorder %v2594, 8.507059e+37
        %v2596 = vand.u32 %v2457, 2147483648
        %v2597 = vor.u32 1.1754944e-38, %v2596
        %v2598 = vsel %vm2595, %v2597, %v2593
        %v2599 = vmul.f32 1.0, %v2598
        %v2600 = vrcp.pop %v2458
        %v2601 = vmul.f32 %v2458, %v2600
        %v2602 = vsub.f32 1.0, %v2601
        %v2603 = vmul.f32 %v2600, %v2602
        %v2604 = vadd.f32 %v2600, %v2603
        %vm2605 = vweird.f32 %v2458
        %vm2606 = vweird.f32 %v2600
        %vm2607 = vmor %vm2605, %vm2606
        %v2608 = vsel %vm2607, %v2600, %v2604
        %v2609 = vand.u32 2147483647, %v2458
        %vm2610 = vcmp.eq.f32.partialorder %v2609, 8.507059e+37
        %v2611 = vand.u32 %v2458, 2147483648
        %v2612 = vor.u32 1.1754944e-38, %v2611
        %v2613 = vsel %vm2610, %v2612, %v2608
        %v2614 = vmul.f32 1.0, %v2613
        %v2615 = vrcp.pop %v2459
        %v2616 = vmul.f32 %v2459, %v2615
        %v2617 = vsub.f32 1.0, %v2616
        %v2618 = vmul.f32 %v2615, %v2617
        %v2619 = vadd.f32 %v2615, %v2618
        %vm2620 = vweird.f32 %v2459
        %vm2621 = vweird.f32 %v2615
        %vm2622 = vmor %vm2620, %vm2621
        %v2623 = vsel %vm2622, %v2615, %v2619
        %v2624 = vand.u32 2147483647, %v2459
        %vm2625 = vcmp.eq.f32.partialorder %v2624, 8.507059e+37
        %v2626 = vand.u32 %v2459, 2147483648
        %v2627 = vor.u32 1.1754944e-38, %v2626
        %v2628 = vsel %vm2625, %v2627, %v2623
        %v2629 = vmul.f32 1.0, %v2628
        %v2630 = vrcp.pop %v2460
        %v2631 = vmul.f32 %v2460, %v2630
        %v2632 = vsub.f32 1.0, %v2631
        %v2633 = vmul.f32 %v2630, %v2632
        %v2634 = vadd.f32 %v2630, %v2633
        %vm2635 = vweird.f32 %v2460
        %vm2636 = vweird.f32 %v2630
        %vm2637 = vmor %vm2635, %vm2636
        %v2638 = vsel %vm2637, %v2630, %v2634
        %v2639 = vand.u32 2147483647, %v2460
        %vm2640 = vcmp.eq.f32.partialorder %v2639, 8.507059e+37
        %v2641 = vand.u32 %v2460, 2147483648
        %v2642 = vor.u32 1.1754944e-38, %v2641
        %v2643 = vsel %vm2640, %v2642, %v2638
        %v2644 = vmul.f32 1.0, %v2643
        %v2645 = vrcp.pop %v2461
        %v2646 = vmul.f32 %v2461, %v2645
        %v2647 = vsub.f32 1.0, %v2646
        %v2648 = vmul.f32 %v2645, %v2647
        %v2649 = vadd.f32 %v2645, %v2648
        %vm2650 = vweird.f32 %v2461
        %vm2651 = vweird.f32 %v2645
        %vm2652 = vmor %vm2650, %vm2651
        %v2653 = vsel %vm2652, %v2645, %v2649
        %v2654 = vand.u32 2147483647, %v2461
        %vm2655 = vcmp.eq.f32.partialorder %v2654, 8.507059e+37
        %v2656 = vand.u32 %v2461, 2147483648
        %v2657 = vor.u32 1.1754944e-38, %v2656
        %v2658 = vsel %vm2655, %v2657, %v2653
        %v2659 = vmul.f32 1.0, %v2658
        %v2660 = vrcp.pop %v2462
        %v2661 = vmul.f32 %v2462, %v2660
        %v2662 = vsub.f32 1.0, %v2661
        %v2663 = vmul.f32 %v2660, %v2662
        %v2664 = vadd.f32 %v2660, %v2663
        %vm2665 = vweird.f32 %v2462
        %vm2666 = vweird.f32 %v2660
        %vm2667 = vmor %vm2665, %vm2666
        %v2668 = vsel %vm2667, %v2660, %v2664
        %v2669 = vand.u32 2147483647, %v2462
        %vm2670 = vcmp.eq.f32.partialorder %v2669, 8.507059e+37
        %v2671 = vand.u32 %v2462, 2147483648
        %v2672 = vor.u32 1.1754944e-38, %v2671
        %v2673 = vsel %vm2670, %v2672, %v2668
        %v2674 = vmul.f32 1.0, %v2673
        %v2675 = vrcp.pop %v2463
        %v2676 = vmul.f32 %v2463, %v2675
        %v2677 = vsub.f32 1.0, %v2676
        %v2678 = vmul.f32 %v2675, %v2677
        %v2679 = vadd.f32 %v2675, %v2678
        %vm2680 = vweird.f32 %v2463
        %vm2681 = vweird.f32 %v2675
        %vm2682 = vmor %vm2680, %vm2681
        %v2683 = vsel %vm2682, %v2675, %v2679
        %v2684 = vand.u32 2147483647, %v2463
        %vm2685 = vcmp.eq.f32.partialorder %v2684, 8.507059e+37
        %v2686 = vand.u32 %v2463, 2147483648
        %v2687 = vor.u32 1.1754944e-38, %v2686
        %v2688 = vsel %vm2685, %v2687, %v2683
        %v2689 = vmul.f32 1.0, %v2688
        %v2690 = vrcp.pop %v2464
        %v2691 = vmul.f32 %v2464, %v2690
        %v2692 = vsub.f32 1.0, %v2691
        %v2693 = vmul.f32 %v2690, %v2692
        %v2694 = vadd.f32 %v2690, %v2693
        %vm2695 = vweird.f32 %v2464
        %vm2696 = vweird.f32 %v2690
        %vm2697 = vmor %vm2695, %vm2696
        %v2698 = vsel %vm2697, %v2690, %v2694
        %v2699 = vand.u32 2147483647, %v2464
        %vm2700 = vcmp.eq.f32.partialorder %v2699, 8.507059e+37
        %v2701 = vand.u32 %v2464, 2147483648
        %v2702 = vor.u32 1.1754944e-38, %v2701
        %v2703 = vsel %vm2700, %v2702, %v2698
        %v2704 = vmul.f32 1.0, %v2703
        %v2705 = vmul.f32 %v2353, %v2479
        %v2706 = vmul.f32 %v2354, %v2494
        %v2707 = vmul.f32 %v2355, %v2509
        %v2708 = vmul.f32 %v2356, %v2524
        %v2709 = vmul.f32 %v2357, %v2539
        %v2710 = vmul.f32 %v2358, %v2554
        %v2711 = vmul.f32 %v2359, %v2569
        %v2712 = vmul.f32 %v2360, %v2584
        %v2713 = vmul.f32 %v2361, %v2599
        %v2714 = vmul.f32 %v2362, %v2614
        %v2715 = vmul.f32 %v2363, %v2629
        %v2716 = vmul.f32 %v2364, %v2644
        %v2717 = vmul.f32 %v2365, %v2659
        %v2718 = vmul.f32 %v2366, %v2674
        %v2719 = vmul.f32 %v2367, %v2689
        %v2720 = vmul.f32 %v2368, %v2704
        %2722 = vset.pattern.permute.xlu0 0
        %2723 = vperm.xlu0 %2722, %v2385
        %v2724 = vpop.permute.xlu0 %2723
        %2727 = vset.pattern.permute.xlu0 0
        %2728 = vperm.xlu0 %2727, %v2386
        %v2729 = vpop.permute.xlu0 %2728
        %2732 = vset.pattern.permute.xlu0 0
        %2733 = vperm.xlu0 %2732, %v2387
        %v2734 = vpop.permute.xlu0 %2733
        %2737 = vset.pattern.permute.xlu0 0
        %2738 = vperm.xlu0 %2737, %v2388
        %v2739 = vpop.permute.xlu0 %2738
        %2742 = vset.pattern.permute.xlu0 0
        %2743 = vperm.xlu0 %2742, %v2389
        %v2744 = vpop.permute.xlu0 %2743
        %2747 = vset.pattern.permute.xlu0 0
        %2748 = vperm.xlu0 %2747, %v2390
        %v2749 = vpop.permute.xlu0 %2748
        %2752 = vset.pattern.permute.xlu0 0
        %2753 = vperm.xlu0 %2752, %v2391
        %v2754 = vpop.permute.xlu0 %2753
        %2757 = vset.pattern.permute.xlu0 0
        %2758 = vperm.xlu0 %2757, %v2392
        %v2759 = vpop.permute.xlu0 %2758
        %2762 = vset.pattern.permute.xlu0 0
        %2763 = vperm.xlu0 %2762, %v2393
        %v2764 = vpop.permute.xlu0 %2763
        %2767 = vset.pattern.permute.xlu0 0
        %2768 = vperm.xlu0 %2767, %v2394
        %v2769 = vpop.permute.xlu0 %2768
        %2772 = vset.pattern.permute.xlu0 0
        %2773 = vperm.xlu0 %2772, %v2395
        %v2774 = vpop.permute.xlu0 %2773
        %2777 = vset.pattern.permute.xlu0 0
        %2778 = vperm.xlu0 %2777, %v2396
        %v2779 = vpop.permute.xlu0 %2778
        %2782 = vset.pattern.permute.xlu0 0
        %2783 = vperm.xlu0 %2782, %v2397
        %v2784 = vpop.permute.xlu0 %2783
        %2787 = vset.pattern.permute.xlu0 0
        %2788 = vperm.xlu0 %2787, %v2398
        %v2789 = vpop.permute.xlu0 %2788
        %2792 = vset.pattern.permute.xlu0 0
        %2793 = vperm.xlu0 %2792, %v2399
        %v2794 = vpop.permute.xlu0 %2793
        %2797 = vset.pattern.permute.xlu0 0
        %2798 = vperm.xlu0 %2797, %v2400
        %v2799 = vpop.permute.xlu0 %2798
        %v2801 = vmul.f32 %v2369, %v2724
        %v2802 = vmul.f32 %v2370, %v2729
        %v2803 = vmul.f32 %v2371, %v2734
        %v2804 = vmul.f32 %v2372, %v2739
        %v2805 = vmul.f32 %v2373, %v2744
        %v2806 = vmul.f32 %v2374, %v2749
        %v2807 = vmul.f32 %v2375, %v2754
        %v2808 = vmul.f32 %v2376, %v2759
        %v2809 = vmul.f32 %v2377, %v2764
        %v2810 = vmul.f32 %v2378, %v2769
        %v2811 = vmul.f32 %v2379, %v2774
        %v2812 = vmul.f32 %v2380, %v2779
        %v2813 = vmul.f32 %v2381, %v2784
        %v2814 = vmul.f32 %v2382, %v2789
        %v2815 = vmul.f32 %v2383, %v2794
        %v2816 = vmul.f32 %v2384, %v2799
        %v2817 = vmul.f32 %v2705, %v2801
        %v2818 = vmul.f32 %v2706, %v2802
        %v2819 = vmul.f32 %v2707, %v2803
        %v2820 = vmul.f32 %v2708, %v2804
        %v2821 = vmul.f32 %v2709, %v2805
        %v2822 = vmul.f32 %v2710, %v2806
        %v2823 = vmul.f32 %v2711, %v2807
        %v2824 = vmul.f32 %v2712, %v2808
        %v2825 = vmul.f32 %v2713, %v2809
        %v2826 = vmul.f32 %v2714, %v2810
        %v2827 = vmul.f32 %v2715, %v2811
        %v2828 = vmul.f32 %v2716, %v2812
        %v2829 = vmul.f32 %v2717, %v2813
        %v2830 = vmul.f32 %v2718, %v2814
        %v2831 = vmul.f32 %v2719, %v2815
        %v2832 = vmul.f32 %v2720, %v2816
        %v2833 = vpack.c.bf16 %v2817, %v2817
        %v2834 = vpack.c.bf16 %v2818, %v2818
        %v2835 = vpack.c.bf16 %v2819, %v2819
        %v2836 = vpack.c.bf16 %v2820, %v2820
        %v2837 = vpack.c.bf16 %v2821, %v2821
        %v2838 = vpack.c.bf16 %v2822, %v2822
        %v2839 = vpack.c.bf16 %v2823, %v2823
        %v2840 = vpack.c.bf16 %v2824, %v2824
        %v2841 = vpack.c.bf16 %v2825, %v2825
        %v2842 = vpack.c.bf16 %v2826, %v2826
        %v2843 = vpack.c.bf16 %v2827, %v2827
        %v2844 = vpack.c.bf16 %v2828, %v2828
        %v2845 = vpack.c.bf16 %v2829, %v2829
        %v2846 = vpack.c.bf16 %v2830, %v2830
        %v2847 = vpack.c.bf16 %v2831, %v2831
        %v2848 = vpack.c.bf16 %v2832, %v2832
        %2849 = vst [vmem:[#allocation3] sm:$0xf] %v2833
        %2850 = vst [vmem:[#allocation3 + $0x24] sm:$0xf] %v2834
        %2851 = vst [vmem:[#allocation3 + $0x48] sm:$0xf] %v2835
        %2852 = vst [vmem:[#allocation3 + $0x6c] sm:$0xf] %v2836
        %2853 = vst [vmem:[#allocation3 + $0x90] sm:$0xf] %v2837
        %2854 = vst [vmem:[#allocation3 + $0xb4] sm:$0xf] %v2838
        %2855 = vst [vmem:[#allocation3 + $0xd8] sm:$0xf] %v2839
        %2856 = vst [vmem:[#allocation3 + $0xfc] sm:$0xf] %v2840
        %2857 = vst [vmem:[#allocation3 + $0x120] sm:$0xf] %v2841
        %2858 = vst [vmem:[#allocation3 + $0x144] sm:$0xf] %v2842
        %2859 = vst [vmem:[#allocation3 + $0x168] sm:$0xf] %v2843
        %2860 = vst [vmem:[#allocation3 + $0x18c] sm:$0xf] %v2844
        %2861 = vst [vmem:[#allocation3 + $0x1b0] sm:$0xf] %v2845
        %2862 = vst [vmem:[#allocation3 + $0x1d4] sm:$0xf] %v2846
        %2863 = vst [vmem:[#allocation3 + $0x1f8] sm:$0xf] %v2847
        %2864 = vst [vmem:[#allocation3 + $0x21c] sm:$0xf] %v2848
        %v2865 = vld [vmem:[#allocation2 + $0x10] sm:$0xff]
        %v2866 = vld [vmem:[#allocation2 + $0xa0] sm:$0xff]
        %v2867 = vld [vmem:[#allocation2 + $0x130] sm:$0xff]
        %v2868 = vld [vmem:[#allocation2 + $0x1c0] sm:$0xff]
        %v2869 = vld [vmem:[#allocation2 + $0x250] sm:$0xff]
        %v2870 = vld [vmem:[#allocation2 + $0x2e0] sm:$0xff]
        %v2871 = vld [vmem:[#allocation2 + $0x370] sm:$0xff]
        %v2872 = vld [vmem:[#allocation2 + $0x400] sm:$0xff]
        %v2873 = vld [vmem:[#allocation2 + $0x490] sm:$0xff]
        %v2874 = vld [vmem:[#allocation2 + $0x520] sm:$0xff]
        %v2875 = vld [vmem:[#allocation2 + $0x5b0] sm:$0xff]
        %v2876 = vld [vmem:[#allocation2 + $0x640] sm:$0xff]
        %v2877 = vld [vmem:[#allocation2 + $0x6d0] sm:$0xff]
        %v2878 = vld [vmem:[#allocation2 + $0x760] sm:$0xff]
        %v2879 = vld [vmem:[#allocation2 + $0x7f0] sm:$0xff]
        %v2880 = vld [vmem:[#allocation2 + $0x880] sm:$0xff]
        %v2881 = vld [vmem:[#allocation2 + $0x18] sm:$0xff]
        %v2882 = vld [vmem:[#allocation2 + $0xa8] sm:$0xff]
        %v2883 = vld [vmem:[#allocation2 + $0x138] sm:$0xff]
        %v2884 = vld [vmem:[#allocation2 + $0x1c8] sm:$0xff]
        %v2885 = vld [vmem:[#allocation2 + $0x258] sm:$0xff]
        %v2886 = vld [vmem:[#allocation2 + $0x2e8] sm:$0xff]
        %v2887 = vld [vmem:[#allocation2 + $0x378] sm:$0xff]
        %v2888 = vld [vmem:[#allocation2 + $0x408] sm:$0xff]
        %v2889 = vld [vmem:[#allocation2 + $0x498] sm:$0xff]
        %v2890 = vld [vmem:[#allocation2 + $0x528] sm:$0xff]
        %v2891 = vld [vmem:[#allocation2 + $0x5b8] sm:$0xff]
        %v2892 = vld [vmem:[#allocation2 + $0x648] sm:$0xff]
        %v2893 = vld [vmem:[#allocation2 + $0x6d8] sm:$0xff]
        %v2894 = vld [vmem:[#allocation2 + $0x768] sm:$0xff]
        %v2895 = vld [vmem:[#allocation2 + $0x7f8] sm:$0xff]
        %v2896 = vld [vmem:[#allocation2 + $0x888] sm:$0xff]
        %v2897 = vld [vmem:[%s252] sm:$0xff]
        %v2898 = vld [vmem:[%s252 + $0x8] sm:$0xff]
        %v2899 = vld [vmem:[%s252 + $0x10] sm:$0xff]
        %v2900 = vld [vmem:[%s252 + $0x18] sm:$0xff]
        %v2901 = vld [vmem:[%s252 + $0x20] sm:$0xff]
        %v2902 = vld [vmem:[%s252 + $0x28] sm:$0xff]
        %v2903 = vld [vmem:[%s252 + $0x30] sm:$0xff]
        %v2904 = vld [vmem:[%s252 + $0x38] sm:$0xff]
        %v2905 = vld [vmem:[%s252 + $0x40] sm:$0xff]
        %v2906 = vld [vmem:[%s252 + $0x48] sm:$0xff]
        %v2907 = vld [vmem:[%s252 + $0x50] sm:$0xff]
        %v2908 = vld [vmem:[%s252 + $0x58] sm:$0xff]
        %v2909 = vld [vmem:[%s252 + $0x60] sm:$0xff]
        %v2910 = vld [vmem:[%s252 + $0x68] sm:$0xff]
        %v2911 = vld [vmem:[%s252 + $0x70] sm:$0xff]
        %v2912 = vld [vmem:[%s252 + $0x78] sm:$0xff]
        %v2913 = vxor.u32 %v2865, 2147483648
        %v2914 = vxor.u32 %v2866, 2147483648
        %v2915 = vxor.u32 %v2867, 2147483648
        %v2916 = vxor.u32 %v2868, 2147483648
        %v2917 = vxor.u32 %v2869, 2147483648
        %v2918 = vxor.u32 %v2870, 2147483648
        %v2919 = vxor.u32 %v2871, 2147483648
        %v2920 = vxor.u32 %v2872, 2147483648
        %v2921 = vxor.u32 %v2873, 2147483648
        %v2922 = vxor.u32 %v2874, 2147483648
        %v2923 = vxor.u32 %v2875, 2147483648
        %v2924 = vxor.u32 %v2876, 2147483648
        %v2925 = vxor.u32 %v2877, 2147483648
        %v2926 = vxor.u32 %v2878, 2147483648
        %v2927 = vxor.u32 %v2879, 2147483648
        %v2928 = vxor.u32 %v2880, 2147483648
        %v2929 = vmul.f32 %v2913, 1.442695
        %v2930 = vpow.pop %v2929
        %v2931 = vmul.f32 %v2914, 1.442695
        %v2932 = vpow.pop %v2931
        %v2933 = vmul.f32 %v2915, 1.442695
        %v2934 = vpow.pop %v2933
        %v2935 = vmul.f32 %v2916, 1.442695
        %v2936 = vpow.pop %v2935
        %v2937 = vmul.f32 %v2917, 1.442695
        %v2938 = vpow.pop %v2937
        %v2939 = vmul.f32 %v2918, 1.442695
        %v2940 = vpow.pop %v2939
        %v2941 = vmul.f32 %v2919, 1.442695
        %v2942 = vpow.pop %v2941
        %v2943 = vmul.f32 %v2920, 1.442695
        %v2944 = vpow.pop %v2943
        %v2945 = vmul.f32 %v2921, 1.442695
        %v2946 = vpow.pop %v2945
        %v2947 = vmul.f32 %v2922, 1.442695
        %v2948 = vpow.pop %v2947
        %v2949 = vmul.f32 %v2923, 1.442695
        %v2950 = vpow.pop %v2949
        %v2951 = vmul.f32 %v2924, 1.442695
        %v2952 = vpow.pop %v2951
        %v2953 = vmul.f32 %v2925, 1.442695
        %v2954 = vpow.pop %v2953
        %v2955 = vmul.f32 %v2926, 1.442695
        %v2956 = vpow.pop %v2955
        %v2957 = vmul.f32 %v2927, 1.442695
        %v2958 = vpow.pop %v2957
        %v2959 = vmul.f32 %v2928, 1.442695
        %v2960 = vpow.pop %v2959
        %v2961 = vadd.f32 %v2930, 1.0
        %v2962 = vadd.f32 %v2932, 1.0
        %v2963 = vadd.f32 %v2934, 1.0
        %v2964 = vadd.f32 %v2936, 1.0
        %v2965 = vadd.f32 %v2938, 1.0
        %v2966 = vadd.f32 %v2940, 1.0
        %v2967 = vadd.f32 %v2942, 1.0
        %v2968 = vadd.f32 %v2944, 1.0
        %v2969 = vadd.f32 %v2946, 1.0
        %v2970 = vadd.f32 %v2948, 1.0
        %v2971 = vadd.f32 %v2950, 1.0
        %v2972 = vadd.f32 %v2952, 1.0
        %v2973 = vadd.f32 %v2954, 1.0
        %v2974 = vadd.f32 %v2956, 1.0
        %v2975 = vadd.f32 %v2958, 1.0
        %v2976 = vadd.f32 %v2960, 1.0
        %v2977 = vrcp.pop %v2961
        %v2978 = vmul.f32 %v2961, %v2977
        %v2979 = vsub.f32 1.0, %v2978
        %v2980 = vmul.f32 %v2977, %v2979
        %v2981 = vadd.f32 %v2977, %v2980
        %vm2982 = vweird.f32 %v2961
        %vm2983 = vweird.f32 %v2977
        %vm2984 = vmor %vm2982, %vm2983
        %v2985 = vsel %vm2984, %v2977, %v2981
        %v2986 = vand.u32 2147483647, %v2961
        %vm2987 = vcmp.eq.f32.partialorder %v2986, 8.507059e+37
        %v2988 = vand.u32 %v2961, 2147483648
        %v2989 = vor.u32 1.1754944e-38, %v2988
        %v2990 = vsel %vm2987, %v2989, %v2985
        %v2991 = vmul.f32 1.0, %v2990
        %v2992 = vrcp.pop %v2962
        %v2993 = vmul.f32 %v2962, %v2992
        %v2994 = vsub.f32 1.0, %v2993
        %v2995 = vmul.f32 %v2992, %v2994
        %v2996 = vadd.f32 %v2992, %v2995
        %vm2997 = vweird.f32 %v2962
        %vm2998 = vweird.f32 %v2992
        %vm2999 = vmor %vm2997, %vm2998
        %v3000 = vsel %vm2999, %v2992, %v2996
        %v3001 = vand.u32 2147483647, %v2962
        %vm3002 = vcmp.eq.f32.partialorder %v3001, 8.507059e+37
        %v3003 = vand.u32 %v2962, 2147483648
        %v3004 = vor.u32 1.1754944e-38, %v3003
        %v3005 = vsel %vm3002, %v3004, %v3000
        %v3006 = vmul.f32 1.0, %v3005
        %v3007 = vrcp.pop %v2963
        %v3008 = vmul.f32 %v2963, %v3007
        %v3009 = vsub.f32 1.0, %v3008
        %v3010 = vmul.f32 %v3007, %v3009
        %v3011 = vadd.f32 %v3007, %v3010
        %vm3012 = vweird.f32 %v2963
        %vm3013 = vweird.f32 %v3007
        %vm3014 = vmor %vm3012, %vm3013
        %v3015 = vsel %vm3014, %v3007, %v3011
        %v3016 = vand.u32 2147483647, %v2963
        %vm3017 = vcmp.eq.f32.partialorder %v3016, 8.507059e+37
        %v3018 = vand.u32 %v2963, 2147483648
        %v3019 = vor.u32 1.1754944e-38, %v3018
        %v3020 = vsel %vm3017, %v3019, %v3015
        %v3021 = vmul.f32 1.0, %v3020
        %v3022 = vrcp.pop %v2964
        %v3023 = vmul.f32 %v2964, %v3022
        %v3024 = vsub.f32 1.0, %v3023
        %v3025 = vmul.f32 %v3022, %v3024
        %v3026 = vadd.f32 %v3022, %v3025
        %vm3027 = vweird.f32 %v2964
        %vm3028 = vweird.f32 %v3022
        %vm3029 = vmor %vm3027, %vm3028
        %v3030 = vsel %vm3029, %v3022, %v3026
        %v3031 = vand.u32 2147483647, %v2964
        %vm3032 = vcmp.eq.f32.partialorder %v3031, 8.507059e+37
        %v3033 = vand.u32 %v2964, 2147483648
        %v3034 = vor.u32 1.1754944e-38, %v3033
        %v3035 = vsel %vm3032, %v3034, %v3030
        %v3036 = vmul.f32 1.0, %v3035
        %v3037 = vrcp.pop %v2965
        %v3038 = vmul.f32 %v2965, %v3037
        %v3039 = vsub.f32 1.0, %v3038
        %v3040 = vmul.f32 %v3037, %v3039
        %v3041 = vadd.f32 %v3037, %v3040
        %vm3042 = vweird.f32 %v2965
        %vm3043 = vweird.f32 %v3037
        %vm3044 = vmor %vm3042, %vm3043
        %v3045 = vsel %vm3044, %v3037, %v3041
        %v3046 = vand.u32 2147483647, %v2965
        %vm3047 = vcmp.eq.f32.partialorder %v3046, 8.507059e+37
        %v3048 = vand.u32 %v2965, 2147483648
        %v3049 = vor.u32 1.1754944e-38, %v3048
        %v3050 = vsel %vm3047, %v3049, %v3045
        %v3051 = vmul.f32 1.0, %v3050
        %v3052 = vrcp.pop %v2966
        %v3053 = vmul.f32 %v2966, %v3052
        %v3054 = vsub.f32 1.0, %v3053
        %v3055 = vmul.f32 %v3052, %v3054
        %v3056 = vadd.f32 %v3052, %v3055
        %vm3057 = vweird.f32 %v2966
        %vm3058 = vweird.f32 %v3052
        %vm3059 = vmor %vm3057, %vm3058
        %v3060 = vsel %vm3059, %v3052, %v3056
        %v3061 = vand.u32 2147483647, %v2966
        %vm3062 = vcmp.eq.f32.partialorder %v3061, 8.507059e+37
        %v3063 = vand.u32 %v2966, 2147483648
        %v3064 = vor.u32 1.1754944e-38, %v3063
        %v3065 = vsel %vm3062, %v3064, %v3060
        %v3066 = vmul.f32 1.0, %v3065
        %v3067 = vrcp.pop %v2967
        %v3068 = vmul.f32 %v2967, %v3067
        %v3069 = vsub.f32 1.0, %v3068
        %v3070 = vmul.f32 %v3067, %v3069
        %v3071 = vadd.f32 %v3067, %v3070
        %vm3072 = vweird.f32 %v2967
        %vm3073 = vweird.f32 %v3067
        %vm3074 = vmor %vm3072, %vm3073
        %v3075 = vsel %vm3074, %v3067, %v3071
        %v3076 = vand.u32 2147483647, %v2967
        %vm3077 = vcmp.eq.f32.partialorder %v3076, 8.507059e+37
        %v3078 = vand.u32 %v2967, 2147483648
        %v3079 = vor.u32 1.1754944e-38, %v3078
        %v3080 = vsel %vm3077, %v3079, %v3075
        %v3081 = vmul.f32 1.0, %v3080
        %v3082 = vrcp.pop %v2968
        %v3083 = vmul.f32 %v2968, %v3082
        %v3084 = vsub.f32 1.0, %v3083
        %v3085 = vmul.f32 %v3082, %v3084
        %v3086 = vadd.f32 %v3082, %v3085
        %vm3087 = vweird.f32 %v2968
        %vm3088 = vweird.f32 %v3082
        %vm3089 = vmor %vm3087, %vm3088
        %v3090 = vsel %vm3089, %v3082, %v3086
        %v3091 = vand.u32 2147483647, %v2968
        %vm3092 = vcmp.eq.f32.partialorder %v3091, 8.507059e+37
        %v3093 = vand.u32 %v2968, 2147483648
        %v3094 = vor.u32 1.1754944e-38, %v3093
        %v3095 = vsel %vm3092, %v3094, %v3090
        %v3096 = vmul.f32 1.0, %v3095
        %v3097 = vrcp.pop %v2969
        %v3098 = vmul.f32 %v2969, %v3097
        %v3099 = vsub.f32 1.0, %v3098
        %v3100 = vmul.f32 %v3097, %v3099
        %v3101 = vadd.f32 %v3097, %v3100
        %vm3102 = vweird.f32 %v2969
        %vm3103 = vweird.f32 %v3097
        %vm3104 = vmor %vm3102, %vm3103
        %v3105 = vsel %vm3104, %v3097, %v3101
        %v3106 = vand.u32 2147483647, %v2969
        %vm3107 = vcmp.eq.f32.partialorder %v3106, 8.507059e+37
        %v3108 = vand.u32 %v2969, 2147483648
        %v3109 = vor.u32 1.1754944e-38, %v3108
        %v3110 = vsel %vm3107, %v3109, %v3105
        %v3111 = vmul.f32 1.0, %v3110
        %v3112 = vrcp.pop %v2970
        %v3113 = vmul.f32 %v2970, %v3112
        %v3114 = vsub.f32 1.0, %v3113
        %v3115 = vmul.f32 %v3112, %v3114
        %v3116 = vadd.f32 %v3112, %v3115
        %vm3117 = vweird.f32 %v2970
        %vm3118 = vweird.f32 %v3112
        %vm3119 = vmor %vm3117, %vm3118
        %v3120 = vsel %vm3119, %v3112, %v3116
        %v3121 = vand.u32 2147483647, %v2970
        %vm3122 = vcmp.eq.f32.partialorder %v3121, 8.507059e+37
        %v3123 = vand.u32 %v2970, 2147483648
        %v3124 = vor.u32 1.1754944e-38, %v3123
        %v3125 = vsel %vm3122, %v3124, %v3120
        %v3126 = vmul.f32 1.0, %v3125
        %v3127 = vrcp.pop %v2971
        %v3128 = vmul.f32 %v2971, %v3127
        %v3129 = vsub.f32 1.0, %v3128
        %v3130 = vmul.f32 %v3127, %v3129
        %v3131 = vadd.f32 %v3127, %v3130
        %vm3132 = vweird.f32 %v2971
        %vm3133 = vweird.f32 %v3127
        %vm3134 = vmor %vm3132, %vm3133
        %v3135 = vsel %vm3134, %v3127, %v3131
        %v3136 = vand.u32 2147483647, %v2971
        %vm3137 = vcmp.eq.f32.partialorder %v3136, 8.507059e+37
        %v3138 = vand.u32 %v2971, 2147483648
        %v3139 = vor.u32 1.1754944e-38, %v3138
        %v3140 = vsel %vm3137, %v3139, %v3135
        %v3141 = vmul.f32 1.0, %v3140
        %v3142 = vrcp.pop %v2972
        %v3143 = vmul.f32 %v2972, %v3142
        %v3144 = vsub.f32 1.0, %v3143
        %v3145 = vmul.f32 %v3142, %v3144
        %v3146 = vadd.f32 %v3142, %v3145
        %vm3147 = vweird.f32 %v2972
        %vm3148 = vweird.f32 %v3142
        %vm3149 = vmor %vm3147, %vm3148
        %v3150 = vsel %vm3149, %v3142, %v3146
        %v3151 = vand.u32 2147483647, %v2972
        %vm3152 = vcmp.eq.f32.partialorder %v3151, 8.507059e+37
        %v3153 = vand.u32 %v2972, 2147483648
        %v3154 = vor.u32 1.1754944e-38, %v3153
        %v3155 = vsel %vm3152, %v3154, %v3150
        %v3156 = vmul.f32 1.0, %v3155
        %v3157 = vrcp.pop %v2973
        %v3158 = vmul.f32 %v2973, %v3157
        %v3159 = vsub.f32 1.0, %v3158
        %v3160 = vmul.f32 %v3157, %v3159
        %v3161 = vadd.f32 %v3157, %v3160
        %vm3162 = vweird.f32 %v2973
        %vm3163 = vweird.f32 %v3157
        %vm3164 = vmor %vm3162, %vm3163
        %v3165 = vsel %vm3164, %v3157, %v3161
        %v3166 = vand.u32 2147483647, %v2973
        %vm3167 = vcmp.eq.f32.partialorder %v3166, 8.507059e+37
        %v3168 = vand.u32 %v2973, 2147483648
        %v3169 = vor.u32 1.1754944e-38, %v3168
        %v3170 = vsel %vm3167, %v3169, %v3165
        %v3171 = vmul.f32 1.0, %v3170
        %v3172 = vrcp.pop %v2974
        %v3173 = vmul.f32 %v2974, %v3172
        %v3174 = vsub.f32 1.0, %v3173
        %v3175 = vmul.f32 %v3172, %v3174
        %v3176 = vadd.f32 %v3172, %v3175
        %vm3177 = vweird.f32 %v2974
        %vm3178 = vweird.f32 %v3172
        %vm3179 = vmor %vm3177, %vm3178
        %v3180 = vsel %vm3179, %v3172, %v3176
        %v3181 = vand.u32 2147483647, %v2974
        %vm3182 = vcmp.eq.f32.partialorder %v3181, 8.507059e+37
        %v3183 = vand.u32 %v2974, 2147483648
        %v3184 = vor.u32 1.1754944e-38, %v3183
        %v3185 = vsel %vm3182, %v3184, %v3180
        %v3186 = vmul.f32 1.0, %v3185
        %v3187 = vrcp.pop %v2975
        %v3188 = vmul.f32 %v2975, %v3187
        %v3189 = vsub.f32 1.0, %v3188
        %v3190 = vmul.f32 %v3187, %v3189
        %v3191 = vadd.f32 %v3187, %v3190
        %vm3192 = vweird.f32 %v2975
        %vm3193 = vweird.f32 %v3187
        %vm3194 = vmor %vm3192, %vm3193
        %v3195 = vsel %vm3194, %v3187, %v3191
        %v3196 = vand.u32 2147483647, %v2975
        %vm3197 = vcmp.eq.f32.partialorder %v3196, 8.507059e+37
        %v3198 = vand.u32 %v2975, 2147483648
        %v3199 = vor.u32 1.1754944e-38, %v3198
        %v3200 = vsel %vm3197, %v3199, %v3195
        %v3201 = vmul.f32 1.0, %v3200
        %v3202 = vrcp.pop %v2976
        %v3203 = vmul.f32 %v2976, %v3202
        %v3204 = vsub.f32 1.0, %v3203
        %v3205 = vmul.f32 %v3202, %v3204
        %v3206 = vadd.f32 %v3202, %v3205
        %vm3207 = vweird.f32 %v2976
        %vm3208 = vweird.f32 %v3202
        %vm3209 = vmor %vm3207, %vm3208
        %v3210 = vsel %vm3209, %v3202, %v3206
        %v3211 = vand.u32 2147483647, %v2976
        %vm3212 = vcmp.eq.f32.partialorder %v3211, 8.507059e+37
        %v3213 = vand.u32 %v2976, 2147483648
        %v3214 = vor.u32 1.1754944e-38, %v3213
        %v3215 = vsel %vm3212, %v3214, %v3210
        %v3216 = vmul.f32 1.0, %v3215
        %v3217 = vmul.f32 %v2865, %v2991
        %v3218 = vmul.f32 %v2866, %v3006
        %v3219 = vmul.f32 %v2867, %v3021
        %v3220 = vmul.f32 %v2868, %v3036
        %v3221 = vmul.f32 %v2869, %v3051
        %v3222 = vmul.f32 %v2870, %v3066
        %v3223 = vmul.f32 %v2871, %v3081
        %v3224 = vmul.f32 %v2872, %v3096
        %v3225 = vmul.f32 %v2873, %v3111
        %v3226 = vmul.f32 %v2874, %v3126
        %v3227 = vmul.f32 %v2875, %v3141
        %v3228 = vmul.f32 %v2876, %v3156
        %v3229 = vmul.f32 %v2877, %v3171
        %v3230 = vmul.f32 %v2878, %v3186
        %v3231 = vmul.f32 %v2879, %v3201
        %v3232 = vmul.f32 %v2880, %v3216
        %3234 = vset.pattern.permute.xlu0 1
        %3235 = vperm.xlu0 %3234, %v2897
        %v3236 = vpop.permute.xlu0 %3235
        %3239 = vset.pattern.permute.xlu0 1
        %3240 = vperm.xlu0 %3239, %v2898
        %v3241 = vpop.permute.xlu0 %3240
        %3244 = vset.pattern.permute.xlu0 1
        %3245 = vperm.xlu0 %3244, %v2899
        %v3246 = vpop.permute.xlu0 %3245
        %3249 = vset.pattern.permute.xlu0 1
        %3250 = vperm.xlu0 %3249, %v2900
        %v3251 = vpop.permute.xlu0 %3250
        %3254 = vset.pattern.permute.xlu0 1
        %3255 = vperm.xlu0 %3254, %v2901
        %v3256 = vpop.permute.xlu0 %3255
        %3259 = vset.pattern.permute.xlu0 1
        %3260 = vperm.xlu0 %3259, %v2902
        %v3261 = vpop.permute.xlu0 %3260
        %3264 = vset.pattern.permute.xlu0 1
        %3265 = vperm.xlu0 %3264, %v2903
        %v3266 = vpop.permute.xlu0 %3265
        %3269 = vset.pattern.permute.xlu0 1
        %3270 = vperm.xlu0 %3269, %v2904
        %v3271 = vpop.permute.xlu0 %3270
        %3274 = vset.pattern.permute.xlu0 1
        %3275 = vperm.xlu0 %3274, %v2905
        %v3276 = vpop.permute.xlu0 %3275
        %3279 = vset.pattern.permute.xlu0 1
        %3280 = vperm.xlu0 %3279, %v2906
        %v3281 = vpop.permute.xlu0 %3280
        %3284 = vset.pattern.permute.xlu0 1
        %3285 = vperm.xlu0 %3284, %v2907
        %v3286 = vpop.permute.xlu0 %3285
        %3289 = vset.pattern.permute.xlu0 1
        %3290 = vperm.xlu0 %3289, %v2908
        %v3291 = vpop.permute.xlu0 %3290
        %3294 = vset.pattern.permute.xlu0 1
        %3295 = vperm.xlu0 %3294, %v2909
        %v3296 = vpop.permute.xlu0 %3295
        %3299 = vset.pattern.permute.xlu0 1
        %3300 = vperm.xlu0 %3299, %v2910
        %v3301 = vpop.permute.xlu0 %3300
        %3304 = vset.pattern.permute.xlu0 1
        %3305 = vperm.xlu0 %3304, %v2911
        %v3306 = vpop.permute.xlu0 %3305
        %3309 = vset.pattern.permute.xlu0 1
        %3310 = vperm.xlu0 %3309, %v2912
        %v3311 = vpop.permute.xlu0 %3310
        %v3313 = vmul.f32 %v2881, %v3236
        %v3314 = vmul.f32 %v2882, %v3241
        %v3315 = vmul.f32 %v2883, %v3246
        %v3316 = vmul.f32 %v2884, %v3251
        %v3317 = vmul.f32 %v2885, %v3256
        %v3318 = vmul.f32 %v2886, %v3261
        %v3319 = vmul.f32 %v2887, %v3266
        %v3320 = vmul.f32 %v2888, %v3271
        %v3321 = vmul.f32 %v2889, %v3276
        %v3322 = vmul.f32 %v2890, %v3281
        %v3323 = vmul.f32 %v2891, %v3286
        %v3324 = vmul.f32 %v2892, %v3291
        %v3325 = vmul.f32 %v2893, %v3296
        %v3326 = vmul.f32 %v2894, %v3301
        %v3327 = vmul.f32 %v2895, %v3306
        %v3328 = vmul.f32 %v2896, %v3311
        %v3329 = vmul.f32 %v3217, %v3313
        %v3330 = vmul.f32 %v3218, %v3314
        %v3331 = vmul.f32 %v3219, %v3315
        %v3332 = vmul.f32 %v3220, %v3316
        %v3333 = vmul.f32 %v3221, %v3317
        %v3334 = vmul.f32 %v3222, %v3318
        %v3335 = vmul.f32 %v3223, %v3319
        %v3336 = vmul.f32 %v3224, %v3320
        %v3337 = vmul.f32 %v3225, %v3321
        %v3338 = vmul.f32 %v3226, %v3322
        %v3339 = vmul.f32 %v3227, %v3323
        %v3340 = vmul.f32 %v3228, %v3324
        %v3341 = vmul.f32 %v3229, %v3325
        %v3342 = vmul.f32 %v3230, %v3326
        %v3343 = vmul.f32 %v3231, %v3327
        %v3344 = vmul.f32 %v3232, %v3328
        %v3345 = vpack.c.bf16 %v3329, %v3329
        %v3346 = vpack.c.bf16 %v3330, %v3330
        %v3347 = vpack.c.bf16 %v3331, %v3331
        %v3348 = vpack.c.bf16 %v3332, %v3332
        %v3349 = vpack.c.bf16 %v3333, %v3333
        %v3350 = vpack.c.bf16 %v3334, %v3334
        %v3351 = vpack.c.bf16 %v3335, %v3335
        %v3352 = vpack.c.bf16 %v3336, %v3336
        %v3353 = vpack.c.bf16 %v3337, %v3337
        %v3354 = vpack.c.bf16 %v3338, %v3338
        %v3355 = vpack.c.bf16 %v3339, %v3339
        %v3356 = vpack.c.bf16 %v3340, %v3340
        %v3357 = vpack.c.bf16 %v3341, %v3341
        %v3358 = vpack.c.bf16 %v3342, %v3342
        %v3359 = vpack.c.bf16 %v3343, %v3343
        %v3360 = vpack.c.bf16 %v3344, %v3344
        %3361 = vst [vmem:[#allocation3 + $0x4] sm:$0xf] %v3345
        %3362 = vst [vmem:[#allocation3 + $0x28] sm:$0xf] %v3346
        %3363 = vst [vmem:[#allocation3 + $0x4c] sm:$0xf] %v3347
        %3364 = vst [vmem:[#allocation3 + $0x70] sm:$0xf] %v3348
        %3365 = vst [vmem:[#allocation3 + $0x94] sm:$0xf] %v3349
        %3366 = vst [vmem:[#allocation3 + $0xb8] sm:$0xf] %v3350
        %3367 = vst [vmem:[#allocation3 + $0xdc] sm:$0xf] %v3351
        %3368 = vst [vmem:[#allocation3 + $0x100] sm:$0xf] %v3352
        %3369 = vst [vmem:[#allocation3 + $0x124] sm:$0xf] %v3353
        %3370 = vst [vmem:[#allocation3 + $0x148] sm:$0xf] %v3354
        %3371 = vst [vmem:[#allocation3 + $0x16c] sm:$0xf] %v3355
        %3372 = vst [vmem:[#allocation3 + $0x190] sm:$0xf] %v3356
        %3373 = vst [vmem:[#allocation3 + $0x1b4] sm:$0xf] %v3357
        %3374 = vst [vmem:[#allocation3 + $0x1d8] sm:$0xf] %v3358
        %3375 = vst [vmem:[#allocation3 + $0x1fc] sm:$0xf] %v3359
        %3376 = vst [vmem:[#allocation3 + $0x220] sm:$0xf] %v3360
        %v3377 = vld [vmem:[#allocation2 + $0x20] sm:$0xff]
        %v3378 = vld [vmem:[#allocation2 + $0xb0] sm:$0xff]
        %v3379 = vld [vmem:[#allocation2 + $0x140] sm:$0xff]
        %v3380 = vld [vmem:[#allocation2 + $0x1d0] sm:$0xff]
        %v3381 = vld [vmem:[#allocation2 + $0x260] sm:$0xff]
        %v3382 = vld [vmem:[#allocation2 + $0x2f0] sm:$0xff]
        %v3383 = vld [vmem:[#allocation2 + $0x380] sm:$0xff]
        %v3384 = vld [vmem:[#allocation2 + $0x410] sm:$0xff]
        %v3385 = vld [vmem:[#allocation2 + $0x4a0] sm:$0xff]
        %v3386 = vld [vmem:[#allocation2 + $0x530] sm:$0xff]
        %v3387 = vld [vmem:[#allocation2 + $0x5c0] sm:$0xff]
        %v3388 = vld [vmem:[#allocation2 + $0x650] sm:$0xff]
        %v3389 = vld [vmem:[#allocation2 + $0x6e0] sm:$0xff]
        %v3390 = vld [vmem:[#allocation2 + $0x770] sm:$0xff]
        %v3391 = vld [vmem:[#allocation2 + $0x800] sm:$0xff]
        %v3392 = vld [vmem:[#allocation2 + $0x890] sm:$0xff]
        %v3393 = vld [vmem:[#allocation2 + $0x28] sm:$0xff]
        %v3394 = vld [vmem:[#allocation2 + $0xb8] sm:$0xff]
        %v3395 = vld [vmem:[#allocation2 + $0x148] sm:$0xff]
        %v3396 = vld [vmem:[#allocation2 + $0x1d8] sm:$0xff]
        %v3397 = vld [vmem:[#allocation2 + $0x268] sm:$0xff]
        %v3398 = vld [vmem:[#allocation2 + $0x2f8] sm:$0xff]
        %v3399 = vld [vmem:[#allocation2 + $0x388] sm:$0xff]
        %v3400 = vld [vmem:[#allocation2 + $0x418] sm:$0xff]
        %v3401 = vld [vmem:[#allocation2 + $0x4a8] sm:$0xff]
        %v3402 = vld [vmem:[#allocation2 + $0x538] sm:$0xff]
        %v3403 = vld [vmem:[#allocation2 + $0x5c8] sm:$0xff]
        %v3404 = vld [vmem:[#allocation2 + $0x658] sm:$0xff]
        %v3405 = vld [vmem:[#allocation2 + $0x6e8] sm:$0xff]
        %v3406 = vld [vmem:[#allocation2 + $0x778] sm:$0xff]
        %v3407 = vld [vmem:[#allocation2 + $0x808] sm:$0xff]
        %v3408 = vld [vmem:[#allocation2 + $0x898] sm:$0xff]
        %v3409 = vld [vmem:[%s252] sm:$0xff]
        %v3410 = vld [vmem:[%s252 + $0x8] sm:$0xff]
        %v3411 = vld [vmem:[%s252 + $0x10] sm:$0xff]
        %v3412 = vld [vmem:[%s252 + $0x18] sm:$0xff]
        %v3413 = vld [vmem:[%s252 + $0x20] sm:$0xff]
        %v3414 = vld [vmem:[%s252 + $0x28] sm:$0xff]
        %v3415 = vld [vmem:[%s252 + $0x30] sm:$0xff]
        %v3416 = vld [vmem:[%s252 + $0x38] sm:$0xff]
        %v3417 = vld [vmem:[%s252 + $0x40] sm:$0xff]
        %v3418 = vld [vmem:[%s252 + $0x48] sm:$0xff]
        %v3419 = vld [vmem:[%s252 + $0x50] sm:$0xff]
        %v3420 = vld [vmem:[%s252 + $0x58] sm:$0xff]
        %v3421 = vld [vmem:[%s252 + $0x60] sm:$0xff]
        %v3422 = vld [vmem:[%s252 + $0x68] sm:$0xff]
        %v3423 = vld [vmem:[%s252 + $0x70] sm:$0xff]
        %v3424 = vld [vmem:[%s252 + $0x78] sm:$0xff]
        %v3425 = vxor.u32 %v3377, 2147483648
        %v3426 = vxor.u32 %v3378, 2147483648
        %v3427 = vxor.u32 %v3379, 2147483648
        %v3428 = vxor.u32 %v3380, 2147483648
        %v3429 = vxor.u32 %v3381, 2147483648
        %v3430 = vxor.u32 %v3382, 2147483648
        %v3431 = vxor.u32 %v3383, 2147483648
        %v3432 = vxor.u32 %v3384, 2147483648
        %v3433 = vxor.u32 %v3385, 2147483648
        %v3434 = vxor.u32 %v3386, 2147483648
        %v3435 = vxor.u32 %v3387, 2147483648
        %v3436 = vxor.u32 %v3388, 2147483648
        %v3437 = vxor.u32 %v3389, 2147483648
        %v3438 = vxor.u32 %v3390, 2147483648
        %v3439 = vxor.u32 %v3391, 2147483648
        %v3440 = vxor.u32 %v3392, 2147483648
        %v3441 = vmul.f32 %v3425, 1.442695
        %v3442 = vpow.pop %v3441
        %v3443 = vmul.f32 %v3426, 1.442695
        %v3444 = vpow.pop %v3443
        %v3445 = vmul.f32 %v3427, 1.442695
        %v3446 = vpow.pop %v3445
        %v3447 = vmul.f32 %v3428, 1.442695
        %v3448 = vpow.pop %v3447
        %v3449 = vmul.f32 %v3429, 1.442695
        %v3450 = vpow.pop %v3449
        %v3451 = vmul.f32 %v3430, 1.442695
        %v3452 = vpow.pop %v3451
        %v3453 = vmul.f32 %v3431, 1.442695
        %v3454 = vpow.pop %v3453
        %v3455 = vmul.f32 %v3432, 1.442695
        %v3456 = vpow.pop %v3455
        %v3457 = vmul.f32 %v3433, 1.442695
        %v3458 = vpow.pop %v3457
        %v3459 = vmul.f32 %v3434, 1.442695
        %v3460 = vpow.pop %v3459
        %v3461 = vmul.f32 %v3435, 1.442695
        %v3462 = vpow.pop %v3461
        %v3463 = vmul.f32 %v3436, 1.442695
        %v3464 = vpow.pop %v3463
        %v3465 = vmul.f32 %v3437, 1.442695
        %v3466 = vpow.pop %v3465
        %v3467 = vmul.f32 %v3438, 1.442695
        %v3468 = vpow.pop %v3467
        %v3469 = vmul.f32 %v3439, 1.442695
        %v3470 = vpow.pop %v3469
        %v3471 = vmul.f32 %v3440, 1.442695
        %v3472 = vpow.pop %v3471
        %v3473 = vadd.f32 %v3442, 1.0
        %v3474 = vadd.f32 %v3444, 1.0
        %v3475 = vadd.f32 %v3446, 1.0
        %v3476 = vadd.f32 %v3448, 1.0
        %v3477 = vadd.f32 %v3450, 1.0
        %v3478 = vadd.f32 %v3452, 1.0
        %v3479 = vadd.f32 %v3454, 1.0
        %v3480 = vadd.f32 %v3456, 1.0
        %v3481 = vadd.f32 %v3458, 1.0
        %v3482 = vadd.f32 %v3460, 1.0
        %v3483 = vadd.f32 %v3462, 1.0
        %v3484 = vadd.f32 %v3464, 1.0
        %v3485 = vadd.f32 %v3466, 1.0
        %v3486 = vadd.f32 %v3468, 1.0
        %v3487 = vadd.f32 %v3470, 1.0
        %v3488 = vadd.f32 %v3472, 1.0
        %v3489 = vrcp.pop %v3473
        %v3490 = vmul.f32 %v3473, %v3489
        %v3491 = vsub.f32 1.0, %v3490
        %v3492 = vmul.f32 %v3489, %v3491
        %v3493 = vadd.f32 %v3489, %v3492
        %vm3494 = vweird.f32 %v3473
        %vm3495 = vweird.f32 %v3489
        %vm3496 = vmor %vm3494, %vm3495
        %v3497 = vsel %vm3496, %v3489, %v3493
        %v3498 = vand.u32 2147483647, %v3473
        %vm3499 = vcmp.eq.f32.partialorder %v3498, 8.507059e+37
        %v3500 = vand.u32 %v3473, 2147483648
        %v3501 = vor.u32 1.1754944e-38, %v3500
        %v3502 = vsel %vm3499, %v3501, %v3497
        %v3503 = vmul.f32 1.0, %v3502
        %v3504 = vrcp.pop %v3474
        %v3505 = vmul.f32 %v3474, %v3504
        %v3506 = vsub.f32 1.0, %v3505
        %v3507 = vmul.f32 %v3504, %v3506
        %v3508 = vadd.f32 %v3504, %v3507
        %vm3509 = vweird.f32 %v3474
        %vm3510 = vweird.f32 %v3504
        %vm3511 = vmor %vm3509, %vm3510
        %v3512 = vsel %vm3511, %v3504, %v3508
        %v3513 = vand.u32 2147483647, %v3474
        %vm3514 = vcmp.eq.f32.partialorder %v3513, 8.507059e+37
        %v3515 = vand.u32 %v3474, 2147483648
        %v3516 = vor.u32 1.1754944e-38, %v3515
        %v3517 = vsel %vm3514, %v3516, %v3512
        %v3518 = vmul.f32 1.0, %v3517
        %v3519 = vrcp.pop %v3475
        %v3520 = vmul.f32 %v3475, %v3519
        %v3521 = vsub.f32 1.0, %v3520
        %v3522 = vmul.f32 %v3519, %v3521
        %v3523 = vadd.f32 %v3519, %v3522
        %vm3524 = vweird.f32 %v3475
        %vm3525 = vweird.f32 %v3519
        %vm3526 = vmor %vm3524, %vm3525
        %v3527 = vsel %vm3526, %v3519, %v3523
        %v3528 = vand.u32 2147483647, %v3475
        %vm3529 = vcmp.eq.f32.partialorder %v3528, 8.507059e+37
        %v3530 = vand.u32 %v3475, 2147483648
        %v3531 = vor.u32 1.1754944e-38, %v3530
        %v3532 = vsel %vm3529, %v3531, %v3527
        %v3533 = vmul.f32 1.0, %v3532
        %v3534 = vrcp.pop %v3476
        %v3535 = vmul.f32 %v3476, %v3534
        %v3536 = vsub.f32 1.0, %v3535
        %v3537 = vmul.f32 %v3534, %v3536
        %v3538 = vadd.f32 %v3534, %v3537
        %vm3539 = vweird.f32 %v3476
        %vm3540 = vweird.f32 %v3534
        %vm3541 = vmor %vm3539, %vm3540
        %v3542 = vsel %vm3541, %v3534, %v3538
        %v3543 = vand.u32 2147483647, %v3476
        %vm3544 = vcmp.eq.f32.partialorder %v3543, 8.507059e+37
        %v3545 = vand.u32 %v3476, 2147483648
        %v3546 = vor.u32 1.1754944e-38, %v3545
        %v3547 = vsel %vm3544, %v3546, %v3542
        %v3548 = vmul.f32 1.0, %v3547
        %v3549 = vrcp.pop %v3477
        %v3550 = vmul.f32 %v3477, %v3549
        %v3551 = vsub.f32 1.0, %v3550
        %v3552 = vmul.f32 %v3549, %v3551
        %v3553 = vadd.f32 %v3549, %v3552
        %vm3554 = vweird.f32 %v3477
        %vm3555 = vweird.f32 %v3549
        %vm3556 = vmor %vm3554, %vm3555
        %v3557 = vsel %vm3556, %v3549, %v3553
        %v3558 = vand.u32 2147483647, %v3477
        %vm3559 = vcmp.eq.f32.partialorder %v3558, 8.507059e+37
        %v3560 = vand.u32 %v3477, 2147483648
        %v3561 = vor.u32 1.1754944e-38, %v3560
        %v3562 = vsel %vm3559, %v3561, %v3557
        %v3563 = vmul.f32 1.0, %v3562
        %v3564 = vrcp.pop %v3478
        %v3565 = vmul.f32 %v3478, %v3564
        %v3566 = vsub.f32 1.0, %v3565
        %v3567 = vmul.f32 %v3564, %v3566
        %v3568 = vadd.f32 %v3564, %v3567
        %vm3569 = vweird.f32 %v3478
        %vm3570 = vweird.f32 %v3564
        %vm3571 = vmor %vm3569, %vm3570
        %v3572 = vsel %vm3571, %v3564, %v3568
        %v3573 = vand.u32 2147483647, %v3478
        %vm3574 = vcmp.eq.f32.partialorder %v3573, 8.507059e+37
        %v3575 = vand.u32 %v3478, 2147483648
        %v3576 = vor.u32 1.1754944e-38, %v3575
        %v3577 = vsel %vm3574, %v3576, %v3572
        %v3578 = vmul.f32 1.0, %v3577
        %v3579 = vrcp.pop %v3479
        %v3580 = vmul.f32 %v3479, %v3579
        %v3581 = vsub.f32 1.0, %v3580
        %v3582 = vmul.f32 %v3579, %v3581
        %v3583 = vadd.f32 %v3579, %v3582
        %vm3584 = vweird.f32 %v3479
        %vm3585 = vweird.f32 %v3579
        %vm3586 = vmor %vm3584, %vm3585
        %v3587 = vsel %vm3586, %v3579, %v3583
        %v3588 = vand.u32 2147483647, %v3479
        %vm3589 = vcmp.eq.f32.partialorder %v3588, 8.507059e+37
        %v3590 = vand.u32 %v3479, 2147483648
        %v3591 = vor.u32 1.1754944e-38, %v3590
        %v3592 = vsel %vm3589, %v3591, %v3587
        %v3593 = vmul.f32 1.0, %v3592
        %v3594 = vrcp.pop %v3480
        %v3595 = vmul.f32 %v3480, %v3594
        %v3596 = vsub.f32 1.0, %v3595
        %v3597 = vmul.f32 %v3594, %v3596
        %v3598 = vadd.f32 %v3594, %v3597
        %vm3599 = vweird.f32 %v3480
        %vm3600 = vweird.f32 %v3594
        %vm3601 = vmor %vm3599, %vm3600
        %v3602 = vsel %vm3601, %v3594, %v3598
        %v3603 = vand.u32 2147483647, %v3480
        %vm3604 = vcmp.eq.f32.partialorder %v3603, 8.507059e+37
        %v3605 = vand.u32 %v3480, 2147483648
        %v3606 = vor.u32 1.1754944e-38, %v3605
        %v3607 = vsel %vm3604, %v3606, %v3602
        %v3608 = vmul.f32 1.0, %v3607
        %v3609 = vrcp.pop %v3481
        %v3610 = vmul.f32 %v3481, %v3609
        %v3611 = vsub.f32 1.0, %v3610
        %v3612 = vmul.f32 %v3609, %v3611
        %v3613 = vadd.f32 %v3609, %v3612
        %vm3614 = vweird.f32 %v3481
        %vm3615 = vweird.f32 %v3609
        %vm3616 = vmor %vm3614, %vm3615
        %v3617 = vsel %vm3616, %v3609, %v3613
        %v3618 = vand.u32 2147483647, %v3481
        %vm3619 = vcmp.eq.f32.partialorder %v3618, 8.507059e+37
        %v3620 = vand.u32 %v3481, 2147483648
        %v3621 = vor.u32 1.1754944e-38, %v3620
        %v3622 = vsel %vm3619, %v3621, %v3617
        %v3623 = vmul.f32 1.0, %v3622
        %v3624 = vrcp.pop %v3482
        %v3625 = vmul.f32 %v3482, %v3624
        %v3626 = vsub.f32 1.0, %v3625
        %v3627 = vmul.f32 %v3624, %v3626
        %v3628 = vadd.f32 %v3624, %v3627
        %vm3629 = vweird.f32 %v3482
        %vm3630 = vweird.f32 %v3624
        %vm3631 = vmor %vm3629, %vm3630
        %v3632 = vsel %vm3631, %v3624, %v3628
        %v3633 = vand.u32 2147483647, %v3482
        %vm3634 = vcmp.eq.f32.partialorder %v3633, 8.507059e+37
        %v3635 = vand.u32 %v3482, 2147483648
        %v3636 = vor.u32 1.1754944e-38, %v3635
        %v3637 = vsel %vm3634, %v3636, %v3632
        %v3638 = vmul.f32 1.0, %v3637
        %v3639 = vrcp.pop %v3483
        %v3640 = vmul.f32 %v3483, %v3639
        %v3641 = vsub.f32 1.0, %v3640
        %v3642 = vmul.f32 %v3639, %v3641
        %v3643 = vadd.f32 %v3639, %v3642
        %vm3644 = vweird.f32 %v3483
        %vm3645 = vweird.f32 %v3639
        %vm3646 = vmor %vm3644, %vm3645
        %v3647 = vsel %vm3646, %v3639, %v3643
        %v3648 = vand.u32 2147483647, %v3483
        %vm3649 = vcmp.eq.f32.partialorder %v3648, 8.507059e+37
        %v3650 = vand.u32 %v3483, 2147483648
        %v3651 = vor.u32 1.1754944e-38, %v3650
        %v3652 = vsel %vm3649, %v3651, %v3647
        %v3653 = vmul.f32 1.0, %v3652
        %v3654 = vrcp.pop %v3484
        %v3655 = vmul.f32 %v3484, %v3654
        %v3656 = vsub.f32 1.0, %v3655
        %v3657 = vmul.f32 %v3654, %v3656
        %v3658 = vadd.f32 %v3654, %v3657
        %vm3659 = vweird.f32 %v3484
        %vm3660 = vweird.f32 %v3654
        %vm3661 = vmor %vm3659, %vm3660
        %v3662 = vsel %vm3661, %v3654, %v3658
        %v3663 = vand.u32 2147483647, %v3484
        %vm3664 = vcmp.eq.f32.partialorder %v3663, 8.507059e+37
        %v3665 = vand.u32 %v3484, 2147483648
        %v3666 = vor.u32 1.1754944e-38, %v3665
        %v3667 = vsel %vm3664, %v3666, %v3662
        %v3668 = vmul.f32 1.0, %v3667
        %v3669 = vrcp.pop %v3485
        %v3670 = vmul.f32 %v3485, %v3669
        %v3671 = vsub.f32 1.0, %v3670
        %v3672 = vmul.f32 %v3669, %v3671
        %v3673 = vadd.f32 %v3669, %v3672
        %vm3674 = vweird.f32 %v3485
        %vm3675 = vweird.f32 %v3669
        %vm3676 = vmor %vm3674, %vm3675
        %v3677 = vsel %vm3676, %v3669, %v3673
        %v3678 = vand.u32 2147483647, %v3485
        %vm3679 = vcmp.eq.f32.partialorder %v3678, 8.507059e+37
        %v3680 = vand.u32 %v3485, 2147483648
        %v3681 = vor.u32 1.1754944e-38, %v3680
        %v3682 = vsel %vm3679, %v3681, %v3677
        %v3683 = vmul.f32 1.0, %v3682
        %v3684 = vrcp.pop %v3486
        %v3685 = vmul.f32 %v3486, %v3684
        %v3686 = vsub.f32 1.0, %v3685
        %v3687 = vmul.f32 %v3684, %v3686
        %v3688 = vadd.f32 %v3684, %v3687
        %vm3689 = vweird.f32 %v3486
        %vm3690 = vweird.f32 %v3684
        %vm3691 = vmor %vm3689, %vm3690
        %v3692 = vsel %vm3691, %v3684, %v3688
        %v3693 = vand.u32 2147483647, %v3486
        %vm3694 = vcmp.eq.f32.partialorder %v3693, 8.507059e+37
        %v3695 = vand.u32 %v3486, 2147483648
        %v3696 = vor.u32 1.1754944e-38, %v3695
        %v3697 = vsel %vm3694, %v3696, %v3692
        %v3698 = vmul.f32 1.0, %v3697
        %v3699 = vrcp.pop %v3487
        %v3700 = vmul.f32 %v3487, %v3699
        %v3701 = vsub.f32 1.0, %v3700
        %v3702 = vmul.f32 %v3699, %v3701
        %v3703 = vadd.f32 %v3699, %v3702
        %vm3704 = vweird.f32 %v3487
        %vm3705 = vweird.f32 %v3699
        %vm3706 = vmor %vm3704, %vm3705
        %v3707 = vsel %vm3706, %v3699, %v3703
        %v3708 = vand.u32 2147483647, %v3487
        %vm3709 = vcmp.eq.f32.partialorder %v3708, 8.507059e+37
        %v3710 = vand.u32 %v3487, 2147483648
        %v3711 = vor.u32 1.1754944e-38, %v3710
        %v3712 = vsel %vm3709, %v3711, %v3707
        %v3713 = vmul.f32 1.0, %v3712
        %v3714 = vrcp.pop %v3488
        %v3715 = vmul.f32 %v3488, %v3714
        %v3716 = vsub.f32 1.0, %v3715
        %v3717 = vmul.f32 %v3714, %v3716
        %v3718 = vadd.f32 %v3714, %v3717
        %vm3719 = vweird.f32 %v3488
        %vm3720 = vweird.f32 %v3714
        %vm3721 = vmor %vm3719, %vm3720
        %v3722 = vsel %vm3721, %v3714, %v3718
        %v3723 = vand.u32 2147483647, %v3488
        %vm3724 = vcmp.eq.f32.partialorder %v3723, 8.507059e+37
        %v3725 = vand.u32 %v3488, 2147483648
        %v3726 = vor.u32 1.1754944e-38, %v3725
        %v3727 = vsel %vm3724, %v3726, %v3722
        %v3728 = vmul.f32 1.0, %v3727
        %v3729 = vmul.f32 %v3377, %v3503
        %v3730 = vmul.f32 %v3378, %v3518
        %v3731 = vmul.f32 %v3379, %v3533
        %v3732 = vmul.f32 %v3380, %v3548
        %v3733 = vmul.f32 %v3381, %v3563
        %v3734 = vmul.f32 %v3382, %v3578
        %v3735 = vmul.f32 %v3383, %v3593
        %v3736 = vmul.f32 %v3384, %v3608
        %v3737 = vmul.f32 %v3385, %v3623
        %v3738 = vmul.f32 %v3386, %v3638
        %v3739 = vmul.f32 %v3387, %v3653
        %v3740 = vmul.f32 %v3388, %v3668
        %v3741 = vmul.f32 %v3389, %v3683
        %v3742 = vmul.f32 %v3390, %v3698
        %v3743 = vmul.f32 %v3391, %v3713
        %v3744 = vmul.f32 %v3392, %v3728
        %3746 = vset.pattern.permute.xlu0 2
        %3747 = vperm.xlu0 %3746, %v3409
        %v3748 = vpop.permute.xlu0 %3747
        %3751 = vset.pattern.permute.xlu0 2
        %3752 = vperm.xlu0 %3751, %v3410
        %v3753 = vpop.permute.xlu0 %3752
        %3756 = vset.pattern.permute.xlu0 2
        %3757 = vperm.xlu0 %3756, %v3411
        %v3758 = vpop.permute.xlu0 %3757
        %3761 = vset.pattern.permute.xlu0 2
        %3762 = vperm.xlu0 %3761, %v3412
        %v3763 = vpop.permute.xlu0 %3762
        %3766 = vset.pattern.permute.xlu0 2
        %3767 = vperm.xlu0 %3766, %v3413
        %v3768 = vpop.permute.xlu0 %3767
        %3771 = vset.pattern.permute.xlu0 2
        %3772 = vperm.xlu0 %3771, %v3414
        %v3773 = vpop.permute.xlu0 %3772
        %3776 = vset.pattern.permute.xlu0 2
        %3777 = vperm.xlu0 %3776, %v3415
        %v3778 = vpop.permute.xlu0 %3777
        %3781 = vset.pattern.permute.xlu0 2
        %3782 = vperm.xlu0 %3781, %v3416
        %v3783 = vpop.permute.xlu0 %3782
        %3786 = vset.pattern.permute.xlu0 2
        %3787 = vperm.xlu0 %3786, %v3417
        %v3788 = vpop.permute.xlu0 %3787
        %3791 = vset.pattern.permute.xlu0 2
        %3792 = vperm.xlu0 %3791, %v3418
        %v3793 = vpop.permute.xlu0 %3792
        %3796 = vset.pattern.permute.xlu0 2
        %3797 = vperm.xlu0 %3796, %v3419
        %v3798 = vpop.permute.xlu0 %3797
        %3801 = vset.pattern.permute.xlu0 2
        %3802 = vperm.xlu0 %3801, %v3420
        %v3803 = vpop.permute.xlu0 %3802
        %3806 = vset.pattern.permute.xlu0 2
        %3807 = vperm.xlu0 %3806, %v3421
        %v3808 = vpop.permute.xlu0 %3807
        %3811 = vset.pattern.permute.xlu0 2
        %3812 = vperm.xlu0 %3811, %v3422
        %v3813 = vpop.permute.xlu0 %3812
        %3816 = vset.pattern.permute.xlu0 2
        %3817 = vperm.xlu0 %3816, %v3423
        %v3818 = vpop.permute.xlu0 %3817
        %3821 = vset.pattern.permute.xlu0 2
        %3822 = vperm.xlu0 %3821, %v3424
        %v3823 = vpop.permute.xlu0 %3822
        %v3825 = vmul.f32 %v3393, %v3748
        %v3826 = vmul.f32 %v3394, %v3753
        %v3827 = vmul.f32 %v3395, %v3758
        %v3828 = vmul.f32 %v3396, %v3763
        %v3829 = vmul.f32 %v3397, %v3768
        %v3830 = vmul.f32 %v3398, %v3773
        %v3831 = vmul.f32 %v3399, %v3778
        %v3832 = vmul.f32 %v3400, %v3783
        %v3833 = vmul.f32 %v3401, %v3788
        %v3834 = vmul.f32 %v3402, %v3793
        %v3835 = vmul.f32 %v3403, %v3798
        %v3836 = vmul.f32 %v3404, %v3803
        %v3837 = vmul.f32 %v3405, %v3808
        %v3838 = vmul.f32 %v3406, %v3813
        %v3839 = vmul.f32 %v3407, %v3818
        %v3840 = vmul.f32 %v3408, %v3823
        %v3841 = vmul.f32 %v3729, %v3825
        %v3842 = vmul.f32 %v3730, %v3826
        %v3843 = vmul.f32 %v3731, %v3827
        %v3844 = vmul.f32 %v3732, %v3828
        %v3845 = vmul.f32 %v3733, %v3829
        %v3846 = vmul.f32 %v3734, %v3830
        %v3847 = vmul.f32 %v3735, %v3831
        %v3848 = vmul.f32 %v3736, %v3832
        %v3849 = vmul.f32 %v3737, %v3833
        %v3850 = vmul.f32 %v3738, %v3834
        %v3851 = vmul.f32 %v3739, %v3835
        %v3852 = vmul.f32 %v3740, %v3836
        %v3853 = vmul.f32 %v3741, %v3837
        %v3854 = vmul.f32 %v3742, %v3838
        %v3855 = vmul.f32 %v3743, %v3839
        %v3856 = vmul.f32 %v3744, %v3840
        %v3857 = vpack.c.bf16 %v3841, %v3841
        %v3858 = vpack.c.bf16 %v3842, %v3842
        %v3859 = vpack.c.bf16 %v3843, %v3843
        %v3860 = vpack.c.bf16 %v3844, %v3844
        %v3861 = vpack.c.bf16 %v3845, %v3845
        %v3862 = vpack.c.bf16 %v3846, %v3846
        %v3863 = vpack.c.bf16 %v3847, %v3847
        %v3864 = vpack.c.bf16 %v3848, %v3848
        %v3865 = vpack.c.bf16 %v3849, %v3849
        %v3866 = vpack.c.bf16 %v3850, %v3850
        %v3867 = vpack.c.bf16 %v3851, %v3851
        %v3868 = vpack.c.bf16 %v3852, %v3852
        %v3869 = vpack.c.bf16 %v3853, %v3853
        %v3870 = vpack.c.bf16 %v3854, %v3854
        %v3871 = vpack.c.bf16 %v3855, %v3855
        %v3872 = vpack.c.bf16 %v3856, %v3856
        %3873 = vst [vmem:[#allocation3 + $0x8] sm:$0xf] %v3857
        %3874 = vst [vmem:[#allocation3 + $0x2c] sm:$0xf] %v3858
        %3875 = vst [vmem:[#allocation3 + $0x50] sm:$0xf] %v3859
        %3876 = vst [vmem:[#allocation3 + $0x74] sm:$0xf] %v3860
        %3877 = vst [vmem:[#allocation3 + $0x98] sm:$0xf] %v3861
        %3878 = vst [vmem:[#allocation3 + $0xbc] sm:$0xf] %v3862
        %3879 = vst [vmem:[#allocation3 + $0xe0] sm:$0xf] %v3863
        %3880 = vst [vmem:[#allocation3 + $0x104] sm:$0xf] %v3864
        %3881 = vst [vmem:[#allocation3 + $0x128] sm:$0xf] %v3865
        %3882 = vst [vmem:[#allocation3 + $0x14c] sm:$0xf] %v3866
        %3883 = vst [vmem:[#allocation3 + $0x170] sm:$0xf] %v3867
        %3884 = vst [vmem:[#allocation3 + $0x194] sm:$0xf] %v3868
        %3885 = vst [vmem:[#allocation3 + $0x1b8] sm:$0xf] %v3869
        %3886 = vst [vmem:[#allocation3 + $0x1dc] sm:$0xf] %v3870
        %3887 = vst [vmem:[#allocation3 + $0x200] sm:$0xf] %v3871
        %3888 = vst [vmem:[#allocation3 + $0x224] sm:$0xf] %v3872
        %v3889 = vld [vmem:[#allocation2 + $0x30] sm:$0xff]
        %v3890 = vld [vmem:[#allocation2 + $0xc0] sm:$0xff]
        %v3891 = vld [vmem:[#allocation2 + $0x150] sm:$0xff]
        %v3892 = vld [vmem:[#allocation2 + $0x1e0] sm:$0xff]
        %v3893 = vld [vmem:[#allocation2 + $0x270] sm:$0xff]
        %v3894 = vld [vmem:[#allocation2 + $0x300] sm:$0xff]
        %v3895 = vld [vmem:[#allocation2 + $0x390] sm:$0xff]
        %v3896 = vld [vmem:[#allocation2 + $0x420] sm:$0xff]
        %v3897 = vld [vmem:[#allocation2 + $0x4b0] sm:$0xff]
        %v3898 = vld [vmem:[#allocation2 + $0x540] sm:$0xff]
        %v3899 = vld [vmem:[#allocation2 + $0x5d0] sm:$0xff]
        %v3900 = vld [vmem:[#allocation2 + $0x660] sm:$0xff]
        %v3901 = vld [vmem:[#allocation2 + $0x6f0] sm:$0xff]
        %v3902 = vld [vmem:[#allocation2 + $0x780] sm:$0xff]
        %v3903 = vld [vmem:[#allocation2 + $0x810] sm:$0xff]
        %v3904 = vld [vmem:[#allocation2 + $0x8a0] sm:$0xff]
        %v3905 = vld [vmem:[#allocation2 + $0x38] sm:$0xff]
        %v3906 = vld [vmem:[#allocation2 + $0xc8] sm:$0xff]
        %v3907 = vld [vmem:[#allocation2 + $0x158] sm:$0xff]
        %v3908 = vld [vmem:[#allocation2 + $0x1e8] sm:$0xff]
        %v3909 = vld [vmem:[#allocation2 + $0x278] sm:$0xff]
        %v3910 = vld [vmem:[#allocation2 + $0x308] sm:$0xff]
        %v3911 = vld [vmem:[#allocation2 + $0x398] sm:$0xff]
        %v3912 = vld [vmem:[#allocation2 + $0x428] sm:$0xff]
        %v3913 = vld [vmem:[#allocation2 + $0x4b8] sm:$0xff]
        %v3914 = vld [vmem:[#allocation2 + $0x548] sm:$0xff]
        %v3915 = vld [vmem:[#allocation2 + $0x5d8] sm:$0xff]
        %v3916 = vld [vmem:[#allocation2 + $0x668] sm:$0xff]
        %v3917 = vld [vmem:[#allocation2 + $0x6f8] sm:$0xff]
        %v3918 = vld [vmem:[#allocation2 + $0x788] sm:$0xff]
        %v3919 = vld [vmem:[#allocation2 + $0x818] sm:$0xff]
        %v3920 = vld [vmem:[#allocation2 + $0x8a8] sm:$0xff]
        %v3921 = vld [vmem:[%s252] sm:$0xff]
        %v3922 = vld [vmem:[%s252 + $0x8] sm:$0xff]
        %v3923 = vld [vmem:[%s252 + $0x10] sm:$0xff]
        %v3924 = vld [vmem:[%s252 + $0x18] sm:$0xff]
        %v3925 = vld [vmem:[%s252 + $0x20] sm:$0xff]
        %v3926 = vld [vmem:[%s252 + $0x28] sm:$0xff]
        %v3927 = vld [vmem:[%s252 + $0x30] sm:$0xff]
        %v3928 = vld [vmem:[%s252 + $0x38] sm:$0xff]
        %v3929 = vld [vmem:[%s252 + $0x40] sm:$0xff]
        %v3930 = vld [vmem:[%s252 + $0x48] sm:$0xff]
        %v3931 = vld [vmem:[%s252 + $0x50] sm:$0xff]
        %v3932 = vld [vmem:[%s252 + $0x58] sm:$0xff]
        %v3933 = vld [vmem:[%s252 + $0x60] sm:$0xff]
        %v3934 = vld [vmem:[%s252 + $0x68] sm:$0xff]
        %v3935 = vld [vmem:[%s252 + $0x70] sm:$0xff]
        %v3936 = vld [vmem:[%s252 + $0x78] sm:$0xff]
        %v3937 = vxor.u32 %v3889, 2147483648
        %v3938 = vxor.u32 %v3890, 2147483648
        %v3939 = vxor.u32 %v3891, 2147483648
        %v3940 = vxor.u32 %v3892, 2147483648
        %v3941 = vxor.u32 %v3893, 2147483648
        %v3942 = vxor.u32 %v3894, 2147483648
        %v3943 = vxor.u32 %v3895, 2147483648
        %v3944 = vxor.u32 %v3896, 2147483648
        %v3945 = vxor.u32 %v3897, 2147483648
        %v3946 = vxor.u32 %v3898, 2147483648
        %v3947 = vxor.u32 %v3899, 2147483648
        %v3948 = vxor.u32 %v3900, 2147483648
        %v3949 = vxor.u32 %v3901, 2147483648
        %v3950 = vxor.u32 %v3902, 2147483648
        %v3951 = vxor.u32 %v3903, 2147483648
        %v3952 = vxor.u32 %v3904, 2147483648
        %v3953 = vmul.f32 %v3937, 1.442695
        %v3954 = vpow.pop %v3953
        %v3955 = vmul.f32 %v3938, 1.442695
        %v3956 = vpow.pop %v3955
        %v3957 = vmul.f32 %v3939, 1.442695
        %v3958 = vpow.pop %v3957
        %v3959 = vmul.f32 %v3940, 1.442695
        %v3960 = vpow.pop %v3959
        %v3961 = vmul.f32 %v3941, 1.442695
        %v3962 = vpow.pop %v3961
        %v3963 = vmul.f32 %v3942, 1.442695
        %v3964 = vpow.pop %v3963
        %v3965 = vmul.f32 %v3943, 1.442695
        %v3966 = vpow.pop %v3965
        %v3967 = vmul.f32 %v3944, 1.442695
        %v3968 = vpow.pop %v3967
        %v3969 = vmul.f32 %v3945, 1.442695
        %v3970 = vpow.pop %v3969
        %v3971 = vmul.f32 %v3946, 1.442695
        %v3972 = vpow.pop %v3971
        %v3973 = vmul.f32 %v3947, 1.442695
        %v3974 = vpow.pop %v3973
        %v3975 = vmul.f32 %v3948, 1.442695
        %v3976 = vpow.pop %v3975
        %v3977 = vmul.f32 %v3949, 1.442695
        %v3978 = vpow.pop %v3977
        %v3979 = vmul.f32 %v3950, 1.442695
        %v3980 = vpow.pop %v3979
        %v3981 = vmul.f32 %v3951, 1.442695
        %v3982 = vpow.pop %v3981
        %v3983 = vmul.f32 %v3952, 1.442695
        %v3984 = vpow.pop %v3983
        %v3985 = vadd.f32 %v3954, 1.0
        %v3986 = vadd.f32 %v3956, 1.0
        %v3987 = vadd.f32 %v3958, 1.0
        %v3988 = vadd.f32 %v3960, 1.0
        %v3989 = vadd.f32 %v3962, 1.0
        %v3990 = vadd.f32 %v3964, 1.0
        %v3991 = vadd.f32 %v3966, 1.0
        %v3992 = vadd.f32 %v3968, 1.0
        %v3993 = vadd.f32 %v3970, 1.0
        %v3994 = vadd.f32 %v3972, 1.0
        %v3995 = vadd.f32 %v3974, 1.0
        %v3996 = vadd.f32 %v3976, 1.0
        %v3997 = vadd.f32 %v3978, 1.0
        %v3998 = vadd.f32 %v3980, 1.0
        %v3999 = vadd.f32 %v3982, 1.0
        %v4000 = vadd.f32 %v3984, 1.0
        %v4001 = vrcp.pop %v3985
        %v4002 = vmul.f32 %v3985, %v4001
        %v4003 = vsub.f32 1.0, %v4002
        %v4004 = vmul.f32 %v4001, %v4003
        %v4005 = vadd.f32 %v4001, %v4004
        %vm4006 = vweird.f32 %v3985
        %vm4007 = vweird.f32 %v4001
        %vm4008 = vmor %vm4006, %vm4007
        %v4009 = vsel %vm4008, %v4001, %v4005
        %v4010 = vand.u32 2147483647, %v3985
        %vm4011 = vcmp.eq.f32.partialorder %v4010, 8.507059e+37
        %v4012 = vand.u32 %v3985, 2147483648
        %v4013 = vor.u32 1.1754944e-38, %v4012
        %v4014 = vsel %vm4011, %v4013, %v4009
        %v4015 = vmul.f32 1.0, %v4014
        %v4016 = vrcp.pop %v3986
        %v4017 = vmul.f32 %v3986, %v4016
        %v4018 = vsub.f32 1.0, %v4017
        %v4019 = vmul.f32 %v4016, %v4018
        %v4020 = vadd.f32 %v4016, %v4019
        %vm4021 = vweird.f32 %v3986
        %vm4022 = vweird.f32 %v4016
        %vm4023 = vmor %vm4021, %vm4022
        %v4024 = vsel %vm4023, %v4016, %v4020
        %v4025 = vand.u32 2147483647, %v3986
        %vm4026 = vcmp.eq.f32.partialorder %v4025, 8.507059e+37
        %v4027 = vand.u32 %v3986, 2147483648
        %v4028 = vor.u32 1.1754944e-38, %v4027
        %v4029 = vsel %vm4026, %v4028, %v4024
        %v4030 = vmul.f32 1.0, %v4029
        %v4031 = vrcp.pop %v3987
        %v4032 = vmul.f32 %v3987, %v4031
        %v4033 = vsub.f32 1.0, %v4032
        %v4034 = vmul.f32 %v4031, %v4033
        %v4035 = vadd.f32 %v4031, %v4034
        %vm4036 = vweird.f32 %v3987
        %vm4037 = vweird.f32 %v4031
        %vm4038 = vmor %vm4036, %vm4037
        %v4039 = vsel %vm4038, %v4031, %v4035
        %v4040 = vand.u32 2147483647, %v3987
        %vm4041 = vcmp.eq.f32.partialorder %v4040, 8.507059e+37
        %v4042 = vand.u32 %v3987, 2147483648
        %v4043 = vor.u32 1.1754944e-38, %v4042
        %v4044 = vsel %vm4041, %v4043, %v4039
        %v4045 = vmul.f32 1.0, %v4044
        %v4046 = vrcp.pop %v3988
        %v4047 = vmul.f32 %v3988, %v4046
        %v4048 = vsub.f32 1.0, %v4047
        %v4049 = vmul.f32 %v4046, %v4048
        %v4050 = vadd.f32 %v4046, %v4049
        %vm4051 = vweird.f32 %v3988
        %vm4052 = vweird.f32 %v4046
        %vm4053 = vmor %vm4051, %vm4052
        %v4054 = vsel %vm4053, %v4046, %v4050
        %v4055 = vand.u32 2147483647, %v3988
        %vm4056 = vcmp.eq.f32.partialorder %v4055, 8.507059e+37
        %v4057 = vand.u32 %v3988, 2147483648
        %v4058 = vor.u32 1.1754944e-38, %v4057
        %v4059 = vsel %vm4056, %v4058, %v4054
        %v4060 = vmul.f32 1.0, %v4059
        %v4061 = vrcp.pop %v3989
        %v4062 = vmul.f32 %v3989, %v4061
        %v4063 = vsub.f32 1.0, %v4062
        %v4064 = vmul.f32 %v4061, %v4063
        %v4065 = vadd.f32 %v4061, %v4064
        %vm4066 = vweird.f32 %v3989
        %vm4067 = vweird.f32 %v4061
        %vm4068 = vmor %vm4066, %vm4067
        %v4069 = vsel %vm4068, %v4061, %v4065
        %v4070 = vand.u32 2147483647, %v3989
        %vm4071 = vcmp.eq.f32.partialorder %v4070, 8.507059e+37
        %v4072 = vand.u32 %v3989, 2147483648
        %v4073 = vor.u32 1.1754944e-38, %v4072
        %v4074 = vsel %vm4071, %v4073, %v4069
        %v4075 = vmul.f32 1.0, %v4074
        %v4076 = vrcp.pop %v3990
        %v4077 = vmul.f32 %v3990, %v4076
        %v4078 = vsub.f32 1.0, %v4077
        %v4079 = vmul.f32 %v4076, %v4078
        %v4080 = vadd.f32 %v4076, %v4079
        %vm4081 = vweird.f32 %v3990
        %vm4082 = vweird.f32 %v4076
        %vm4083 = vmor %vm4081, %vm4082
        %v4084 = vsel %vm4083, %v4076, %v4080
        %v4085 = vand.u32 2147483647, %v3990
        %vm4086 = vcmp.eq.f32.partialorder %v4085, 8.507059e+37
        %v4087 = vand.u32 %v3990, 2147483648
        %v4088 = vor.u32 1.1754944e-38, %v4087
        %v4089 = vsel %vm4086, %v4088, %v4084
        %v4090 = vmul.f32 1.0, %v4089
        %v4091 = vrcp.pop %v3991
        %v4092 = vmul.f32 %v3991, %v4091
        %v4093 = vsub.f32 1.0, %v4092
        %v4094 = vmul.f32 %v4091, %v4093
        %v4095 = vadd.f32 %v4091, %v4094
        %vm4096 = vweird.f32 %v3991
        %vm4097 = vweird.f32 %v4091
        %vm4098 = vmor %vm4096, %vm4097
        %v4099 = vsel %vm4098, %v4091, %v4095
        %v4100 = vand.u32 2147483647, %v3991
        %vm4101 = vcmp.eq.f32.partialorder %v4100, 8.507059e+37
        %v4102 = vand.u32 %v3991, 2147483648
        %v4103 = vor.u32 1.1754944e-38, %v4102
        %v4104 = vsel %vm4101, %v4103, %v4099
        %v4105 = vmul.f32 1.0, %v4104
        %v4106 = vrcp.pop %v3992
        %v4107 = vmul.f32 %v3992, %v4106
        %v4108 = vsub.f32 1.0, %v4107
        %v4109 = vmul.f32 %v4106, %v4108
        %v4110 = vadd.f32 %v4106, %v4109
        %vm4111 = vweird.f32 %v3992
        %vm4112 = vweird.f32 %v4106
        %vm4113 = vmor %vm4111, %vm4112
        %v4114 = vsel %vm4113, %v4106, %v4110
        %v4115 = vand.u32 2147483647, %v3992
        %vm4116 = vcmp.eq.f32.partialorder %v4115, 8.507059e+37
        %v4117 = vand.u32 %v3992, 2147483648
        %v4118 = vor.u32 1.1754944e-38, %v4117
        %v4119 = vsel %vm4116, %v4118, %v4114
        %v4120 = vmul.f32 1.0, %v4119
        %v4121 = vrcp.pop %v3993
        %v4122 = vmul.f32 %v3993, %v4121
        %v4123 = vsub.f32 1.0, %v4122
        %v4124 = vmul.f32 %v4121, %v4123
        %v4125 = vadd.f32 %v4121, %v4124
        %vm4126 = vweird.f32 %v3993
        %vm4127 = vweird.f32 %v4121
        %vm4128 = vmor %vm4126, %vm4127
        %v4129 = vsel %vm4128, %v4121, %v4125
        %v4130 = vand.u32 2147483647, %v3993
        %vm4131 = vcmp.eq.f32.partialorder %v4130, 8.507059e+37
        %v4132 = vand.u32 %v3993, 2147483648
        %v4133 = vor.u32 1.1754944e-38, %v4132
        %v4134 = vsel %vm4131, %v4133, %v4129
        %v4135 = vmul.f32 1.0, %v4134
        %v4136 = vrcp.pop %v3994
        %v4137 = vmul.f32 %v3994, %v4136
        %v4138 = vsub.f32 1.0, %v4137
        %v4139 = vmul.f32 %v4136, %v4138
        %v4140 = vadd.f32 %v4136, %v4139
        %vm4141 = vweird.f32 %v3994
        %vm4142 = vweird.f32 %v4136
        %vm4143 = vmor %vm4141, %vm4142
        %v4144 = vsel %vm4143, %v4136, %v4140
        %v4145 = vand.u32 2147483647, %v3994
        %vm4146 = vcmp.eq.f32.partialorder %v4145, 8.507059e+37
        %v4147 = vand.u32 %v3994, 2147483648
        %v4148 = vor.u32 1.1754944e-38, %v4147
        %v4149 = vsel %vm4146, %v4148, %v4144
        %v4150 = vmul.f32 1.0, %v4149
        %v4151 = vrcp.pop %v3995
        %v4152 = vmul.f32 %v3995, %v4151
        %v4153 = vsub.f32 1.0, %v4152
        %v4154 = vmul.f32 %v4151, %v4153
        %v4155 = vadd.f32 %v4151, %v4154
        %vm4156 = vweird.f32 %v3995
        %vm4157 = vweird.f32 %v4151
        %vm4158 = vmor %vm4156, %vm4157
        %v4159 = vsel %vm4158, %v4151, %v4155
        %v4160 = vand.u32 2147483647, %v3995
        %vm4161 = vcmp.eq.f32.partialorder %v4160, 8.507059e+37
        %v4162 = vand.u32 %v3995, 2147483648
        %v4163 = vor.u32 1.1754944e-38, %v4162
        %v4164 = vsel %vm4161, %v4163, %v4159
        %v4165 = vmul.f32 1.0, %v4164
        %v4166 = vrcp.pop %v3996
        %v4167 = vmul.f32 %v3996, %v4166
        %v4168 = vsub.f32 1.0, %v4167
        %v4169 = vmul.f32 %v4166, %v4168
        %v4170 = vadd.f32 %v4166, %v4169
        %vm4171 = vweird.f32 %v3996
        %vm4172 = vweird.f32 %v4166
        %vm4173 = vmor %vm4171, %vm4172
        %v4174 = vsel %vm4173, %v4166, %v4170
        %v4175 = vand.u32 2147483647, %v3996
        %vm4176 = vcmp.eq.f32.partialorder %v4175, 8.507059e+37
        %v4177 = vand.u32 %v3996, 2147483648
        %v4178 = vor.u32 1.1754944e-38, %v4177
        %v4179 = vsel %vm4176, %v4178, %v4174
        %v4180 = vmul.f32 1.0, %v4179
        %v4181 = vrcp.pop %v3997
        %v4182 = vmul.f32 %v3997, %v4181
        %v4183 = vsub.f32 1.0, %v4182
        %v4184 = vmul.f32 %v4181, %v4183
        %v4185 = vadd.f32 %v4181, %v4184
        %vm4186 = vweird.f32 %v3997
        %vm4187 = vweird.f32 %v4181
        %vm4188 = vmor %vm4186, %vm4187
        %v4189 = vsel %vm4188, %v4181, %v4185
        %v4190 = vand.u32 2147483647, %v3997
        %vm4191 = vcmp.eq.f32.partialorder %v4190, 8.507059e+37
        %v4192 = vand.u32 %v3997, 2147483648
        %v4193 = vor.u32 1.1754944e-38, %v4192
        %v4194 = vsel %vm4191, %v4193, %v4189
        %v4195 = vmul.f32 1.0, %v4194
        %v4196 = vrcp.pop %v3998
        %v4197 = vmul.f32 %v3998, %v4196
        %v4198 = vsub.f32 1.0, %v4197
        %v4199 = vmul.f32 %v4196, %v4198
        %v4200 = vadd.f32 %v4196, %v4199
        %vm4201 = vweird.f32 %v3998
        %vm4202 = vweird.f32 %v4196
        %vm4203 = vmor %vm4201, %vm4202
        %v4204 = vsel %vm4203, %v4196, %v4200
        %v4205 = vand.u32 2147483647, %v3998
        %vm4206 = vcmp.eq.f32.partialorder %v4205, 8.507059e+37
        %v4207 = vand.u32 %v3998, 2147483648
        %v4208 = vor.u32 1.1754944e-38, %v4207
        %v4209 = vsel %vm4206, %v4208, %v4204
        %v4210 = vmul.f32 1.0, %v4209
        %v4211 = vrcp.pop %v3999
        %v4212 = vmul.f32 %v3999, %v4211
        %v4213 = vsub.f32 1.0, %v4212
        %v4214 = vmul.f32 %v4211, %v4213
        %v4215 = vadd.f32 %v4211, %v4214
        %vm4216 = vweird.f32 %v3999
        %vm4217 = vweird.f32 %v4211
        %vm4218 = vmor %vm4216, %vm4217
        %v4219 = vsel %vm4218, %v4211, %v4215
        %v4220 = vand.u32 2147483647, %v3999
        %vm4221 = vcmp.eq.f32.partialorder %v4220, 8.507059e+37
        %v4222 = vand.u32 %v3999, 2147483648
        %v4223 = vor.u32 1.1754944e-38, %v4222
        %v4224 = vsel %vm4221, %v4223, %v4219
        %v4225 = vmul.f32 1.0, %v4224
        %v4226 = vrcp.pop %v4000
        %v4227 = vmul.f32 %v4000, %v4226
        %v4228 = vsub.f32 1.0, %v4227
        %v4229 = vmul.f32 %v4226, %v4228
        %v4230 = vadd.f32 %v4226, %v4229
        %vm4231 = vweird.f32 %v4000
        %vm4232 = vweird.f32 %v4226
        %vm4233 = vmor %vm4231, %vm4232
        %v4234 = vsel %vm4233, %v4226, %v4230
        %v4235 = vand.u32 2147483647, %v4000
        %vm4236 = vcmp.eq.f32.partialorder %v4235, 8.507059e+37
        %v4237 = vand.u32 %v4000, 2147483648
        %v4238 = vor.u32 1.1754944e-38, %v4237
        %v4239 = vsel %vm4236, %v4238, %v4234
        %v4240 = vmul.f32 1.0, %v4239
        %v4241 = vmul.f32 %v3889, %v4015
        %v4242 = vmul.f32 %v3890, %v4030
        %v4243 = vmul.f32 %v3891, %v4045
        %v4244 = vmul.f32 %v3892, %v4060
        %v4245 = vmul.f32 %v3893, %v4075
        %v4246 = vmul.f32 %v3894, %v4090
        %v4247 = vmul.f32 %v3895, %v4105
        %v4248 = vmul.f32 %v3896, %v4120
        %v4249 = vmul.f32 %v3897, %v4135
        %v4250 = vmul.f32 %v3898, %v4150
        %v4251 = vmul.f32 %v3899, %v4165
        %v4252 = vmul.f32 %v3900, %v4180
        %v4253 = vmul.f32 %v3901, %v4195
        %v4254 = vmul.f32 %v3902, %v4210
        %v4255 = vmul.f32 %v3903, %v4225
        %v4256 = vmul.f32 %v3904, %v4240
        %4258 = vset.pattern.permute.xlu0 3
        %4259 = vperm.xlu0 %4258, %v3921
        %v4260 = vpop.permute.xlu0 %4259
        %4263 = vset.pattern.permute.xlu0 3
        %4264 = vperm.xlu0 %4263, %v3922
        %v4265 = vpop.permute.xlu0 %4264
        %4268 = vset.pattern.permute.xlu0 3
        %4269 = vperm.xlu0 %4268, %v3923
        %v4270 = vpop.permute.xlu0 %4269
        %4273 = vset.pattern.permute.xlu0 3
        %4274 = vperm.xlu0 %4273, %v3924
        %v4275 = vpop.permute.xlu0 %4274
        %4278 = vset.pattern.permute.xlu0 3
        %4279 = vperm.xlu0 %4278, %v3925
        %v4280 = vpop.permute.xlu0 %4279
        %4283 = vset.pattern.permute.xlu0 3
        %4284 = vperm.xlu0 %4283, %v3926
        %v4285 = vpop.permute.xlu0 %4284
        %4288 = vset.pattern.permute.xlu0 3
        %4289 = vperm.xlu0 %4288, %v3927
        %v4290 = vpop.permute.xlu0 %4289
        %4293 = vset.pattern.permute.xlu0 3
        %4294 = vperm.xlu0 %4293, %v3928
        %v4295 = vpop.permute.xlu0 %4294
        %4298 = vset.pattern.permute.xlu0 3
        %4299 = vperm.xlu0 %4298, %v3929
        %v4300 = vpop.permute.xlu0 %4299
        %4303 = vset.pattern.permute.xlu0 3
        %4304 = vperm.xlu0 %4303, %v3930
        %v4305 = vpop.permute.xlu0 %4304
        %4308 = vset.pattern.permute.xlu0 3
        %4309 = vperm.xlu0 %4308, %v3931
        %v4310 = vpop.permute.xlu0 %4309
        %4313 = vset.pattern.permute.xlu0 3
        %4314 = vperm.xlu0 %4313, %v3932
        %v4315 = vpop.permute.xlu0 %4314
        %4318 = vset.pattern.permute.xlu0 3
        %4319 = vperm.xlu0 %4318, %v3933
        %v4320 = vpop.permute.xlu0 %4319
        %4323 = vset.pattern.permute.xlu0 3
        %4324 = vperm.xlu0 %4323, %v3934
        %v4325 = vpop.permute.xlu0 %4324
        %4328 = vset.pattern.permute.xlu0 3
        %4329 = vperm.xlu0 %4328, %v3935
        %v4330 = vpop.permute.xlu0 %4329
        %4333 = vset.pattern.permute.xlu0 3
        %4334 = vperm.xlu0 %4333, %v3936
        %v4335 = vpop.permute.xlu0 %4334
        %v4337 = vmul.f32 %v3905, %v4260
        %v4338 = vmul.f32 %v3906, %v4265
        %v4339 = vmul.f32 %v3907, %v4270
        %v4340 = vmul.f32 %v3908, %v4275
        %v4341 = vmul.f32 %v3909, %v4280
        %v4342 = vmul.f32 %v3910, %v4285
        %v4343 = vmul.f32 %v3911, %v4290
        %v4344 = vmul.f32 %v3912, %v4295
        %v4345 = vmul.f32 %v3913, %v4300
        %v4346 = vmul.f32 %v3914, %v4305
        %v4347 = vmul.f32 %v3915, %v4310
        %v4348 = vmul.f32 %v3916, %v4315
        %v4349 = vmul.f32 %v3917, %v4320
        %v4350 = vmul.f32 %v3918, %v4325
        %v4351 = vmul.f32 %v3919, %v4330
        %v4352 = vmul.f32 %v3920, %v4335
        %v4353 = vmul.f32 %v4241, %v4337
        %v4354 = vmul.f32 %v4242, %v4338
        %v4355 = vmul.f32 %v4243, %v4339
        %v4356 = vmul.f32 %v4244, %v4340
        %v4357 = vmul.f32 %v4245, %v4341
        %v4358 = vmul.f32 %v4246, %v4342
        %v4359 = vmul.f32 %v4247, %v4343
        %v4360 = vmul.f32 %v4248, %v4344
        %v4361 = vmul.f32 %v4249, %v4345
        %v4362 = vmul.f32 %v4250, %v4346
        %v4363 = vmul.f32 %v4251, %v4347
        %v4364 = vmul.f32 %v4252, %v4348
        %v4365 = vmul.f32 %v4253, %v4349
        %v4366 = vmul.f32 %v4254, %v4350
        %v4367 = vmul.f32 %v4255, %v4351
        %v4368 = vmul.f32 %v4256, %v4352
        %v4369 = vpack.c.bf16 %v4353, %v4353
        %v4370 = vpack.c.bf16 %v4354, %v4354
        %v4371 = vpack.c.bf16 %v4355, %v4355
        %v4372 = vpack.c.bf16 %v4356, %v4356
        %v4373 = vpack.c.bf16 %v4357, %v4357
        %v4374 = vpack.c.bf16 %v4358, %v4358
        %v4375 = vpack.c.bf16 %v4359, %v4359
        %v4376 = vpack.c.bf16 %v4360, %v4360
        %v4377 = vpack.c.bf16 %v4361, %v4361
        %v4378 = vpack.c.bf16 %v4362, %v4362
        %v4379 = vpack.c.bf16 %v4363, %v4363
        %v4380 = vpack.c.bf16 %v4364, %v4364
        %v4381 = vpack.c.bf16 %v4365, %v4365
        %v4382 = vpack.c.bf16 %v4366, %v4366
        %v4383 = vpack.c.bf16 %v4367, %v4367
        %v4384 = vpack.c.bf16 %v4368, %v4368
        %4385 = vst [vmem:[#allocation3 + $0xc] sm:$0xf] %v4369
        %4386 = vst [vmem:[#allocation3 + $0x30] sm:$0xf] %v4370
        %4387 = vst [vmem:[#allocation3 + $0x54] sm:$0xf] %v4371
        %4388 = vst [vmem:[#allocation3 + $0x78] sm:$0xf] %v4372
        %4389 = vst [vmem:[#allocation3 + $0x9c] sm:$0xf] %v4373
        %4390 = vst [vmem:[#allocation3 + $0xc0] sm:$0xf] %v4374
        %4391 = vst [vmem:[#allocation3 + $0xe4] sm:$0xf] %v4375
        %4392 = vst [vmem:[#allocation3 + $0x108] sm:$0xf] %v4376
        %4393 = vst [vmem:[#allocation3 + $0x12c] sm:$0xf] %v4377
        %4394 = vst [vmem:[#allocation3 + $0x150] sm:$0xf] %v4378
        %4395 = vst [vmem:[#allocation3 + $0x174] sm:$0xf] %v4379
        %4396 = vst [vmem:[#allocation3 + $0x198] sm:$0xf] %v4380
        %4397 = vst [vmem:[#allocation3 + $0x1bc] sm:$0xf] %v4381
        %4398 = vst [vmem:[#allocation3 + $0x1e0] sm:$0xf] %v4382
        %4399 = vst [vmem:[#allocation3 + $0x204] sm:$0xf] %v4383
        %4400 = vst [vmem:[#allocation3 + $0x228] sm:$0xf] %v4384
        %v4401 = vld [vmem:[#allocation2 + $0x40] sm:$0xff]
        %v4402 = vld [vmem:[#allocation2 + $0xd0] sm:$0xff]
        %v4403 = vld [vmem:[#allocation2 + $0x160] sm:$0xff]
        %v4404 = vld [vmem:[#allocation2 + $0x1f0] sm:$0xff]
        %v4405 = vld [vmem:[#allocation2 + $0x280] sm:$0xff]
        %v4406 = vld [vmem:[#allocation2 + $0x310] sm:$0xff]
        %v4407 = vld [vmem:[#allocation2 + $0x3a0] sm:$0xff]
        %v4408 = vld [vmem:[#allocation2 + $0x430] sm:$0xff]
        %v4409 = vld [vmem:[#allocation2 + $0x4c0] sm:$0xff]
        %v4410 = vld [vmem:[#allocation2 + $0x550] sm:$0xff]
        %v4411 = vld [vmem:[#allocation2 + $0x5e0] sm:$0xff]
        %v4412 = vld [vmem:[#allocation2 + $0x670] sm:$0xff]
        %v4413 = vld [vmem:[#allocation2 + $0x700] sm:$0xff]
        %v4414 = vld [vmem:[#allocation2 + $0x790] sm:$0xff]
        %v4415 = vld [vmem:[#allocation2 + $0x820] sm:$0xff]
        %v4416 = vld [vmem:[#allocation2 + $0x8b0] sm:$0xff]
        %v4417 = vld [vmem:[#allocation2 + $0x48] sm:$0xff]
        %v4418 = vld [vmem:[#allocation2 + $0xd8] sm:$0xff]
        %v4419 = vld [vmem:[#allocation2 + $0x168] sm:$0xff]
        %v4420 = vld [vmem:[#allocation2 + $0x1f8] sm:$0xff]
        %v4421 = vld [vmem:[#allocation2 + $0x288] sm:$0xff]
        %v4422 = vld [vmem:[#allocation2 + $0x318] sm:$0xff]
        %v4423 = vld [vmem:[#allocation2 + $0x3a8] sm:$0xff]
        %v4424 = vld [vmem:[#allocation2 + $0x438] sm:$0xff]
        %v4425 = vld [vmem:[#allocation2 + $0x4c8] sm:$0xff]
        %v4426 = vld [vmem:[#allocation2 + $0x558] sm:$0xff]
        %v4427 = vld [vmem:[#allocation2 + $0x5e8] sm:$0xff]
        %v4428 = vld [vmem:[#allocation2 + $0x678] sm:$0xff]
        %v4429 = vld [vmem:[#allocation2 + $0x708] sm:$0xff]
        %v4430 = vld [vmem:[#allocation2 + $0x798] sm:$0xff]
        %v4431 = vld [vmem:[#allocation2 + $0x828] sm:$0xff]
        %v4432 = vld [vmem:[#allocation2 + $0x8b8] sm:$0xff]
        %v4433 = vld [vmem:[%s252] sm:$0xff]
        %v4434 = vld [vmem:[%s252 + $0x8] sm:$0xff]
        %v4435 = vld [vmem:[%s252 + $0x10] sm:$0xff]
        %v4436 = vld [vmem:[%s252 + $0x18] sm:$0xff]
        %v4437 = vld [vmem:[%s252 + $0x20] sm:$0xff]
        %v4438 = vld [vmem:[%s252 + $0x28] sm:$0xff]
        %v4439 = vld [vmem:[%s252 + $0x30] sm:$0xff]
        %v4440 = vld [vmem:[%s252 + $0x38] sm:$0xff]
        %v4441 = vld [vmem:[%s252 + $0x40] sm:$0xff]
        %v4442 = vld [vmem:[%s252 + $0x48] sm:$0xff]
        %v4443 = vld [vmem:[%s252 + $0x50] sm:$0xff]
        %v4444 = vld [vmem:[%s252 + $0x58] sm:$0xff]
        %v4445 = vld [vmem:[%s252 + $0x60] sm:$0xff]
        %v4446 = vld [vmem:[%s252 + $0x68] sm:$0xff]
        %v4447 = vld [vmem:[%s252 + $0x70] sm:$0xff]
        %v4448 = vld [vmem:[%s252 + $0x78] sm:$0xff]
        %v4449 = vxor.u32 %v4401, 2147483648
        %v4450 = vxor.u32 %v4402, 2147483648
        %v4451 = vxor.u32 %v4403, 2147483648
        %v4452 = vxor.u32 %v4404, 2147483648
        %v4453 = vxor.u32 %v4405, 2147483648
        %v4454 = vxor.u32 %v4406, 2147483648
        %v4455 = vxor.u32 %v4407, 2147483648
        %v4456 = vxor.u32 %v4408, 2147483648
        %v4457 = vxor.u32 %v4409, 2147483648
        %v4458 = vxor.u32 %v4410, 2147483648
        %v4459 = vxor.u32 %v4411, 2147483648
        %v4460 = vxor.u32 %v4412, 2147483648
        %v4461 = vxor.u32 %v4413, 2147483648
        %v4462 = vxor.u32 %v4414, 2147483648
        %v4463 = vxor.u32 %v4415, 2147483648
        %v4464 = vxor.u32 %v4416, 2147483648
        %v4465 = vmul.f32 %v4449, 1.442695
        %v4466 = vpow.pop %v4465
        %v4467 = vmul.f32 %v4450, 1.442695
        %v4468 = vpow.pop %v4467
        %v4469 = vmul.f32 %v4451, 1.442695
        %v4470 = vpow.pop %v4469
        %v4471 = vmul.f32 %v4452, 1.442695
        %v4472 = vpow.pop %v4471
        %v4473 = vmul.f32 %v4453, 1.442695
        %v4474 = vpow.pop %v4473
        %v4475 = vmul.f32 %v4454, 1.442695
        %v4476 = vpow.pop %v4475
        %v4477 = vmul.f32 %v4455, 1.442695
        %v4478 = vpow.pop %v4477
        %v4479 = vmul.f32 %v4456, 1.442695
        %v4480 = vpow.pop %v4479
        %v4481 = vmul.f32 %v4457, 1.442695
        %v4482 = vpow.pop %v4481
        %v4483 = vmul.f32 %v4458, 1.442695
        %v4484 = vpow.pop %v4483
        %v4485 = vmul.f32 %v4459, 1.442695
        %v4486 = vpow.pop %v4485
        %v4487 = vmul.f32 %v4460, 1.442695
        %v4488 = vpow.pop %v4487
        %v4489 = vmul.f32 %v4461, 1.442695
        %v4490 = vpow.pop %v4489
        %v4491 = vmul.f32 %v4462, 1.442695
        %v4492 = vpow.pop %v4491
        %v4493 = vmul.f32 %v4463, 1.442695
        %v4494 = vpow.pop %v4493
        %v4495 = vmul.f32 %v4464, 1.442695
        %v4496 = vpow.pop %v4495
        %v4497 = vadd.f32 %v4466, 1.0
        %v4498 = vadd.f32 %v4468, 1.0
        %v4499 = vadd.f32 %v4470, 1.0
        %v4500 = vadd.f32 %v4472, 1.0
        %v4501 = vadd.f32 %v4474, 1.0
        %v4502 = vadd.f32 %v4476, 1.0
        %v4503 = vadd.f32 %v4478, 1.0
        %v4504 = vadd.f32 %v4480, 1.0
        %v4505 = vadd.f32 %v4482, 1.0
        %v4506 = vadd.f32 %v4484, 1.0
        %v4507 = vadd.f32 %v4486, 1.0
        %v4508 = vadd.f32 %v4488, 1.0
        %v4509 = vadd.f32 %v4490, 1.0
        %v4510 = vadd.f32 %v4492, 1.0
        %v4511 = vadd.f32 %v4494, 1.0
        %v4512 = vadd.f32 %v4496, 1.0
        %v4513 = vrcp.pop %v4497
        %v4514 = vmul.f32 %v4497, %v4513
        %v4515 = vsub.f32 1.0, %v4514
        %v4516 = vmul.f32 %v4513, %v4515
        %v4517 = vadd.f32 %v4513, %v4516
        %vm4518 = vweird.f32 %v4497
        %vm4519 = vweird.f32 %v4513
        %vm4520 = vmor %vm4518, %vm4519
        %v4521 = vsel %vm4520, %v4513, %v4517
        %v4522 = vand.u32 2147483647, %v4497
        %vm4523 = vcmp.eq.f32.partialorder %v4522, 8.507059e+37
        %v4524 = vand.u32 %v4497, 2147483648
        %v4525 = vor.u32 1.1754944e-38, %v4524
        %v4526 = vsel %vm4523, %v4525, %v4521
        %v4527 = vmul.f32 1.0, %v4526
        %v4528 = vrcp.pop %v4498
        %v4529 = vmul.f32 %v4498, %v4528
        %v4530 = vsub.f32 1.0, %v4529
        %v4531 = vmul.f32 %v4528, %v4530
        %v4532 = vadd.f32 %v4528, %v4531
        %vm4533 = vweird.f32 %v4498
        %vm4534 = vweird.f32 %v4528
        %vm4535 = vmor %vm4533, %vm4534
        %v4536 = vsel %vm4535, %v4528, %v4532
        %v4537 = vand.u32 2147483647, %v4498
        %vm4538 = vcmp.eq.f32.partialorder %v4537, 8.507059e+37
        %v4539 = vand.u32 %v4498, 2147483648
        %v4540 = vor.u32 1.1754944e-38, %v4539
        %v4541 = vsel %vm4538, %v4540, %v4536
        %v4542 = vmul.f32 1.0, %v4541
        %v4543 = vrcp.pop %v4499
        %v4544 = vmul.f32 %v4499, %v4543
        %v4545 = vsub.f32 1.0, %v4544
        %v4546 = vmul.f32 %v4543, %v4545
        %v4547 = vadd.f32 %v4543, %v4546
        %vm4548 = vweird.f32 %v4499
        %vm4549 = vweird.f32 %v4543
        %vm4550 = vmor %vm4548, %vm4549
        %v4551 = vsel %vm4550, %v4543, %v4547
        %v4552 = vand.u32 2147483647, %v4499
        %vm4553 = vcmp.eq.f32.partialorder %v4552, 8.507059e+37
        %v4554 = vand.u32 %v4499, 2147483648
        %v4555 = vor.u32 1.1754944e-38, %v4554
        %v4556 = vsel %vm4553, %v4555, %v4551
        %v4557 = vmul.f32 1.0, %v4556
        %v4558 = vrcp.pop %v4500
        %v4559 = vmul.f32 %v4500, %v4558
        %v4560 = vsub.f32 1.0, %v4559
        %v4561 = vmul.f32 %v4558, %v4560
        %v4562 = vadd.f32 %v4558, %v4561
        %vm4563 = vweird.f32 %v4500
        %vm4564 = vweird.f32 %v4558
        %vm4565 = vmor %vm4563, %vm4564
        %v4566 = vsel %vm4565, %v4558, %v4562
        %v4567 = vand.u32 2147483647, %v4500
        %vm4568 = vcmp.eq.f32.partialorder %v4567, 8.507059e+37
        %v4569 = vand.u32 %v4500, 2147483648
        %v4570 = vor.u32 1.1754944e-38, %v4569
        %v4571 = vsel %vm4568, %v4570, %v4566
        %v4572 = vmul.f32 1.0, %v4571
        %v4573 = vrcp.pop %v4501
        %v4574 = vmul.f32 %v4501, %v4573
        %v4575 = vsub.f32 1.0, %v4574
        %v4576 = vmul.f32 %v4573, %v4575
        %v4577 = vadd.f32 %v4573, %v4576
        %vm4578 = vweird.f32 %v4501
        %vm4579 = vweird.f32 %v4573
        %vm4580 = vmor %vm4578, %vm4579
        %v4581 = vsel %vm4580, %v4573, %v4577
        %v4582 = vand.u32 2147483647, %v4501
        %vm4583 = vcmp.eq.f32.partialorder %v4582, 8.507059e+37
        %v4584 = vand.u32 %v4501, 2147483648
        %v4585 = vor.u32 1.1754944e-38, %v4584
        %v4586 = vsel %vm4583, %v4585, %v4581
        %v4587 = vmul.f32 1.0, %v4586
        %v4588 = vrcp.pop %v4502
        %v4589 = vmul.f32 %v4502, %v4588
        %v4590 = vsub.f32 1.0, %v4589
        %v4591 = vmul.f32 %v4588, %v4590
        %v4592 = vadd.f32 %v4588, %v4591
        %vm4593 = vweird.f32 %v4502
        %vm4594 = vweird.f32 %v4588
        %vm4595 = vmor %vm4593, %vm4594
        %v4596 = vsel %vm4595, %v4588, %v4592
        %v4597 = vand.u32 2147483647, %v4502
        %vm4598 = vcmp.eq.f32.partialorder %v4597, 8.507059e+37
        %v4599 = vand.u32 %v4502, 2147483648
        %v4600 = vor.u32 1.1754944e-38, %v4599
        %v4601 = vsel %vm4598, %v4600, %v4596
        %v4602 = vmul.f32 1.0, %v4601
        %v4603 = vrcp.pop %v4503
        %v4604 = vmul.f32 %v4503, %v4603
        %v4605 = vsub.f32 1.0, %v4604
        %v4606 = vmul.f32 %v4603, %v4605
        %v4607 = vadd.f32 %v4603, %v4606
        %vm4608 = vweird.f32 %v4503
        %vm4609 = vweird.f32 %v4603
        %vm4610 = vmor %vm4608, %vm4609
        %v4611 = vsel %vm4610, %v4603, %v4607
        %v4612 = vand.u32 2147483647, %v4503
        %vm4613 = vcmp.eq.f32.partialorder %v4612, 8.507059e+37
        %v4614 = vand.u32 %v4503, 2147483648
        %v4615 = vor.u32 1.1754944e-38, %v4614
        %v4616 = vsel %vm4613, %v4615, %v4611
        %v4617 = vmul.f32 1.0, %v4616
        %v4618 = vrcp.pop %v4504
        %v4619 = vmul.f32 %v4504, %v4618
        %v4620 = vsub.f32 1.0, %v4619
        %v4621 = vmul.f32 %v4618, %v4620
        %v4622 = vadd.f32 %v4618, %v4621
        %vm4623 = vweird.f32 %v4504
        %vm4624 = vweird.f32 %v4618
        %vm4625 = vmor %vm4623, %vm4624
        %v4626 = vsel %vm4625, %v4618, %v4622
        %v4627 = vand.u32 2147483647, %v4504
        %vm4628 = vcmp.eq.f32.partialorder %v4627, 8.507059e+37
        %v4629 = vand.u32 %v4504, 2147483648
        %v4630 = vor.u32 1.1754944e-38, %v4629
        %v4631 = vsel %vm4628, %v4630, %v4626
        %v4632 = vmul.f32 1.0, %v4631
        %v4633 = vrcp.pop %v4505
        %v4634 = vmul.f32 %v4505, %v4633
        %v4635 = vsub.f32 1.0, %v4634
        %v4636 = vmul.f32 %v4633, %v4635
        %v4637 = vadd.f32 %v4633, %v4636
        %vm4638 = vweird.f32 %v4505
        %vm4639 = vweird.f32 %v4633
        %vm4640 = vmor %vm4638, %vm4639
        %v4641 = vsel %vm4640, %v4633, %v4637
        %v4642 = vand.u32 2147483647, %v4505
        %vm4643 = vcmp.eq.f32.partialorder %v4642, 8.507059e+37
        %v4644 = vand.u32 %v4505, 2147483648
        %v4645 = vor.u32 1.1754944e-38, %v4644
        %v4646 = vsel %vm4643, %v4645, %v4641
        %v4647 = vmul.f32 1.0, %v4646
        %v4648 = vrcp.pop %v4506
        %v4649 = vmul.f32 %v4506, %v4648
        %v4650 = vsub.f32 1.0, %v4649
        %v4651 = vmul.f32 %v4648, %v4650
        %v4652 = vadd.f32 %v4648, %v4651
        %vm4653 = vweird.f32 %v4506
        %vm4654 = vweird.f32 %v4648
        %vm4655 = vmor %vm4653, %vm4654
        %v4656 = vsel %vm4655, %v4648, %v4652
        %v4657 = vand.u32 2147483647, %v4506
        %vm4658 = vcmp.eq.f32.partialorder %v4657, 8.507059e+37
        %v4659 = vand.u32 %v4506, 2147483648
        %v4660 = vor.u32 1.1754944e-38, %v4659
        %v4661 = vsel %vm4658, %v4660, %v4656
        %v4662 = vmul.f32 1.0, %v4661
        %v4663 = vrcp.pop %v4507
        %v4664 = vmul.f32 %v4507, %v4663
        %v4665 = vsub.f32 1.0, %v4664
        %v4666 = vmul.f32 %v4663, %v4665
        %v4667 = vadd.f32 %v4663, %v4666
        %vm4668 = vweird.f32 %v4507
        %vm4669 = vweird.f32 %v4663
        %vm4670 = vmor %vm4668, %vm4669
        %v4671 = vsel %vm4670, %v4663, %v4667
        %v4672 = vand.u32 2147483647, %v4507
        %vm4673 = vcmp.eq.f32.partialorder %v4672, 8.507059e+37
        %v4674 = vand.u32 %v4507, 2147483648
        %v4675 = vor.u32 1.1754944e-38, %v4674
        %v4676 = vsel %vm4673, %v4675, %v4671
        %v4677 = vmul.f32 1.0, %v4676
        %v4678 = vrcp.pop %v4508
        %v4679 = vmul.f32 %v4508, %v4678
        %v4680 = vsub.f32 1.0, %v4679
        %v4681 = vmul.f32 %v4678, %v4680
        %v4682 = vadd.f32 %v4678, %v4681
        %vm4683 = vweird.f32 %v4508
        %vm4684 = vweird.f32 %v4678
        %vm4685 = vmor %vm4683, %vm4684
        %v4686 = vsel %vm4685, %v4678, %v4682
        %v4687 = vand.u32 2147483647, %v4508
        %vm4688 = vcmp.eq.f32.partialorder %v4687, 8.507059e+37
        %v4689 = vand.u32 %v4508, 2147483648
        %v4690 = vor.u32 1.1754944e-38, %v4689
        %v4691 = vsel %vm4688, %v4690, %v4686
        %v4692 = vmul.f32 1.0, %v4691
        %v4693 = vrcp.pop %v4509
        %v4694 = vmul.f32 %v4509, %v4693
        %v4695 = vsub.f32 1.0, %v4694
        %v4696 = vmul.f32 %v4693, %v4695
        %v4697 = vadd.f32 %v4693, %v4696
        %vm4698 = vweird.f32 %v4509
        %vm4699 = vweird.f32 %v4693
        %vm4700 = vmor %vm4698, %vm4699
        %v4701 = vsel %vm4700, %v4693, %v4697
        %v4702 = vand.u32 2147483647, %v4509
        %vm4703 = vcmp.eq.f32.partialorder %v4702, 8.507059e+37
        %v4704 = vand.u32 %v4509, 2147483648
        %v4705 = vor.u32 1.1754944e-38, %v4704
        %v4706 = vsel %vm4703, %v4705, %v4701
        %v4707 = vmul.f32 1.0, %v4706
        %v4708 = vrcp.pop %v4510
        %v4709 = vmul.f32 %v4510, %v4708
        %v4710 = vsub.f32 1.0, %v4709
        %v4711 = vmul.f32 %v4708, %v4710
        %v4712 = vadd.f32 %v4708, %v4711
        %vm4713 = vweird.f32 %v4510
        %vm4714 = vweird.f32 %v4708
        %vm4715 = vmor %vm4713, %vm4714
        %v4716 = vsel %vm4715, %v4708, %v4712
        %v4717 = vand.u32 2147483647, %v4510
        %vm4718 = vcmp.eq.f32.partialorder %v4717, 8.507059e+37
        %v4719 = vand.u32 %v4510, 2147483648
        %v4720 = vor.u32 1.1754944e-38, %v4719
        %v4721 = vsel %vm4718, %v4720, %v4716
        %v4722 = vmul.f32 1.0, %v4721
        %v4723 = vrcp.pop %v4511
        %v4724 = vmul.f32 %v4511, %v4723
        %v4725 = vsub.f32 1.0, %v4724
        %v4726 = vmul.f32 %v4723, %v4725
        %v4727 = vadd.f32 %v4723, %v4726
        %vm4728 = vweird.f32 %v4511
        %vm4729 = vweird.f32 %v4723
        %vm4730 = vmor %vm4728, %vm4729
        %v4731 = vsel %vm4730, %v4723, %v4727
        %v4732 = vand.u32 2147483647, %v4511
        %vm4733 = vcmp.eq.f32.partialorder %v4732, 8.507059e+37
        %v4734 = vand.u32 %v4511, 2147483648
        %v4735 = vor.u32 1.1754944e-38, %v4734
        %v4736 = vsel %vm4733, %v4735, %v4731
        %v4737 = vmul.f32 1.0, %v4736
        %v4738 = vrcp.pop %v4512
        %v4739 = vmul.f32 %v4512, %v4738
        %v4740 = vsub.f32 1.0, %v4739
        %v4741 = vmul.f32 %v4738, %v4740
        %v4742 = vadd.f32 %v4738, %v4741
        %vm4743 = vweird.f32 %v4512
        %vm4744 = vweird.f32 %v4738
        %vm4745 = vmor %vm4743, %vm4744
        %v4746 = vsel %vm4745, %v4738, %v4742
        %v4747 = vand.u32 2147483647, %v4512
        %vm4748 = vcmp.eq.f32.partialorder %v4747, 8.507059e+37
        %v4749 = vand.u32 %v4512, 2147483648
        %v4750 = vor.u32 1.1754944e-38, %v4749
        %v4751 = vsel %vm4748, %v4750, %v4746
        %v4752 = vmul.f32 1.0, %v4751
        %v4753 = vmul.f32 %v4401, %v4527
        %v4754 = vmul.f32 %v4402, %v4542
        %v4755 = vmul.f32 %v4403, %v4557
        %v4756 = vmul.f32 %v4404, %v4572
        %v4757 = vmul.f32 %v4405, %v4587
        %v4758 = vmul.f32 %v4406, %v4602
        %v4759 = vmul.f32 %v4407, %v4617
        %v4760 = vmul.f32 %v4408, %v4632
        %v4761 = vmul.f32 %v4409, %v4647
        %v4762 = vmul.f32 %v4410, %v4662
        %v4763 = vmul.f32 %v4411, %v4677
        %v4764 = vmul.f32 %v4412, %v4692
        %v4765 = vmul.f32 %v4413, %v4707
        %v4766 = vmul.f32 %v4414, %v4722
        %v4767 = vmul.f32 %v4415, %v4737
        %v4768 = vmul.f32 %v4416, %v4752
        %4770 = vset.pattern.permute.xlu0 4
        %4771 = vperm.xlu0 %4770, %v4433
        %v4772 = vpop.permute.xlu0 %4771
        %4775 = vset.pattern.permute.xlu0 4
        %4776 = vperm.xlu0 %4775, %v4434
        %v4777 = vpop.permute.xlu0 %4776
        %4780 = vset.pattern.permute.xlu0 4
        %4781 = vperm.xlu0 %4780, %v4435
        %v4782 = vpop.permute.xlu0 %4781
        %4785 = vset.pattern.permute.xlu0 4
        %4786 = vperm.xlu0 %4785, %v4436
        %v4787 = vpop.permute.xlu0 %4786
        %4790 = vset.pattern.permute.xlu0 4
        %4791 = vperm.xlu0 %4790, %v4437
        %v4792 = vpop.permute.xlu0 %4791
        %4795 = vset.pattern.permute.xlu0 4
        %4796 = vperm.xlu0 %4795, %v4438
        %v4797 = vpop.permute.xlu0 %4796
        %4800 = vset.pattern.permute.xlu0 4
        %4801 = vperm.xlu0 %4800, %v4439
        %v4802 = vpop.permute.xlu0 %4801
        %4805 = vset.pattern.permute.xlu0 4
        %4806 = vperm.xlu0 %4805, %v4440
        %v4807 = vpop.permute.xlu0 %4806
        %4810 = vset.pattern.permute.xlu0 4
        %4811 = vperm.xlu0 %4810, %v4441
        %v4812 = vpop.permute.xlu0 %4811
        %4815 = vset.pattern.permute.xlu0 4
        %4816 = vperm.xlu0 %4815, %v4442
        %v4817 = vpop.permute.xlu0 %4816
        %4820 = vset.pattern.permute.xlu0 4
        %4821 = vperm.xlu0 %4820, %v4443
        %v4822 = vpop.permute.xlu0 %4821
        %4825 = vset.pattern.permute.xlu0 4
        %4826 = vperm.xlu0 %4825, %v4444
        %v4827 = vpop.permute.xlu0 %4826
        %4830 = vset.pattern.permute.xlu0 4
        %4831 = vperm.xlu0 %4830, %v4445
        %v4832 = vpop.permute.xlu0 %4831
        %4835 = vset.pattern.permute.xlu0 4
        %4836 = vperm.xlu0 %4835, %v4446
        %v4837 = vpop.permute.xlu0 %4836
        %4840 = vset.pattern.permute.xlu0 4
        %4841 = vperm.xlu0 %4840, %v4447
        %v4842 = vpop.permute.xlu0 %4841
        %4845 = vset.pattern.permute.xlu0 4
        %4846 = vperm.xlu0 %4845, %v4448
        %v4847 = vpop.permute.xlu0 %4846
        %v4849 = vmul.f32 %v4417, %v4772
        %v4850 = vmul.f32 %v4418, %v4777
        %v4851 = vmul.f32 %v4419, %v4782
        %v4852 = vmul.f32 %v4420, %v4787
        %v4853 = vmul.f32 %v4421, %v4792
        %v4854 = vmul.f32 %v4422, %v4797
        %v4855 = vmul.f32 %v4423, %v4802
        %v4856 = vmul.f32 %v4424, %v4807
        %v4857 = vmul.f32 %v4425, %v4812
        %v4858 = vmul.f32 %v4426, %v4817
        %v4859 = vmul.f32 %v4427, %v4822
        %v4860 = vmul.f32 %v4428, %v4827
        %v4861 = vmul.f32 %v4429, %v4832
        %v4862 = vmul.f32 %v4430, %v4837
        %v4863 = vmul.f32 %v4431, %v4842
        %v4864 = vmul.f32 %v4432, %v4847
        %v4865 = vmul.f32 %v4753, %v4849
        %v4866 = vmul.f32 %v4754, %v4850
        %v4867 = vmul.f32 %v4755, %v4851
        %v4868 = vmul.f32 %v4756, %v4852
        %v4869 = vmul.f32 %v4757, %v4853
        %v4870 = vmul.f32 %v4758, %v4854
        %v4871 = vmul.f32 %v4759, %v4855
        %v4872 = vmul.f32 %v4760, %v4856
        %v4873 = vmul.f32 %v4761, %v4857
        %v4874 = vmul.f32 %v4762, %v4858
        %v4875 = vmul.f32 %v4763, %v4859
        %v4876 = vmul.f32 %v4764, %v4860
        %v4877 = vmul.f32 %v4765, %v4861
        %v4878 = vmul.f32 %v4766, %v4862
        %v4879 = vmul.f32 %v4767, %v4863
        %v4880 = vmul.f32 %v4768, %v4864
        %v4881 = vpack.c.bf16 %v4865, %v4865
        %v4882 = vpack.c.bf16 %v4866, %v4866
        %v4883 = vpack.c.bf16 %v4867, %v4867
        %v4884 = vpack.c.bf16 %v4868, %v4868
        %v4885 = vpack.c.bf16 %v4869, %v4869
        %v4886 = vpack.c.bf16 %v4870, %v4870
        %v4887 = vpack.c.bf16 %v4871, %v4871
        %v4888 = vpack.c.bf16 %v4872, %v4872
        %v4889 = vpack.c.bf16 %v4873, %v4873
        %v4890 = vpack.c.bf16 %v4874, %v4874
        %v4891 = vpack.c.bf16 %v4875, %v4875
        %v4892 = vpack.c.bf16 %v4876, %v4876
        %v4893 = vpack.c.bf16 %v4877, %v4877
        %v4894 = vpack.c.bf16 %v4878, %v4878
        %v4895 = vpack.c.bf16 %v4879, %v4879
        %v4896 = vpack.c.bf16 %v4880, %v4880
        %4897 = vst [vmem:[#allocation3 + $0x10] sm:$0xf] %v4881
        %4898 = vst [vmem:[#allocation3 + $0x34] sm:$0xf] %v4882
        %4899 = vst [vmem:[#allocation3 + $0x58] sm:$0xf] %v4883
        %4900 = vst [vmem:[#allocation3 + $0x7c] sm:$0xf] %v4884
        %4901 = vst [vmem:[#allocation3 + $0xa0] sm:$0xf] %v4885
        %4902 = vst [vmem:[#allocation3 + $0xc4] sm:$0xf] %v4886
        %4903 = vst [vmem:[#allocation3 + $0xe8] sm:$0xf] %v4887
        %4904 = vst [vmem:[#allocation3 + $0x10c] sm:$0xf] %v4888
        %4905 = vst [vmem:[#allocation3 + $0x130] sm:$0xf] %v4889
        %4906 = vst [vmem:[#allocation3 + $0x154] sm:$0xf] %v4890
        %4907 = vst [vmem:[#allocation3 + $0x178] sm:$0xf] %v4891
        %4908 = vst [vmem:[#allocation3 + $0x19c] sm:$0xf] %v4892
        %4909 = vst [vmem:[#allocation3 + $0x1c0] sm:$0xf] %v4893
        %4910 = vst [vmem:[#allocation3 + $0x1e4] sm:$0xf] %v4894
        %4911 = vst [vmem:[#allocation3 + $0x208] sm:$0xf] %v4895
        %4912 = vst [vmem:[#allocation3 + $0x22c] sm:$0xf] %v4896
        %v4913 = vld [vmem:[#allocation2 + $0x50] sm:$0xff]
        %v4914 = vld [vmem:[#allocation2 + $0xe0] sm:$0xff]
        %v4915 = vld [vmem:[#allocation2 + $0x170] sm:$0xff]
        %v4916 = vld [vmem:[#allocation2 + $0x200] sm:$0xff]
        %v4917 = vld [vmem:[#allocation2 + $0x290] sm:$0xff]
        %v4918 = vld [vmem:[#allocation2 + $0x320] sm:$0xff]
        %v4919 = vld [vmem:[#allocation2 + $0x3b0] sm:$0xff]
        %v4920 = vld [vmem:[#allocation2 + $0x440] sm:$0xff]
        %v4921 = vld [vmem:[#allocation2 + $0x4d0] sm:$0xff]
        %v4922 = vld [vmem:[#allocation2 + $0x560] sm:$0xff]
        %v4923 = vld [vmem:[#allocation2 + $0x5f0] sm:$0xff]
        %v4924 = vld [vmem:[#allocation2 + $0x680] sm:$0xff]
        %v4925 = vld [vmem:[#allocation2 + $0x710] sm:$0xff]
        %v4926 = vld [vmem:[#allocation2 + $0x7a0] sm:$0xff]
        %v4927 = vld [vmem:[#allocation2 + $0x830] sm:$0xff]
        %v4928 = vld [vmem:[#allocation2 + $0x8c0] sm:$0xff]
        %v4929 = vld [vmem:[#allocation2 + $0x58] sm:$0xff]
        %v4930 = vld [vmem:[#allocation2 + $0xe8] sm:$0xff]
        %v4931 = vld [vmem:[#allocation2 + $0x178] sm:$0xff]
        %v4932 = vld [vmem:[#allocation2 + $0x208] sm:$0xff]
        %v4933 = vld [vmem:[#allocation2 + $0x298] sm:$0xff]
        %v4934 = vld [vmem:[#allocation2 + $0x328] sm:$0xff]
        %v4935 = vld [vmem:[#allocation2 + $0x3b8] sm:$0xff]
        %v4936 = vld [vmem:[#allocation2 + $0x448] sm:$0xff]
        %v4937 = vld [vmem:[#allocation2 + $0x4d8] sm:$0xff]
        %v4938 = vld [vmem:[#allocation2 + $0x568] sm:$0xff]
        %v4939 = vld [vmem:[#allocation2 + $0x5f8] sm:$0xff]
        %v4940 = vld [vmem:[#allocation2 + $0x688] sm:$0xff]
        %v4941 = vld [vmem:[#allocation2 + $0x718] sm:$0xff]
        %v4942 = vld [vmem:[#allocation2 + $0x7a8] sm:$0xff]
        %v4943 = vld [vmem:[#allocation2 + $0x838] sm:$0xff]
        %v4944 = vld [vmem:[#allocation2 + $0x8c8] sm:$0xff]
        %v4945 = vld [vmem:[%s252] sm:$0xff]
        %v4946 = vld [vmem:[%s252 + $0x8] sm:$0xff]
        %v4947 = vld [vmem:[%s252 + $0x10] sm:$0xff]
        %v4948 = vld [vmem:[%s252 + $0x18] sm:$0xff]
        %v4949 = vld [vmem:[%s252 + $0x20] sm:$0xff]
        %v4950 = vld [vmem:[%s252 + $0x28] sm:$0xff]
        %v4951 = vld [vmem:[%s252 + $0x30] sm:$0xff]
        %v4952 = vld [vmem:[%s252 + $0x38] sm:$0xff]
        %v4953 = vld [vmem:[%s252 + $0x40] sm:$0xff]
        %v4954 = vld [vmem:[%s252 + $0x48] sm:$0xff]
        %v4955 = vld [vmem:[%s252 + $0x50] sm:$0xff]
        %v4956 = vld [vmem:[%s252 + $0x58] sm:$0xff]
        %v4957 = vld [vmem:[%s252 + $0x60] sm:$0xff]
        %v4958 = vld [vmem:[%s252 + $0x68] sm:$0xff]
        %v4959 = vld [vmem:[%s252 + $0x70] sm:$0xff]
        %v4960 = vld [vmem:[%s252 + $0x78] sm:$0xff]
        %v4961 = vxor.u32 %v4913, 2147483648
        %v4962 = vxor.u32 %v4914, 2147483648
        %v4963 = vxor.u32 %v4915, 2147483648
        %v4964 = vxor.u32 %v4916, 2147483648
        %v4965 = vxor.u32 %v4917, 2147483648
        %v4966 = vxor.u32 %v4918, 2147483648
        %v4967 = vxor.u32 %v4919, 2147483648
        %v4968 = vxor.u32 %v4920, 2147483648
        %v4969 = vxor.u32 %v4921, 2147483648
        %v4970 = vxor.u32 %v4922, 2147483648
        %v4971 = vxor.u32 %v4923, 2147483648
        %v4972 = vxor.u32 %v4924, 2147483648
        %v4973 = vxor.u32 %v4925, 2147483648
        %v4974 = vxor.u32 %v4926, 2147483648
        %v4975 = vxor.u32 %v4927, 2147483648
        %v4976 = vxor.u32 %v4928, 2147483648
        %v4977 = vmul.f32 %v4961, 1.442695
        %v4978 = vpow.pop %v4977
        %v4979 = vmul.f32 %v4962, 1.442695
        %v4980 = vpow.pop %v4979
        %v4981 = vmul.f32 %v4963, 1.442695
        %v4982 = vpow.pop %v4981
        %v4983 = vmul.f32 %v4964, 1.442695
        %v4984 = vpow.pop %v4983
        %v4985 = vmul.f32 %v4965, 1.442695
        %v4986 = vpow.pop %v4985
        %v4987 = vmul.f32 %v4966, 1.442695
        %v4988 = vpow.pop %v4987
        %v4989 = vmul.f32 %v4967, 1.442695
        %v4990 = vpow.pop %v4989
        %v4991 = vmul.f32 %v4968, 1.442695
        %v4992 = vpow.pop %v4991
        %v4993 = vmul.f32 %v4969, 1.442695
        %v4994 = vpow.pop %v4993
        %v4995 = vmul.f32 %v4970, 1.442695
        %v4996 = vpow.pop %v4995
        %v4997 = vmul.f32 %v4971, 1.442695
        %v4998 = vpow.pop %v4997
        %v4999 = vmul.f32 %v4972, 1.442695
        %v5000 = vpow.pop %v4999
        %v5001 = vmul.f32 %v4973, 1.442695
        %v5002 = vpow.pop %v5001
        %v5003 = vmul.f32 %v4974, 1.442695
        %v5004 = vpow.pop %v5003
        %v5005 = vmul.f32 %v4975, 1.442695
        %v5006 = vpow.pop %v5005
        %v5007 = vmul.f32 %v4976, 1.442695
        %v5008 = vpow.pop %v5007
        %v5009 = vadd.f32 %v4978, 1.0
        %v5010 = vadd.f32 %v4980, 1.0
        %v5011 = vadd.f32 %v4982, 1.0
        %v5012 = vadd.f32 %v4984, 1.0
        %v5013 = vadd.f32 %v4986, 1.0
        %v5014 = vadd.f32 %v4988, 1.0
        %v5015 = vadd.f32 %v4990, 1.0
        %v5016 = vadd.f32 %v4992, 1.0
        %v5017 = vadd.f32 %v4994, 1.0
        %v5018 = vadd.f32 %v4996, 1.0
        %v5019 = vadd.f32 %v4998, 1.0
        %v5020 = vadd.f32 %v5000, 1.0
        %v5021 = vadd.f32 %v5002, 1.0
        %v5022 = vadd.f32 %v5004, 1.0
        %v5023 = vadd.f32 %v5006, 1.0
        %v5024 = vadd.f32 %v5008, 1.0
        %v5025 = vrcp.pop %v5009
        %v5026 = vmul.f32 %v5009, %v5025
        %v5027 = vsub.f32 1.0, %v5026
        %v5028 = vmul.f32 %v5025, %v5027
        %v5029 = vadd.f32 %v5025, %v5028
        %vm5030 = vweird.f32 %v5009
        %vm5031 = vweird.f32 %v5025
        %vm5032 = vmor %vm5030, %vm5031
        %v5033 = vsel %vm5032, %v5025, %v5029
        %v5034 = vand.u32 2147483647, %v5009
        %vm5035 = vcmp.eq.f32.partialorder %v5034, 8.507059e+37
        %v5036 = vand.u32 %v5009, 2147483648
        %v5037 = vor.u32 1.1754944e-38, %v5036
        %v5038 = vsel %vm5035, %v5037, %v5033
        %v5039 = vmul.f32 1.0, %v5038
        %v5040 = vrcp.pop %v5010
        %v5041 = vmul.f32 %v5010, %v5040
        %v5042 = vsub.f32 1.0, %v5041
        %v5043 = vmul.f32 %v5040, %v5042
        %v5044 = vadd.f32 %v5040, %v5043
        %vm5045 = vweird.f32 %v5010
        %vm5046 = vweird.f32 %v5040
        %vm5047 = vmor %vm5045, %vm5046
        %v5048 = vsel %vm5047, %v5040, %v5044
        %v5049 = vand.u32 2147483647, %v5010
        %vm5050 = vcmp.eq.f32.partialorder %v5049, 8.507059e+37
        %v5051 = vand.u32 %v5010, 2147483648
        %v5052 = vor.u32 1.1754944e-38, %v5051
        %v5053 = vsel %vm5050, %v5052, %v5048
        %v5054 = vmul.f32 1.0, %v5053
        %v5055 = vrcp.pop %v5011
        %v5056 = vmul.f32 %v5011, %v5055
        %v5057 = vsub.f32 1.0, %v5056
        %v5058 = vmul.f32 %v5055, %v5057
        %v5059 = vadd.f32 %v5055, %v5058
        %vm5060 = vweird.f32 %v5011
        %vm5061 = vweird.f32 %v5055
        %vm5062 = vmor %vm5060, %vm5061
        %v5063 = vsel %vm5062, %v5055, %v5059
        %v5064 = vand.u32 2147483647, %v5011
        %vm5065 = vcmp.eq.f32.partialorder %v5064, 8.507059e+37
        %v5066 = vand.u32 %v5011, 2147483648
        %v5067 = vor.u32 1.1754944e-38, %v5066
        %v5068 = vsel %vm5065, %v5067, %v5063
        %v5069 = vmul.f32 1.0, %v5068
        %v5070 = vrcp.pop %v5012
        %v5071 = vmul.f32 %v5012, %v5070
        %v5072 = vsub.f32 1.0, %v5071
        %v5073 = vmul.f32 %v5070, %v5072
        %v5074 = vadd.f32 %v5070, %v5073
        %vm5075 = vweird.f32 %v5012
        %vm5076 = vweird.f32 %v5070
        %vm5077 = vmor %vm5075, %vm5076
        %v5078 = vsel %vm5077, %v5070, %v5074
        %v5079 = vand.u32 2147483647, %v5012
        %vm5080 = vcmp.eq.f32.partialorder %v5079, 8.507059e+37
        %v5081 = vand.u32 %v5012, 2147483648
        %v5082 = vor.u32 1.1754944e-38, %v5081
        %v5083 = vsel %vm5080, %v5082, %v5078
        %v5084 = vmul.f32 1.0, %v5083
        %v5085 = vrcp.pop %v5013
        %v5086 = vmul.f32 %v5013, %v5085
        %v5087 = vsub.f32 1.0, %v5086
        %v5088 = vmul.f32 %v5085, %v5087
        %v5089 = vadd.f32 %v5085, %v5088
        %vm5090 = vweird.f32 %v5013
        %vm5091 = vweird.f32 %v5085
        %vm5092 = vmor %vm5090, %vm5091
        %v5093 = vsel %vm5092, %v5085, %v5089
        %v5094 = vand.u32 2147483647, %v5013
        %vm5095 = vcmp.eq.f32.partialorder %v5094, 8.507059e+37
        %v5096 = vand.u32 %v5013, 2147483648
        %v5097 = vor.u32 1.1754944e-38, %v5096
        %v5098 = vsel %vm5095, %v5097, %v5093
        %v5099 = vmul.f32 1.0, %v5098
        %v5100 = vrcp.pop %v5014
        %v5101 = vmul.f32 %v5014, %v5100
        %v5102 = vsub.f32 1.0, %v5101
        %v5103 = vmul.f32 %v5100, %v5102
        %v5104 = vadd.f32 %v5100, %v5103
        %vm5105 = vweird.f32 %v5014
        %vm5106 = vweird.f32 %v5100
        %vm5107 = vmor %vm5105, %vm5106
        %v5108 = vsel %vm5107, %v5100, %v5104
        %v5109 = vand.u32 2147483647, %v5014
        %vm5110 = vcmp.eq.f32.partialorder %v5109, 8.507059e+37
        %v5111 = vand.u32 %v5014, 2147483648
        %v5112 = vor.u32 1.1754944e-38, %v5111
        %v5113 = vsel %vm5110, %v5112, %v5108
        %v5114 = vmul.f32 1.0, %v5113
        %v5115 = vrcp.pop %v5015
        %v5116 = vmul.f32 %v5015, %v5115
        %v5117 = vsub.f32 1.0, %v5116
        %v5118 = vmul.f32 %v5115, %v5117
        %v5119 = vadd.f32 %v5115, %v5118
        %vm5120 = vweird.f32 %v5015
        %vm5121 = vweird.f32 %v5115
        %vm5122 = vmor %vm5120, %vm5121
        %v5123 = vsel %vm5122, %v5115, %v5119
        %v5124 = vand.u32 2147483647, %v5015
        %vm5125 = vcmp.eq.f32.partialorder %v5124, 8.507059e+37
        %v5126 = vand.u32 %v5015, 2147483648
        %v5127 = vor.u32 1.1754944e-38, %v5126
        %v5128 = vsel %vm5125, %v5127, %v5123
        %v5129 = vmul.f32 1.0, %v5128
        %v5130 = vrcp.pop %v5016
        %v5131 = vmul.f32 %v5016, %v5130
        %v5132 = vsub.f32 1.0, %v5131
        %v5133 = vmul.f32 %v5130, %v5132
        %v5134 = vadd.f32 %v5130, %v5133
        %vm5135 = vweird.f32 %v5016
        %vm5136 = vweird.f32 %v5130
        %vm5137 = vmor %vm5135, %vm5136
        %v5138 = vsel %vm5137, %v5130, %v5134
        %v5139 = vand.u32 2147483647, %v5016
        %vm5140 = vcmp.eq.f32.partialorder %v5139, 8.507059e+37
        %v5141 = vand.u32 %v5016, 2147483648
        %v5142 = vor.u32 1.1754944e-38, %v5141
        %v5143 = vsel %vm5140, %v5142, %v5138
        %v5144 = vmul.f32 1.0, %v5143
        %v5145 = vrcp.pop %v5017
        %v5146 = vmul.f32 %v5017, %v5145
        %v5147 = vsub.f32 1.0, %v5146
        %v5148 = vmul.f32 %v5145, %v5147
        %v5149 = vadd.f32 %v5145, %v5148
        %vm5150 = vweird.f32 %v5017
        %vm5151 = vweird.f32 %v5145
        %vm5152 = vmor %vm5150, %vm5151
        %v5153 = vsel %vm5152, %v5145, %v5149
        %v5154 = vand.u32 2147483647, %v5017
        %vm5155 = vcmp.eq.f32.partialorder %v5154, 8.507059e+37
        %v5156 = vand.u32 %v5017, 2147483648
        %v5157 = vor.u32 1.1754944e-38, %v5156
        %v5158 = vsel %vm5155, %v5157, %v5153
        %v5159 = vmul.f32 1.0, %v5158
        %v5160 = vrcp.pop %v5018
        %v5161 = vmul.f32 %v5018, %v5160
        %v5162 = vsub.f32 1.0, %v5161
        %v5163 = vmul.f32 %v5160, %v5162
        %v5164 = vadd.f32 %v5160, %v5163
        %vm5165 = vweird.f32 %v5018
        %vm5166 = vweird.f32 %v5160
        %vm5167 = vmor %vm5165, %vm5166
        %v5168 = vsel %vm5167, %v5160, %v5164
        %v5169 = vand.u32 2147483647, %v5018
        %vm5170 = vcmp.eq.f32.partialorder %v5169, 8.507059e+37
        %v5171 = vand.u32 %v5018, 2147483648
        %v5172 = vor.u32 1.1754944e-38, %v5171
        %v5173 = vsel %vm5170, %v5172, %v5168
        %v5174 = vmul.f32 1.0, %v5173
        %v5175 = vrcp.pop %v5019
        %v5176 = vmul.f32 %v5019, %v5175
        %v5177 = vsub.f32 1.0, %v5176
        %v5178 = vmul.f32 %v5175, %v5177
        %v5179 = vadd.f32 %v5175, %v5178
        %vm5180 = vweird.f32 %v5019
        %vm5181 = vweird.f32 %v5175
        %vm5182 = vmor %vm5180, %vm5181
        %v5183 = vsel %vm5182, %v5175, %v5179
        %v5184 = vand.u32 2147483647, %v5019
        %vm5185 = vcmp.eq.f32.partialorder %v5184, 8.507059e+37
        %v5186 = vand.u32 %v5019, 2147483648
        %v5187 = vor.u32 1.1754944e-38, %v5186
        %v5188 = vsel %vm5185, %v5187, %v5183
        %v5189 = vmul.f32 1.0, %v5188
        %v5190 = vrcp.pop %v5020
        %v5191 = vmul.f32 %v5020, %v5190
        %v5192 = vsub.f32 1.0, %v5191
        %v5193 = vmul.f32 %v5190, %v5192
        %v5194 = vadd.f32 %v5190, %v5193
        %vm5195 = vweird.f32 %v5020
        %vm5196 = vweird.f32 %v5190
        %vm5197 = vmor %vm5195, %vm5196
        %v5198 = vsel %vm5197, %v5190, %v5194
        %v5199 = vand.u32 2147483647, %v5020
        %vm5200 = vcmp.eq.f32.partialorder %v5199, 8.507059e+37
        %v5201 = vand.u32 %v5020, 2147483648
        %v5202 = vor.u32 1.1754944e-38, %v5201
        %v5203 = vsel %vm5200, %v5202, %v5198
        %v5204 = vmul.f32 1.0, %v5203
        %v5205 = vrcp.pop %v5021
        %v5206 = vmul.f32 %v5021, %v5205
        %v5207 = vsub.f32 1.0, %v5206
        %v5208 = vmul.f32 %v5205, %v5207
        %v5209 = vadd.f32 %v5205, %v5208
        %vm5210 = vweird.f32 %v5021
        %vm5211 = vweird.f32 %v5205
        %vm5212 = vmor %vm5210, %vm5211
        %v5213 = vsel %vm5212, %v5205, %v5209
        %v5214 = vand.u32 2147483647, %v5021
        %vm5215 = vcmp.eq.f32.partialorder %v5214, 8.507059e+37
        %v5216 = vand.u32 %v5021, 2147483648
        %v5217 = vor.u32 1.1754944e-38, %v5216
        %v5218 = vsel %vm5215, %v5217, %v5213
        %v5219 = vmul.f32 1.0, %v5218
        %v5220 = vrcp.pop %v5022
        %v5221 = vmul.f32 %v5022, %v5220
        %v5222 = vsub.f32 1.0, %v5221
        %v5223 = vmul.f32 %v5220, %v5222
        %v5224 = vadd.f32 %v5220, %v5223
        %vm5225 = vweird.f32 %v5022
        %vm5226 = vweird.f32 %v5220
        %vm5227 = vmor %vm5225, %vm5226
        %v5228 = vsel %vm5227, %v5220, %v5224
        %v5229 = vand.u32 2147483647, %v5022
        %vm5230 = vcmp.eq.f32.partialorder %v5229, 8.507059e+37
        %v5231 = vand.u32 %v5022, 2147483648
        %v5232 = vor.u32 1.1754944e-38, %v5231
        %v5233 = vsel %vm5230, %v5232, %v5228
        %v5234 = vmul.f32 1.0, %v5233
        %v5235 = vrcp.pop %v5023
        %v5236 = vmul.f32 %v5023, %v5235
        %v5237 = vsub.f32 1.0, %v5236
        %v5238 = vmul.f32 %v5235, %v5237
        %v5239 = vadd.f32 %v5235, %v5238
        %vm5240 = vweird.f32 %v5023
        %vm5241 = vweird.f32 %v5235
        %vm5242 = vmor %vm5240, %vm5241
        %v5243 = vsel %vm5242, %v5235, %v5239
        %v5244 = vand.u32 2147483647, %v5023
        %vm5245 = vcmp.eq.f32.partialorder %v5244, 8.507059e+37
        %v5246 = vand.u32 %v5023, 2147483648
        %v5247 = vor.u32 1.1754944e-38, %v5246
        %v5248 = vsel %vm5245, %v5247, %v5243
        %v5249 = vmul.f32 1.0, %v5248
        %v5250 = vrcp.pop %v5024
        %v5251 = vmul.f32 %v5024, %v5250
        %v5252 = vsub.f32 1.0, %v5251
        %v5253 = vmul.f32 %v5250, %v5252
        %v5254 = vadd.f32 %v5250, %v5253
        %vm5255 = vweird.f32 %v5024
        %vm5256 = vweird.f32 %v5250
        %vm5257 = vmor %vm5255, %vm5256
        %v5258 = vsel %vm5257, %v5250, %v5254
        %v5259 = vand.u32 2147483647, %v5024
        %vm5260 = vcmp.eq.f32.partialorder %v5259, 8.507059e+37
        %v5261 = vand.u32 %v5024, 2147483648
        %v5262 = vor.u32 1.1754944e-38, %v5261
        %v5263 = vsel %vm5260, %v5262, %v5258
        %v5264 = vmul.f32 1.0, %v5263
        %v5265 = vmul.f32 %v4913, %v5039
        %v5266 = vmul.f32 %v4914, %v5054
        %v5267 = vmul.f32 %v4915, %v5069
        %v5268 = vmul.f32 %v4916, %v5084
        %v5269 = vmul.f32 %v4917, %v5099
        %v5270 = vmul.f32 %v4918, %v5114
        %v5271 = vmul.f32 %v4919, %v5129
        %v5272 = vmul.f32 %v4920, %v5144
        %v5273 = vmul.f32 %v4921, %v5159
        %v5274 = vmul.f32 %v4922, %v5174
        %v5275 = vmul.f32 %v4923, %v5189
        %v5276 = vmul.f32 %v4924, %v5204
        %v5277 = vmul.f32 %v4925, %v5219
        %v5278 = vmul.f32 %v4926, %v5234
        %v5279 = vmul.f32 %v4927, %v5249
        %v5280 = vmul.f32 %v4928, %v5264
        %5282 = vset.pattern.permute.xlu0 5
        %5283 = vperm.xlu0 %5282, %v4945
        %v5284 = vpop.permute.xlu0 %5283
        %5287 = vset.pattern.permute.xlu0 5
        %5288 = vperm.xlu0 %5287, %v4946
        %v5289 = vpop.permute.xlu0 %5288
        %5292 = vset.pattern.permute.xlu0 5
        %5293 = vperm.xlu0 %5292, %v4947
        %v5294 = vpop.permute.xlu0 %5293
        %5297 = vset.pattern.permute.xlu0 5
        %5298 = vperm.xlu0 %5297, %v4948
        %v5299 = vpop.permute.xlu0 %5298
        %5302 = vset.pattern.permute.xlu0 5
        %5303 = vperm.xlu0 %5302, %v4949
        %v5304 = vpop.permute.xlu0 %5303
        %5307 = vset.pattern.permute.xlu0 5
        %5308 = vperm.xlu0 %5307, %v4950
        %v5309 = vpop.permute.xlu0 %5308
        %5312 = vset.pattern.permute.xlu0 5
        %5313 = vperm.xlu0 %5312, %v4951
        %v5314 = vpop.permute.xlu0 %5313
        %5317 = vset.pattern.permute.xlu0 5
        %5318 = vperm.xlu0 %5317, %v4952
        %v5319 = vpop.permute.xlu0 %5318
        %5322 = vset.pattern.permute.xlu0 5
        %5323 = vperm.xlu0 %5322, %v4953
        %v5324 = vpop.permute.xlu0 %5323
        %5327 = vset.pattern.permute.xlu0 5
        %5328 = vperm.xlu0 %5327, %v4954
        %v5329 = vpop.permute.xlu0 %5328
        %5332 = vset.pattern.permute.xlu0 5
        %5333 = vperm.xlu0 %5332, %v4955
        %v5334 = vpop.permute.xlu0 %5333
        %5337 = vset.pattern.permute.xlu0 5
        %5338 = vperm.xlu0 %5337, %v4956
        %v5339 = vpop.permute.xlu0 %5338
        %5342 = vset.pattern.permute.xlu0 5
        %5343 = vperm.xlu0 %5342, %v4957
        %v5344 = vpop.permute.xlu0 %5343
        %5347 = vset.pattern.permute.xlu0 5
        %5348 = vperm.xlu0 %5347, %v4958
        %v5349 = vpop.permute.xlu0 %5348
        %5352 = vset.pattern.permute.xlu0 5
        %5353 = vperm.xlu0 %5352, %v4959
        %v5354 = vpop.permute.xlu0 %5353
        %5357 = vset.pattern.permute.xlu0 5
        %5358 = vperm.xlu0 %5357, %v4960
        %v5359 = vpop.permute.xlu0 %5358
        %v5361 = vmul.f32 %v4929, %v5284
        %v5362 = vmul.f32 %v4930, %v5289
        %v5363 = vmul.f32 %v4931, %v5294
        %v5364 = vmul.f32 %v4932, %v5299
        %v5365 = vmul.f32 %v4933, %v5304
        %v5366 = vmul.f32 %v4934, %v5309
        %v5367 = vmul.f32 %v4935, %v5314
        %v5368 = vmul.f32 %v4936, %v5319
        %v5369 = vmul.f32 %v4937, %v5324
        %v5370 = vmul.f32 %v4938, %v5329
        %v5371 = vmul.f32 %v4939, %v5334
        %v5372 = vmul.f32 %v4940, %v5339
        %v5373 = vmul.f32 %v4941, %v5344
        %v5374 = vmul.f32 %v4942, %v5349
        %v5375 = vmul.f32 %v4943, %v5354
        %v5376 = vmul.f32 %v4944, %v5359
        %v5377 = vmul.f32 %v5265, %v5361
        %v5378 = vmul.f32 %v5266, %v5362
        %v5379 = vmul.f32 %v5267, %v5363
        %v5380 = vmul.f32 %v5268, %v5364
        %v5381 = vmul.f32 %v5269, %v5365
        %v5382 = vmul.f32 %v5270, %v5366
        %v5383 = vmul.f32 %v5271, %v5367
        %v5384 = vmul.f32 %v5272, %v5368
        %v5385 = vmul.f32 %v5273, %v5369
        %v5386 = vmul.f32 %v5274, %v5370
        %v5387 = vmul.f32 %v5275, %v5371
        %v5388 = vmul.f32 %v5276, %v5372
        %v5389 = vmul.f32 %v5277, %v5373
        %v5390 = vmul.f32 %v5278, %v5374
        %v5391 = vmul.f32 %v5279, %v5375
        %v5392 = vmul.f32 %v5280, %v5376
        %v5393 = vpack.c.bf16 %v5377, %v5377
        %v5394 = vpack.c.bf16 %v5378, %v5378
        %v5395 = vpack.c.bf16 %v5379, %v5379
        %v5396 = vpack.c.bf16 %v5380, %v5380
        %v5397 = vpack.c.bf16 %v5381, %v5381
        %v5398 = vpack.c.bf16 %v5382, %v5382
        %v5399 = vpack.c.bf16 %v5383, %v5383
        %v5400 = vpack.c.bf16 %v5384, %v5384
        %v5401 = vpack.c.bf16 %v5385, %v5385
        %v5402 = vpack.c.bf16 %v5386, %v5386
        %v5403 = vpack.c.bf16 %v5387, %v5387
        %v5404 = vpack.c.bf16 %v5388, %v5388
        %v5405 = vpack.c.bf16 %v5389, %v5389
        %v5406 = vpack.c.bf16 %v5390, %v5390
        %v5407 = vpack.c.bf16 %v5391, %v5391
        %v5408 = vpack.c.bf16 %v5392, %v5392
        %5409 = vst [vmem:[#allocation3 + $0x14] sm:$0xf] %v5393
        %5410 = vst [vmem:[#allocation3 + $0x38] sm:$0xf] %v5394
        %5411 = vst [vmem:[#allocation3 + $0x5c] sm:$0xf] %v5395
        %5412 = vst [vmem:[#allocation3 + $0x80] sm:$0xf] %v5396
        %5413 = vst [vmem:[#allocation3 + $0xa4] sm:$0xf] %v5397
        %5414 = vst [vmem:[#allocation3 + $0xc8] sm:$0xf] %v5398
        %5415 = vst [vmem:[#allocation3 + $0xec] sm:$0xf] %v5399
        %5416 = vst [vmem:[#allocation3 + $0x110] sm:$0xf] %v5400
        %5417 = vst [vmem:[#allocation3 + $0x134] sm:$0xf] %v5401
        %5418 = vst [vmem:[#allocation3 + $0x158] sm:$0xf] %v5402
        %5419 = vst [vmem:[#allocation3 + $0x17c] sm:$0xf] %v5403
        %5420 = vst [vmem:[#allocation3 + $0x1a0] sm:$0xf] %v5404
        %5421 = vst [vmem:[#allocation3 + $0x1c4] sm:$0xf] %v5405
        %5422 = vst [vmem:[#allocation3 + $0x1e8] sm:$0xf] %v5406
        %5423 = vst [vmem:[#allocation3 + $0x20c] sm:$0xf] %v5407
        %5424 = vst [vmem:[#allocation3 + $0x230] sm:$0xf] %v5408
        %v5425 = vld [vmem:[#allocation2 + $0x60] sm:$0xff]
        %v5426 = vld [vmem:[#allocation2 + $0xf0] sm:$0xff]
        %v5427 = vld [vmem:[#allocation2 + $0x180] sm:$0xff]
        %v5428 = vld [vmem:[#allocation2 + $0x210] sm:$0xff]
        %v5429 = vld [vmem:[#allocation2 + $0x2a0] sm:$0xff]
        %v5430 = vld [vmem:[#allocation2 + $0x330] sm:$0xff]
        %v5431 = vld [vmem:[#allocation2 + $0x3c0] sm:$0xff]
        %v5432 = vld [vmem:[#allocation2 + $0x450] sm:$0xff]
        %v5433 = vld [vmem:[#allocation2 + $0x4e0] sm:$0xff]
        %v5434 = vld [vmem:[#allocation2 + $0x570] sm:$0xff]
        %v5435 = vld [vmem:[#allocation2 + $0x600] sm:$0xff]
        %v5436 = vld [vmem:[#allocation2 + $0x690] sm:$0xff]
        %v5437 = vld [vmem:[#allocation2 + $0x720] sm:$0xff]
        %v5438 = vld [vmem:[#allocation2 + $0x7b0] sm:$0xff]
        %v5439 = vld [vmem:[#allocation2 + $0x840] sm:$0xff]
        %v5440 = vld [vmem:[#allocation2 + $0x8d0] sm:$0xff]
        %v5441 = vld [vmem:[#allocation2 + $0x68] sm:$0xff]
        %v5442 = vld [vmem:[#allocation2 + $0xf8] sm:$0xff]
        %v5443 = vld [vmem:[#allocation2 + $0x188] sm:$0xff]
        %v5444 = vld [vmem:[#allocation2 + $0x218] sm:$0xff]
        %v5445 = vld [vmem:[#allocation2 + $0x2a8] sm:$0xff]
        %v5446 = vld [vmem:[#allocation2 + $0x338] sm:$0xff]
        %v5447 = vld [vmem:[#allocation2 + $0x3c8] sm:$0xff]
        %v5448 = vld [vmem:[#allocation2 + $0x458] sm:$0xff]
        %v5449 = vld [vmem:[#allocation2 + $0x4e8] sm:$0xff]
        %v5450 = vld [vmem:[#allocation2 + $0x578] sm:$0xff]
        %v5451 = vld [vmem:[#allocation2 + $0x608] sm:$0xff]
        %v5452 = vld [vmem:[#allocation2 + $0x698] sm:$0xff]
        %v5453 = vld [vmem:[#allocation2 + $0x728] sm:$0xff]
        %v5454 = vld [vmem:[#allocation2 + $0x7b8] sm:$0xff]
        %v5455 = vld [vmem:[#allocation2 + $0x848] sm:$0xff]
        %v5456 = vld [vmem:[#allocation2 + $0x8d8] sm:$0xff]
        %v5457 = vld [vmem:[%s252] sm:$0xff]
        %v5458 = vld [vmem:[%s252 + $0x8] sm:$0xff]
        %v5459 = vld [vmem:[%s252 + $0x10] sm:$0xff]
        %v5460 = vld [vmem:[%s252 + $0x18] sm:$0xff]
        %v5461 = vld [vmem:[%s252 + $0x20] sm:$0xff]
        %v5462 = vld [vmem:[%s252 + $0x28] sm:$0xff]
        %v5463 = vld [vmem:[%s252 + $0x30] sm:$0xff]
        %v5464 = vld [vmem:[%s252 + $0x38] sm:$0xff]
        %v5465 = vld [vmem:[%s252 + $0x40] sm:$0xff]
        %v5466 = vld [vmem:[%s252 + $0x48] sm:$0xff]
        %v5467 = vld [vmem:[%s252 + $0x50] sm:$0xff]
        %v5468 = vld [vmem:[%s252 + $0x58] sm:$0xff]
        %v5469 = vld [vmem:[%s252 + $0x60] sm:$0xff]
        %v5470 = vld [vmem:[%s252 + $0x68] sm:$0xff]
        %v5471 = vld [vmem:[%s252 + $0x70] sm:$0xff]
        %v5472 = vld [vmem:[%s252 + $0x78] sm:$0xff]
        %v5473 = vxor.u32 %v5425, 2147483648
        %v5474 = vxor.u32 %v5426, 2147483648
        %v5475 = vxor.u32 %v5427, 2147483648
        %v5476 = vxor.u32 %v5428, 2147483648
        %v5477 = vxor.u32 %v5429, 2147483648
        %v5478 = vxor.u32 %v5430, 2147483648
        %v5479 = vxor.u32 %v5431, 2147483648
        %v5480 = vxor.u32 %v5432, 2147483648
        %v5481 = vxor.u32 %v5433, 2147483648
        %v5482 = vxor.u32 %v5434, 2147483648
        %v5483 = vxor.u32 %v5435, 2147483648
        %v5484 = vxor.u32 %v5436, 2147483648
        %v5485 = vxor.u32 %v5437, 2147483648
        %v5486 = vxor.u32 %v5438, 2147483648
        %v5487 = vxor.u32 %v5439, 2147483648
        %v5488 = vxor.u32 %v5440, 2147483648
        %v5489 = vmul.f32 %v5473, 1.442695
        %v5490 = vpow.pop %v5489
        %v5491 = vmul.f32 %v5474, 1.442695
        %v5492 = vpow.pop %v5491
        %v5493 = vmul.f32 %v5475, 1.442695
        %v5494 = vpow.pop %v5493
        %v5495 = vmul.f32 %v5476, 1.442695
        %v5496 = vpow.pop %v5495
        %v5497 = vmul.f32 %v5477, 1.442695
        %v5498 = vpow.pop %v5497
        %v5499 = vmul.f32 %v5478, 1.442695
        %v5500 = vpow.pop %v5499
        %v5501 = vmul.f32 %v5479, 1.442695
        %v5502 = vpow.pop %v5501
        %v5503 = vmul.f32 %v5480, 1.442695
        %v5504 = vpow.pop %v5503
        %v5505 = vmul.f32 %v5481, 1.442695
        %v5506 = vpow.pop %v5505
        %v5507 = vmul.f32 %v5482, 1.442695
        %v5508 = vpow.pop %v5507
        %v5509 = vmul.f32 %v5483, 1.442695
        %v5510 = vpow.pop %v5509
        %v5511 = vmul.f32 %v5484, 1.442695
        %v5512 = vpow.pop %v5511
        %v5513 = vmul.f32 %v5485, 1.442695
        %v5514 = vpow.pop %v5513
        %v5515 = vmul.f32 %v5486, 1.442695
        %v5516 = vpow.pop %v5515
        %v5517 = vmul.f32 %v5487, 1.442695
        %v5518 = vpow.pop %v5517
        %v5519 = vmul.f32 %v5488, 1.442695
        %v5520 = vpow.pop %v5519
        %v5521 = vadd.f32 %v5490, 1.0
        %v5522 = vadd.f32 %v5492, 1.0
        %v5523 = vadd.f32 %v5494, 1.0
        %v5524 = vadd.f32 %v5496, 1.0
        %v5525 = vadd.f32 %v5498, 1.0
        %v5526 = vadd.f32 %v5500, 1.0
        %v5527 = vadd.f32 %v5502, 1.0
        %v5528 = vadd.f32 %v5504, 1.0
        %v5529 = vadd.f32 %v5506, 1.0
        %v5530 = vadd.f32 %v5508, 1.0
        %v5531 = vadd.f32 %v5510, 1.0
        %v5532 = vadd.f32 %v5512, 1.0
        %v5533 = vadd.f32 %v5514, 1.0
        %v5534 = vadd.f32 %v5516, 1.0
        %v5535 = vadd.f32 %v5518, 1.0
        %v5536 = vadd.f32 %v5520, 1.0
        %v5537 = vrcp.pop %v5521
        %v5538 = vmul.f32 %v5521, %v5537
        %v5539 = vsub.f32 1.0, %v5538
        %v5540 = vmul.f32 %v5537, %v5539
        %v5541 = vadd.f32 %v5537, %v5540
        %vm5542 = vweird.f32 %v5521
        %vm5543 = vweird.f32 %v5537
        %vm5544 = vmor %vm5542, %vm5543
        %v5545 = vsel %vm5544, %v5537, %v5541
        %v5546 = vand.u32 2147483647, %v5521
        %vm5547 = vcmp.eq.f32.partialorder %v5546, 8.507059e+37
        %v5548 = vand.u32 %v5521, 2147483648
        %v5549 = vor.u32 1.1754944e-38, %v5548
        %v5550 = vsel %vm5547, %v5549, %v5545
        %v5551 = vmul.f32 1.0, %v5550
        %v5552 = vrcp.pop %v5522
        %v5553 = vmul.f32 %v5522, %v5552
        %v5554 = vsub.f32 1.0, %v5553
        %v5555 = vmul.f32 %v5552, %v5554
        %v5556 = vadd.f32 %v5552, %v5555
        %vm5557 = vweird.f32 %v5522
        %vm5558 = vweird.f32 %v5552
        %vm5559 = vmor %vm5557, %vm5558
        %v5560 = vsel %vm5559, %v5552, %v5556
        %v5561 = vand.u32 2147483647, %v5522
        %vm5562 = vcmp.eq.f32.partialorder %v5561, 8.507059e+37
        %v5563 = vand.u32 %v5522, 2147483648
        %v5564 = vor.u32 1.1754944e-38, %v5563
        %v5565 = vsel %vm5562, %v5564, %v5560
        %v5566 = vmul.f32 1.0, %v5565
        %v5567 = vrcp.pop %v5523
        %v5568 = vmul.f32 %v5523, %v5567
        %v5569 = vsub.f32 1.0, %v5568
        %v5570 = vmul.f32 %v5567, %v5569
        %v5571 = vadd.f32 %v5567, %v5570
        %vm5572 = vweird.f32 %v5523
        %vm5573 = vweird.f32 %v5567
        %vm5574 = vmor %vm5572, %vm5573
        %v5575 = vsel %vm5574, %v5567, %v5571
        %v5576 = vand.u32 2147483647, %v5523
        %vm5577 = vcmp.eq.f32.partialorder %v5576, 8.507059e+37
        %v5578 = vand.u32 %v5523, 2147483648
        %v5579 = vor.u32 1.1754944e-38, %v5578
        %v5580 = vsel %vm5577, %v5579, %v5575
        %v5581 = vmul.f32 1.0, %v5580
        %v5582 = vrcp.pop %v5524
        %v5583 = vmul.f32 %v5524, %v5582
        %v5584 = vsub.f32 1.0, %v5583
        %v5585 = vmul.f32 %v5582, %v5584
        %v5586 = vadd.f32 %v5582, %v5585
        %vm5587 = vweird.f32 %v5524
        %vm5588 = vweird.f32 %v5582
        %vm5589 = vmor %vm5587, %vm5588
        %v5590 = vsel %vm5589, %v5582, %v5586
        %v5591 = vand.u32 2147483647, %v5524
        %vm5592 = vcmp.eq.f32.partialorder %v5591, 8.507059e+37
        %v5593 = vand.u32 %v5524, 2147483648
        %v5594 = vor.u32 1.1754944e-38, %v5593
        %v5595 = vsel %vm5592, %v5594, %v5590
        %v5596 = vmul.f32 1.0, %v5595
        %v5597 = vrcp.pop %v5525
        %v5598 = vmul.f32 %v5525, %v5597
        %v5599 = vsub.f32 1.0, %v5598
        %v5600 = vmul.f32 %v5597, %v5599
        %v5601 = vadd.f32 %v5597, %v5600
        %vm5602 = vweird.f32 %v5525
        %vm5603 = vweird.f32 %v5597
        %vm5604 = vmor %vm5602, %vm5603
        %v5605 = vsel %vm5604, %v5597, %v5601
        %v5606 = vand.u32 2147483647, %v5525
        %vm5607 = vcmp.eq.f32.partialorder %v5606, 8.507059e+37
        %v5608 = vand.u32 %v5525, 2147483648
        %v5609 = vor.u32 1.1754944e-38, %v5608
        %v5610 = vsel %vm5607, %v5609, %v5605
        %v5611 = vmul.f32 1.0, %v5610
        %v5612 = vrcp.pop %v5526
        %v5613 = vmul.f32 %v5526, %v5612
        %v5614 = vsub.f32 1.0, %v5613
        %v5615 = vmul.f32 %v5612, %v5614
        %v5616 = vadd.f32 %v5612, %v5615
        %vm5617 = vweird.f32 %v5526
        %vm5618 = vweird.f32 %v5612
        %vm5619 = vmor %vm5617, %vm5618
        %v5620 = vsel %vm5619, %v5612, %v5616
        %v5621 = vand.u32 2147483647, %v5526
        %vm5622 = vcmp.eq.f32.partialorder %v5621, 8.507059e+37
        %v5623 = vand.u32 %v5526, 2147483648
        %v5624 = vor.u32 1.1754944e-38, %v5623
        %v5625 = vsel %vm5622, %v5624, %v5620
        %v5626 = vmul.f32 1.0, %v5625
        %v5627 = vrcp.pop %v5527
        %v5628 = vmul.f32 %v5527, %v5627
        %v5629 = vsub.f32 1.0, %v5628
        %v5630 = vmul.f32 %v5627, %v5629
        %v5631 = vadd.f32 %v5627, %v5630
        %vm5632 = vweird.f32 %v5527
        %vm5633 = vweird.f32 %v5627
        %vm5634 = vmor %vm5632, %vm5633
        %v5635 = vsel %vm5634, %v5627, %v5631
        %v5636 = vand.u32 2147483647, %v5527
        %vm5637 = vcmp.eq.f32.partialorder %v5636, 8.507059e+37
        %v5638 = vand.u32 %v5527, 2147483648
        %v5639 = vor.u32 1.1754944e-38, %v5638
        %v5640 = vsel %vm5637, %v5639, %v5635
        %v5641 = vmul.f32 1.0, %v5640
        %v5642 = vrcp.pop %v5528
        %v5643 = vmul.f32 %v5528, %v5642
        %v5644 = vsub.f32 1.0, %v5643
        %v5645 = vmul.f32 %v5642, %v5644
        %v5646 = vadd.f32 %v5642, %v5645
        %vm5647 = vweird.f32 %v5528
        %vm5648 = vweird.f32 %v5642
        %vm5649 = vmor %vm5647, %vm5648
        %v5650 = vsel %vm5649, %v5642, %v5646
        %v5651 = vand.u32 2147483647, %v5528
        %vm5652 = vcmp.eq.f32.partialorder %v5651, 8.507059e+37
        %v5653 = vand.u32 %v5528, 2147483648
        %v5654 = vor.u32 1.1754944e-38, %v5653
        %v5655 = vsel %vm5652, %v5654, %v5650
        %v5656 = vmul.f32 1.0, %v5655
        %v5657 = vrcp.pop %v5529
        %v5658 = vmul.f32 %v5529, %v5657
        %v5659 = vsub.f32 1.0, %v5658
        %v5660 = vmul.f32 %v5657, %v5659
        %v5661 = vadd.f32 %v5657, %v5660
        %vm5662 = vweird.f32 %v5529
        %vm5663 = vweird.f32 %v5657
        %vm5664 = vmor %vm5662, %vm5663
        %v5665 = vsel %vm5664, %v5657, %v5661
        %v5666 = vand.u32 2147483647, %v5529
        %vm5667 = vcmp.eq.f32.partialorder %v5666, 8.507059e+37
        %v5668 = vand.u32 %v5529, 2147483648
        %v5669 = vor.u32 1.1754944e-38, %v5668
        %v5670 = vsel %vm5667, %v5669, %v5665
        %v5671 = vmul.f32 1.0, %v5670
        %v5672 = vrcp.pop %v5530
        %v5673 = vmul.f32 %v5530, %v5672
        %v5674 = vsub.f32 1.0, %v5673
        %v5675 = vmul.f32 %v5672, %v5674
        %v5676 = vadd.f32 %v5672, %v5675
        %vm5677 = vweird.f32 %v5530
        %vm5678 = vweird.f32 %v5672
        %vm5679 = vmor %vm5677, %vm5678
        %v5680 = vsel %vm5679, %v5672, %v5676
        %v5681 = vand.u32 2147483647, %v5530
        %vm5682 = vcmp.eq.f32.partialorder %v5681, 8.507059e+37
        %v5683 = vand.u32 %v5530, 2147483648
        %v5684 = vor.u32 1.1754944e-38, %v5683
        %v5685 = vsel %vm5682, %v5684, %v5680
        %v5686 = vmul.f32 1.0, %v5685
        %v5687 = vrcp.pop %v5531
        %v5688 = vmul.f32 %v5531, %v5687
        %v5689 = vsub.f32 1.0, %v5688
        %v5690 = vmul.f32 %v5687, %v5689
        %v5691 = vadd.f32 %v5687, %v5690
        %vm5692 = vweird.f32 %v5531
        %vm5693 = vweird.f32 %v5687
        %vm5694 = vmor %vm5692, %vm5693
        %v5695 = vsel %vm5694, %v5687, %v5691
        %v5696 = vand.u32 2147483647, %v5531
        %vm5697 = vcmp.eq.f32.partialorder %v5696, 8.507059e+37
        %v5698 = vand.u32 %v5531, 2147483648
        %v5699 = vor.u32 1.1754944e-38, %v5698
        %v5700 = vsel %vm5697, %v5699, %v5695
        %v5701 = vmul.f32 1.0, %v5700
        %v5702 = vrcp.pop %v5532
        %v5703 = vmul.f32 %v5532, %v5702
        %v5704 = vsub.f32 1.0, %v5703
        %v5705 = vmul.f32 %v5702, %v5704
        %v5706 = vadd.f32 %v5702, %v5705
        %vm5707 = vweird.f32 %v5532
        %vm5708 = vweird.f32 %v5702
        %vm5709 = vmor %vm5707, %vm5708
        %v5710 = vsel %vm5709, %v5702, %v5706
        %v5711 = vand.u32 2147483647, %v5532
        %vm5712 = vcmp.eq.f32.partialorder %v5711, 8.507059e+37
        %v5713 = vand.u32 %v5532, 2147483648
        %v5714 = vor.u32 1.1754944e-38, %v5713
        %v5715 = vsel %vm5712, %v5714, %v5710
        %v5716 = vmul.f32 1.0, %v5715
        %v5717 = vrcp.pop %v5533
        %v5718 = vmul.f32 %v5533, %v5717
        %v5719 = vsub.f32 1.0, %v5718
        %v5720 = vmul.f32 %v5717, %v5719
        %v5721 = vadd.f32 %v5717, %v5720
        %vm5722 = vweird.f32 %v5533
        %vm5723 = vweird.f32 %v5717
        %vm5724 = vmor %vm5722, %vm5723
        %v5725 = vsel %vm5724, %v5717, %v5721
        %v5726 = vand.u32 2147483647, %v5533
        %vm5727 = vcmp.eq.f32.partialorder %v5726, 8.507059e+37
        %v5728 = vand.u32 %v5533, 2147483648
        %v5729 = vor.u32 1.1754944e-38, %v5728
        %v5730 = vsel %vm5727, %v5729, %v5725
        %v5731 = vmul.f32 1.0, %v5730
        %v5732 = vrcp.pop %v5534
        %v5733 = vmul.f32 %v5534, %v5732
        %v5734 = vsub.f32 1.0, %v5733
        %v5735 = vmul.f32 %v5732, %v5734
        %v5736 = vadd.f32 %v5732, %v5735
        %vm5737 = vweird.f32 %v5534
        %vm5738 = vweird.f32 %v5732
        %vm5739 = vmor %vm5737, %vm5738
        %v5740 = vsel %vm5739, %v5732, %v5736
        %v5741 = vand.u32 2147483647, %v5534
        %vm5742 = vcmp.eq.f32.partialorder %v5741, 8.507059e+37
        %v5743 = vand.u32 %v5534, 2147483648
        %v5744 = vor.u32 1.1754944e-38, %v5743
        %v5745 = vsel %vm5742, %v5744, %v5740
        %v5746 = vmul.f32 1.0, %v5745
        %v5747 = vrcp.pop %v5535
        %v5748 = vmul.f32 %v5535, %v5747
        %v5749 = vsub.f32 1.0, %v5748
        %v5750 = vmul.f32 %v5747, %v5749
        %v5751 = vadd.f32 %v5747, %v5750
        %vm5752 = vweird.f32 %v5535
        %vm5753 = vweird.f32 %v5747
        %vm5754 = vmor %vm5752, %vm5753
        %v5755 = vsel %vm5754, %v5747, %v5751
        %v5756 = vand.u32 2147483647, %v5535
        %vm5757 = vcmp.eq.f32.partialorder %v5756, 8.507059e+37
        %v5758 = vand.u32 %v5535, 2147483648
        %v5759 = vor.u32 1.1754944e-38, %v5758
        %v5760 = vsel %vm5757, %v5759, %v5755
        %v5761 = vmul.f32 1.0, %v5760
        %v5762 = vrcp.pop %v5536
        %v5763 = vmul.f32 %v5536, %v5762
        %v5764 = vsub.f32 1.0, %v5763
        %v5765 = vmul.f32 %v5762, %v5764
        %v5766 = vadd.f32 %v5762, %v5765
        %vm5767 = vweird.f32 %v5536
        %vm5768 = vweird.f32 %v5762
        %vm5769 = vmor %vm5767, %vm5768
        %v5770 = vsel %vm5769, %v5762, %v5766
        %v5771 = vand.u32 2147483647, %v5536
        %vm5772 = vcmp.eq.f32.partialorder %v5771, 8.507059e+37
        %v5773 = vand.u32 %v5536, 2147483648
        %v5774 = vor.u32 1.1754944e-38, %v5773
        %v5775 = vsel %vm5772, %v5774, %v5770
        %v5776 = vmul.f32 1.0, %v5775
        %v5777 = vmul.f32 %v5425, %v5551
        %v5778 = vmul.f32 %v5426, %v5566
        %v5779 = vmul.f32 %v5427, %v5581
        %v5780 = vmul.f32 %v5428, %v5596
        %v5781 = vmul.f32 %v5429, %v5611
        %v5782 = vmul.f32 %v5430, %v5626
        %v5783 = vmul.f32 %v5431, %v5641
        %v5784 = vmul.f32 %v5432, %v5656
        %v5785 = vmul.f32 %v5433, %v5671
        %v5786 = vmul.f32 %v5434, %v5686
        %v5787 = vmul.f32 %v5435, %v5701
        %v5788 = vmul.f32 %v5436, %v5716
        %v5789 = vmul.f32 %v5437, %v5731
        %v5790 = vmul.f32 %v5438, %v5746
        %v5791 = vmul.f32 %v5439, %v5761
        %v5792 = vmul.f32 %v5440, %v5776
        %5794 = vset.pattern.permute.xlu0 6
        %5795 = vperm.xlu0 %5794, %v5457
        %v5796 = vpop.permute.xlu0 %5795
        %5799 = vset.pattern.permute.xlu0 6
        %5800 = vperm.xlu0 %5799, %v5458
        %v5801 = vpop.permute.xlu0 %5800
        %5804 = vset.pattern.permute.xlu0 6
        %5805 = vperm.xlu0 %5804, %v5459
        %v5806 = vpop.permute.xlu0 %5805
        %5809 = vset.pattern.permute.xlu0 6
        %5810 = vperm.xlu0 %5809, %v5460
        %v5811 = vpop.permute.xlu0 %5810
        %5814 = vset.pattern.permute.xlu0 6
        %5815 = vperm.xlu0 %5814, %v5461
        %v5816 = vpop.permute.xlu0 %5815
        %5819 = vset.pattern.permute.xlu0 6
        %5820 = vperm.xlu0 %5819, %v5462
        %v5821 = vpop.permute.xlu0 %5820
        %5824 = vset.pattern.permute.xlu0 6
        %5825 = vperm.xlu0 %5824, %v5463
        %v5826 = vpop.permute.xlu0 %5825
        %5829 = vset.pattern.permute.xlu0 6
        %5830 = vperm.xlu0 %5829, %v5464
        %v5831 = vpop.permute.xlu0 %5830
        %5834 = vset.pattern.permute.xlu0 6
        %5835 = vperm.xlu0 %5834, %v5465
        %v5836 = vpop.permute.xlu0 %5835
        %5839 = vset.pattern.permute.xlu0 6
        %5840 = vperm.xlu0 %5839, %v5466
        %v5841 = vpop.permute.xlu0 %5840
        %5844 = vset.pattern.permute.xlu0 6
        %5845 = vperm.xlu0 %5844, %v5467
        %v5846 = vpop.permute.xlu0 %5845
        %5849 = vset.pattern.permute.xlu0 6
        %5850 = vperm.xlu0 %5849, %v5468
        %v5851 = vpop.permute.xlu0 %5850
        %5854 = vset.pattern.permute.xlu0 6
        %5855 = vperm.xlu0 %5854, %v5469
        %v5856 = vpop.permute.xlu0 %5855
        %5859 = vset.pattern.permute.xlu0 6
        %5860 = vperm.xlu0 %5859, %v5470
        %v5861 = vpop.permute.xlu0 %5860
        %5864 = vset.pattern.permute.xlu0 6
        %5865 = vperm.xlu0 %5864, %v5471
        %v5866 = vpop.permute.xlu0 %5865
        %5869 = vset.pattern.permute.xlu0 6
        %5870 = vperm.xlu0 %5869, %v5472
        %v5871 = vpop.permute.xlu0 %5870
        %v5873 = vmul.f32 %v5441, %v5796
        %v5874 = vmul.f32 %v5442, %v5801
        %v5875 = vmul.f32 %v5443, %v5806
        %v5876 = vmul.f32 %v5444, %v5811
        %v5877 = vmul.f32 %v5445, %v5816
        %v5878 = vmul.f32 %v5446, %v5821
        %v5879 = vmul.f32 %v5447, %v5826
        %v5880 = vmul.f32 %v5448, %v5831
        %v5881 = vmul.f32 %v5449, %v5836
        %v5882 = vmul.f32 %v5450, %v5841
        %v5883 = vmul.f32 %v5451, %v5846
        %v5884 = vmul.f32 %v5452, %v5851
        %v5885 = vmul.f32 %v5453, %v5856
        %v5886 = vmul.f32 %v5454, %v5861
        %v5887 = vmul.f32 %v5455, %v5866
        %v5888 = vmul.f32 %v5456, %v5871
        %v5889 = vmul.f32 %v5777, %v5873
        %v5890 = vmul.f32 %v5778, %v5874
        %v5891 = vmul.f32 %v5779, %v5875
        %v5892 = vmul.f32 %v5780, %v5876
        %v5893 = vmul.f32 %v5781, %v5877
        %v5894 = vmul.f32 %v5782, %v5878
        %v5895 = vmul.f32 %v5783, %v5879
        %v5896 = vmul.f32 %v5784, %v5880
        %v5897 = vmul.f32 %v5785, %v5881
        %v5898 = vmul.f32 %v5786, %v5882
        %v5899 = vmul.f32 %v5787, %v5883
        %v5900 = vmul.f32 %v5788, %v5884
        %v5901 = vmul.f32 %v5789, %v5885
        %v5902 = vmul.f32 %v5790, %v5886
        %v5903 = vmul.f32 %v5791, %v5887
        %v5904 = vmul.f32 %v5792, %v5888
        %v5905 = vpack.c.bf16 %v5889, %v5889
        %v5906 = vpack.c.bf16 %v5890, %v5890
        %v5907 = vpack.c.bf16 %v5891, %v5891
        %v5908 = vpack.c.bf16 %v5892, %v5892
        %v5909 = vpack.c.bf16 %v5893, %v5893
        %v5910 = vpack.c.bf16 %v5894, %v5894
        %v5911 = vpack.c.bf16 %v5895, %v5895
        %v5912 = vpack.c.bf16 %v5896, %v5896
        %v5913 = vpack.c.bf16 %v5897, %v5897
        %v5914 = vpack.c.bf16 %v5898, %v5898
        %v5915 = vpack.c.bf16 %v5899, %v5899
        %v5916 = vpack.c.bf16 %v5900, %v5900
        %v5917 = vpack.c.bf16 %v5901, %v5901
        %v5918 = vpack.c.bf16 %v5902, %v5902
        %v5919 = vpack.c.bf16 %v5903, %v5903
        %v5920 = vpack.c.bf16 %v5904, %v5904
        %5921 = vst [vmem:[#allocation3 + $0x18] sm:$0xf] %v5905
        %5922 = vst [vmem:[#allocation3 + $0x3c] sm:$0xf] %v5906
        %5923 = vst [vmem:[#allocation3 + $0x60] sm:$0xf] %v5907
        %5924 = vst [vmem:[#allocation3 + $0x84] sm:$0xf] %v5908
        %5925 = vst [vmem:[#allocation3 + $0xa8] sm:$0xf] %v5909
        %5926 = vst [vmem:[#allocation3 + $0xcc] sm:$0xf] %v5910
        %5927 = vst [vmem:[#allocation3 + $0xf0] sm:$0xf] %v5911
        %5928 = vst [vmem:[#allocation3 + $0x114] sm:$0xf] %v5912
        %5929 = vst [vmem:[#allocation3 + $0x138] sm:$0xf] %v5913
        %5930 = vst [vmem:[#allocation3 + $0x15c] sm:$0xf] %v5914
        %5931 = vst [vmem:[#allocation3 + $0x180] sm:$0xf] %v5915
        %5932 = vst [vmem:[#allocation3 + $0x1a4] sm:$0xf] %v5916
        %5933 = vst [vmem:[#allocation3 + $0x1c8] sm:$0xf] %v5917
        %5934 = vst [vmem:[#allocation3 + $0x1ec] sm:$0xf] %v5918
        %5935 = vst [vmem:[#allocation3 + $0x210] sm:$0xf] %v5919
        %5936 = vst [vmem:[#allocation3 + $0x234] sm:$0xf] %v5920
        %v5937 = vld [vmem:[#allocation2 + $0x70] sm:$0xff]
        %v5938 = vld [vmem:[#allocation2 + $0x100] sm:$0xff]
        %v5939 = vld [vmem:[#allocation2 + $0x190] sm:$0xff]
        %v5940 = vld [vmem:[#allocation2 + $0x220] sm:$0xff]
        %v5941 = vld [vmem:[#allocation2 + $0x2b0] sm:$0xff]
        %v5942 = vld [vmem:[#allocation2 + $0x340] sm:$0xff]
        %v5943 = vld [vmem:[#allocation2 + $0x3d0] sm:$0xff]
        %v5944 = vld [vmem:[#allocation2 + $0x460] sm:$0xff]
        %v5945 = vld [vmem:[#allocation2 + $0x4f0] sm:$0xff]
        %v5946 = vld [vmem:[#allocation2 + $0x580] sm:$0xff]
        %v5947 = vld [vmem:[#allocation2 + $0x610] sm:$0xff]
        %v5948 = vld [vmem:[#allocation2 + $0x6a0] sm:$0xff]
        %v5949 = vld [vmem:[#allocation2 + $0x730] sm:$0xff]
        %v5950 = vld [vmem:[#allocation2 + $0x7c0] sm:$0xff]
        %v5951 = vld [vmem:[#allocation2 + $0x850] sm:$0xff]
        %v5952 = vld [vmem:[#allocation2 + $0x8e0] sm:$0xff]
        %v5953 = vld [vmem:[#allocation2 + $0x78] sm:$0xff]
        %v5954 = vld [vmem:[#allocation2 + $0x108] sm:$0xff]
        %v5955 = vld [vmem:[#allocation2 + $0x198] sm:$0xff]
        %v5956 = vld [vmem:[#allocation2 + $0x228] sm:$0xff]
        %v5957 = vld [vmem:[#allocation2 + $0x2b8] sm:$0xff]
        %v5958 = vld [vmem:[#allocation2 + $0x348] sm:$0xff]
        %v5959 = vld [vmem:[#allocation2 + $0x3d8] sm:$0xff]
        %v5960 = vld [vmem:[#allocation2 + $0x468] sm:$0xff]
        %v5961 = vld [vmem:[#allocation2 + $0x4f8] sm:$0xff]
        %v5962 = vld [vmem:[#allocation2 + $0x588] sm:$0xff]
        %v5963 = vld [vmem:[#allocation2 + $0x618] sm:$0xff]
        %v5964 = vld [vmem:[#allocation2 + $0x6a8] sm:$0xff]
        %v5965 = vld [vmem:[#allocation2 + $0x738] sm:$0xff]
        %v5966 = vld [vmem:[#allocation2 + $0x7c8] sm:$0xff]
        %v5967 = vld [vmem:[#allocation2 + $0x858] sm:$0xff]
        %v5968 = vld [vmem:[#allocation2 + $0x8e8] sm:$0xff]
        %v5969 = vld [vmem:[%s252] sm:$0xff]
        %v5970 = vld [vmem:[%s252 + $0x8] sm:$0xff]
        %v5971 = vld [vmem:[%s252 + $0x10] sm:$0xff]
        %v5972 = vld [vmem:[%s252 + $0x18] sm:$0xff]
        %v5973 = vld [vmem:[%s252 + $0x20] sm:$0xff]
        %v5974 = vld [vmem:[%s252 + $0x28] sm:$0xff]
        %v5975 = vld [vmem:[%s252 + $0x30] sm:$0xff]
        %v5976 = vld [vmem:[%s252 + $0x38] sm:$0xff]
        %v5977 = vld [vmem:[%s252 + $0x40] sm:$0xff]
        %v5978 = vld [vmem:[%s252 + $0x48] sm:$0xff]
        %v5979 = vld [vmem:[%s252 + $0x50] sm:$0xff]
        %v5980 = vld [vmem:[%s252 + $0x58] sm:$0xff]
        %v5981 = vld [vmem:[%s252 + $0x60] sm:$0xff]
        %v5982 = vld [vmem:[%s252 + $0x68] sm:$0xff]
        %v5983 = vld [vmem:[%s252 + $0x70] sm:$0xff]
        %v5984 = vld [vmem:[%s252 + $0x78] sm:$0xff]
        %v5985 = vxor.u32 %v5937, 2147483648
        %v5986 = vxor.u32 %v5938, 2147483648
        %v5987 = vxor.u32 %v5939, 2147483648
        %v5988 = vxor.u32 %v5940, 2147483648
        %v5989 = vxor.u32 %v5941, 2147483648
        %v5990 = vxor.u32 %v5942, 2147483648
        %v5991 = vxor.u32 %v5943, 2147483648
        %v5992 = vxor.u32 %v5944, 2147483648
        %v5993 = vxor.u32 %v5945, 2147483648
        %v5994 = vxor.u32 %v5946, 2147483648
        %v5995 = vxor.u32 %v5947, 2147483648
        %v5996 = vxor.u32 %v5948, 2147483648
        %v5997 = vxor.u32 %v5949, 2147483648
        %v5998 = vxor.u32 %v5950, 2147483648
        %v5999 = vxor.u32 %v5951, 2147483648
        %v6000 = vxor.u32 %v5952, 2147483648
        %v6001 = vmul.f32 %v5985, 1.442695
        %v6002 = vpow.pop %v6001
        %v6003 = vmul.f32 %v5986, 1.442695
        %v6004 = vpow.pop %v6003
        %v6005 = vmul.f32 %v5987, 1.442695
        %v6006 = vpow.pop %v6005
        %v6007 = vmul.f32 %v5988, 1.442695
        %v6008 = vpow.pop %v6007
        %v6009 = vmul.f32 %v5989, 1.442695
        %v6010 = vpow.pop %v6009
        %v6011 = vmul.f32 %v5990, 1.442695
        %v6012 = vpow.pop %v6011
        %v6013 = vmul.f32 %v5991, 1.442695
        %v6014 = vpow.pop %v6013
        %v6015 = vmul.f32 %v5992, 1.442695
        %v6016 = vpow.pop %v6015
        %v6017 = vmul.f32 %v5993, 1.442695
        %v6018 = vpow.pop %v6017
        %v6019 = vmul.f32 %v5994, 1.442695
        %v6020 = vpow.pop %v6019
        %v6021 = vmul.f32 %v5995, 1.442695
        %v6022 = vpow.pop %v6021
        %v6023 = vmul.f32 %v5996, 1.442695
        %v6024 = vpow.pop %v6023
        %v6025 = vmul.f32 %v5997, 1.442695
        %v6026 = vpow.pop %v6025
        %v6027 = vmul.f32 %v5998, 1.442695
        %v6028 = vpow.pop %v6027
        %v6029 = vmul.f32 %v5999, 1.442695
        %v6030 = vpow.pop %v6029
        %v6031 = vmul.f32 %v6000, 1.442695
        %v6032 = vpow.pop %v6031
        %v6033 = vadd.f32 %v6002, 1.0
        %v6034 = vadd.f32 %v6004, 1.0
        %v6035 = vadd.f32 %v6006, 1.0
        %v6036 = vadd.f32 %v6008, 1.0
        %v6037 = vadd.f32 %v6010, 1.0
        %v6038 = vadd.f32 %v6012, 1.0
        %v6039 = vadd.f32 %v6014, 1.0
        %v6040 = vadd.f32 %v6016, 1.0
        %v6041 = vadd.f32 %v6018, 1.0
        %v6042 = vadd.f32 %v6020, 1.0
        %v6043 = vadd.f32 %v6022, 1.0
        %v6044 = vadd.f32 %v6024, 1.0
        %v6045 = vadd.f32 %v6026, 1.0
        %v6046 = vadd.f32 %v6028, 1.0
        %v6047 = vadd.f32 %v6030, 1.0
        %v6048 = vadd.f32 %v6032, 1.0
        %v6049 = vrcp.pop %v6033
        %v6050 = vmul.f32 %v6033, %v6049
        %v6051 = vsub.f32 1.0, %v6050
        %v6052 = vmul.f32 %v6049, %v6051
        %v6053 = vadd.f32 %v6049, %v6052
        %vm6054 = vweird.f32 %v6033
        %vm6055 = vweird.f32 %v6049
        %vm6056 = vmor %vm6054, %vm6055
        %v6057 = vsel %vm6056, %v6049, %v6053
        %v6058 = vand.u32 2147483647, %v6033
        %vm6059 = vcmp.eq.f32.partialorder %v6058, 8.507059e+37
        %v6060 = vand.u32 %v6033, 2147483648
        %v6061 = vor.u32 1.1754944e-38, %v6060
        %v6062 = vsel %vm6059, %v6061, %v6057
        %v6063 = vmul.f32 1.0, %v6062
        %v6064 = vrcp.pop %v6034
        %v6065 = vmul.f32 %v6034, %v6064
        %v6066 = vsub.f32 1.0, %v6065
        %v6067 = vmul.f32 %v6064, %v6066
        %v6068 = vadd.f32 %v6064, %v6067
        %vm6069 = vweird.f32 %v6034
        %vm6070 = vweird.f32 %v6064
        %vm6071 = vmor %vm6069, %vm6070
        %v6072 = vsel %vm6071, %v6064, %v6068
        %v6073 = vand.u32 2147483647, %v6034
        %vm6074 = vcmp.eq.f32.partialorder %v6073, 8.507059e+37
        %v6075 = vand.u32 %v6034, 2147483648
        %v6076 = vor.u32 1.1754944e-38, %v6075
        %v6077 = vsel %vm6074, %v6076, %v6072
        %v6078 = vmul.f32 1.0, %v6077
        %v6079 = vrcp.pop %v6035
        %v6080 = vmul.f32 %v6035, %v6079
        %v6081 = vsub.f32 1.0, %v6080
        %v6082 = vmul.f32 %v6079, %v6081
        %v6083 = vadd.f32 %v6079, %v6082
        %vm6084 = vweird.f32 %v6035
        %vm6085 = vweird.f32 %v6079
        %vm6086 = vmor %vm6084, %vm6085
        %v6087 = vsel %vm6086, %v6079, %v6083
        %v6088 = vand.u32 2147483647, %v6035
        %vm6089 = vcmp.eq.f32.partialorder %v6088, 8.507059e+37
        %v6090 = vand.u32 %v6035, 2147483648
        %v6091 = vor.u32 1.1754944e-38, %v6090
        %v6092 = vsel %vm6089, %v6091, %v6087
        %v6093 = vmul.f32 1.0, %v6092
        %v6094 = vrcp.pop %v6036
        %v6095 = vmul.f32 %v6036, %v6094
        %v6096 = vsub.f32 1.0, %v6095
        %v6097 = vmul.f32 %v6094, %v6096
        %v6098 = vadd.f32 %v6094, %v6097
        %vm6099 = vweird.f32 %v6036
        %vm6100 = vweird.f32 %v6094
        %vm6101 = vmor %vm6099, %vm6100
        %v6102 = vsel %vm6101, %v6094, %v6098
        %v6103 = vand.u32 2147483647, %v6036
        %vm6104 = vcmp.eq.f32.partialorder %v6103, 8.507059e+37
        %v6105 = vand.u32 %v6036, 2147483648
        %v6106 = vor.u32 1.1754944e-38, %v6105
        %v6107 = vsel %vm6104, %v6106, %v6102
        %v6108 = vmul.f32 1.0, %v6107
        %v6109 = vrcp.pop %v6037
        %v6110 = vmul.f32 %v6037, %v6109
        %v6111 = vsub.f32 1.0, %v6110
        %v6112 = vmul.f32 %v6109, %v6111
        %v6113 = vadd.f32 %v6109, %v6112
        %vm6114 = vweird.f32 %v6037
        %vm6115 = vweird.f32 %v6109
        %vm6116 = vmor %vm6114, %vm6115
        %v6117 = vsel %vm6116, %v6109, %v6113
        %v6118 = vand.u32 2147483647, %v6037
        %vm6119 = vcmp.eq.f32.partialorder %v6118, 8.507059e+37
        %v6120 = vand.u32 %v6037, 2147483648
        %v6121 = vor.u32 1.1754944e-38, %v6120
        %v6122 = vsel %vm6119, %v6121, %v6117
        %v6123 = vmul.f32 1.0, %v6122
        %v6124 = vrcp.pop %v6038
        %v6125 = vmul.f32 %v6038, %v6124
        %v6126 = vsub.f32 1.0, %v6125
        %v6127 = vmul.f32 %v6124, %v6126
        %v6128 = vadd.f32 %v6124, %v6127
        %vm6129 = vweird.f32 %v6038
        %vm6130 = vweird.f32 %v6124
        %vm6131 = vmor %vm6129, %vm6130
        %v6132 = vsel %vm6131, %v6124, %v6128
        %v6133 = vand.u32 2147483647, %v6038
        %vm6134 = vcmp.eq.f32.partialorder %v6133, 8.507059e+37
        %v6135 = vand.u32 %v6038, 2147483648
        %v6136 = vor.u32 1.1754944e-38, %v6135
        %v6137 = vsel %vm6134, %v6136, %v6132
        %v6138 = vmul.f32 1.0, %v6137
        %v6139 = vrcp.pop %v6039
        %v6140 = vmul.f32 %v6039, %v6139
        %v6141 = vsub.f32 1.0, %v6140
        %v6142 = vmul.f32 %v6139, %v6141
        %v6143 = vadd.f32 %v6139, %v6142
        %vm6144 = vweird.f32 %v6039
        %vm6145 = vweird.f32 %v6139
        %vm6146 = vmor %vm6144, %vm6145
        %v6147 = vsel %vm6146, %v6139, %v6143
        %v6148 = vand.u32 2147483647, %v6039
        %vm6149 = vcmp.eq.f32.partialorder %v6148, 8.507059e+37
        %v6150 = vand.u32 %v6039, 2147483648
        %v6151 = vor.u32 1.1754944e-38, %v6150
        %v6152 = vsel %vm6149, %v6151, %v6147
        %v6153 = vmul.f32 1.0, %v6152
        %v6154 = vrcp.pop %v6040
        %v6155 = vmul.f32 %v6040, %v6154
        %v6156 = vsub.f32 1.0, %v6155
        %v6157 = vmul.f32 %v6154, %v6156
        %v6158 = vadd.f32 %v6154, %v6157
        %vm6159 = vweird.f32 %v6040
        %vm6160 = vweird.f32 %v6154
        %vm6161 = vmor %vm6159, %vm6160
        %v6162 = vsel %vm6161, %v6154, %v6158
        %v6163 = vand.u32 2147483647, %v6040
        %vm6164 = vcmp.eq.f32.partialorder %v6163, 8.507059e+37
        %v6165 = vand.u32 %v6040, 2147483648
        %v6166 = vor.u32 1.1754944e-38, %v6165
        %v6167 = vsel %vm6164, %v6166, %v6162
        %v6168 = vmul.f32 1.0, %v6167
        %v6169 = vrcp.pop %v6041
        %v6170 = vmul.f32 %v6041, %v6169
        %v6171 = vsub.f32 1.0, %v6170
        %v6172 = vmul.f32 %v6169, %v6171
        %v6173 = vadd.f32 %v6169, %v6172
        %vm6174 = vweird.f32 %v6041
        %vm6175 = vweird.f32 %v6169
        %vm6176 = vmor %vm6174, %vm6175
        %v6177 = vsel %vm6176, %v6169, %v6173
        %v6178 = vand.u32 2147483647, %v6041
        %vm6179 = vcmp.eq.f32.partialorder %v6178, 8.507059e+37
        %v6180 = vand.u32 %v6041, 2147483648
        %v6181 = vor.u32 1.1754944e-38, %v6180
        %v6182 = vsel %vm6179, %v6181, %v6177
        %v6183 = vmul.f32 1.0, %v6182
        %v6184 = vrcp.pop %v6042
        %v6185 = vmul.f32 %v6042, %v6184
        %v6186 = vsub.f32 1.0, %v6185
        %v6187 = vmul.f32 %v6184, %v6186
        %v6188 = vadd.f32 %v6184, %v6187
        %vm6189 = vweird.f32 %v6042
        %vm6190 = vweird.f32 %v6184
        %vm6191 = vmor %vm6189, %vm6190
        %v6192 = vsel %vm6191, %v6184, %v6188
        %v6193 = vand.u32 2147483647, %v6042
        %vm6194 = vcmp.eq.f32.partialorder %v6193, 8.507059e+37
        %v6195 = vand.u32 %v6042, 2147483648
        %v6196 = vor.u32 1.1754944e-38, %v6195
        %v6197 = vsel %vm6194, %v6196, %v6192
        %v6198 = vmul.f32 1.0, %v6197
        %v6199 = vrcp.pop %v6043
        %v6200 = vmul.f32 %v6043, %v6199
        %v6201 = vsub.f32 1.0, %v6200
        %v6202 = vmul.f32 %v6199, %v6201
        %v6203 = vadd.f32 %v6199, %v6202
        %vm6204 = vweird.f32 %v6043
        %vm6205 = vweird.f32 %v6199
        %vm6206 = vmor %vm6204, %vm6205
        %v6207 = vsel %vm6206, %v6199, %v6203
        %v6208 = vand.u32 2147483647, %v6043
        %vm6209 = vcmp.eq.f32.partialorder %v6208, 8.507059e+37
        %v6210 = vand.u32 %v6043, 2147483648
        %v6211 = vor.u32 1.1754944e-38, %v6210
        %v6212 = vsel %vm6209, %v6211, %v6207
        %v6213 = vmul.f32 1.0, %v6212
        %v6214 = vrcp.pop %v6044
        %v6215 = vmul.f32 %v6044, %v6214
        %v6216 = vsub.f32 1.0, %v6215
        %v6217 = vmul.f32 %v6214, %v6216
        %v6218 = vadd.f32 %v6214, %v6217
        %vm6219 = vweird.f32 %v6044
        %vm6220 = vweird.f32 %v6214
        %vm6221 = vmor %vm6219, %vm6220
        %v6222 = vsel %vm6221, %v6214, %v6218
        %v6223 = vand.u32 2147483647, %v6044
        %vm6224 = vcmp.eq.f32.partialorder %v6223, 8.507059e+37
        %v6225 = vand.u32 %v6044, 2147483648
        %v6226 = vor.u32 1.1754944e-38, %v6225
        %v6227 = vsel %vm6224, %v6226, %v6222
        %v6228 = vmul.f32 1.0, %v6227
        %v6229 = vrcp.pop %v6045
        %v6230 = vmul.f32 %v6045, %v6229
        %v6231 = vsub.f32 1.0, %v6230
        %v6232 = vmul.f32 %v6229, %v6231
        %v6233 = vadd.f32 %v6229, %v6232
        %vm6234 = vweird.f32 %v6045
        %vm6235 = vweird.f32 %v6229
        %vm6236 = vmor %vm6234, %vm6235
        %v6237 = vsel %vm6236, %v6229, %v6233
        %v6238 = vand.u32 2147483647, %v6045
        %vm6239 = vcmp.eq.f32.partialorder %v6238, 8.507059e+37
        %v6240 = vand.u32 %v6045, 2147483648
        %v6241 = vor.u32 1.1754944e-38, %v6240
        %v6242 = vsel %vm6239, %v6241, %v6237
        %v6243 = vmul.f32 1.0, %v6242
        %v6244 = vrcp.pop %v6046
        %v6245 = vmul.f32 %v6046, %v6244
        %v6246 = vsub.f32 1.0, %v6245
        %v6247 = vmul.f32 %v6244, %v6246
        %v6248 = vadd.f32 %v6244, %v6247
        %vm6249 = vweird.f32 %v6046
        %vm6250 = vweird.f32 %v6244
        %vm6251 = vmor %vm6249, %vm6250
        %v6252 = vsel %vm6251, %v6244, %v6248
        %v6253 = vand.u32 2147483647, %v6046
        %vm6254 = vcmp.eq.f32.partialorder %v6253, 8.507059e+37
        %v6255 = vand.u32 %v6046, 2147483648
        %v6256 = vor.u32 1.1754944e-38, %v6255
        %v6257 = vsel %vm6254, %v6256, %v6252
        %v6258 = vmul.f32 1.0, %v6257
        %v6259 = vrcp.pop %v6047
        %v6260 = vmul.f32 %v6047, %v6259
        %v6261 = vsub.f32 1.0, %v6260
        %v6262 = vmul.f32 %v6259, %v6261
        %v6263 = vadd.f32 %v6259, %v6262
        %vm6264 = vweird.f32 %v6047
        %vm6265 = vweird.f32 %v6259
        %vm6266 = vmor %vm6264, %vm6265
        %v6267 = vsel %vm6266, %v6259, %v6263
        %v6268 = vand.u32 2147483647, %v6047
        %vm6269 = vcmp.eq.f32.partialorder %v6268, 8.507059e+37
        %v6270 = vand.u32 %v6047, 2147483648
        %v6271 = vor.u32 1.1754944e-38, %v6270
        %v6272 = vsel %vm6269, %v6271, %v6267
        %v6273 = vmul.f32 1.0, %v6272
        %v6274 = vrcp.pop %v6048
        %v6275 = vmul.f32 %v6048, %v6274
        %v6276 = vsub.f32 1.0, %v6275
        %v6277 = vmul.f32 %v6274, %v6276
        %v6278 = vadd.f32 %v6274, %v6277
        %vm6279 = vweird.f32 %v6048
        %vm6280 = vweird.f32 %v6274
        %vm6281 = vmor %vm6279, %vm6280
        %v6282 = vsel %vm6281, %v6274, %v6278
        %v6283 = vand.u32 2147483647, %v6048
        %vm6284 = vcmp.eq.f32.partialorder %v6283, 8.507059e+37
        %v6285 = vand.u32 %v6048, 2147483648
        %v6286 = vor.u32 1.1754944e-38, %v6285
        %v6287 = vsel %vm6284, %v6286, %v6282
        %v6288 = vmul.f32 1.0, %v6287
        %v6289 = vmul.f32 %v5937, %v6063
        %v6290 = vmul.f32 %v5938, %v6078
        %v6291 = vmul.f32 %v5939, %v6093
        %v6292 = vmul.f32 %v5940, %v6108
        %v6293 = vmul.f32 %v5941, %v6123
        %v6294 = vmul.f32 %v5942, %v6138
        %v6295 = vmul.f32 %v5943, %v6153
        %v6296 = vmul.f32 %v5944, %v6168
        %v6297 = vmul.f32 %v5945, %v6183
        %v6298 = vmul.f32 %v5946, %v6198
        %v6299 = vmul.f32 %v5947, %v6213
        %v6300 = vmul.f32 %v5948, %v6228
        %v6301 = vmul.f32 %v5949, %v6243
        %v6302 = vmul.f32 %v5950, %v6258
        %v6303 = vmul.f32 %v5951, %v6273
        %v6304 = vmul.f32 %v5952, %v6288
        %6306 = vset.pattern.permute.xlu0 7
        %6307 = vperm.xlu0 %6306, %v5969
        %v6308 = vpop.permute.xlu0 %6307
        %6311 = vset.pattern.permute.xlu0 7
        %6312 = vperm.xlu0 %6311, %v5970
        %v6313 = vpop.permute.xlu0 %6312
        %6316 = vset.pattern.permute.xlu0 7
        %6317 = vperm.xlu0 %6316, %v5971
        %v6318 = vpop.permute.xlu0 %6317
        %6321 = vset.pattern.permute.xlu0 7
        %6322 = vperm.xlu0 %6321, %v5972
        %v6323 = vpop.permute.xlu0 %6322
        %6326 = vset.pattern.permute.xlu0 7
        %6327 = vperm.xlu0 %6326, %v5973
        %v6328 = vpop.permute.xlu0 %6327
        %6331 = vset.pattern.permute.xlu0 7
        %6332 = vperm.xlu0 %6331, %v5974
        %v6333 = vpop.permute.xlu0 %6332
        %6336 = vset.pattern.permute.xlu0 7
        %6337 = vperm.xlu0 %6336, %v5975
        %v6338 = vpop.permute.xlu0 %6337
        %6341 = vset.pattern.permute.xlu0 7
        %6342 = vperm.xlu0 %6341, %v5976
        %v6343 = vpop.permute.xlu0 %6342
        %6346 = vset.pattern.permute.xlu0 7
        %6347 = vperm.xlu0 %6346, %v5977
        %v6348 = vpop.permute.xlu0 %6347
        %6351 = vset.pattern.permute.xlu0 7
        %6352 = vperm.xlu0 %6351, %v5978
        %v6353 = vpop.permute.xlu0 %6352
        %6356 = vset.pattern.permute.xlu0 7
        %6357 = vperm.xlu0 %6356, %v5979
        %v6358 = vpop.permute.xlu0 %6357
        %6361 = vset.pattern.permute.xlu0 7
        %6362 = vperm.xlu0 %6361, %v5980
        %v6363 = vpop.permute.xlu0 %6362
        %6366 = vset.pattern.permute.xlu0 7
        %6367 = vperm.xlu0 %6366, %v5981
        %v6368 = vpop.permute.xlu0 %6367
        %6371 = vset.pattern.permute.xlu0 7
        %6372 = vperm.xlu0 %6371, %v5982
        %v6373 = vpop.permute.xlu0 %6372
        %6376 = vset.pattern.permute.xlu0 7
        %6377 = vperm.xlu0 %6376, %v5983
        %v6378 = vpop.permute.xlu0 %6377
        %6381 = vset.pattern.permute.xlu0 7
        %6382 = vperm.xlu0 %6381, %v5984
        %v6383 = vpop.permute.xlu0 %6382
        %v6385 = vmul.f32 %v5953, %v6308
        %v6386 = vmul.f32 %v5954, %v6313
        %v6387 = vmul.f32 %v5955, %v6318
        %v6388 = vmul.f32 %v5956, %v6323
        %v6389 = vmul.f32 %v5957, %v6328
        %v6390 = vmul.f32 %v5958, %v6333
        %v6391 = vmul.f32 %v5959, %v6338
        %v6392 = vmul.f32 %v5960, %v6343
        %v6393 = vmul.f32 %v5961, %v6348
        %v6394 = vmul.f32 %v5962, %v6353
        %v6395 = vmul.f32 %v5963, %v6358
        %v6396 = vmul.f32 %v5964, %v6363
        %v6397 = vmul.f32 %v5965, %v6368
        %v6398 = vmul.f32 %v5966, %v6373
        %v6399 = vmul.f32 %v5967, %v6378
        %v6400 = vmul.f32 %v5968, %v6383
        %v6401 = vmul.f32 %v6289, %v6385
        %v6402 = vmul.f32 %v6290, %v6386
        %v6403 = vmul.f32 %v6291, %v6387
        %v6404 = vmul.f32 %v6292, %v6388
        %v6405 = vmul.f32 %v6293, %v6389
        %v6406 = vmul.f32 %v6294, %v6390
        %v6407 = vmul.f32 %v6295, %v6391
        %v6408 = vmul.f32 %v6296, %v6392
        %v6409 = vmul.f32 %v6297, %v6393
        %v6410 = vmul.f32 %v6298, %v6394
        %v6411 = vmul.f32 %v6299, %v6395
        %v6412 = vmul.f32 %v6300, %v6396
        %v6413 = vmul.f32 %v6301, %v6397
        %v6414 = vmul.f32 %v6302, %v6398
        %v6415 = vmul.f32 %v6303, %v6399
        %v6416 = vmul.f32 %v6304, %v6400
        %v6417 = vpack.c.bf16 %v6401, %v6401
        %v6418 = vpack.c.bf16 %v6402, %v6402
        %v6419 = vpack.c.bf16 %v6403, %v6403
        %v6420 = vpack.c.bf16 %v6404, %v6404
        %v6421 = vpack.c.bf16 %v6405, %v6405
        %v6422 = vpack.c.bf16 %v6406, %v6406
        %v6423 = vpack.c.bf16 %v6407, %v6407
        %v6424 = vpack.c.bf16 %v6408, %v6408
        %v6425 = vpack.c.bf16 %v6409, %v6409
        %v6426 = vpack.c.bf16 %v6410, %v6410
        %v6427 = vpack.c.bf16 %v6411, %v6411
        %v6428 = vpack.c.bf16 %v6412, %v6412
        %v6429 = vpack.c.bf16 %v6413, %v6413
        %v6430 = vpack.c.bf16 %v6414, %v6414
        %v6431 = vpack.c.bf16 %v6415, %v6415
        %v6432 = vpack.c.bf16 %v6416, %v6416
        %6433 = vst [vmem:[#allocation3 + $0x1c] sm:$0xf] %v6417
        %6434 = vst [vmem:[#allocation3 + $0x40] sm:$0xf] %v6418
        %6435 = vst [vmem:[#allocation3 + $0x64] sm:$0xf] %v6419
        %6436 = vst [vmem:[#allocation3 + $0x88] sm:$0xf] %v6420
        %6437 = vst [vmem:[#allocation3 + $0xac] sm:$0xf] %v6421
        %6438 = vst [vmem:[#allocation3 + $0xd0] sm:$0xf] %v6422
        %6439 = vst [vmem:[#allocation3 + $0xf4] sm:$0xf] %v6423
        %6440 = vst [vmem:[#allocation3 + $0x118] sm:$0xf] %v6424
        %6441 = vst [vmem:[#allocation3 + $0x13c] sm:$0xf] %v6425
        %6442 = vst [vmem:[#allocation3 + $0x160] sm:$0xf] %v6426
        %6443 = vst [vmem:[#allocation3 + $0x184] sm:$0xf] %v6427
        %6444 = vst [vmem:[#allocation3 + $0x1a8] sm:$0xf] %v6428
        %6445 = vst [vmem:[#allocation3 + $0x1cc] sm:$0xf] %v6429
        %6446 = vst [vmem:[#allocation3 + $0x1f0] sm:$0xf] %v6430
        %6447 = vst [vmem:[#allocation3 + $0x214] sm:$0xf] %v6431
        %6448 = vst [vmem:[#allocation3 + $0x238] sm:$0xf] %v6432
        %v6449 = vld [vmem:[#allocation2 + $0x80] sm:$0xff]
        %v6450 = vld [vmem:[#allocation2 + $0x110] sm:$0xff]
        %v6451 = vld [vmem:[#allocation2 + $0x1a0] sm:$0xff]
        %v6452 = vld [vmem:[#allocation2 + $0x230] sm:$0xff]
        %v6453 = vld [vmem:[#allocation2 + $0x2c0] sm:$0xff]
        %v6454 = vld [vmem:[#allocation2 + $0x350] sm:$0xff]
        %v6455 = vld [vmem:[#allocation2 + $0x3e0] sm:$0xff]
        %v6456 = vld [vmem:[#allocation2 + $0x470] sm:$0xff]
        %v6457 = vld [vmem:[#allocation2 + $0x500] sm:$0xff]
        %v6458 = vld [vmem:[#allocation2 + $0x590] sm:$0xff]
        %v6459 = vld [vmem:[#allocation2 + $0x620] sm:$0xff]
        %v6460 = vld [vmem:[#allocation2 + $0x6b0] sm:$0xff]
        %v6461 = vld [vmem:[#allocation2 + $0x740] sm:$0xff]
        %v6462 = vld [vmem:[#allocation2 + $0x7d0] sm:$0xff]
        %v6463 = vld [vmem:[#allocation2 + $0x860] sm:$0xff]
        %v6464 = vld [vmem:[#allocation2 + $0x8f0] sm:$0xff]
        %v6465 = vld [vmem:[#allocation2 + $0x88] sm:$0xff]
        %v6466 = vld [vmem:[#allocation2 + $0x118] sm:$0xff]
        %v6467 = vld [vmem:[#allocation2 + $0x1a8] sm:$0xff]
        %v6468 = vld [vmem:[#allocation2 + $0x238] sm:$0xff]
        %v6469 = vld [vmem:[#allocation2 + $0x2c8] sm:$0xff]
        %v6470 = vld [vmem:[#allocation2 + $0x358] sm:$0xff]
        %v6471 = vld [vmem:[#allocation2 + $0x3e8] sm:$0xff]
        %v6472 = vld [vmem:[#allocation2 + $0x478] sm:$0xff]
        %v6473 = vld [vmem:[#allocation2 + $0x508] sm:$0xff]
        %v6474 = vld [vmem:[#allocation2 + $0x598] sm:$0xff]
        %v6475 = vld [vmem:[#allocation2 + $0x628] sm:$0xff]
        %v6476 = vld [vmem:[#allocation2 + $0x6b8] sm:$0xff]
        %v6477 = vld [vmem:[#allocation2 + $0x748] sm:$0xff]
        %v6478 = vld [vmem:[#allocation2 + $0x7d8] sm:$0xff]
        %v6479 = vld [vmem:[#allocation2 + $0x868] sm:$0xff]
        %v6480 = vld [vmem:[#allocation2 + $0x8f8] sm:$0xff]
        %v6481 = vld [vmem:[%s252] sm:$0xff]
        %v6482 = vld [vmem:[%s252 + $0x8] sm:$0xff]
        %v6483 = vld [vmem:[%s252 + $0x10] sm:$0xff]
        %v6484 = vld [vmem:[%s252 + $0x18] sm:$0xff]
        %v6485 = vld [vmem:[%s252 + $0x20] sm:$0xff]
        %v6486 = vld [vmem:[%s252 + $0x28] sm:$0xff]
        %v6487 = vld [vmem:[%s252 + $0x30] sm:$0xff]
        %v6488 = vld [vmem:[%s252 + $0x38] sm:$0xff]
        %v6489 = vld [vmem:[%s252 + $0x40] sm:$0xff]
        %v6490 = vld [vmem:[%s252 + $0x48] sm:$0xff]
        %v6491 = vld [vmem:[%s252 + $0x50] sm:$0xff]
        %v6492 = vld [vmem:[%s252 + $0x58] sm:$0xff]
        %v6493 = vld [vmem:[%s252 + $0x60] sm:$0xff]
        %v6494 = vld [vmem:[%s252 + $0x68] sm:$0xff]
        %v6495 = vld [vmem:[%s252 + $0x70] sm:$0xff]
        %v6496 = vld [vmem:[%s252 + $0x78] sm:$0xff]
        %v6497 = vxor.u32 %v6449, 2147483648
        %v6498 = vxor.u32 %v6450, 2147483648
        %v6499 = vxor.u32 %v6451, 2147483648
        %v6500 = vxor.u32 %v6452, 2147483648
        %v6501 = vxor.u32 %v6453, 2147483648
        %v6502 = vxor.u32 %v6454, 2147483648
        %v6503 = vxor.u32 %v6455, 2147483648
        %v6504 = vxor.u32 %v6456, 2147483648
        %v6505 = vxor.u32 %v6457, 2147483648
        %v6506 = vxor.u32 %v6458, 2147483648
        %v6507 = vxor.u32 %v6459, 2147483648
        %v6508 = vxor.u32 %v6460, 2147483648
        %v6509 = vxor.u32 %v6461, 2147483648
        %v6510 = vxor.u32 %v6462, 2147483648
        %v6511 = vxor.u32 %v6463, 2147483648
        %v6512 = vxor.u32 %v6464, 2147483648
        %v6513 = vmul.f32 %v6497, 1.442695
        %v6514 = vpow.pop %v6513
        %v6515 = vmul.f32 %v6498, 1.442695
        %v6516 = vpow.pop %v6515
        %v6517 = vmul.f32 %v6499, 1.442695
        %v6518 = vpow.pop %v6517
        %v6519 = vmul.f32 %v6500, 1.442695
        %v6520 = vpow.pop %v6519
        %v6521 = vmul.f32 %v6501, 1.442695
        %v6522 = vpow.pop %v6521
        %v6523 = vmul.f32 %v6502, 1.442695
        %v6524 = vpow.pop %v6523
        %v6525 = vmul.f32 %v6503, 1.442695
        %v6526 = vpow.pop %v6525
        %v6527 = vmul.f32 %v6504, 1.442695
        %v6528 = vpow.pop %v6527
        %v6529 = vmul.f32 %v6505, 1.442695
        %v6530 = vpow.pop %v6529
        %v6531 = vmul.f32 %v6506, 1.442695
        %v6532 = vpow.pop %v6531
        %v6533 = vmul.f32 %v6507, 1.442695
        %v6534 = vpow.pop %v6533
        %v6535 = vmul.f32 %v6508, 1.442695
        %v6536 = vpow.pop %v6535
        %v6537 = vmul.f32 %v6509, 1.442695
        %v6538 = vpow.pop %v6537
        %v6539 = vmul.f32 %v6510, 1.442695
        %v6540 = vpow.pop %v6539
        %v6541 = vmul.f32 %v6511, 1.442695
        %v6542 = vpow.pop %v6541
        %v6543 = vmul.f32 %v6512, 1.442695
        %v6544 = vpow.pop %v6543
        %v6545 = vadd.f32 %v6514, 1.0
        %v6546 = vadd.f32 %v6516, 1.0
        %v6547 = vadd.f32 %v6518, 1.0
        %v6548 = vadd.f32 %v6520, 1.0
        %v6549 = vadd.f32 %v6522, 1.0
        %v6550 = vadd.f32 %v6524, 1.0
        %v6551 = vadd.f32 %v6526, 1.0
        %v6552 = vadd.f32 %v6528, 1.0
        %v6553 = vadd.f32 %v6530, 1.0
        %v6554 = vadd.f32 %v6532, 1.0
        %v6555 = vadd.f32 %v6534, 1.0
        %v6556 = vadd.f32 %v6536, 1.0
        %v6557 = vadd.f32 %v6538, 1.0
        %v6558 = vadd.f32 %v6540, 1.0
        %v6559 = vadd.f32 %v6542, 1.0
        %v6560 = vadd.f32 %v6544, 1.0
        %v6561 = vrcp.pop %v6545
        %v6562 = vmul.f32 %v6545, %v6561
        %v6563 = vsub.f32 1.0, %v6562
        %v6564 = vmul.f32 %v6561, %v6563
        %v6565 = vadd.f32 %v6561, %v6564
        %vm6566 = vweird.f32 %v6545
        %vm6567 = vweird.f32 %v6561
        %vm6568 = vmor %vm6566, %vm6567
        %v6569 = vsel %vm6568, %v6561, %v6565
        %v6570 = vand.u32 2147483647, %v6545
        %vm6571 = vcmp.eq.f32.partialorder %v6570, 8.507059e+37
        %v6572 = vand.u32 %v6545, 2147483648
        %v6573 = vor.u32 1.1754944e-38, %v6572
        %v6574 = vsel %vm6571, %v6573, %v6569
        %v6575 = vmul.f32 1.0, %v6574
        %v6576 = vrcp.pop %v6546
        %v6577 = vmul.f32 %v6546, %v6576
        %v6578 = vsub.f32 1.0, %v6577
        %v6579 = vmul.f32 %v6576, %v6578
        %v6580 = vadd.f32 %v6576, %v6579
        %vm6581 = vweird.f32 %v6546
        %vm6582 = vweird.f32 %v6576
        %vm6583 = vmor %vm6581, %vm6582
        %v6584 = vsel %vm6583, %v6576, %v6580
        %v6585 = vand.u32 2147483647, %v6546
        %vm6586 = vcmp.eq.f32.partialorder %v6585, 8.507059e+37
        %v6587 = vand.u32 %v6546, 2147483648
        %v6588 = vor.u32 1.1754944e-38, %v6587
        %v6589 = vsel %vm6586, %v6588, %v6584
        %v6590 = vmul.f32 1.0, %v6589
        %v6591 = vrcp.pop %v6547
        %v6592 = vmul.f32 %v6547, %v6591
        %v6593 = vsub.f32 1.0, %v6592
        %v6594 = vmul.f32 %v6591, %v6593
        %v6595 = vadd.f32 %v6591, %v6594
        %vm6596 = vweird.f32 %v6547
        %vm6597 = vweird.f32 %v6591
        %vm6598 = vmor %vm6596, %vm6597
        %v6599 = vsel %vm6598, %v6591, %v6595
        %v6600 = vand.u32 2147483647, %v6547
        %vm6601 = vcmp.eq.f32.partialorder %v6600, 8.507059e+37
        %v6602 = vand.u32 %v6547, 2147483648
        %v6603 = vor.u32 1.1754944e-38, %v6602
        %v6604 = vsel %vm6601, %v6603, %v6599
        %v6605 = vmul.f32 1.0, %v6604
        %v6606 = vrcp.pop %v6548
        %v6607 = vmul.f32 %v6548, %v6606
        %v6608 = vsub.f32 1.0, %v6607
        %v6609 = vmul.f32 %v6606, %v6608
        %v6610 = vadd.f32 %v6606, %v6609
        %vm6611 = vweird.f32 %v6548
        %vm6612 = vweird.f32 %v6606
        %vm6613 = vmor %vm6611, %vm6612
        %v6614 = vsel %vm6613, %v6606, %v6610
        %v6615 = vand.u32 2147483647, %v6548
        %vm6616 = vcmp.eq.f32.partialorder %v6615, 8.507059e+37
        %v6617 = vand.u32 %v6548, 2147483648
        %v6618 = vor.u32 1.1754944e-38, %v6617
        %v6619 = vsel %vm6616, %v6618, %v6614
        %v6620 = vmul.f32 1.0, %v6619
        %v6621 = vrcp.pop %v6549
        %v6622 = vmul.f32 %v6549, %v6621
        %v6623 = vsub.f32 1.0, %v6622
        %v6624 = vmul.f32 %v6621, %v6623
        %v6625 = vadd.f32 %v6621, %v6624
        %vm6626 = vweird.f32 %v6549
        %vm6627 = vweird.f32 %v6621
        %vm6628 = vmor %vm6626, %vm6627
        %v6629 = vsel %vm6628, %v6621, %v6625
        %v6630 = vand.u32 2147483647, %v6549
        %vm6631 = vcmp.eq.f32.partialorder %v6630, 8.507059e+37
        %v6632 = vand.u32 %v6549, 2147483648
        %v6633 = vor.u32 1.1754944e-38, %v6632
        %v6634 = vsel %vm6631, %v6633, %v6629
        %v6635 = vmul.f32 1.0, %v6634
        %v6636 = vrcp.pop %v6550
        %v6637 = vmul.f32 %v6550, %v6636
        %v6638 = vsub.f32 1.0, %v6637
        %v6639 = vmul.f32 %v6636, %v6638
        %v6640 = vadd.f32 %v6636, %v6639
        %vm6641 = vweird.f32 %v6550
        %vm6642 = vweird.f32 %v6636
        %vm6643 = vmor %vm6641, %vm6642
        %v6644 = vsel %vm6643, %v6636, %v6640
        %v6645 = vand.u32 2147483647, %v6550
        %vm6646 = vcmp.eq.f32.partialorder %v6645, 8.507059e+37
        %v6647 = vand.u32 %v6550, 2147483648
        %v6648 = vor.u32 1.1754944e-38, %v6647
        %v6649 = vsel %vm6646, %v6648, %v6644
        %v6650 = vmul.f32 1.0, %v6649
        %v6651 = vrcp.pop %v6551
        %v6652 = vmul.f32 %v6551, %v6651
        %v6653 = vsub.f32 1.0, %v6652
        %v6654 = vmul.f32 %v6651, %v6653
        %v6655 = vadd.f32 %v6651, %v6654
        %vm6656 = vweird.f32 %v6551
        %vm6657 = vweird.f32 %v6651
        %vm6658 = vmor %vm6656, %vm6657
        %v6659 = vsel %vm6658, %v6651, %v6655
        %v6660 = vand.u32 2147483647, %v6551
        %vm6661 = vcmp.eq.f32.partialorder %v6660, 8.507059e+37
        %v6662 = vand.u32 %v6551, 2147483648
        %v6663 = vor.u32 1.1754944e-38, %v6662
        %v6664 = vsel %vm6661, %v6663, %v6659
        %v6665 = vmul.f32 1.0, %v6664
        %v6666 = vrcp.pop %v6552
        %v6667 = vmul.f32 %v6552, %v6666
        %v6668 = vsub.f32 1.0, %v6667
        %v6669 = vmul.f32 %v6666, %v6668
        %v6670 = vadd.f32 %v6666, %v6669
        %vm6671 = vweird.f32 %v6552
        %vm6672 = vweird.f32 %v6666
        %vm6673 = vmor %vm6671, %vm6672
        %v6674 = vsel %vm6673, %v6666, %v6670
        %v6675 = vand.u32 2147483647, %v6552
        %vm6676 = vcmp.eq.f32.partialorder %v6675, 8.507059e+37
        %v6677 = vand.u32 %v6552, 2147483648
        %v6678 = vor.u32 1.1754944e-38, %v6677
        %v6679 = vsel %vm6676, %v6678, %v6674
        %v6680 = vmul.f32 1.0, %v6679
        %v6681 = vrcp.pop %v6553
        %v6682 = vmul.f32 %v6553, %v6681
        %v6683 = vsub.f32 1.0, %v6682
        %v6684 = vmul.f32 %v6681, %v6683
        %v6685 = vadd.f32 %v6681, %v6684
        %vm6686 = vweird.f32 %v6553
        %vm6687 = vweird.f32 %v6681
        %vm6688 = vmor %vm6686, %vm6687
        %v6689 = vsel %vm6688, %v6681, %v6685
        %v6690 = vand.u32 2147483647, %v6553
        %vm6691 = vcmp.eq.f32.partialorder %v6690, 8.507059e+37
        %v6692 = vand.u32 %v6553, 2147483648
        %v6693 = vor.u32 1.1754944e-38, %v6692
        %v6694 = vsel %vm6691, %v6693, %v6689
        %v6695 = vmul.f32 1.0, %v6694
        %v6696 = vrcp.pop %v6554
        %v6697 = vmul.f32 %v6554, %v6696
        %v6698 = vsub.f32 1.0, %v6697
        %v6699 = vmul.f32 %v6696, %v6698
        %v6700 = vadd.f32 %v6696, %v6699
        %vm6701 = vweird.f32 %v6554
        %vm6702 = vweird.f32 %v6696
        %vm6703 = vmor %vm6701, %vm6702
        %v6704 = vsel %vm6703, %v6696, %v6700
        %v6705 = vand.u32 2147483647, %v6554
        %vm6706 = vcmp.eq.f32.partialorder %v6705, 8.507059e+37
        %v6707 = vand.u32 %v6554, 2147483648
        %v6708 = vor.u32 1.1754944e-38, %v6707
        %v6709 = vsel %vm6706, %v6708, %v6704
        %v6710 = vmul.f32 1.0, %v6709
        %v6711 = vrcp.pop %v6555
        %v6712 = vmul.f32 %v6555, %v6711
        %v6713 = vsub.f32 1.0, %v6712
        %v6714 = vmul.f32 %v6711, %v6713
        %v6715 = vadd.f32 %v6711, %v6714
        %vm6716 = vweird.f32 %v6555
        %vm6717 = vweird.f32 %v6711
        %vm6718 = vmor %vm6716, %vm6717
        %v6719 = vsel %vm6718, %v6711, %v6715
        %v6720 = vand.u32 2147483647, %v6555
        %vm6721 = vcmp.eq.f32.partialorder %v6720, 8.507059e+37
        %v6722 = vand.u32 %v6555, 2147483648
        %v6723 = vor.u32 1.1754944e-38, %v6722
        %v6724 = vsel %vm6721, %v6723, %v6719
        %v6725 = vmul.f32 1.0, %v6724
        %v6726 = vrcp.pop %v6556
        %v6727 = vmul.f32 %v6556, %v6726
        %v6728 = vsub.f32 1.0, %v6727
        %v6729 = vmul.f32 %v6726, %v6728
        %v6730 = vadd.f32 %v6726, %v6729
        %vm6731 = vweird.f32 %v6556
        %vm6732 = vweird.f32 %v6726
        %vm6733 = vmor %vm6731, %vm6732
        %v6734 = vsel %vm6733, %v6726, %v6730
        %v6735 = vand.u32 2147483647, %v6556
        %vm6736 = vcmp.eq.f32.partialorder %v6735, 8.507059e+37
        %v6737 = vand.u32 %v6556, 2147483648
        %v6738 = vor.u32 1.1754944e-38, %v6737
        %v6739 = vsel %vm6736, %v6738, %v6734
        %v6740 = vmul.f32 1.0, %v6739
        %v6741 = vrcp.pop %v6557
        %v6742 = vmul.f32 %v6557, %v6741
        %v6743 = vsub.f32 1.0, %v6742
        %v6744 = vmul.f32 %v6741, %v6743
        %v6745 = vadd.f32 %v6741, %v6744
        %vm6746 = vweird.f32 %v6557
        %vm6747 = vweird.f32 %v6741
        %vm6748 = vmor %vm6746, %vm6747
        %v6749 = vsel %vm6748, %v6741, %v6745
        %v6750 = vand.u32 2147483647, %v6557
        %vm6751 = vcmp.eq.f32.partialorder %v6750, 8.507059e+37
        %v6752 = vand.u32 %v6557, 2147483648
        %v6753 = vor.u32 1.1754944e-38, %v6752
        %v6754 = vsel %vm6751, %v6753, %v6749
        %v6755 = vmul.f32 1.0, %v6754
        %v6756 = vrcp.pop %v6558
        %v6757 = vmul.f32 %v6558, %v6756
        %v6758 = vsub.f32 1.0, %v6757
        %v6759 = vmul.f32 %v6756, %v6758
        %v6760 = vadd.f32 %v6756, %v6759
        %vm6761 = vweird.f32 %v6558
        %vm6762 = vweird.f32 %v6756
        %vm6763 = vmor %vm6761, %vm6762
        %v6764 = vsel %vm6763, %v6756, %v6760
        %v6765 = vand.u32 2147483647, %v6558
        %vm6766 = vcmp.eq.f32.partialorder %v6765, 8.507059e+37
        %v6767 = vand.u32 %v6558, 2147483648
        %v6768 = vor.u32 1.1754944e-38, %v6767
        %v6769 = vsel %vm6766, %v6768, %v6764
        %v6770 = vmul.f32 1.0, %v6769
        %v6771 = vrcp.pop %v6559
        %v6772 = vmul.f32 %v6559, %v6771
        %v6773 = vsub.f32 1.0, %v6772
        %v6774 = vmul.f32 %v6771, %v6773
        %v6775 = vadd.f32 %v6771, %v6774
        %vm6776 = vweird.f32 %v6559
        %vm6777 = vweird.f32 %v6771
        %vm6778 = vmor %vm6776, %vm6777
        %v6779 = vsel %vm6778, %v6771, %v6775
        %v6780 = vand.u32 2147483647, %v6559
        %vm6781 = vcmp.eq.f32.partialorder %v6780, 8.507059e+37
        %v6782 = vand.u32 %v6559, 2147483648
        %v6783 = vor.u32 1.1754944e-38, %v6782
        %v6784 = vsel %vm6781, %v6783, %v6779
        %v6785 = vmul.f32 1.0, %v6784
        %v6786 = vrcp.pop %v6560
        %v6787 = vmul.f32 %v6560, %v6786
        %v6788 = vsub.f32 1.0, %v6787
        %v6789 = vmul.f32 %v6786, %v6788
        %v6790 = vadd.f32 %v6786, %v6789
        %vm6791 = vweird.f32 %v6560
        %vm6792 = vweird.f32 %v6786
        %vm6793 = vmor %vm6791, %vm6792
        %v6794 = vsel %vm6793, %v6786, %v6790
        %v6795 = vand.u32 2147483647, %v6560
        %vm6796 = vcmp.eq.f32.partialorder %v6795, 8.507059e+37
        %v6797 = vand.u32 %v6560, 2147483648
        %v6798 = vor.u32 1.1754944e-38, %v6797
        %v6799 = vsel %vm6796, %v6798, %v6794
        %v6800 = vmul.f32 1.0, %v6799
        %v6801 = vmul.f32 %v6449, %v6575
        %v6802 = vmul.f32 %v6450, %v6590
        %v6803 = vmul.f32 %v6451, %v6605
        %v6804 = vmul.f32 %v6452, %v6620
        %v6805 = vmul.f32 %v6453, %v6635
        %v6806 = vmul.f32 %v6454, %v6650
        %v6807 = vmul.f32 %v6455, %v6665
        %v6808 = vmul.f32 %v6456, %v6680
        %v6809 = vmul.f32 %v6457, %v6695
        %v6810 = vmul.f32 %v6458, %v6710
        %v6811 = vmul.f32 %v6459, %v6725
        %v6812 = vmul.f32 %v6460, %v6740
        %v6813 = vmul.f32 %v6461, %v6755
        %v6814 = vmul.f32 %v6462, %v6770
        %v6815 = vmul.f32 %v6463, %v6785
        %v6816 = vmul.f32 %v6464, %v6800
        %6818 = vset.pattern.permute.xlu0 8
        %6819 = vperm.xlu0 %6818, %v6481
        %v6820 = vpop.permute.xlu0 %6819
        %6823 = vset.pattern.permute.xlu0 8
        %6824 = vperm.xlu0 %6823, %v6482
        %v6825 = vpop.permute.xlu0 %6824
        %6828 = vset.pattern.permute.xlu0 8
        %6829 = vperm.xlu0 %6828, %v6483
        %v6830 = vpop.permute.xlu0 %6829
        %6833 = vset.pattern.permute.xlu0 8
        %6834 = vperm.xlu0 %6833, %v6484
        %v6835 = vpop.permute.xlu0 %6834
        %6838 = vset.pattern.permute.xlu0 8
        %6839 = vperm.xlu0 %6838, %v6485
        %v6840 = vpop.permute.xlu0 %6839
        %6843 = vset.pattern.permute.xlu0 8
        %6844 = vperm.xlu0 %6843, %v6486
        %v6845 = vpop.permute.xlu0 %6844
        %6848 = vset.pattern.permute.xlu0 8
        %6849 = vperm.xlu0 %6848, %v6487
        %v6850 = vpop.permute.xlu0 %6849
        %6853 = vset.pattern.permute.xlu0 8
        %6854 = vperm.xlu0 %6853, %v6488
        %v6855 = vpop.permute.xlu0 %6854
        %6858 = vset.pattern.permute.xlu0 8
        %6859 = vperm.xlu0 %6858, %v6489
        %v6860 = vpop.permute.xlu0 %6859
        %6863 = vset.pattern.permute.xlu0 8
        %6864 = vperm.xlu0 %6863, %v6490
        %v6865 = vpop.permute.xlu0 %6864
        %6868 = vset.pattern.permute.xlu0 8
        %6869 = vperm.xlu0 %6868, %v6491
        %v6870 = vpop.permute.xlu0 %6869
        %6873 = vset.pattern.permute.xlu0 8
        %6874 = vperm.xlu0 %6873, %v6492
        %v6875 = vpop.permute.xlu0 %6874
        %6878 = vset.pattern.permute.xlu0 8
        %6879 = vperm.xlu0 %6878, %v6493
        %v6880 = vpop.permute.xlu0 %6879
        %6883 = vset.pattern.permute.xlu0 8
        %6884 = vperm.xlu0 %6883, %v6494
        %v6885 = vpop.permute.xlu0 %6884
        %6888 = vset.pattern.permute.xlu0 8
        %6889 = vperm.xlu0 %6888, %v6495
        %v6890 = vpop.permute.xlu0 %6889
        %6893 = vset.pattern.permute.xlu0 8
        %6894 = vperm.xlu0 %6893, %v6496
        %v6895 = vpop.permute.xlu0 %6894
        %v6897 = vmul.f32 %v6465, %v6820
        %v6898 = vmul.f32 %v6466, %v6825
        %v6899 = vmul.f32 %v6467, %v6830
        %v6900 = vmul.f32 %v6468, %v6835
        %v6901 = vmul.f32 %v6469, %v6840
        %v6902 = vmul.f32 %v6470, %v6845
        %v6903 = vmul.f32 %v6471, %v6850
        %v6904 = vmul.f32 %v6472, %v6855
        %v6905 = vmul.f32 %v6473, %v6860
        %v6906 = vmul.f32 %v6474, %v6865
        %v6907 = vmul.f32 %v6475, %v6870
        %v6908 = vmul.f32 %v6476, %v6875
        %v6909 = vmul.f32 %v6477, %v6880
        %v6910 = vmul.f32 %v6478, %v6885
        %v6911 = vmul.f32 %v6479, %v6890
        %v6912 = vmul.f32 %v6480, %v6895
        %v6913 = vmul.f32 %v6801, %v6897
        %v6914 = vmul.f32 %v6802, %v6898
        %v6915 = vmul.f32 %v6803, %v6899
        %v6916 = vmul.f32 %v6804, %v6900
        %v6917 = vmul.f32 %v6805, %v6901
        %v6918 = vmul.f32 %v6806, %v6902
        %v6919 = vmul.f32 %v6807, %v6903
        %v6920 = vmul.f32 %v6808, %v6904
        %v6921 = vmul.f32 %v6809, %v6905
        %v6922 = vmul.f32 %v6810, %v6906
        %v6923 = vmul.f32 %v6811, %v6907
        %v6924 = vmul.f32 %v6812, %v6908
        %v6925 = vmul.f32 %v6813, %v6909
        %v6926 = vmul.f32 %v6814, %v6910
        %v6927 = vmul.f32 %v6815, %v6911
        %v6928 = vmul.f32 %v6816, %v6912
        %v6929 = vpack.c.bf16 %v6913, %v6913
        %v6930 = vpack.c.bf16 %v6914, %v6914
        %v6931 = vpack.c.bf16 %v6915, %v6915
        %v6932 = vpack.c.bf16 %v6916, %v6916
        %v6933 = vpack.c.bf16 %v6917, %v6917
        %v6934 = vpack.c.bf16 %v6918, %v6918
        %v6935 = vpack.c.bf16 %v6919, %v6919
        %v6936 = vpack.c.bf16 %v6920, %v6920
        %v6937 = vpack.c.bf16 %v6921, %v6921
        %v6938 = vpack.c.bf16 %v6922, %v6922
        %v6939 = vpack.c.bf16 %v6923, %v6923
        %v6940 = vpack.c.bf16 %v6924, %v6924
        %v6941 = vpack.c.bf16 %v6925, %v6925
        %v6942 = vpack.c.bf16 %v6926, %v6926
        %v6943 = vpack.c.bf16 %v6927, %v6927
        %v6944 = vpack.c.bf16 %v6928, %v6928
        %6945 = vst [vmem:[#allocation3 + $0x20] sm:$0xf] %v6929
        %6946 = vst [vmem:[#allocation3 + $0x44] sm:$0xf] %v6930
        %6947 = vst [vmem:[#allocation3 + $0x68] sm:$0xf] %v6931
        %6948 = vst [vmem:[#allocation3 + $0x8c] sm:$0xf] %v6932
        %6949 = vst [vmem:[#allocation3 + $0xb0] sm:$0xf] %v6933
        %6950 = vst [vmem:[#allocation3 + $0xd4] sm:$0xf] %v6934
        %6951 = vst [vmem:[#allocation3 + $0xf8] sm:$0xf] %v6935
        %6952 = vst [vmem:[#allocation3 + $0x11c] sm:$0xf] %v6936
        %6953 = vst [vmem:[#allocation3 + $0x140] sm:$0xf] %v6937
        %6954 = vst [vmem:[#allocation3 + $0x164] sm:$0xf] %v6938
        %6955 = vst [vmem:[#allocation3 + $0x188] sm:$0xf] %v6939
        %6956 = vst [vmem:[#allocation3 + $0x1ac] sm:$0xf] %v6940
        %6957 = vst [vmem:[#allocation3 + $0x1d0] sm:$0xf] %v6941
        %6958 = vst [vmem:[#allocation3 + $0x1f4] sm:$0xf] %v6942
        %6959 = vst [vmem:[#allocation3 + $0x218] sm:$0xf] %v6943
        %6960 = vst [vmem:[#allocation3 + $0x23c] sm:$0xf] %v6944
        %v6961 = vld [vmem:[#allocation3] sm:$0xff]
        %v6962 = vld [vmem:[#allocation3 + $0x8] sm:$0xff]
        %v6963 = vld [vmem:[#allocation3 + $0x10] sm:$0xff]
        %v6964 = vld [vmem:[#allocation3 + $0x18] sm:$0xff]
        %v6965 = vld [vmem:[#allocation3 + $0x20] sm:$0xf]
        %v6966 = vld [vmem:[#allocation3 + $0x24] sm:$0xff]
        %v6967 = vld [vmem:[#allocation3 + $0x2c] sm:$0xff]
        %v6968 = vld [vmem:[#allocation3 + $0x34] sm:$0xff]
        %v6969 = vld [vmem:[#allocation3 + $0x3c] sm:$0xff]
        %v6970 = vld [vmem:[#allocation3 + $0x44] sm:$0xf]
        %v6971 = vld [vmem:[#allocation3 + $0x48] sm:$0xff]
        %v6972 = vld [vmem:[#allocation3 + $0x50] sm:$0xff]
        %v6973 = vld [vmem:[#allocation3 + $0x58] sm:$0xff]
        %v6974 = vld [vmem:[#allocation3 + $0x60] sm:$0xff]
        %v6975 = vld [vmem:[#allocation3 + $0x68] sm:$0xf]
        %v6976 = vld [vmem:[#allocation3 + $0x6c] sm:$0xff]
        %v6977 = vld [vmem:[#allocation3 + $0x74] sm:$0xff]
        %v6978 = vld [vmem:[#allocation3 + $0x7c] sm:$0xff]
        %v6979 = vld [vmem:[#allocation3 + $0x84] sm:$0xff]
        %v6980 = vld [vmem:[#allocation3 + $0x8c] sm:$0xf]
        %v6981 = vld [vmem:[#allocation3 + $0x90] sm:$0xff]
        %v6982 = vld [vmem:[#allocation3 + $0x98] sm:$0xff]
        %v6983 = vld [vmem:[#allocation3 + $0xa0] sm:$0xff]
        %v6984 = vld [vmem:[#allocation3 + $0xa8] sm:$0xff]
        %v6985 = vld [vmem:[#allocation3 + $0xb0] sm:$0xf]
        %v6986 = vld [vmem:[#allocation3 + $0xb4] sm:$0xff]
        %v6987 = vld [vmem:[#allocation3 + $0xbc] sm:$0xff]
        %v6988 = vld [vmem:[#allocation3 + $0xc4] sm:$0xff]
        %v6989 = vld [vmem:[#allocation3 + $0xcc] sm:$0xff]
        %v6990 = vld [vmem:[#allocation3 + $0xd4] sm:$0xf]
        %v6991 = vld [vmem:[#allocation3 + $0xd8] sm:$0xff]
        %v6992 = vld [vmem:[#allocation3 + $0xe0] sm:$0xff]
        %v6993 = vld [vmem:[#allocation3 + $0xe8] sm:$0xff]
        %v6994 = vld [vmem:[#allocation3 + $0xf0] sm:$0xff]
        %v6995 = vld [vmem:[#allocation3 + $0xf8] sm:$0xf]
        %v6996 = vld [vmem:[#allocation3 + $0xfc] sm:$0xff]
        %v6997 = vld [vmem:[#allocation3 + $0x104] sm:$0xff]
        %v6998 = vld [vmem:[#allocation3 + $0x10c] sm:$0xff]
        %v6999 = vld [vmem:[#allocation3 + $0x114] sm:$0xff]
        %v7000 = vld [vmem:[#allocation3 + $0x11c] sm:$0xf]
        %v7001 = vld [vmem:[#allocation3 + $0x120] sm:$0xff]
        %v7002 = vld [vmem:[#allocation3 + $0x128] sm:$0xff]
        %v7003 = vld [vmem:[#allocation3 + $0x130] sm:$0xff]
        %v7004 = vld [vmem:[#allocation3 + $0x138] sm:$0xff]
        %v7005 = vld [vmem:[#allocation3 + $0x140] sm:$0xf]
        %v7006 = vld [vmem:[#allocation3 + $0x144] sm:$0xff]
        %v7007 = vld [vmem:[#allocation3 + $0x14c] sm:$0xff]
        %v7008 = vld [vmem:[#allocation3 + $0x154] sm:$0xff]
        %v7009 = vld [vmem:[#allocation3 + $0x15c] sm:$0xff]
        %v7010 = vld [vmem:[#allocation3 + $0x164] sm:$0xf]
        %v7011 = vld [vmem:[#allocation3 + $0x168] sm:$0xff]
        %v7012 = vld [vmem:[#allocation3 + $0x170] sm:$0xff]
        %v7013 = vld [vmem:[#allocation3 + $0x178] sm:$0xff]
        %v7014 = vld [vmem:[#allocation3 + $0x180] sm:$0xff]
        %v7015 = vld [vmem:[#allocation3 + $0x188] sm:$0xf]
        %v7016 = vld [vmem:[#allocation3 + $0x18c] sm:$0xff]
        %v7017 = vld [vmem:[#allocation3 + $0x194] sm:$0xff]
        %v7018 = vld [vmem:[#allocation3 + $0x19c] sm:$0xff]
        %v7019 = vld [vmem:[#allocation3 + $0x1a4] sm:$0xff]
        %v7020 = vld [vmem:[#allocation3 + $0x1ac] sm:$0xf]
        %v7021 = vld [vmem:[#allocation3 + $0x1b0] sm:$0xff]
        %v7022 = vld [vmem:[#allocation3 + $0x1b8] sm:$0xff]
        %v7023 = vld [vmem:[#allocation3 + $0x1c0] sm:$0xff]
        %v7024 = vld [vmem:[#allocation3 + $0x1c8] sm:$0xff]
        %v7025 = vld [vmem:[#allocation3 + $0x1d0] sm:$0xf]
        %v7026 = vld [vmem:[#allocation3 + $0x1d4] sm:$0xff]
        %v7027 = vld [vmem:[#allocation3 + $0x1dc] sm:$0xff]
        %v7028 = vld [vmem:[#allocation3 + $0x1e4] sm:$0xff]
        %v7029 = vld [vmem:[#allocation3 + $0x1ec] sm:$0xff]
        %v7030 = vld [vmem:[#allocation3 + $0x1f4] sm:$0xf]
        %v7031 = vld [vmem:[#allocation3 + $0x1f8] sm:$0xff]
        %v7032 = vld [vmem:[#allocation3 + $0x200] sm:$0xff]
        %v7033 = vld [vmem:[#allocation3 + $0x208] sm:$0xff]
        %v7034 = vld [vmem:[#allocation3 + $0x210] sm:$0xff]
        %v7035 = vld [vmem:[#allocation3 + $0x218] sm:$0xf]
        %v7036 = vld [vmem:[#allocation3 + $0x21c] sm:$0xff]
        %v7037 = vld [vmem:[#allocation3 + $0x224] sm:$0xff]
        %v7038 = vld [vmem:[#allocation3 + $0x22c] sm:$0xff]
        %v7039 = vld [vmem:[#allocation3 + $0x234] sm:$0xff]
        %v7040 = vld [vmem:[#allocation3 + $0x23c] sm:$0xf]
        %v7041 = vld [vmem:[#allocation7] sm:$0xf]
        %v7042 = vld [vmem:[#allocation7 + $0x4] sm:$0xf]
        %v7043 = vld [vmem:[#allocation7 + $0x8] sm:$0xf]
        %v7044 = vld [vmem:[#allocation7 + $0xc] sm:$0xf]
        %v7045 = vld [vmem:[#allocation7 + $0x10] sm:$0xf]
        %v7046 = vld [vmem:[#allocation7 + $0x14] sm:$0xf]
        %v7047 = vld [vmem:[#allocation7 + $0x18] sm:$0xf]
        %v7048 = vld [vmem:[#allocation7 + $0x1c] sm:$0xf]
        %v7049 = vld [vmem:[#allocation7 + $0x20] sm:$0xf]
        %v7050 = vld [vmem:[#allocation7 + $0x24] sm:$0xf]
        %v7051 = vld [vmem:[#allocation7 + $0x28] sm:$0xf]
        %v7052 = vld [vmem:[#allocation7 + $0x2c] sm:$0xf]
        %v7053 = vld [vmem:[#allocation7 + $0x30] sm:$0xf]
        %v7054 = vld [vmem:[#allocation7 + $0x34] sm:$0xf]
        %v7055 = vld [vmem:[#allocation7 + $0x38] sm:$0xf]
        %v7056 = vld [vmem:[#allocation7 + $0x3c] sm:$0xf]
        %v7057 = vld [vmem:[#allocation7 + $0x40] sm:$0xf]
        %v7058 = vld [vmem:[#allocation7 + $0x44] sm:$0xf]
        %v7059 = vld [vmem:[#allocation7 + $0x48] sm:$0xf]
        %v7060 = vld [vmem:[#allocation7 + $0x4c] sm:$0xf]
        %v7061 = vld [vmem:[#allocation7 + $0x50] sm:$0xf]
        %v7062 = vld [vmem:[#allocation7 + $0x54] sm:$0xf]
        %v7063 = vld [vmem:[#allocation7 + $0x58] sm:$0xf]
        %v7064 = vld [vmem:[#allocation7 + $0x5c] sm:$0xf]
        %v7065 = vld [vmem:[#allocation7 + $0x60] sm:$0xf]
        %v7066 = vld [vmem:[#allocation7 + $0x64] sm:$0xf]
        %v7067 = vld [vmem:[#allocation7 + $0x68] sm:$0xf]
        %v7068 = vld [vmem:[#allocation7 + $0x6c] sm:$0xf]
        %v7069 = vld [vmem:[#allocation7 + $0x70] sm:$0xf]
        %v7070 = vld [vmem:[#allocation7 + $0x74] sm:$0xf]
        %v7071 = vld [vmem:[#allocation7 + $0x78] sm:$0xf]
        %v7072 = vld [vmem:[#allocation7 + $0x7c] sm:$0xf]
        %v7073 = vld [vmem:[#allocation7 + $0x80] sm:$0xf]
        %v7074 = vld [vmem:[#allocation7 + $0x84] sm:$0xf]
        %v7075 = vld [vmem:[#allocation7 + $0x88] sm:$0xf]
        %v7076 = vld [vmem:[#allocation7 + $0x8c] sm:$0xf]
        %v7077 = vld [vmem:[#allocation7 + $0x90] sm:$0xf]
        %v7078 = vld [vmem:[#allocation7 + $0x94] sm:$0xf]
        %v7079 = vld [vmem:[#allocation7 + $0x98] sm:$0xf]
        %v7080 = vld [vmem:[#allocation7 + $0x9c] sm:$0xf]
        %v7081 = vld [vmem:[#allocation7 + $0xa0] sm:$0xf]
        %v7082 = vld [vmem:[#allocation7 + $0xa4] sm:$0xf]
        %v7083 = vld [vmem:[#allocation7 + $0xa8] sm:$0xf]
        %v7084 = vld [vmem:[#allocation7 + $0xac] sm:$0xf]
        %v7085 = vld [vmem:[#allocation7 + $0xb0] sm:$0xf]
        %v7086 = vld [vmem:[#allocation7 + $0xb4] sm:$0xf]
        %v7087 = vld [vmem:[#allocation7 + $0xb8] sm:$0xf]
        %v7088 = vld [vmem:[#allocation7 + $0xbc] sm:$0xf]
        %v7089 = vld [vmem:[#allocation7 + $0xc0] sm:$0xf]
        %v7090 = vld [vmem:[#allocation7 + $0xc4] sm:$0xf]
        %v7091 = vld [vmem:[#allocation7 + $0xc8] sm:$0xf]
        %v7092 = vld [vmem:[#allocation7 + $0xcc] sm:$0xf]
        %v7093 = vld [vmem:[#allocation7 + $0xd0] sm:$0xf]
        %v7094 = vld [vmem:[#allocation7 + $0xd4] sm:$0xf]
        %v7095 = vld [vmem:[#allocation7 + $0xd8] sm:$0xf]
        %v7096 = vld [vmem:[#allocation7 + $0xdc] sm:$0xf]
        %v7097 = vld [vmem:[#allocation7 + $0xe0] sm:$0xf]
        %v7098 = vld [vmem:[#allocation7 + $0xe4] sm:$0xf]
        %v7099 = vld [vmem:[#allocation7 + $0xe8] sm:$0xf]
        %v7100 = vld [vmem:[#allocation7 + $0xec] sm:$0xf]
        %v7101 = vld [vmem:[#allocation7 + $0xf0] sm:$0xf]
        %v7102 = vld [vmem:[#allocation7 + $0xf4] sm:$0xf]
        %v7103 = vld [vmem:[#allocation7 + $0xf8] sm:$0xf]
        %v7104 = vld [vmem:[#allocation7 + $0xfc] sm:$0xf]
        %v7105 = vld [vmem:[#allocation7 + $0x100] sm:$0xf]
        %v7106 = vld [vmem:[#allocation7 + $0x104] sm:$0xf]
        %v7107 = vld [vmem:[#allocation7 + $0x108] sm:$0xf]
        %v7108 = vld [vmem:[#allocation7 + $0x10c] sm:$0xf]
        %v7109 = vld [vmem:[#allocation7 + $0x110] sm:$0xf]
        %v7110 = vld [vmem:[#allocation7 + $0x114] sm:$0xf]
        %v7111 = vld [vmem:[#allocation7 + $0x118] sm:$0xf]
        %v7112 = vld [vmem:[#allocation7 + $0x11c] sm:$0xf]
        %v7113 = vld [vmem:[#allocation7 + $0x120] sm:$0xf]
        %v7114 = vld [vmem:[#allocation7 + $0x124] sm:$0xf]
        %v7115 = vld [vmem:[#allocation7 + $0x128] sm:$0xf]
        %v7116 = vld [vmem:[#allocation7 + $0x12c] sm:$0xf]
        %v7117 = vld [vmem:[#allocation7 + $0x130] sm:$0xf]
        %v7118 = vld [vmem:[#allocation7 + $0x134] sm:$0xf]
        %v7119 = vld [vmem:[#allocation7 + $0x138] sm:$0xf]
        %v7120 = vld [vmem:[#allocation7 + $0x13c] sm:$0xf]
        %v7121 = vld [vmem:[#allocation7 + $0x140] sm:$0xf]
        %v7122 = vld [vmem:[#allocation7 + $0x144] sm:$0xf]
        %v7123 = vld [vmem:[#allocation7 + $0x148] sm:$0xf]
        %v7124 = vld [vmem:[#allocation7 + $0x14c] sm:$0xf]
        %v7125 = vld [vmem:[#allocation7 + $0x150] sm:$0xf]
        %v7126 = vld [vmem:[#allocation7 + $0x154] sm:$0xf]
        %v7127 = vld [vmem:[#allocation7 + $0x158] sm:$0xf]
        %v7128 = vld [vmem:[#allocation7 + $0x15c] sm:$0xf]
        %v7129 = vld [vmem:[#allocation7 + $0x160] sm:$0xf]
        %v7130 = vld [vmem:[#allocation7 + $0x164] sm:$0xf]
        %v7131 = vld [vmem:[#allocation7 + $0x168] sm:$0xf]
        %v7132 = vld [vmem:[#allocation7 + $0x16c] sm:$0xf]
        %v7133 = vld [vmem:[#allocation7 + $0x170] sm:$0xf]
        %v7134 = vld [vmem:[#allocation7 + $0x174] sm:$0xf]
        %v7135 = vld [vmem:[#allocation7 + $0x178] sm:$0xf]
        %v7136 = vld [vmem:[#allocation7 + $0x17c] sm:$0xf]
        %v7137 = vld [vmem:[#allocation7 + $0x180] sm:$0xf]
        %v7138 = vld [vmem:[#allocation7 + $0x184] sm:$0xf]
        %v7139 = vld [vmem:[#allocation7 + $0x188] sm:$0xf]
        %v7140 = vld [vmem:[#allocation7 + $0x18c] sm:$0xf]
        %v7141 = vld [vmem:[#allocation7 + $0x190] sm:$0xf]
        %v7142 = vld [vmem:[#allocation7 + $0x194] sm:$0xf]
        %v7143 = vld [vmem:[#allocation7 + $0x198] sm:$0xf]
        %v7144 = vld [vmem:[#allocation7 + $0x19c] sm:$0xf]
        %v7145 = vld [vmem:[#allocation7 + $0x1a0] sm:$0xf]
        %v7146 = vld [vmem:[#allocation7 + $0x1a4] sm:$0xf]
        %v7147 = vld [vmem:[#allocation7 + $0x1a8] sm:$0xf]
        %v7148 = vld [vmem:[#allocation7 + $0x1ac] sm:$0xf]
        %v7149 = vld [vmem:[#allocation7 + $0x1b0] sm:$0xf]
        %v7150 = vld [vmem:[#allocation7 + $0x1b4] sm:$0xf]
        %v7151 = vld [vmem:[#allocation7 + $0x1b8] sm:$0xf]
        %v7152 = vld [vmem:[#allocation7 + $0x1bc] sm:$0xf]
        %v7153 = vld [vmem:[#allocation7 + $0x1c0] sm:$0xf]
        %v7154 = vld [vmem:[#allocation7 + $0x1c4] sm:$0xf]
        %v7155 = vld [vmem:[#allocation7 + $0x1c8] sm:$0xf]
        %v7156 = vld [vmem:[#allocation7 + $0x1cc] sm:$0xf]
        %v7157 = vld [vmem:[#allocation7 + $0x1d0] sm:$0xf]
        %v7158 = vld [vmem:[#allocation7 + $0x1d4] sm:$0xf]
        %v7159 = vld [vmem:[#allocation7 + $0x1d8] sm:$0xf]
        %v7160 = vld [vmem:[#allocation7 + $0x1dc] sm:$0xf]
        %v7161 = vld [vmem:[#allocation7 + $0x1e0] sm:$0xf]
        %v7162 = vld [vmem:[#allocation7 + $0x1e4] sm:$0xf]
        %v7163 = vld [vmem:[#allocation7 + $0x1e8] sm:$0xf]
        %v7164 = vld [vmem:[#allocation7 + $0x1ec] sm:$0xf]
        %v7165 = vld [vmem:[#allocation7 + $0x1f0] sm:$0xf]
        %v7166 = vld [vmem:[#allocation7 + $0x1f4] sm:$0xf]
        %v7167 = vld [vmem:[#allocation7 + $0x1f8] sm:$0xf]
        %v7168 = vld [vmem:[#allocation7 + $0x1fc] sm:$0xf]
        %v7169 = vld [vmem:[#allocation7 + $0x200] sm:$0xf]
        %v7170 = vld [vmem:[#allocation7 + $0x204] sm:$0xf]
        %v7171 = vld [vmem:[#allocation7 + $0x208] sm:$0xf]
        %v7172 = vld [vmem:[#allocation7 + $0x20c] sm:$0xf]
        %v7173 = vld [vmem:[#allocation7 + $0x210] sm:$0xf]
        %v7174 = vld [vmem:[#allocation7 + $0x214] sm:$0xf]
        %v7175 = vld [vmem:[#allocation7 + $0x218] sm:$0xf]
        %v7176 = vld [vmem:[#allocation7 + $0x21c] sm:$0xf]
        %v7177 = vld [vmem:[#allocation7 + $0x220] sm:$0xf]
        %v7178 = vld [vmem:[#allocation7 + $0x224] sm:$0xf]
        %v7179 = vld [vmem:[#allocation7 + $0x228] sm:$0xf]
        %v7180 = vld [vmem:[#allocation7 + $0x22c] sm:$0xf]
        %v7181 = vld [vmem:[#allocation7 + $0x230] sm:$0xf]
        %v7182 = vld [vmem:[#allocation7 + $0x234] sm:$0xf]
        %v7183 = vld [vmem:[#allocation7 + $0x238] sm:$0xf]
        %v7184 = vld [vmem:[#allocation7 + $0x23c] sm:$0xf]
        %v7265 = vunpack.c.l.b16 %v6961
        %v7266 = vunpack.c.h.b16 %v6961
        %v7267 = vunpack.c.l.b16 %v6962
        %v7268 = vunpack.c.h.b16 %v6962
        %v7269 = vunpack.c.l.b16 %v6963
        %v7270 = vunpack.c.h.b16 %v6963
        %v7271 = vunpack.c.l.b16 %v6964
        %v7272 = vunpack.c.h.b16 %v6964
        %v7273 = vunpack.c.l.b16 %v6965
        %v7274 = vunpack.c.l.b16 %v6966
        %v7275 = vunpack.c.h.b16 %v6966
        %v7276 = vunpack.c.l.b16 %v6967
        %v7277 = vunpack.c.h.b16 %v6967
        %v7278 = vunpack.c.l.b16 %v6968
        %v7279 = vunpack.c.h.b16 %v6968
        %v7280 = vunpack.c.l.b16 %v6969
        %v7281 = vunpack.c.h.b16 %v6969
        %v7282 = vunpack.c.l.b16 %v6970
        %v7283 = vunpack.c.l.b16 %v6971
        %v7284 = vunpack.c.h.b16 %v6971
        %v7285 = vunpack.c.l.b16 %v6972
        %v7286 = vunpack.c.h.b16 %v6972
        %v7287 = vunpack.c.l.b16 %v6973
        %v7288 = vunpack.c.h.b16 %v6973
        %v7289 = vunpack.c.l.b16 %v6974
        %v7290 = vunpack.c.h.b16 %v6974
        %v7291 = vunpack.c.l.b16 %v6975
        %v7292 = vunpack.c.l.b16 %v6976
        %v7293 = vunpack.c.h.b16 %v6976
        %v7294 = vunpack.c.l.b16 %v6977
        %v7295 = vunpack.c.h.b16 %v6977
        %v7296 = vunpack.c.l.b16 %v6978
        %v7297 = vunpack.c.h.b16 %v6978
        %v7298 = vunpack.c.l.b16 %v6979
        %v7299 = vunpack.c.h.b16 %v6979
        %v7300 = vunpack.c.l.b16 %v6980
        %v7301 = vunpack.c.l.b16 %v6981
        %v7302 = vunpack.c.h.b16 %v6981
        %v7303 = vunpack.c.l.b16 %v6982
        %v7304 = vunpack.c.h.b16 %v6982
        %v7305 = vunpack.c.l.b16 %v6983
        %v7306 = vunpack.c.h.b16 %v6983
        %v7307 = vunpack.c.l.b16 %v6984
        %v7308 = vunpack.c.h.b16 %v6984
        %v7309 = vunpack.c.l.b16 %v6985
        %v7310 = vunpack.c.l.b16 %v6986
        %v7311 = vunpack.c.h.b16 %v6986
        %v7312 = vunpack.c.l.b16 %v6987
        %v7313 = vunpack.c.h.b16 %v6987
        %v7314 = vunpack.c.l.b16 %v6988
        %v7315 = vunpack.c.h.b16 %v6988
        %v7316 = vunpack.c.l.b16 %v6989
        %v7317 = vunpack.c.h.b16 %v6989
        %v7318 = vunpack.c.l.b16 %v6990
        %v7319 = vunpack.c.l.b16 %v6991
        %v7320 = vunpack.c.h.b16 %v6991
        %v7321 = vunpack.c.l.b16 %v6992
        %v7322 = vunpack.c.h.b16 %v6992
        %v7323 = vunpack.c.l.b16 %v6993
        %v7324 = vunpack.c.h.b16 %v6993
        %v7325 = vunpack.c.l.b16 %v6994
        %v7326 = vunpack.c.h.b16 %v6994
        %v7327 = vunpack.c.l.b16 %v6995
        %v7328 = vunpack.c.l.b16 %v6996
        %v7329 = vunpack.c.h.b16 %v6996
        %v7330 = vunpack.c.l.b16 %v6997
        %v7331 = vunpack.c.h.b16 %v6997
        %v7332 = vunpack.c.l.b16 %v6998
        %v7333 = vunpack.c.h.b16 %v6998
        %v7334 = vunpack.c.l.b16 %v6999
        %v7335 = vunpack.c.h.b16 %v6999
        %v7336 = vunpack.c.l.b16 %v7000
        %v7337 = vunpack.c.l.b16 %v7001
        %v7338 = vunpack.c.h.b16 %v7001
        %v7339 = vunpack.c.l.b16 %v7002
        %v7340 = vunpack.c.h.b16 %v7002
        %v7341 = vunpack.c.l.b16 %v7003
        %v7342 = vunpack.c.h.b16 %v7003
        %v7343 = vunpack.c.l.b16 %v7004
        %v7344 = vunpack.c.h.b16 %v7004
        %v7345 = vunpack.c.l.b16 %v7005
        %v7346 = vunpack.c.l.b16 %v7006
        %v7347 = vunpack.c.h.b16 %v7006
        %v7348 = vunpack.c.l.b16 %v7007
        %v7349 = vunpack.c.h.b16 %v7007
        %v7350 = vunpack.c.l.b16 %v7008
        %v7351 = vunpack.c.h.b16 %v7008
        %v7352 = vunpack.c.l.b16 %v7009
        %v7353 = vunpack.c.h.b16 %v7009
        %v7354 = vunpack.c.l.b16 %v7010
        %v7355 = vunpack.c.l.b16 %v7011
        %v7356 = vunpack.c.h.b16 %v7011
        %v7357 = vunpack.c.l.b16 %v7012
        %v7358 = vunpack.c.h.b16 %v7012
        %v7359 = vunpack.c.l.b16 %v7013
        %v7360 = vunpack.c.h.b16 %v7013
        %v7361 = vunpack.c.l.b16 %v7014
        %v7362 = vunpack.c.h.b16 %v7014
        %v7363 = vunpack.c.l.b16 %v7015
        %v7364 = vunpack.c.l.b16 %v7016
        %v7365 = vunpack.c.h.b16 %v7016
        %v7366 = vunpack.c.l.b16 %v7017
        %v7367 = vunpack.c.h.b16 %v7017
        %v7368 = vunpack.c.l.b16 %v7018
        %v7369 = vunpack.c.h.b16 %v7018
        %v7370 = vunpack.c.l.b16 %v7019
        %v7371 = vunpack.c.h.b16 %v7019
        %v7372 = vunpack.c.l.b16 %v7020
        %v7373 = vunpack.c.l.b16 %v7021
        %v7374 = vunpack.c.h.b16 %v7021
        %v7375 = vunpack.c.l.b16 %v7022
        %v7376 = vunpack.c.h.b16 %v7022
        %v7377 = vunpack.c.l.b16 %v7023
        %v7378 = vunpack.c.h.b16 %v7023
        %v7379 = vunpack.c.l.b16 %v7024
        %v7380 = vunpack.c.h.b16 %v7024
        %v7381 = vunpack.c.l.b16 %v7025
        %v7382 = vunpack.c.l.b16 %v7026
        %v7383 = vunpack.c.h.b16 %v7026
        %v7384 = vunpack.c.l.b16 %v7027
        %v7385 = vunpack.c.h.b16 %v7027
        %v7386 = vunpack.c.l.b16 %v7028
        %v7387 = vunpack.c.h.b16 %v7028
        %v7388 = vunpack.c.l.b16 %v7029
        %v7389 = vunpack.c.h.b16 %v7029
        %v7390 = vunpack.c.l.b16 %v7030
        %v7391 = vunpack.c.l.b16 %v7031
        %v7392 = vunpack.c.h.b16 %v7031
        %v7393 = vunpack.c.l.b16 %v7032
        %v7394 = vunpack.c.h.b16 %v7032
        %v7395 = vunpack.c.l.b16 %v7033
        %v7396 = vunpack.c.h.b16 %v7033
        %v7397 = vunpack.c.l.b16 %v7034
        %v7398 = vunpack.c.h.b16 %v7034
        %v7399 = vunpack.c.l.b16 %v7035
        %v7400 = vunpack.c.l.b16 %v7036
        %v7401 = vunpack.c.h.b16 %v7036
        %v7402 = vunpack.c.l.b16 %v7037
        %v7403 = vunpack.c.h.b16 %v7037
        %v7404 = vunpack.c.l.b16 %v7038
        %v7405 = vunpack.c.h.b16 %v7038
        %v7406 = vunpack.c.l.b16 %v7039
        %v7407 = vunpack.c.h.b16 %v7039
        %v7408 = vunpack.c.l.b16 %v7040
        %v7409 = vpack.c.b16 %v7274, %v7265
        %v7410 = vpack.c.b16 %v7275, %v7266
        %v7411 = vpack.c.b16 %v7276, %v7267
        %v7412 = vpack.c.b16 %v7277, %v7268
        %v7413 = vpack.c.b16 %v7278, %v7269
        %v7414 = vpack.c.b16 %v7279, %v7270
        %v7415 = vpack.c.b16 %v7280, %v7271
        %v7416 = vpack.c.b16 %v7281, %v7272
        %v7417 = vpack.c.b16 %v7282, %v7273
        %v7418 = vpack.c.b16 %v7292, %v7283
        %v7419 = vpack.c.b16 %v7293, %v7284
        %v7420 = vpack.c.b16 %v7294, %v7285
        %v7421 = vpack.c.b16 %v7295, %v7286
        %v7422 = vpack.c.b16 %v7296, %v7287
        %v7423 = vpack.c.b16 %v7297, %v7288
        %v7424 = vpack.c.b16 %v7298, %v7289
        %v7425 = vpack.c.b16 %v7299, %v7290
        %v7426 = vpack.c.b16 %v7300, %v7291
        %v7427 = vpack.c.b16 %v7310, %v7301
        %v7428 = vpack.c.b16 %v7311, %v7302
        %v7429 = vpack.c.b16 %v7312, %v7303
        %v7430 = vpack.c.b16 %v7313, %v7304
        %v7431 = vpack.c.b16 %v7314, %v7305
        %v7432 = vpack.c.b16 %v7315, %v7306
        %v7433 = vpack.c.b16 %v7316, %v7307
        %v7434 = vpack.c.b16 %v7317, %v7308
        %v7435 = vpack.c.b16 %v7318, %v7309
        %v7436 = vpack.c.b16 %v7328, %v7319
        %v7437 = vpack.c.b16 %v7329, %v7320
        %v7438 = vpack.c.b16 %v7330, %v7321
        %v7439 = vpack.c.b16 %v7331, %v7322
        %v7440 = vpack.c.b16 %v7332, %v7323
        %v7441 = vpack.c.b16 %v7333, %v7324
        %v7442 = vpack.c.b16 %v7334, %v7325
        %v7443 = vpack.c.b16 %v7335, %v7326
        %v7444 = vpack.c.b16 %v7336, %v7327
        %v7445 = vpack.c.b16 %v7346, %v7337
        %v7446 = vpack.c.b16 %v7347, %v7338
        %v7447 = vpack.c.b16 %v7348, %v7339
        %v7448 = vpack.c.b16 %v7349, %v7340
        %v7449 = vpack.c.b16 %v7350, %v7341
        %v7450 = vpack.c.b16 %v7351, %v7342
        %v7451 = vpack.c.b16 %v7352, %v7343
        %v7452 = vpack.c.b16 %v7353, %v7344
        %v7453 = vpack.c.b16 %v7354, %v7345
        %v7454 = vpack.c.b16 %v7364, %v7355
        %v7455 = vpack.c.b16 %v7365, %v7356
        %v7456 = vpack.c.b16 %v7366, %v7357
        %v7457 = vpack.c.b16 %v7367, %v7358
        %v7458 = vpack.c.b16 %v7368, %v7359
        %v7459 = vpack.c.b16 %v7369, %v7360
        %v7460 = vpack.c.b16 %v7370, %v7361
        %v7461 = vpack.c.b16 %v7371, %v7362
        %v7462 = vpack.c.b16 %v7372, %v7363
        %v7463 = vpack.c.b16 %v7382, %v7373
        %v7464 = vpack.c.b16 %v7383, %v7374
        %v7465 = vpack.c.b16 %v7384, %v7375
        %v7466 = vpack.c.b16 %v7385, %v7376
        %v7467 = vpack.c.b16 %v7386, %v7377
        %v7468 = vpack.c.b16 %v7387, %v7378
        %v7469 = vpack.c.b16 %v7388, %v7379
        %v7470 = vpack.c.b16 %v7389, %v7380
        %v7471 = vpack.c.b16 %v7390, %v7381
        %v7472 = vpack.c.b16 %v7400, %v7391
        %v7473 = vpack.c.b16 %v7401, %v7392
        %v7474 = vpack.c.b16 %v7402, %v7393
        %v7475 = vpack.c.b16 %v7403, %v7394
        %v7476 = vpack.c.b16 %v7404, %v7395
        %v7477 = vpack.c.b16 %v7405, %v7396
        %v7478 = vpack.c.b16 %v7406, %v7397
        %v7479 = vpack.c.b16 %v7407, %v7398
        %v7480 = vpack.c.b16 %v7408, %v7399
        %v7697 = vunpack.c.l.b16 %v7041
        %v7698 = vunpack.c.l.b16 %v7042
        %v7699 = vunpack.c.l.b16 %v7043
        %v7700 = vunpack.c.l.b16 %v7044
        %v7701 = vunpack.c.l.b16 %v7045
        %v7702 = vunpack.c.l.b16 %v7046
        %v7703 = vunpack.c.l.b16 %v7047
        %v7704 = vunpack.c.l.b16 %v7048
        %v7705 = vunpack.c.l.b16 %v7049
        %v7706 = vunpack.c.l.b16 %v7050
        %v7707 = vunpack.c.l.b16 %v7051
        %v7708 = vunpack.c.l.b16 %v7052
        %v7709 = vunpack.c.l.b16 %v7053
        %v7710 = vunpack.c.l.b16 %v7054
        %v7711 = vunpack.c.l.b16 %v7055
        %v7712 = vunpack.c.l.b16 %v7056
        %v7713 = vunpack.c.l.b16 %v7057
        %v7714 = vunpack.c.l.b16 %v7058
        %v7715 = vunpack.c.l.b16 %v7059
        %v7716 = vunpack.c.l.b16 %v7060
        %v7717 = vunpack.c.l.b16 %v7061
        %v7718 = vunpack.c.l.b16 %v7062
        %v7719 = vunpack.c.l.b16 %v7063
        %v7720 = vunpack.c.l.b16 %v7064
        %v7721 = vunpack.c.l.b16 %v7065
        %v7722 = vunpack.c.l.b16 %v7066
        %v7723 = vunpack.c.l.b16 %v7067
        %v7724 = vunpack.c.l.b16 %v7068
        %v7725 = vunpack.c.l.b16 %v7069
        %v7726 = vunpack.c.l.b16 %v7070
        %v7727 = vunpack.c.l.b16 %v7071
        %v7728 = vunpack.c.l.b16 %v7072
        %v7729 = vunpack.c.l.b16 %v7073
        %v7730 = vunpack.c.l.b16 %v7074
        %v7731 = vunpack.c.l.b16 %v7075
        %v7732 = vunpack.c.l.b16 %v7076
        %v7733 = vunpack.c.l.b16 %v7077
        %v7734 = vunpack.c.l.b16 %v7078
        %v7735 = vunpack.c.l.b16 %v7079
        %v7736 = vunpack.c.l.b16 %v7080
        %v7737 = vunpack.c.l.b16 %v7081
        %v7738 = vunpack.c.l.b16 %v7082
        %v7739 = vunpack.c.l.b16 %v7083
        %v7740 = vunpack.c.l.b16 %v7084
        %v7741 = vunpack.c.l.b16 %v7085
        %v7742 = vunpack.c.l.b16 %v7086
        %v7743 = vunpack.c.l.b16 %v7087
        %v7744 = vunpack.c.l.b16 %v7088
        %v7745 = vunpack.c.l.b16 %v7089
        %v7746 = vunpack.c.l.b16 %v7090
        %v7747 = vunpack.c.l.b16 %v7091
        %v7748 = vunpack.c.l.b16 %v7092
        %v7749 = vunpack.c.l.b16 %v7093
        %v7750 = vunpack.c.l.b16 %v7094
        %v7751 = vunpack.c.l.b16 %v7095
        %v7752 = vunpack.c.l.b16 %v7096
        %v7753 = vunpack.c.l.b16 %v7097
        %v7754 = vunpack.c.l.b16 %v7098
        %v7755 = vunpack.c.l.b16 %v7099
        %v7756 = vunpack.c.l.b16 %v7100
        %v7757 = vunpack.c.l.b16 %v7101
        %v7758 = vunpack.c.l.b16 %v7102
        %v7759 = vunpack.c.l.b16 %v7103
        %v7760 = vunpack.c.l.b16 %v7104
        %v7761 = vunpack.c.l.b16 %v7105
        %v7762 = vunpack.c.l.b16 %v7106
        %v7763 = vunpack.c.l.b16 %v7107
        %v7764 = vunpack.c.l.b16 %v7108
        %v7765 = vunpack.c.l.b16 %v7109
        %v7766 = vunpack.c.l.b16 %v7110
        %v7767 = vunpack.c.l.b16 %v7111
        %v7768 = vunpack.c.l.b16 %v7112
        %v7769 = vunpack.c.l.b16 %v7113
        %v7770 = vunpack.c.l.b16 %v7114
        %v7771 = vunpack.c.l.b16 %v7115
        %v7772 = vunpack.c.l.b16 %v7116
        %v7773 = vunpack.c.l.b16 %v7117
        %v7774 = vunpack.c.l.b16 %v7118
        %v7775 = vunpack.c.l.b16 %v7119
        %v7776 = vunpack.c.l.b16 %v7120
        %v7777 = vunpack.c.l.b16 %v7121
        %v7778 = vunpack.c.l.b16 %v7122
        %v7779 = vunpack.c.l.b16 %v7123
        %v7780 = vunpack.c.l.b16 %v7124
        %v7781 = vunpack.c.l.b16 %v7125
        %v7782 = vunpack.c.l.b16 %v7126
        %v7783 = vunpack.c.l.b16 %v7127
        %v7784 = vunpack.c.l.b16 %v7128
        %v7785 = vunpack.c.l.b16 %v7129
        %v7786 = vunpack.c.l.b16 %v7130
        %v7787 = vunpack.c.l.b16 %v7131
        %v7788 = vunpack.c.l.b16 %v7132
        %v7789 = vunpack.c.l.b16 %v7133
        %v7790 = vunpack.c.l.b16 %v7134
        %v7791 = vunpack.c.l.b16 %v7135
        %v7792 = vunpack.c.l.b16 %v7136
        %v7793 = vunpack.c.l.b16 %v7137
        %v7794 = vunpack.c.l.b16 %v7138
        %v7795 = vunpack.c.l.b16 %v7139
        %v7796 = vunpack.c.l.b16 %v7140
        %v7797 = vunpack.c.l.b16 %v7141
        %v7798 = vunpack.c.l.b16 %v7142
        %v7799 = vunpack.c.l.b16 %v7143
        %v7800 = vunpack.c.l.b16 %v7144
        %v7801 = vunpack.c.l.b16 %v7145
        %v7802 = vunpack.c.l.b16 %v7146
        %v7803 = vunpack.c.l.b16 %v7147
        %v7804 = vunpack.c.l.b16 %v7148
        %v7805 = vunpack.c.l.b16 %v7149
        %v7806 = vunpack.c.l.b16 %v7150
        %v7807 = vunpack.c.l.b16 %v7151
        %v7808 = vunpack.c.l.b16 %v7152
        %v7809 = vunpack.c.l.b16 %v7153
        %v7810 = vunpack.c.l.b16 %v7154
        %v7811 = vunpack.c.l.b16 %v7155
        %v7812 = vunpack.c.l.b16 %v7156
        %v7813 = vunpack.c.l.b16 %v7157
        %v7814 = vunpack.c.l.b16 %v7158
        %v7815 = vunpack.c.l.b16 %v7159
        %v7816 = vunpack.c.l.b16 %v7160
        %v7817 = vunpack.c.l.b16 %v7161
        %v7818 = vunpack.c.l.b16 %v7162
        %v7819 = vunpack.c.l.b16 %v7163
        %v7820 = vunpack.c.l.b16 %v7164
        %v7821 = vunpack.c.l.b16 %v7165
        %v7822 = vunpack.c.l.b16 %v7166
        %v7823 = vunpack.c.l.b16 %v7167
        %v7824 = vunpack.c.l.b16 %v7168
        %v7825 = vunpack.c.l.b16 %v7169
        %v7826 = vunpack.c.l.b16 %v7170
        %v7827 = vunpack.c.l.b16 %v7171
        %v7828 = vunpack.c.l.b16 %v7172
        %v7829 = vunpack.c.l.b16 %v7173
        %v7830 = vunpack.c.l.b16 %v7174
        %v7831 = vunpack.c.l.b16 %v7175
        %v7832 = vunpack.c.l.b16 %v7176
        %v7833 = vunpack.c.l.b16 %v7177
        %v7834 = vunpack.c.l.b16 %v7178
        %v7835 = vunpack.c.l.b16 %v7179
        %v7836 = vunpack.c.l.b16 %v7180
        %v7837 = vunpack.c.l.b16 %v7181
        %v7838 = vunpack.c.l.b16 %v7182
        %v7839 = vunpack.c.l.b16 %v7183
        %v7840 = vunpack.c.l.b16 %v7184
        %v7841 = vpack.c.b16 %v7698, %v7697
        %v7842 = vpack.c.b16 %v7700, %v7699
        %v7843 = vpack.c.b16 %v7702, %v7701
        %v7844 = vpack.c.b16 %v7704, %v7703
        %v7845 = vpack.c.b16 %v7706, %v7705
        %v7846 = vpack.c.b16 %v7708, %v7707
        %v7847 = vpack.c.b16 %v7710, %v7709
        %v7848 = vpack.c.b16 %v7712, %v7711
        %v7849 = vpack.c.b16 %v7714, %v7713
        %v7850 = vpack.c.b16 %v7716, %v7715
        %v7851 = vpack.c.b16 %v7718, %v7717
        %v7852 = vpack.c.b16 %v7720, %v7719
        %v7853 = vpack.c.b16 %v7722, %v7721
        %v7854 = vpack.c.b16 %v7724, %v7723
        %v7855 = vpack.c.b16 %v7726, %v7725
        %v7856 = vpack.c.b16 %v7728, %v7727
        %v7857 = vpack.c.b16 %v7730, %v7729
        %v7858 = vpack.c.b16 %v7732, %v7731
        %v7859 = vpack.c.b16 %v7734, %v7733
        %v7860 = vpack.c.b16 %v7736, %v7735
        %v7861 = vpack.c.b16 %v7738, %v7737
        %v7862 = vpack.c.b16 %v7740, %v7739
        %v7863 = vpack.c.b16 %v7742, %v7741
        %v7864 = vpack.c.b16 %v7744, %v7743
        %v7865 = vpack.c.b16 %v7746, %v7745
        %v7866 = vpack.c.b16 %v7748, %v7747
        %v7867 = vpack.c.b16 %v7750, %v7749
        %v7868 = vpack.c.b16 %v7752, %v7751
        %v7869 = vpack.c.b16 %v7754, %v7753
        %v7870 = vpack.c.b16 %v7756, %v7755
        %v7871 = vpack.c.b16 %v7758, %v7757
        %v7872 = vpack.c.b16 %v7760, %v7759
        %v7873 = vpack.c.b16 %v7762, %v7761
        %v7874 = vpack.c.b16 %v7764, %v7763
        %v7875 = vpack.c.b16 %v7766, %v7765
        %v7876 = vpack.c.b16 %v7768, %v7767
        %v7877 = vpack.c.b16 %v7770, %v7769
        %v7878 = vpack.c.b16 %v7772, %v7771
        %v7879 = vpack.c.b16 %v7774, %v7773
        %v7880 = vpack.c.b16 %v7776, %v7775
        %v7881 = vpack.c.b16 %v7778, %v7777
        %v7882 = vpack.c.b16 %v7780, %v7779
        %v7883 = vpack.c.b16 %v7782, %v7781
        %v7884 = vpack.c.b16 %v7784, %v7783
        %v7885 = vpack.c.b16 %v7786, %v7785
        %v7886 = vpack.c.b16 %v7788, %v7787
        %v7887 = vpack.c.b16 %v7790, %v7789
        %v7888 = vpack.c.b16 %v7792, %v7791
        %v7889 = vpack.c.b16 %v7794, %v7793
        %v7890 = vpack.c.b16 %v7796, %v7795
        %v7891 = vpack.c.b16 %v7798, %v7797
        %v7892 = vpack.c.b16 %v7800, %v7799
        %v7893 = vpack.c.b16 %v7802, %v7801
        %v7894 = vpack.c.b16 %v7804, %v7803
        %v7895 = vpack.c.b16 %v7806, %v7805
        %v7896 = vpack.c.b16 %v7808, %v7807
        %v7897 = vpack.c.b16 %v7810, %v7809
        %v7898 = vpack.c.b16 %v7812, %v7811
        %v7899 = vpack.c.b16 %v7814, %v7813
        %v7900 = vpack.c.b16 %v7816, %v7815
        %v7901 = vpack.c.b16 %v7818, %v7817
        %v7902 = vpack.c.b16 %v7820, %v7819
        %v7903 = vpack.c.b16 %v7822, %v7821
        %v7904 = vpack.c.b16 %v7824, %v7823
        %v7905 = vpack.c.b16 %v7826, %v7825
        %v7906 = vpack.c.b16 %v7828, %v7827
        %v7907 = vpack.c.b16 %v7830, %v7829
        %v7908 = vpack.c.b16 %v7832, %v7831
        %v7909 = vpack.c.b16 %v7834, %v7833
        %v7910 = vpack.c.b16 %v7836, %v7835
        %v7911 = vpack.c.b16 %v7838, %v7837
        %v7912 = vpack.c.b16 %v7840, %v7839
        %7985 = vmatpush.bf16.msra.mxu0 %v7848
        %7986 = vmatpush.bf16.msra.mxu0 %v7847
        %7987 = vmatpush.bf16.msra.mxu0 %v7846
        %7988 = vmatpush.bf16.msra.mxu0 %v7845
        %7989 = vmatpush.bf16.msra.mxu0 %v7844
        %7990 = vmatpush.bf16.msra.mxu0 %v7843
        %7991 = vmatpush.bf16.msra.mxu0 %v7842
        %7992 = vmatpush.bf16.msra.mxu0 %v7841
        %7993 = vmatmul.bf16.gmra.mxu0 %v7409
        %v7994 = vpop.f32.mrf.mxu0
        %v7995 = vadd.f32 0.0, %v7994
        %v7996 = vpop.f32.mrf.mxu0
        %v7997 = vadd.f32 0.0, %v7996
        %7998 = vmatmul.bf16.gmra.mxu0 %v7418
        %v7999 = vpop.f32.mrf.mxu0
        %v8000 = vadd.f32 0.0, %v7999
        %v8001 = vpop.f32.mrf.mxu0
        %v8002 = vadd.f32 0.0, %v8001
        %8003 = vmatmul.bf16.gmra.mxu0 %v7427
        %v8004 = vpop.f32.mrf.mxu0
        %v8005 = vadd.f32 0.0, %v8004
        %v8006 = vpop.f32.mrf.mxu0
        %v8007 = vadd.f32 0.0, %v8006
        %8008 = vmatmul.bf16.gmra.mxu0 %v7436
        %v8009 = vpop.f32.mrf.mxu0
        %v8010 = vadd.f32 0.0, %v8009
        %v8011 = vpop.f32.mrf.mxu0
        %v8012 = vadd.f32 0.0, %v8011
        %8013 = vmatmul.bf16.gmra.mxu0 %v7445
        %v8014 = vpop.f32.mrf.mxu0
        %v8015 = vadd.f32 0.0, %v8014
        %v8016 = vpop.f32.mrf.mxu0
        %v8017 = vadd.f32 0.0, %v8016
        %8018 = vmatmul.bf16.gmra.mxu0 %v7454
        %v8019 = vpop.f32.mrf.mxu0
        %v8020 = vadd.f32 0.0, %v8019
        %v8021 = vpop.f32.mrf.mxu0
        %v8022 = vadd.f32 0.0, %v8021
        %8023 = vmatmul.bf16.gmra.mxu0 %v7463
        %v8024 = vpop.f32.mrf.mxu0
        %v8025 = vadd.f32 0.0, %v8024
        %v8026 = vpop.f32.mrf.mxu0
        %v8027 = vadd.f32 0.0, %v8026
        %8028 = vmatmul.bf16.gmra.mxu0 %v7472
        %v8029 = vpop.f32.mrf.mxu0
        %v8030 = vadd.f32 0.0, %v8029
        %v8031 = vpop.f32.mrf.mxu0
        %v8032 = vadd.f32 0.0, %v8031
        %8033 = vdwg.mxu0
        %8034 = vmatpush.bf16.msra.mxu0 %v7856
        %8035 = vmatpush.bf16.msra.mxu0 %v7855
        %8036 = vmatpush.bf16.msra.mxu0 %v7854
        %8037 = vmatpush.bf16.msra.mxu0 %v7853
        %8038 = vmatpush.bf16.msra.mxu0 %v7852
        %8039 = vmatpush.bf16.msra.mxu0 %v7851
        %8040 = vmatpush.bf16.msra.mxu0 %v7850
        %8041 = vmatpush.bf16.msra.mxu0 %v7849
        %8042 = vmatmul.bf16.gmra.mxu0 %v7410
        %v8043 = vpop.f32.mrf.mxu0
        %v8044 = vadd.f32 %v7995, %v8043
        %v8045 = vpop.f32.mrf.mxu0
        %v8046 = vadd.f32 %v7997, %v8045
        %8047 = vmatmul.bf16.gmra.mxu0 %v7419
        %v8048 = vpop.f32.mrf.mxu0
        %v8049 = vadd.f32 %v8000, %v8048
        %v8050 = vpop.f32.mrf.mxu0
        %v8051 = vadd.f32 %v8002, %v8050
        %8052 = vmatmul.bf16.gmra.mxu0 %v7428
        %v8053 = vpop.f32.mrf.mxu0
        %v8054 = vadd.f32 %v8005, %v8053
        %v8055 = vpop.f32.mrf.mxu0
        %v8056 = vadd.f32 %v8007, %v8055
        %8057 = vmatmul.bf16.gmra.mxu0 %v7437
        %v8058 = vpop.f32.mrf.mxu0
        %v8059 = vadd.f32 %v8010, %v8058
        %v8060 = vpop.f32.mrf.mxu0
        %v8061 = vadd.f32 %v8012, %v8060
        %8062 = vmatmul.bf16.gmra.mxu0 %v7446
        %v8063 = vpop.f32.mrf.mxu0
        %v8064 = vadd.f32 %v8015, %v8063
        %v8065 = vpop.f32.mrf.mxu0
        %v8066 = vadd.f32 %v8017, %v8065
        %8067 = vmatmul.bf16.gmra.mxu0 %v7455
        %v8068 = vpop.f32.mrf.mxu0
        %v8069 = vadd.f32 %v8020, %v8068
        %v8070 = vpop.f32.mrf.mxu0
        %v8071 = vadd.f32 %v8022, %v8070
        %8072 = vmatmul.bf16.gmra.mxu0 %v7464
        %v8073 = vpop.f32.mrf.mxu0
        %v8074 = vadd.f32 %v8025, %v8073
        %v8075 = vpop.f32.mrf.mxu0
        %v8076 = vadd.f32 %v8027, %v8075
        %8077 = vmatmul.bf16.gmra.mxu0 %v7473
        %v8078 = vpop.f32.mrf.mxu0
        %v8079 = vadd.f32 %v8030, %v8078
        %v8080 = vpop.f32.mrf.mxu0
        %v8081 = vadd.f32 %v8032, %v8080
        %8082 = vdwg.mxu0
        %8083 = vmatpush.bf16.msra.mxu0 %v7864
        %8084 = vmatpush.bf16.msra.mxu0 %v7863
        %8085 = vmatpush.bf16.msra.mxu0 %v7862
        %8086 = vmatpush.bf16.msra.mxu0 %v7861
        %8087 = vmatpush.bf16.msra.mxu0 %v7860
        %8088 = vmatpush.bf16.msra.mxu0 %v7859
        %8089 = vmatpush.bf16.msra.mxu0 %v7858
        %8090 = vmatpush.bf16.msra.mxu0 %v7857
        %8091 = vmatmul.bf16.gmra.mxu0 %v7411
        %v8092 = vpop.f32.mrf.mxu0
        %v8093 = vadd.f32 %v8044, %v8092
        %v8094 = vpop.f32.mrf.mxu0
        %v8095 = vadd.f32 %v8046, %v8094
        %8096 = vmatmul.bf16.gmra.mxu0 %v7420
        %v8097 = vpop.f32.mrf.mxu0
        %v8098 = vadd.f32 %v8049, %v8097
        %v8099 = vpop.f32.mrf.mxu0
        %v8100 = vadd.f32 %v8051, %v8099
        %8101 = vmatmul.bf16.gmra.mxu0 %v7429
        %v8102 = vpop.f32.mrf.mxu0
        %v8103 = vadd.f32 %v8054, %v8102
        %v8104 = vpop.f32.mrf.mxu0
        %v8105 = vadd.f32 %v8056, %v8104
        %8106 = vmatmul.bf16.gmra.mxu0 %v7438
        %v8107 = vpop.f32.mrf.mxu0
        %v8108 = vadd.f32 %v8059, %v8107
        %v8109 = vpop.f32.mrf.mxu0
        %v8110 = vadd.f32 %v8061, %v8109
        %8111 = vmatmul.bf16.gmra.mxu0 %v7447
        %v8112 = vpop.f32.mrf.mxu0
        %v8113 = vadd.f32 %v8064, %v8112
        %v8114 = vpop.f32.mrf.mxu0
        %v8115 = vadd.f32 %v8066, %v8114
        %8116 = vmatmul.bf16.gmra.mxu0 %v7456
        %v8117 = vpop.f32.mrf.mxu0
        %v8118 = vadd.f32 %v8069, %v8117
        %v8119 = vpop.f32.mrf.mxu0
        %v8120 = vadd.f32 %v8071, %v8119
        %8121 = vmatmul.bf16.gmra.mxu0 %v7465
        %v8122 = vpop.f32.mrf.mxu0
        %v8123 = vadd.f32 %v8074, %v8122
        %v8124 = vpop.f32.mrf.mxu0
        %v8125 = vadd.f32 %v8076, %v8124
        %8126 = vmatmul.bf16.gmra.mxu0 %v7474
        %v8127 = vpop.f32.mrf.mxu0
        %v8128 = vadd.f32 %v8079, %v8127
        %v8129 = vpop.f32.mrf.mxu0
        %v8130 = vadd.f32 %v8081, %v8129
        %8131 = vdwg.mxu0
        %8132 = vmatpush.bf16.msra.mxu0 %v7872
        %8133 = vmatpush.bf16.msra.mxu0 %v7871
        %8134 = vmatpush.bf16.msra.mxu0 %v7870
        %8135 = vmatpush.bf16.msra.mxu0 %v7869
        %8136 = vmatpush.bf16.msra.mxu0 %v7868
        %8137 = vmatpush.bf16.msra.mxu0 %v7867
        %8138 = vmatpush.bf16.msra.mxu0 %v7866
        %8139 = vmatpush.bf16.msra.mxu0 %v7865
        %8140 = vmatmul.bf16.gmra.mxu0 %v7412
        %v8141 = vpop.f32.mrf.mxu0
        %v8142 = vadd.f32 %v8093, %v8141
        %v8143 = vpop.f32.mrf.mxu0
        %v8144 = vadd.f32 %v8095, %v8143
        %8145 = vmatmul.bf16.gmra.mxu0 %v7421
        %v8146 = vpop.f32.mrf.mxu0
        %v8147 = vadd.f32 %v8098, %v8146
        %v8148 = vpop.f32.mrf.mxu0
        %v8149 = vadd.f32 %v8100, %v8148
        %8150 = vmatmul.bf16.gmra.mxu0 %v7430
        %v8151 = vpop.f32.mrf.mxu0
        %v8152 = vadd.f32 %v8103, %v8151
        %v8153 = vpop.f32.mrf.mxu0
        %v8154 = vadd.f32 %v8105, %v8153
        %8155 = vmatmul.bf16.gmra.mxu0 %v7439
        %v8156 = vpop.f32.mrf.mxu0
        %v8157 = vadd.f32 %v8108, %v8156
        %v8158 = vpop.f32.mrf.mxu0
        %v8159 = vadd.f32 %v8110, %v8158
        %8160 = vmatmul.bf16.gmra.mxu0 %v7448
        %v8161 = vpop.f32.mrf.mxu0
        %v8162 = vadd.f32 %v8113, %v8161
        %v8163 = vpop.f32.mrf.mxu0
        %v8164 = vadd.f32 %v8115, %v8163
        %8165 = vmatmul.bf16.gmra.mxu0 %v7457
        %v8166 = vpop.f32.mrf.mxu0
        %v8167 = vadd.f32 %v8118, %v8166
        %v8168 = vpop.f32.mrf.mxu0
        %v8169 = vadd.f32 %v8120, %v8168
        %8170 = vmatmul.bf16.gmra.mxu0 %v7466
        %v8171 = vpop.f32.mrf.mxu0
        %v8172 = vadd.f32 %v8123, %v8171
        %v8173 = vpop.f32.mrf.mxu0
        %v8174 = vadd.f32 %v8125, %v8173
        %8175 = vmatmul.bf16.gmra.mxu0 %v7475
        %v8176 = vpop.f32.mrf.mxu0
        %v8177 = vadd.f32 %v8128, %v8176
        %v8178 = vpop.f32.mrf.mxu0
        %v8179 = vadd.f32 %v8130, %v8178
        %8180 = vdwg.mxu0
        %8181 = vmatpush.bf16.msra.mxu0 %v7880
        %8182 = vmatpush.bf16.msra.mxu0 %v7879
        %8183 = vmatpush.bf16.msra.mxu0 %v7878
        %8184 = vmatpush.bf16.msra.mxu0 %v7877
        %8185 = vmatpush.bf16.msra.mxu0 %v7876
        %8186 = vmatpush.bf16.msra.mxu0 %v7875
        %8187 = vmatpush.bf16.msra.mxu0 %v7874
        %8188 = vmatpush.bf16.msra.mxu0 %v7873
        %8189 = vmatmul.bf16.gmra.mxu0 %v7413
        %v8190 = vpop.f32.mrf.mxu0
        %v8191 = vadd.f32 %v8142, %v8190
        %v8192 = vpop.f32.mrf.mxu0
        %v8193 = vadd.f32 %v8144, %v8192
        %8194 = vmatmul.bf16.gmra.mxu0 %v7422
        %v8195 = vpop.f32.mrf.mxu0
        %v8196 = vadd.f32 %v8147, %v8195
        %v8197 = vpop.f32.mrf.mxu0
        %v8198 = vadd.f32 %v8149, %v8197
        %8199 = vmatmul.bf16.gmra.mxu0 %v7431
        %v8200 = vpop.f32.mrf.mxu0
        %v8201 = vadd.f32 %v8152, %v8200
        %v8202 = vpop.f32.mrf.mxu0
        %v8203 = vadd.f32 %v8154, %v8202
        %8204 = vmatmul.bf16.gmra.mxu0 %v7440
        %v8205 = vpop.f32.mrf.mxu0
        %v8206 = vadd.f32 %v8157, %v8205
        %v8207 = vpop.f32.mrf.mxu0
        %v8208 = vadd.f32 %v8159, %v8207
        %8209 = vmatmul.bf16.gmra.mxu0 %v7449
        %v8210 = vpop.f32.mrf.mxu0
        %v8211 = vadd.f32 %v8162, %v8210
        %v8212 = vpop.f32.mrf.mxu0
        %v8213 = vadd.f32 %v8164, %v8212
        %8214 = vmatmul.bf16.gmra.mxu0 %v7458
        %v8215 = vpop.f32.mrf.mxu0
        %v8216 = vadd.f32 %v8167, %v8215
        %v8217 = vpop.f32.mrf.mxu0
        %v8218 = vadd.f32 %v8169, %v8217
        %8219 = vmatmul.bf16.gmra.mxu0 %v7467
        %v8220 = vpop.f32.mrf.mxu0
        %v8221 = vadd.f32 %v8172, %v8220
        %v8222 = vpop.f32.mrf.mxu0
        %v8223 = vadd.f32 %v8174, %v8222
        %8224 = vmatmul.bf16.gmra.mxu0 %v7476
        %v8225 = vpop.f32.mrf.mxu0
        %v8226 = vadd.f32 %v8177, %v8225
        %v8227 = vpop.f32.mrf.mxu0
        %v8228 = vadd.f32 %v8179, %v8227
        %8229 = vdwg.mxu0
        %8230 = vmatpush.bf16.msra.mxu0 %v7888
        %8231 = vmatpush.bf16.msra.mxu0 %v7887
        %8232 = vmatpush.bf16.msra.mxu0 %v7886
        %8233 = vmatpush.bf16.msra.mxu0 %v7885
        %8234 = vmatpush.bf16.msra.mxu0 %v7884
        %8235 = vmatpush.bf16.msra.mxu0 %v7883
        %8236 = vmatpush.bf16.msra.mxu0 %v7882
        %8237 = vmatpush.bf16.msra.mxu0 %v7881
        %8238 = vmatmul.bf16.gmra.mxu0 %v7414
        %v8239 = vpop.f32.mrf.mxu0
        %v8240 = vadd.f32 %v8191, %v8239
        %v8241 = vpop.f32.mrf.mxu0
        %v8242 = vadd.f32 %v8193, %v8241
        %8243 = vmatmul.bf16.gmra.mxu0 %v7423
        %v8244 = vpop.f32.mrf.mxu0
        %v8245 = vadd.f32 %v8196, %v8244
        %v8246 = vpop.f32.mrf.mxu0
        %v8247 = vadd.f32 %v8198, %v8246
        %8248 = vmatmul.bf16.gmra.mxu0 %v7432
        %v8249 = vpop.f32.mrf.mxu0
        %v8250 = vadd.f32 %v8201, %v8249
        %v8251 = vpop.f32.mrf.mxu0
        %v8252 = vadd.f32 %v8203, %v8251
        %8253 = vmatmul.bf16.gmra.mxu0 %v7441
        %v8254 = vpop.f32.mrf.mxu0
        %v8255 = vadd.f32 %v8206, %v8254
        %v8256 = vpop.f32.mrf.mxu0
        %v8257 = vadd.f32 %v8208, %v8256
        %8258 = vmatmul.bf16.gmra.mxu0 %v7450
        %v8259 = vpop.f32.mrf.mxu0
        %v8260 = vadd.f32 %v8211, %v8259
        %v8261 = vpop.f32.mrf.mxu0
        %v8262 = vadd.f32 %v8213, %v8261
        %8263 = vmatmul.bf16.gmra.mxu0 %v7459
        %v8264 = vpop.f32.mrf.mxu0
        %v8265 = vadd.f32 %v8216, %v8264
        %v8266 = vpop.f32.mrf.mxu0
        %v8267 = vadd.f32 %v8218, %v8266
        %8268 = vmatmul.bf16.gmra.mxu0 %v7468
        %v8269 = vpop.f32.mrf.mxu0
        %v8270 = vadd.f32 %v8221, %v8269
        %v8271 = vpop.f32.mrf.mxu0
        %v8272 = vadd.f32 %v8223, %v8271
        %8273 = vmatmul.bf16.gmra.mxu0 %v7477
        %v8274 = vpop.f32.mrf.mxu0
        %v8275 = vadd.f32 %v8226, %v8274
        %v8276 = vpop.f32.mrf.mxu0
        %v8277 = vadd.f32 %v8228, %v8276
        %8278 = vdwg.mxu0
        %8279 = vmatpush.bf16.msra.mxu0 %v7896
        %8280 = vmatpush.bf16.msra.mxu0 %v7895
        %8281 = vmatpush.bf16.msra.mxu0 %v7894
        %8282 = vmatpush.bf16.msra.mxu0 %v7893
        %8283 = vmatpush.bf16.msra.mxu0 %v7892
        %8284 = vmatpush.bf16.msra.mxu0 %v7891
        %8285 = vmatpush.bf16.msra.mxu0 %v7890
        %8286 = vmatpush.bf16.msra.mxu0 %v7889
        %8287 = vmatmul.bf16.gmra.mxu0 %v7415
        %v8288 = vpop.f32.mrf.mxu0
        %v8289 = vadd.f32 %v8240, %v8288
        %v8290 = vpop.f32.mrf.mxu0
        %v8291 = vadd.f32 %v8242, %v8290
        %8292 = vmatmul.bf16.gmra.mxu0 %v7424
        %v8293 = vpop.f32.mrf.mxu0
        %v8294 = vadd.f32 %v8245, %v8293
        %v8295 = vpop.f32.mrf.mxu0
        %v8296 = vadd.f32 %v8247, %v8295
        %8297 = vmatmul.bf16.gmra.mxu0 %v7433
        %v8298 = vpop.f32.mrf.mxu0
        %v8299 = vadd.f32 %v8250, %v8298
        %v8300 = vpop.f32.mrf.mxu0
        %v8301 = vadd.f32 %v8252, %v8300
        %8302 = vmatmul.bf16.gmra.mxu0 %v7442
        %v8303 = vpop.f32.mrf.mxu0
        %v8304 = vadd.f32 %v8255, %v8303
        %v8305 = vpop.f32.mrf.mxu0
        %v8306 = vadd.f32 %v8257, %v8305
        %8307 = vmatmul.bf16.gmra.mxu0 %v7451
        %v8308 = vpop.f32.mrf.mxu0
        %v8309 = vadd.f32 %v8260, %v8308
        %v8310 = vpop.f32.mrf.mxu0
        %v8311 = vadd.f32 %v8262, %v8310
        %8312 = vmatmul.bf16.gmra.mxu0 %v7460
        %v8313 = vpop.f32.mrf.mxu0
        %v8314 = vadd.f32 %v8265, %v8313
        %v8315 = vpop.f32.mrf.mxu0
        %v8316 = vadd.f32 %v8267, %v8315
        %8317 = vmatmul.bf16.gmra.mxu0 %v7469
        %v8318 = vpop.f32.mrf.mxu0
        %v8319 = vadd.f32 %v8270, %v8318
        %v8320 = vpop.f32.mrf.mxu0
        %v8321 = vadd.f32 %v8272, %v8320
        %8322 = vmatmul.bf16.gmra.mxu0 %v7478
        %v8323 = vpop.f32.mrf.mxu0
        %v8324 = vadd.f32 %v8275, %v8323
        %v8325 = vpop.f32.mrf.mxu0
        %v8326 = vadd.f32 %v8277, %v8325
        %8327 = vdwg.mxu0
        %8328 = vmatpush.bf16.msra.mxu0 %v7904
        %8329 = vmatpush.bf16.msra.mxu0 %v7903
        %8330 = vmatpush.bf16.msra.mxu0 %v7902
        %8331 = vmatpush.bf16.msra.mxu0 %v7901
        %8332 = vmatpush.bf16.msra.mxu0 %v7900
        %8333 = vmatpush.bf16.msra.mxu0 %v7899
        %8334 = vmatpush.bf16.msra.mxu0 %v7898
        %8335 = vmatpush.bf16.msra.mxu0 %v7897
        %8336 = vmatmul.bf16.gmra.mxu0 %v7416
        %v8337 = vpop.f32.mrf.mxu0
        %v8338 = vadd.f32 %v8289, %v8337
        %v8339 = vpop.f32.mrf.mxu0
        %v8340 = vadd.f32 %v8291, %v8339
        %8341 = vmatmul.bf16.gmra.mxu0 %v7425
        %v8342 = vpop.f32.mrf.mxu0
        %v8343 = vadd.f32 %v8294, %v8342
        %v8344 = vpop.f32.mrf.mxu0
        %v8345 = vadd.f32 %v8296, %v8344
        %8346 = vmatmul.bf16.gmra.mxu0 %v7434
        %v8347 = vpop.f32.mrf.mxu0
        %v8348 = vadd.f32 %v8299, %v8347
        %v8349 = vpop.f32.mrf.mxu0
        %v8350 = vadd.f32 %v8301, %v8349
        %8351 = vmatmul.bf16.gmra.mxu0 %v7443
        %v8352 = vpop.f32.mrf.mxu0
        %v8353 = vadd.f32 %v8304, %v8352
        %v8354 = vpop.f32.mrf.mxu0
        %v8355 = vadd.f32 %v8306, %v8354
        %8356 = vmatmul.bf16.gmra.mxu0 %v7452
        %v8357 = vpop.f32.mrf.mxu0
        %v8358 = vadd.f32 %v8309, %v8357
        %v8359 = vpop.f32.mrf.mxu0
        %v8360 = vadd.f32 %v8311, %v8359
        %8361 = vmatmul.bf16.gmra.mxu0 %v7461
        %v8362 = vpop.f32.mrf.mxu0
        %v8363 = vadd.f32 %v8314, %v8362
        %v8364 = vpop.f32.mrf.mxu0
        %v8365 = vadd.f32 %v8316, %v8364
        %8366 = vmatmul.bf16.gmra.mxu0 %v7470
        %v8367 = vpop.f32.mrf.mxu0
        %v8368 = vadd.f32 %v8319, %v8367
        %v8369 = vpop.f32.mrf.mxu0
        %v8370 = vadd.f32 %v8321, %v8369
        %8371 = vmatmul.bf16.gmra.mxu0 %v7479
        %v8372 = vpop.f32.mrf.mxu0
        %v8373 = vadd.f32 %v8324, %v8372
        %v8374 = vpop.f32.mrf.mxu0
        %v8375 = vadd.f32 %v8326, %v8374
        %8376 = vdwg.mxu0
        %8377 = vmatpush.bf16.msra.mxu0 %v7912
        %8378 = vmatpush.bf16.msra.mxu0 %v7911
        %8379 = vmatpush.bf16.msra.mxu0 %v7910
        %8380 = vmatpush.bf16.msra.mxu0 %v7909
        %8381 = vmatpush.bf16.msra.mxu0 %v7908
        %8382 = vmatpush.bf16.msra.mxu0 %v7907
        %8383 = vmatpush.bf16.msra.mxu0 %v7906
        %8384 = vmatpush.bf16.msra.mxu0 %v7905
        %8385 = vmatmul.bf16.gmra.mxu0 %v7417
        %v8386 = vpop.f32.mrf.mxu0
        %v8387 = vadd.f32 %v8338, %v8386
        %v8388 = vpop.f32.mrf.mxu0
        %v8389 = vadd.f32 %v8340, %v8388
        %8390 = vmatmul.bf16.gmra.mxu0 %v7426
        %v8391 = vpop.f32.mrf.mxu0
        %v8392 = vadd.f32 %v8343, %v8391
        %v8393 = vpop.f32.mrf.mxu0
        %v8394 = vadd.f32 %v8345, %v8393
        %8395 = vmatmul.bf16.gmra.mxu0 %v7435
        %v8396 = vpop.f32.mrf.mxu0
        %v8397 = vadd.f32 %v8348, %v8396
        %v8398 = vpop.f32.mrf.mxu0
        %v8399 = vadd.f32 %v8350, %v8398
        %8400 = vmatmul.bf16.gmra.mxu0 %v7444
        %v8401 = vpop.f32.mrf.mxu0
        %v8402 = vadd.f32 %v8353, %v8401
        %v8403 = vpop.f32.mrf.mxu0
        %v8404 = vadd.f32 %v8355, %v8403
        %8405 = vmatmul.bf16.gmra.mxu0 %v7453
        %v8406 = vpop.f32.mrf.mxu0
        %v8407 = vadd.f32 %v8358, %v8406
        %v8408 = vpop.f32.mrf.mxu0
        %v8409 = vadd.f32 %v8360, %v8408
        %8410 = vmatmul.bf16.gmra.mxu0 %v7462
        %v8411 = vpop.f32.mrf.mxu0
        %v8412 = vadd.f32 %v8363, %v8411
        %v8413 = vpop.f32.mrf.mxu0
        %v8414 = vadd.f32 %v8365, %v8413
        %8415 = vmatmul.bf16.gmra.mxu0 %v7471
        %v8416 = vpop.f32.mrf.mxu0
        %v8417 = vadd.f32 %v8368, %v8416
        %v8418 = vpop.f32.mrf.mxu0
        %v8419 = vadd.f32 %v8370, %v8418
        %8420 = vmatmul.bf16.gmra.mxu0 %v7480
        %v8421 = vpop.f32.mrf.mxu0
        %v8422 = vadd.f32 %v8373, %v8421
        %v8423 = vpop.f32.mrf.mxu0
        %v8424 = vadd.f32 %v8375, %v8423
        %8425 = vdwg.mxu0
        %8426 = vst [vmem:[%s241] sm:$0xff] %v8387
        %8427 = vst [vmem:[%s241 + $0x8] sm:$0xff] %v8389
        %8428 = vst [vmem:[%s241 + $0x10] sm:$0xff] %v8392
        %8429 = vst [vmem:[%s241 + $0x18] sm:$0xff] %v8394
        %8430 = vst [vmem:[%s241 + $0x20] sm:$0xff] %v8397
        %8431 = vst [vmem:[%s241 + $0x28] sm:$0xff] %v8399
        %8432 = vst [vmem:[%s241 + $0x30] sm:$0xff] %v8402
        %8433 = vst [vmem:[%s241 + $0x38] sm:$0xff] %v8404
        %8434 = vst [vmem:[%s241 + $0x40] sm:$0xff] %v8407
        %8435 = vst [vmem:[%s241 + $0x48] sm:$0xff] %v8409
        %8436 = vst [vmem:[%s241 + $0x50] sm:$0xff] %v8412
        %8437 = vst [vmem:[%s241 + $0x58] sm:$0xff] %v8414
        %8438 = vst [vmem:[%s241 + $0x60] sm:$0xff] %v8417
        %8439 = vst [vmem:[%s241 + $0x68] sm:$0xff] %v8419
        %8440 = vst [vmem:[%s241 + $0x70] sm:$0xff] %v8422
        %8441 = vst [vmem:[%s241 + $0x78] sm:$0xff] %v8424
        %s8442 = sand.u32 %s122, 1
        %s8443 = scalar_lea.sflag [#allocation6], %s8442
        %s8444 = sand.u32 %s122, 1
        %s8445 = smul.addr %s8444, 128
        %s8446 = scalar_lea.vmem [#allocation9], %s8445
        // Predicated region
        $region45: #{tpu_custom_call.1} parent=35 // pred_check
          %p8447 = pneg %p132
        $region46: #{tpu_custom_call.1} parent=35 // pred_check_branch
          %8449 = sbr.rel (%p8447) target = $region48
        $region47: #{tpu_custom_call.1} parent=35 // pred_region
          %s8450 = smul.u32 16, %s20
          %8452 = vsyncadd %s8443, 0
          %s8453 = smul.addr %s8450, 8
          %s8454 = scalar_lea.hbm %s4, %s8453
          %s8455 = sshll.u32 %s8446, 4
          %s8456 = int_to_ptr.vmem [resolvable:$true] %s8455
          %s8457 = sshll.u32 %s8454, 4
          %s8458 = int_to_ptr.hbm [resolvable:$true] %s8457
          %8463 = dma.vmem_to_hbm [thread:$0]  %s8456, 2048, %s8458, %s8443, 128, 128, 8
        $region48: #{tpu_custom_call.1} parent=35 // pred_fallthru
          _
      $region36: #{tpu_custom_call.1} parent=5 // pred_fallthru
        _
      %p8464 = scmp.le.s32.totalorder 2, %s15
      // Predicated region
      $region49: #{tpu_custom_call.1} parent=5 // pred_check
        %p8465 = pneg %p8464
      $region50: #{tpu_custom_call.1} parent=5 // pred_check_branch
        %8467 = sbr.rel (%p8465) target = $region52
      $region51: #{tpu_custom_call.1} parent=5 // pred_region
        %s8468 = ssub.s32 %s15, 2
        // Predicated region
        $region53: #{tpu_custom_call.1} parent=51 // pred_check
          %p8469 = pneg %p138
        $region54: #{tpu_custom_call.1} parent=51 // pred_check_branch
          %8471 = sbr.rel (%p8469) target = $region56
        $region55: #{tpu_custom_call.1} parent=51 // pred_region
          %s8472 = sand.u32 %s123, 1
          %s8473 = scalar_lea.sflag [#allocation6], %s8472
          %s8474 = sand.u32 %s123, 1
          %s8475 = smul.addr %s8474, 128
          %s8476 = scalar_lea.vmem [#allocation9], %s8475
          %8478 = dma.done %s8473, 2048
        $region56: #{tpu_custom_call.1} parent=51 // pred_fallthru
          _
      $region52: #{tpu_custom_call.1} parent=5 // pred_fallthru
        _
    $region6: #{tpu_custom_call.1} parent=1 // loop_footer
      %s19 = sadd.s32 1, %s15
    $region7: #{tpu_custom_call.1} parent=1 // loop_footer_branch
      %14 = sbr.rel target = $region3
    $region8: #{tpu_custom_call.1} parent=1 // loop_exit
      _
    %8479 = vsyncpa [#allocation5], 1
    %s8480 = scalar_lea.sflag [#allocation5], 1
    %8481 = vsyncpa %s8480, 1
    %8482 = vsyncpa [#allocation8], 1
    %8483 = vsyncpa [#allocation6], 1
    %s8484 = scalar_lea.sflag [#allocation6], 1
    %8485 = vsyncpa %s8484, 1

</llo_original>
